<compile_context>
chip_gen: v7x
topology: tpu7x:2x2x1
jax: 0.10.0
libtpu: 0.0.40
codegen_flags: <defaults>
</compile_context>

<pallas_src>
import functools

import jax
import jax.numpy as jnp
import numpy as np
from jax import lax
from jax.experimental import pallas as pl
from jax.experimental.pallas import tpu as pltpu


def _gemma_block_kernel(
    x_ref, cosf_ref, sinf_ref, kc_ref, vc_ref, mask_ref,
    w_q2_ref, w_o_ref, w_gu_ref, w_dn_ref, rms1_ref, rms2_ref,
    out_ref,
    q_scr, hn_scr, m_scr, l_scr, acc_scr,
    *, n_heads, n_kv_heads, head_dim, n_t_tiles, eps):
  H, KV, Dh, NT = n_heads, n_kv_heads, head_dim, n_t_tiles
  rep = H // KV
  S = x_ref.shape[1]
  D = x_ref.shape[2]
  nt = (((1,), (1,)), ((), ()))          # y = x @ W.T   (torch (out, in) weight layout)
  step = pl.program_id(1)                # [0, NT): attention T tiles;  [NT, NT+NH): MLP Hd tiles

  # ---- step 0: input RMSNorm + fused [Q ; rotate_half(Q)] projection + RoPE (+scale) --------
  @pl.when(step == 0)
  def _prologue():
    x = x_ref[0].astype(jnp.float32)
    xn = x * lax.rsqrt(jnp.mean(x * x, axis=-1, keepdims=True) + eps)
    xn = (xn * (1.0 + rms1_ref[...])).astype(jnp.bfloat16)
    # One MXU matmul producing q and rotate_half(q) side by side (the rotate-half is a row
    # permutation of W_q, folded into the weight in the wrapper) -> RoPE is pure elementwise
    # VPU math, no lane shuffles/concats even at Dh < 128.
    qq = lax.dot_general(xn, w_q2_ref[...], nt,
                         preferred_element_type=jnp.float32)        # (S, 2*H*Dh) f32
    cos_all = jnp.concatenate([cosf_ref[...]] * H, axis=-1)         # (S, H*Dh) in-VMEM broadcast
    sin_all = jnp.concatenate([sinf_ref[...]] * H, axis=-1)         # (scale + sign folded in)
    q_scr[...] = (qq[:, :H * Dh] * cos_all + qq[:, H * Dh:] * sin_all).astype(jnp.bfloat16)
    m_scr[...] = jnp.full(m_scr.shape, -jnp.inf, jnp.float32)
    l_scr[...] = jnp.zeros(l_scr.shape, jnp.float32)
    acc_scr[...] = jnp.zeros(acc_scr.shape, jnp.float32)

  # ---- attention phase: one K/V-cache T-tile per grid step, flash-style online softmax ------
  @pl.when(step < NT)
  def _attention_step():
    kc = kc_ref[0]                       # (TT, KV*Dh) bf16
    vc = vc_ref[0]
    mask = mask_ref[...]                 # (S, TT) f32 — never tiled across heads
    q_all = q_scr[...]                   # (S, H*Dh) bf16 (scale already folded in)
    for h in range(H):                   # TODO(synk): lax.fori_loop(unroll=True) once H is large
      g = h // rep
      qh = q_all[:, h * Dh:(h + 1) * Dh]
      kg = kc[:, g * Dh:(g + 1) * Dh]
      vg = vc[:, g * Dh:(g + 1) * Dh]
      sc = lax.dot_general(qh, kg, nt, preferred_element_type=jnp.float32)   # (S, TT)
      sc = sc + mask
      m_prev = m_scr[h]
      m_new = jnp.maximum(m_prev, jnp.max(sc, axis=-1, keepdims=True))
      alpha = jnp.exp(m_prev - m_new)
      p = jnp.exp(sc - m_new)
      l_scr[h] = alpha * l_scr[h] + jnp.sum(p, axis=-1, keepdims=True)
      acc_scr[h] = alpha * acc_scr[h] + jnp.dot(
          p.astype(jnp.bfloat16), vg, preferred_element_type=jnp.float32)
      m_scr[h] = m_new

  # ---- last attention step: finalize softmax, per-head o_proj accumulation, residual, norm --
  @pl.when(step == NT - 1)
  def _attention_finalize():
    x = x_ref[0].astype(jnp.float32)
    w_o = w_o_ref[...]                   # (D, H*Dh) bf16
    attn = jnp.zeros((S, D), jnp.float32)
    for h in range(H):
      o_h = acc_scr[h] * pl.reciprocal(l_scr[h], approx=True)       # (S, Dh) f32
      # per-head output projection, accumulated in f32 — no (S, H*Dh) scratch round-trip
      attn = attn + lax.dot_general(
          o_h.astype(jnp.bfloat16), w_o[:, h * Dh:(h + 1) * Dh], nt,
          preferred_element_type=jnp.float32)
    h1 = attn + x
    out_ref[0] = h1.astype(out_ref.dtype)           # residual; MLP tiles accumulate on top
    # post-attention RMSNorm (reference eps=args is unrunnable; norm_eps used — see header)
    hn = h1 * lax.rsqrt(jnp.mean(h1 * h1, axis=-1, keepdims=True) + eps)
    hn_scr[...] = (hn * (1.0 + rms2_ref[...])).astype(jnp.bfloat16)

  # ---- MLP phase: one Hd tile per grid step, f32 accumulation straight into the output ------
  @pl.when(step >= NT)
  def _mlp_step():
    hn = hn_scr[...]                     # (S, D) bf16
    gate = lax.dot_general(hn, w_gu_ref[0], nt, preferred_element_type=jnp.float32)  # (S, thd)
    up = lax.dot_general(hn, w_gu_ref[1], nt, preferred_element_type=jnp.float32)
    gate = 0.5 * gate * (1.0 + lax.erf(gate * float(1.0 / np.sqrt(2.0))))  # exact-erf GELU (torch default)
    contrib = lax.dot_general((gate * up).astype(jnp.bfloat16), w_dn_ref[...], nt,
                              preferred_element_type=jnp.float32)          # (S, D)
    # out dtype is f32 here; for a bf16 output dtype use an f32 VMEM accumulator instead.
    out_ref[0] = out_ref[0] + contrib.astype(out_ref.dtype)


def prepare_gemma_block(params, cos, sin, *, cfg):
  """One-time weight / RoPE-table preparation (kept out of the per-call path)."""
  H, Dh, D = cfg["n_heads"], cfg["head_dim"], cfg["dim"]
  bf16 = jnp.bfloat16
  scale = Dh ** (-0.5)

  # Only the Q rows of the fused QKV weight: the reference's Tensor.index_copy is OUT-of-place
  # and its result discarded, so the projected K/V are dead and attention reads the caches as-is.
  w_q = params["w_qkv"][:H * Dh]                                   # (H*Dh, D), torch (out, in)
  # rotate_half(x @ W.T) == x @ (row-permuted W).T: swap the two half-blocks of output rows per head.
  w_q_perm = w_q.reshape(H, 2, Dh // 2, D)[:, ::-1].reshape(H * Dh, D)
  w_q2 = jnp.concatenate([w_q, w_q_perm], axis=0).astype(bf16)     # (2*H*Dh, D)

  # Minimal (S, Dh) RoPE tables (broadcast across heads in-kernel); attention scale and the
  # rotate-half sign pattern are folded in here at zero kernel cost.
  cosf = (scale * jnp.concatenate([cos, cos], axis=-1)).astype(jnp.float32)    # (S, Dh)
  sinf = (scale * jnp.concatenate([-sin, sin], axis=-1)).astype(jnp.float32)

  return dict(
      w_q2=w_q2,
      w_o=params["w_o"].astype(bf16),                                          # (D, H*Dh)
      w_gu=jnp.stack([params["w_gate"], params["w_up"]], axis=0).astype(bf16),  # (2, Hd, D)
      w_dn=params["w_down"].astype(bf16),                                      # (D, Hd)
      rms1=params["rms1"].reshape(1, D).astype(jnp.float32),
      rms2=params["rms2"].reshape(1, D).astype(jnp.float32),
      cosf=cosf, sinf=sinf)


def gemma_block(x, kv_idx, k_cache, v_cache, mask2d, prep, *, cfg,
                t_tile=128, hd_tile=128):
  """Fused Gemma block.  k_cache/v_cache: (B, T, KV, Dh), ideally persisted in bf16 by caller."""
  del kv_idx   # reference's index_copy is out-of-place (result discarded) -> caches used as-is
  B, S, D = x.shape
  H, KV, Dh, Hd = cfg["n_heads"], cfg["n_kv_heads"], cfg["head_dim"], cfg["hidden_dim"]
  T = k_cache.shape[1]
  bf16 = jnp.bfloat16

  t_tile = min(t_tile, T)
  hd_tile = min(hd_tile, Hd)
  assert T % t_tile == 0 and Hd % hd_tile == 0
  NT, NH = T // t_tile, Hd // hd_tile

  # (B, T, KV*Dh) is a free reshape of the native cache layout.  The bf16 cast is a no-op if the
  # caller already persists the caches in bf16 (recommended — avoids a full HBM rewrite per call).
  kc = k_cache.reshape(B, T, KV * Dh).astype(bf16)
  vc = v_cache.reshape(B, T, KV * Dh).astype(bf16)
  mask2d = mask2d.astype(jnp.float32)

  kernel = functools.partial(
      _gemma_block_kernel, n_heads=H, n_kv_heads=KV, head_dim=Dh, n_t_tiles=NT,
      eps=cfg["norm_eps"])

  # Explicit scoped-VMEM limit: physical capacity minus headroom (≈112 MiB on v5e/v6e, 48 on v7x).
  try:
    vmem_cap = int(pltpu.get_tpu_info().vmem_capacity_bytes)
  except Exception:
    vmem_cap = 128 * 1024 * 1024
  vmem_limit = max(32 * 1024 * 1024, vmem_cap - 16 * 1024 * 1024)

  def build(single_buffer):
    def const_spec(shape):
      n = len(shape)
      if single_buffer:   # grid-invariant operands: no point double-buffering them
        return pl.BlockSpec(shape, lambda *_: (0,) * n, pipeline_mode=pl.Buffered(1))
      return pl.BlockSpec(shape, lambda *_: (0,) * n)

    t_idx = lambda b, s: jnp.minimum(s, NT - 1)    # stick to the last T tile during the MLP phase
    h_idx = lambda b, s: jnp.maximum(s - NT, 0)    # first MLP tile prefetched during attention

    grid_spec = pltpu.PrefetchScalarGridSpec(
        num_scalar_prefetch=0,
        grid=(B, NT + NH),
        in_specs=[
            pl.BlockSpec((1, S, D), lambda b, s: (b, 0, 0)),                       # x (per batch)
            const_spec(prep["cosf"].shape), const_spec(prep["sinf"].shape),        # RoPE tables
            pl.BlockSpec((1, t_tile, KV * Dh), lambda b, s: (b, t_idx(b, s), 0)),  # K-cache tile
            pl.BlockSpec((1, t_tile, KV * Dh), lambda b, s: (b, t_idx(b, s), 0)),  # V-cache tile
            pl.BlockSpec((S, t_tile), lambda b, s: (0, t_idx(b, s))),              # mask tile
            const_spec(prep["w_q2"].shape), const_spec(prep["w_o"].shape),
            pl.BlockSpec((2, hd_tile, D), lambda b, s: (0, h_idx(b, s), 0)),       # gate/up tile
            pl.BlockSpec((D, hd_tile), lambda b, s: (0, h_idx(b, s))),             # down tile
            const_spec(prep["rms1"].shape), const_spec(prep["rms2"].shape),
        ],
        out_specs=pl.BlockSpec((1, S, D), lambda b, s: (b, 0, 0)),
        scratch_shapes=[
            pltpu.VMEM((S, H * Dh), bf16),         # RoPE'd (pre-scaled) q
            pltpu.VMEM((S, D), bf16),              # post-attention RMSNorm output
            pltpu.VMEM((H, S, 1), jnp.float32),    # flash m
            pltpu.VMEM((H, S, 1), jnp.float32),    # flash l
            pltpu.VMEM((H, S, Dh), jnp.float32),   # flash acc
        ])

    return pl.pallas_call(
        kernel,
        out_shape=jax.ShapeDtypeStruct((B, S, D), x.dtype),
        grid_spec=grid_spec,
        compiler_params=pltpu.CompilerParams(
            dimension_semantics=("parallel", "arbitrary"),
            vmem_limit_bytes=vmem_limit))

  args = (x, prep["cosf"], prep["sinf"], kc, vc, mask2d,
          prep["w_q2"], prep["w_o"], prep["w_gu"], prep["w_dn"],
          prep["rms1"], prep["rms2"])
  try:
    return build(single_buffer=True)(*args)
  except Exception:
    # pl.Buffered(1) single-buffering not supported by this jax build -> default buffering.
    return build(single_buffer=False)(*args)


def gemma_block_ref(x, cos, sin, k_cache, v_cache, mask, params, *, cfg):
  """Plain-JAX reference mirroring the PyTorch forward (numeric check)."""
  H, KV, Dh = cfg["n_heads"], cfg["n_kv_heads"], cfg["head_dim"]
  eps = cfg["norm_eps"]
  rep = H // KV
  B, S, _ = x.shape

  def rms(v, w):
    m = jnp.mean(v.astype(jnp.float32) ** 2, axis=-1, keepdims=True)
    return v * lax.rsqrt(m + eps) * (1.0 + w)

  res = x
  xn = rms(x, params["rms1"])
  qkv = xn @ params["w_qkv"].T
  q = qkv[..., :H * Dh].reshape(B, S, H, Dh)
  q1, q2 = q[..., :Dh // 2], q[..., Dh // 2:]
  c = cos[None, :, None, :]
  s = sin[None, :, None, :]
  q = jnp.concatenate([q1 * c - q2 * s, q1 * s + q2 * c], axis=-1)
  key = jnp.repeat(k_cache, rep, axis=2)
  val = jnp.repeat(v_cache, rep, axis=2)
  qh = q.transpose(0, 2, 1, 3)
  kh = key.transpose(0, 2, 1, 3)
  vh = val.transpose(0, 2, 1, 3)
  scores = jnp.einsum("bhsd,bhtd->bhst", qh, kh) * (Dh ** -0.5) + mask
  p = jax.nn.softmax(scores.astype(jnp.float32), axis=-1)
  o = jnp.einsum("bhst,bhtd->bhsd", p, vh).transpose(0, 2, 1, 3).reshape(B, S, H * Dh)
  o = o @ params["w_o"].T
  x1 = o + res
  hn = rms(x1, params["rms2"])
  g = hn @ params["w_gate"].T
  u = hn @ params["w_up"].T
  g = 0.5 * g * (1.0 + lax.erf(g / jnp.sqrt(2.0)))
  return (g * u) @ params["w_down"].T + x1


if __name__ == "__main__":
  cfg = dict(dim=128, n_heads=4, n_kv_heads=2, head_dim=32,
             hidden_dim=256, norm_eps=1e-6)
  B, S, T = 2, 8, 256     # T chosen so the T-tiling (t_tile=128, 2 tiles) is actually exercised
  D, H, KV, Dh, Hd = cfg["dim"], cfg["n_heads"], cfg["n_kv_heads"], cfg["head_dim"], cfg["hidden_dim"]
  E = (H + 2 * KV) * Dh

  key = jax.random.PRNGKey(0)
  ks = jax.random.split(key, 10)
  x = jax.random.normal(ks[0], (B, S, D), jnp.float32)
  params = {
      "w_qkv": jax.random.normal(ks[1], (E, D), jnp.float32) * 0.05,   # torch (out, in) layout
      "w_o": jax.random.normal(ks[2], (D, H * Dh), jnp.float32) * 0.05,
      "w_gate": jax.random.normal(ks[3], (Hd, D), jnp.float32) * 0.05,
      "w_up": jax.random.normal(ks[4], (Hd, D), jnp.float32) * 0.05,
      "w_down": jax.random.normal(ks[5], (D, Hd), jnp.float32) * 0.05,
      "rms1": jax.random.normal(ks[6], (D,), jnp.float32) * 0.1,
      "rms2": jax.random.normal(ks[7], (D,), jnp.float32) * 0.1,
  }
  k_cache = jax.random.normal(ks[8], (B, T, KV, Dh), jnp.float32)
  v_cache = jax.random.normal(ks[9], (B, T, KV, Dh), jnp.float32)

  # rotary tables (real cos/sin of shape (S, Dh//2))
  inv_freq = 1.0 / (10000.0 ** (jnp.arange(0, Dh, 2, dtype=jnp.float32) / Dh))
  angles = jnp.arange(S, dtype=jnp.float32)[:, None] * inv_freq[None, :]
  cos, sin = jnp.cos(angles), jnp.sin(angles)

  # kv write positions (no effect on the output: reference's index_copy is out-of-place)
  kv_idx = jnp.arange(S, dtype=jnp.int32) + (T - S)

  # additive attention mask (S, T): query i sits at absolute position T-S+i, causal over the cache
  i = jnp.arange(S)[:, None]
  j = jnp.arange(T)[None, :]
  mask2d = jnp.where(j <= i + (T - S), 0.0, -1e9).astype(jnp.float32)
  mask = mask2d[None, None]                                   # (1, 1, S, T) for the reference

  # One-time prep (bf16 weights, fused/permuted layouts, scaled RoPE tables); caches persisted bf16.
  prep = prepare_gemma_block(params, cos, sin, cfg=cfg)
  k_cache_bf16 = k_cache.astype(jnp.bfloat16)
  v_cache_bf16 = v_cache.astype(jnp.bfloat16)

  out = gemma_block(x, kv_idx, k_cache_bf16, v_cache_bf16, mask2d, prep, cfg=cfg)
  out = jax.block_until_ready(out)

  ref = gemma_block_ref(x, cos, sin, k_cache, v_cache, mask, params, cfg=cfg)
  # bf16 MXU matmuls / bf16 caches (f32 accumulation) + approx softmax reciprocal -> loose tol
  np.testing.assert_allclose(np.asarray(out), np.asarray(ref), atol=3e-2, rtol=3e-2)
  print("KERNEL_OK")
</pallas_src>

<mosaic_0001>
module attributes {stable_mosaic.version = 11 : i64} {
  func.func @_gemma_block_kernel(%arg0: i32, %arg1: i32, %arg2: memref<1x8x128xf32, #tpu.memory_space<vmem>>, %arg3: memref<8x32xf32, #tpu.memory_space<vmem>>, %arg4: memref<8x32xf32, #tpu.memory_space<vmem>>, %arg5: memref<1x128x64xbf16, #tpu.memory_space<vmem>>, %arg6: memref<1x128x64xbf16, #tpu.memory_space<vmem>>, %arg7: memref<8x128xf32, #tpu.memory_space<vmem>>, %arg8: memref<256x128xbf16, #tpu.memory_space<vmem>>, %arg9: memref<128x128xbf16, #tpu.memory_space<vmem>>, %arg10: memref<2x128x128xbf16, #tpu.memory_space<vmem>>, %arg11: memref<128x128xbf16, #tpu.memory_space<vmem>>, %arg12: memref<1x128xf32, #tpu.memory_space<vmem>>, %arg13: memref<1x128xf32, #tpu.memory_space<vmem>>, %arg14: memref<1x8x128xf32, #tpu.memory_space<vmem>>, %arg15: memref<8x128xbf16, #tpu.memory_space<vmem>>, %arg16: memref<8x128xbf16, #tpu.memory_space<vmem>>, %arg17: memref<4x8x1xf32, #tpu.memory_space<vmem>>, %arg18: memref<4x8x1xf32, #tpu.memory_space<vmem>>, %arg19: memref<4x8x32xf32, #tpu.memory_space<vmem>>) attributes {dimension_semantics = [#tpu.dimension_semantics<parallel>, #tpu.dimension_semantics<arbitrary>], iteration_bounds = array<i64: 2, 4>, scalar_prefetch = 0 : i64, scratch_operands = 5 : i64, tpu.core_type = #tpu.core_type<tc>, window_params = [{transform_indices = @transform_0, window_bounds = array<i64: 1, 8, 128>}, {pipeline_mode = #tpu.pipeline_mode<synchronous>, transform_indices = @transform_1, window_bounds = array<i64: 8, 32>}, {pipeline_mode = #tpu.pipeline_mode<synchronous>, transform_indices = @transform_2, window_bounds = array<i64: 8, 32>}, {transform_indices = @transform_3, window_bounds = array<i64: 1, 128, 64>}, {transform_indices = @transform_4, window_bounds = array<i64: 1, 128, 64>}, {transform_indices = @transform_5, window_bounds = array<i64: 8, 128>}, {pipeline_mode = #tpu.pipeline_mode<synchronous>, transform_indices = @transform_6, window_bounds = array<i64: 256, 128>}, {pipeline_mode = #tpu.pipeline_mode<synchronous>, transform_indices = @transform_7, window_bounds = array<i64: 128, 128>}, {transform_indices = @transform_8, window_bounds = array<i64: 2, 128, 128>}, {transform_indices = @transform_9, window_bounds = array<i64: 128, 128>}, {pipeline_mode = #tpu.pipeline_mode<synchronous>, transform_indices = @transform_10, window_bounds = array<i64: 1, 128>}, {pipeline_mode = #tpu.pipeline_mode<synchronous>, transform_indices = @transform_11, window_bounds = array<i64: 1, 128>}, {transform_indices = @transform_12, window_bounds = array<i64: 1, 8, 128>}]} {
    %c0_i32 = arith.constant 0 : i32
    %0 = arith.cmpi eq, %arg1, %c0_i32 : i32
    %1 = arith.extui %0 : i1 to i32
    %c0_i32_0 = arith.constant 0 : i32
    %2 = arith.cmpi ne, %1, %c0_i32_0 : i32
    scf.if %2 {
      %c0 = arith.constant 0 : index
      %c0_5 = arith.constant 0 : index
      %c0_6 = arith.constant 0 : index
      %12 = vector.load %arg2[%c0, %c0_5, %c0_6] : memref<1x8x128xf32, #tpu.memory_space<vmem>>, vector<1x8x128xf32>
      %13 = vector.shape_cast %12 : vector<1x8x128xf32> to vector<8x128xf32>
      %14 = arith.mulf %13, %13 : vector<8x128xf32>
      %cst = arith.constant dense<0.000000e+00> : vector<8xf32>
      %15 = vector.multi_reduction <add>, %14, %cst [1] : vector<8x128xf32> to vector<8xf32>
      %16 = vector.shape_cast %15 : vector<8xf32> to vector<8x1xf32>
      %cst_7 = arith.constant 1.280000e+02 : f32
      %17 = vector.broadcast %cst_7 : f32 to vector<8x1xf32>
      %18 = arith.divf %16, %17 : vector<8x1xf32>
      %cst_8 = arith.constant 9.99999997E-7 : f32
      %19 = vector.broadcast %cst_8 : f32 to vector<8x1xf32>
      %20 = arith.addf %18, %19 : vector<8x1xf32>
      %21 = math.rsqrt %20 : vector<8x1xf32>
      %22 = vector.broadcast %21 : vector<8x1xf32> to vector<8x128xf32>
      %23 = arith.mulf %13, %22 : vector<8x128xf32>
      %c0_9 = arith.constant 0 : index
      %c0_10 = arith.constant 0 : index
      %24 = vector.load %arg12[%c0_9, %c0_10] : memref<1x128xf32, #tpu.memory_space<vmem>>, vector<1x128xf32>
      %cst_11 = arith.constant 1.000000e+00 : f32
      %25 = vector.broadcast %cst_11 : f32 to vector<1x128xf32>
      %26 = arith.addf %25, %24 : vector<1x128xf32>
      %27 = vector.broadcast %26 : vector<1x128xf32> to vector<8x128xf32>
      %28 = arith.mulf %23, %27 : vector<8x128xf32>
      %29 = arith.truncf %28 : vector<8x128xf32> to vector<8x128xbf16>
      %c0_12 = arith.constant 0 : index
      %c0_13 = arith.constant 0 : index
      %30 = vector.load %arg8[%c0_12, %c0_13] : memref<256x128xbf16, #tpu.memory_space<vmem>>, vector<256x128xbf16>
      %cst_14 = arith.constant dense<0.000000e+00> : vector<8x256xf32>
      %31 = tpu.matmul %29, %30, %cst_14 {dimension_numbers = #tpu.dot_dimension_numbers<[1], [1], [0], [0], [0, 0, 1, 0], [], []>} : vector<8x128xbf16>, vector<256x128xbf16>, vector<8x256xf32> -> vector<8x256xf32>
      %c0_15 = arith.constant 0 : index
      %c0_16 = arith.constant 0 : index
      %32 = vector.load %arg3[%c0_15, %c0_16] : memref<8x32xf32, #tpu.memory_space<vmem>>, vector<8x32xf32>
      %33 = tpu.concatenate %32, %32, %32, %32 in 1 : vector<8x32xf32>, vector<8x32xf32>, vector<8x32xf32>, vector<8x32xf32> -> vector<8x128xf32>
      %c0_17 = arith.constant 0 : index
      %c0_18 = arith.constant 0 : index
      %34 = vector.load %arg4[%c0_17, %c0_18] : memref<8x32xf32, #tpu.memory_space<vmem>>, vector<8x32xf32>
      %35 = tpu.concatenate %34, %34, %34, %34 in 1 : vector<8x32xf32>, vector<8x32xf32>, vector<8x32xf32>, vector<8x32xf32> -> vector<8x128xf32>
      %36 = vector.extract_strided_slice %31 {offsets = [0, 0], sizes = [8, 128], strides = [1, 1]} : vector<8x256xf32> to vector<8x128xf32>
      %37 = arith.mulf %36, %33 : vector<8x128xf32>
      %38 = vector.extract_strided_slice %31 {offsets = [0, 128], sizes = [8, 128], strides = [1, 1]} : vector<8x256xf32> to vector<8x128xf32>
      %39 = arith.mulf %38, %35 : vector<8x128xf32>
      %40 = arith.addf %37, %39 : vector<8x128xf32>
      %41 = arith.truncf %40 : vector<8x128xf32> to vector<8x128xbf16>
      %c0_19 = arith.constant 0 : index
      %c0_20 = arith.constant 0 : index
      %42 = vector.load %arg15[%c0_19, %c0_20] : memref<8x128xbf16, #tpu.memory_space<vmem>>, vector<8x128xbf16>
      tpu.vector_store %arg15[%c0_19, %c0_20], %41 {strides = array<i32>} : memref<8x128xbf16, #tpu.memory_space<vmem>>, vector<8x128xbf16>,
      %cst_21 = arith.constant 0xFF800000 : f32
      %43 = vector.broadcast %cst_21 : f32 to vector<4x8x1xf32>
      %c0_22 = arith.constant 0 : index
      %c0_23 = arith.constant 0 : index
      %c0_24 = arith.constant 0 : index
      %44 = vector.load %arg17[%c0_22, %c0_23, %c0_24] : memref<4x8x1xf32, #tpu.memory_space<vmem>>, vector<4x8x1xf32>
      tpu.vector_store %arg17[%c0_22, %c0_23, %c0_24], %43 {strides = array<i32>} : memref<4x8x1xf32, #tpu.memory_space<vmem>>, vector<4x8x1xf32>,
      %cst_25 = arith.constant 0.000000e+00 : f32
      %45 = vector.broadcast %cst_25 : f32 to vector<4x8x1xf32>
      %c0_26 = arith.constant 0 : index
      %c0_27 = arith.constant 0 : index
      %c0_28 = arith.constant 0 : index
      %46 = vector.load %arg18[%c0_26, %c0_27, %c0_28] : memref<4x8x1xf32, #tpu.memory_space<vmem>>, vector<4x8x1xf32>
      tpu.vector_store %arg18[%c0_26, %c0_27, %c0_28], %45 {strides = array<i32>} : memref<4x8x1xf32, #tpu.memory_space<vmem>>, vector<4x8x1xf32>,
      %cst_29 = arith.constant 0.000000e+00 : f32
      %47 = vector.broadcast %cst_29 : f32 to vector<4x8x32xf32>
      %c0_30 = arith.constant 0 : index
      %c0_31 = arith.constant 0 : index
      %c0_32 = arith.constant 0 : index
      %48 = vector.load %arg19[%c0_30, %c0_31, %c0_32] : memref<4x8x32xf32, #tpu.memory_space<vmem>>, vector<4x8x32xf32>
      tpu.vector_store %arg19[%c0_30, %c0_31, %c0_32], %47 {strides = array<i32>} : memref<4x8x32xf32, #tpu.memory_space<vmem>>, vector<4x8x32xf32>,
    } else {
    }
    %c2_i32 = arith.constant 2 : i32
    %3 = arith.cmpi slt, %arg1, %c2_i32 : i32
    %4 = arith.extui %3 : i1 to i32
    %c0_i32_1 = arith.constant 0 : i32
    %5 = arith.cmpi ne, %4, %c0_i32_1 : i32
    scf.if %5 {
      %c0 = arith.constant 0 : index
      %c0_5 = arith.constant 0 : index
      %c0_6 = arith.constant 0 : index
      %12 = vector.load %arg5[%c0, %c0_5, %c0_6] : memref<1x128x64xbf16, #tpu.memory_space<vmem>>, vector<1x128x64xbf16>
      %13 = vector.shape_cast %12 : vector<1x128x64xbf16> to vector<128x64xbf16>
      %c0_7 = arith.constant 0 : index
      %c0_8 = arith.constant 0 : index
      %c0_9 = arith.constant 0 : index
      %14 = vector.load %arg6[%c0_7, %c0_8, %c0_9] : memref<1x128x64xbf16, #tpu.memory_space<vmem>>, vector<1x128x64xbf16>
      %15 = vector.shape_cast %14 : vector<1x128x64xbf16> to vector<128x64xbf16>
      %c0_10 = arith.constant 0 : index
      %c0_11 = arith.constant 0 : index
      %16 = vector.load %arg7[%c0_10, %c0_11] : memref<8x128xf32, #tpu.memory_space<vmem>>, vector<8x128xf32>
      %c0_12 = arith.constant 0 : index
      %c0_13 = arith.constant 0 : index
      %17 = vector.load %arg15[%c0_12, %c0_13] : memref<8x128xbf16, #tpu.memory_space<vmem>>, vector<8x128xbf16>
      %18 = vector.extract_strided_slice %17 {offsets = [0, 0], sizes = [8, 32], strides = [1, 1]} : vector<8x128xbf16> to vector<8x32xbf16>
      %19 = vector.extract_strided_slice %13 {offsets = [0, 0], sizes = [128, 32], strides = [1, 1]} : vector<128x64xbf16> to vector<128x32xbf16>
      %20 = vector.extract_strided_slice %15 {offsets = [0, 0], sizes = [128, 32], strides = [1, 1]} : vector<128x64xbf16> to vector<128x32xbf16>
      %cst = arith.constant dense<0.000000e+00> : vector<8x128xf32>
      %21 = tpu.matmul %18, %19, %cst {dimension_numbers = #tpu.dot_dimension_numbers<[1], [1], [0], [0], [0, 0, 1, 0], [], []>} : vector<8x32xbf16>, vector<128x32xbf16>, vector<8x128xf32> -> vector<8x128xf32>
      %22 = arith.addf %21, %16 : vector<8x128xf32>
      %c0_14 = arith.constant 0 : index
      %c0_15 = arith.constant 0 : index
      %c0_16 = arith.constant 0 : index
      %23 = vector.load %arg17[%c0_14, %c0_15, %c0_16] : memref<4x8x1xf32, #tpu.memory_space<vmem>>, vector<1x8x1xf32>
      %24 = vector.shape_cast %23 : vector<1x8x1xf32> to vector<8x1xf32>
      %cst_17 = arith.constant dense<0xFF800000> : vector<8xf32>
      %25 = vector.multi_reduction <maximumf>, %22, %cst_17 [1] : vector<8x128xf32> to vector<8xf32>
      %26 = vector.shape_cast %25 : vector<8xf32> to vector<8x1xf32>
      %27 = arith.maximumf %24, %26 : vector<8x1xf32>
      %28 = arith.subf %24, %27 : vector<8x1xf32>
      %29 = math.exp %28 : vector<8x1xf32>
      %30 = vector.broadcast %27 : vector<8x1xf32> to vector<8x128xf32>
      %31 = arith.subf %22, %30 : vector<8x128xf32>
      %32 = math.exp %31 : vector<8x128xf32>
      %c0_18 = arith.constant 0 : index
      %c0_19 = arith.constant 0 : index
      %c0_20 = arith.constant 0 : index
      %33 = vector.load %arg18[%c0_18, %c0_19, %c0_20] : memref<4x8x1xf32, #tpu.memory_space<vmem>>, vector<1x8x1xf32>
      %34 = vector.shape_cast %33 : vector<1x8x1xf32> to vector<8x1xf32>
      %35 = arith.mulf %29, %34 : vector<8x1xf32>
      %cst_21 = arith.constant dense<0.000000e+00> : vector<8xf32>
      %36 = vector.multi_reduction <add>, %32, %cst_21 [1] : vector<8x128xf32> to vector<8xf32>
      %37 = vector.shape_cast %36 : vector<8xf32> to vector<8x1xf32>
      %38 = arith.addf %35, %37 : vector<8x1xf32>
      %c0_22 = arith.constant 0 : index
      %c0_23 = arith.constant 0 : index
      %c0_24 = arith.constant 0 : index
      %39 = vector.load %arg18[%c0_22, %c0_23, %c0_24] : memref<4x8x1xf32, #tpu.memory_space<vmem>>, vector<1x8x1xf32>
      %40 = vector.shape_cast %39 : vector<1x8x1xf32> to vector<8x1xf32>
      %41 = vector.shape_cast %38 : vector<8x1xf32> to vector<1x8x1xf32>
      tpu.vector_store %arg18[%c0_22, %c0_23, %c0_24], %41 {strides = array<i32>} : memref<4x8x1xf32, #tpu.memory_space<vmem>>, vector<1x8x1xf32>,
      %c0_25 = arith.constant 0 : index
      %c0_26 = arith.constant 0 : index
      %c0_27 = arith.constant 0 : index
      %42 = vector.load %arg19[%c0_25, %c0_26, %c0_27] : memref<4x8x32xf32, #tpu.memory_space<vmem>>, vector<1x8x32xf32>
      %43 = vector.shape_cast %42 : vector<1x8x32xf32> to vector<8x32xf32>
      %44 = vector.broadcast %29 : vector<8x1xf32> to vector<8x32xf32>
      %45 = arith.mulf %44, %43 : vector<8x32xf32>
      %46 = arith.truncf %32 : vector<8x128xf32> to vector<8x128xbf16>
      %cst_28 = arith.constant dense<0.000000e+00> : vector<8x32xf32>
      %47 = tpu.matmul %46, %20, %cst_28 {dimension_numbers = #tpu.dot_dimension_numbers<[1], [0], [0], [1], [0, 0, 1, 1], [], []>} : vector<8x128xbf16>, vector<128x32xbf16>, vector<8x32xf32> -> vector<8x32xf32>
      %48 = arith.addf %45, %47 : vector<8x32xf32>
      %c0_29 = arith.constant 0 : index
      %c0_30 = arith.constant 0 : index
      %c0_31 = arith.constant 0 : index
      %49 = vector.load %arg19[%c0_29, %c0_30, %c0_31] : memref<4x8x32xf32, #tpu.memory_space<vmem>>, vector<1x8x32xf32>
      %50 = vector.shape_cast %49 : vector<1x8x32xf32> to vector<8x32xf32>
      %51 = vector.shape_cast %48 : vector<8x32xf32> to vector<1x8x32xf32>
      tpu.vector_store %arg19[%c0_29, %c0_30, %c0_31], %51 {strides = array<i32>} : memref<4x8x32xf32, #tpu.memory_space<vmem>>, vector<1x8x32xf32>,
      %c0_32 = arith.constant 0 : index
      %c0_33 = arith.constant 0 : index
      %c0_34 = arith.constant 0 : index
      %52 = vector.load %arg17[%c0_32, %c0_33, %c0_34] : memref<4x8x1xf32, #tpu.memory_space<vmem>>, vector<1x8x1xf32>
      %53 = vector.shape_cast %52 : vector<1x8x1xf32> to vector<8x1xf32>
      %54 = vector.shape_cast %27 : vector<8x1xf32> to vector<1x8x1xf32>
      tpu.vector_store %arg17[%c0_32, %c0_33, %c0_34], %54 {strides = array<i32>} : memref<4x8x1xf32, #tpu.memory_space<vmem>>, vector<1x8x1xf32>,
      %55 = vector.extract_strided_slice %17 {offsets = [0, 32], sizes = [8, 32], strides = [1, 1]} : vector<8x128xbf16> to vector<8x32xbf16>
      %56 = vector.extract_strided_slice %13 {offsets = [0, 0], sizes = [128, 32], strides = [1, 1]} : vector<128x64xbf16> to vector<128x32xbf16>
      %57 = vector.extract_strided_slice %15 {offsets = [0, 0], sizes = [128, 32], strides = [1, 1]} : vector<128x64xbf16> to vector<128x32xbf16>
      %cst_35 = arith.constant dense<0.000000e+00> : vector<8x128xf32>
      %58 = tpu.matmul %55, %56, %cst_35 {dimension_numbers = #tpu.dot_dimension_numbers<[1], [1], [0], [0], [0, 0, 1, 0], [], []>} : vector<8x32xbf16>, vector<128x32xbf16>, vector<8x128xf32> -> vector<8x128xf32>
      %59 = arith.addf %58, %16 : vector<8x128xf32>
      %c1 = arith.constant 1 : index
      %c0_36 = arith.constant 0 : index
      %c0_37 = arith.constant 0 : index
      %60 = vector.load %arg17[%c1, %c0_36, %c0_37] : memref<4x8x1xf32, #tpu.memory_space<vmem>>, vector<1x8x1xf32>
      %61 = vector.shape_cast %60 : vector<1x8x1xf32> to vector<8x1xf32>
      %cst_38 = arith.constant dense<0xFF800000> : vector<8xf32>
      %62 = vector.multi_reduction <maximumf>, %59, %cst_38 [1] : vector<8x128xf32> to vector<8xf32>
      %63 = vector.shape_cast %62 : vector<8xf32> to vector<8x1xf32>
      %64 = arith.maximumf %61, %63 : vector<8x1xf32>
      %65 = arith.subf %61, %64 : vector<8x1xf32>
      %66 = math.exp %65 : vector<8x1xf32>
      %67 = vector.broadcast %64 : vector<8x1xf32> to vector<8x128xf32>
      %68 = arith.subf %59, %67 : vector<8x128xf32>
      %69 = math.exp %68 : vector<8x128xf32>
      %c1_39 = arith.constant 1 : index
      %c0_40 = arith.constant 0 : index
      %c0_41 = arith.constant 0 : index
      %70 = vector.load %arg18[%c1_39, %c0_40, %c0_41] : memref<4x8x1xf32, #tpu.memory_space<vmem>>, vector<1x8x1xf32>
      %71 = vector.shape_cast %70 : vector<1x8x1xf32> to vector<8x1xf32>
      %72 = arith.mulf %66, %71 : vector<8x1xf32>
      %cst_42 = arith.constant dense<0.000000e+00> : vector<8xf32>
      %73 = vector.multi_reduction <add>, %69, %cst_42 [1] : vector<8x128xf32> to vector<8xf32>
      %74 = vector.shape_cast %73 : vector<8xf32> to vector<8x1xf32>
      %75 = arith.addf %72, %74 : vector<8x1xf32>
      %c1_43 = arith.constant 1 : index
      %c0_44 = arith.constant 0 : index
      %c0_45 = arith.constant 0 : index
      %76 = vector.load %arg18[%c1_43, %c0_44, %c0_45] : memref<4x8x1xf32, #tpu.memory_space<vmem>>, vector<1x8x1xf32>
      %77 = vector.shape_cast %76 : vector<1x8x1xf32> to vector<8x1xf32>
      %78 = vector.shape_cast %75 : vector<8x1xf32> to vector<1x8x1xf32>
      tpu.vector_store %arg18[%c1_43, %c0_44, %c0_45], %78 {strides = array<i32>} : memref<4x8x1xf32, #tpu.memory_space<vmem>>, vector<1x8x1xf32>,
      %c1_46 = arith.constant 1 : index
      %c0_47 = arith.constant 0 : index
      %c0_48 = arith.constant 0 : index
      %79 = vector.load %arg19[%c1_46, %c0_47, %c0_48] : memref<4x8x32xf32, #tpu.memory_space<vmem>>, vector<1x8x32xf32>
      %80 = vector.shape_cast %79 : vector<1x8x32xf32> to vector<8x32xf32>
      %81 = vector.broadcast %66 : vector<8x1xf32> to vector<8x32xf32>
      %82 = arith.mulf %81, %80 : vector<8x32xf32>
      %83 = arith.truncf %69 : vector<8x128xf32> to vector<8x128xbf16>
      %cst_49 = arith.constant dense<0.000000e+00> : vector<8x32xf32>
      %84 = tpu.matmul %83, %57, %cst_49 {dimension_numbers = #tpu.dot_dimension_numbers<[1], [0], [0], [1], [0, 0, 1, 1], [], []>} : vector<8x128xbf16>, vector<128x32xbf16>, vector<8x32xf32> -> vector<8x32xf32>
      %85 = arith.addf %82, %84 : vector<8x32xf32>
      %c1_50 = arith.constant 1 : index
      %c0_51 = arith.constant 0 : index
      %c0_52 = arith.constant 0 : index
      %86 = vector.load %arg19[%c1_50, %c0_51, %c0_52] : memref<4x8x32xf32, #tpu.memory_space<vmem>>, vector<1x8x32xf32>
      %87 = vector.shape_cast %86 : vector<1x8x32xf32> to vector<8x32xf32>
      %88 = vector.shape_cast %85 : vector<8x32xf32> to vector<1x8x32xf32>
      tpu.vector_store %arg19[%c1_50, %c0_51, %c0_52], %88 {strides = array<i32>} : memref<4x8x32xf32, #tpu.memory_space<vmem>>, vector<1x8x32xf32>,
      %c1_53 = arith.constant 1 : index
      %c0_54 = arith.constant 0 : index
      %c0_55 = arith.constant 0 : index
      %89 = vector.load %arg17[%c1_53, %c0_54, %c0_55] : memref<4x8x1xf32, #tpu.memory_space<vmem>>, vector<1x8x1xf32>
      %90 = vector.shape_cast %89 : vector<1x8x1xf32> to vector<8x1xf32>
      %91 = vector.shape_cast %64 : vector<8x1xf32> to vector<1x8x1xf32>
      tpu.vector_store %arg17[%c1_53, %c0_54, %c0_55], %91 {strides = array<i32>} : memref<4x8x1xf32, #tpu.memory_space<vmem>>, vector<1x8x1xf32>,
      %92 = vector.extract_strided_slice %17 {offsets = [0, 64], sizes = [8, 32], strides = [1, 1]} : vector<8x128xbf16> to vector<8x32xbf16>
      %93 = vector.extract_strided_slice %13 {offsets = [0, 32], sizes = [128, 32], strides = [1, 1]} : vector<128x64xbf16> to vector<128x32xbf16>
      %94 = vector.extract_strided_slice %15 {offsets = [0, 32], sizes = [128, 32], strides = [1, 1]} : vector<128x64xbf16> to vector<128x32xbf16>
      %cst_56 = arith.constant dense<0.000000e+00> : vector<8x128xf32>
      %95 = tpu.matmul %92, %93, %cst_56 {dimension_numbers = #tpu.dot_dimension_numbers<[1], [1], [0], [0], [0, 0, 1, 0], [], []>} : vector<8x32xbf16>, vector<128x32xbf16>, vector<8x128xf32> -> vector<8x128xf32>
      %96 = arith.addf %95, %16 : vector<8x128xf32>
      %c2 = arith.constant 2 : index
      %c0_57 = arith.constant 0 : index
      %c0_58 = arith.constant 0 : index
      %97 = vector.load %arg17[%c2, %c0_57, %c0_58] : memref<4x8x1xf32, #tpu.memory_space<vmem>>, vector<1x8x1xf32>
      %98 = vector.shape_cast %97 : vector<1x8x1xf32> to vector<8x1xf32>
      %cst_59 = arith.constant dense<0xFF800000> : vector<8xf32>
      %99 = vector.multi_reduction <maximumf>, %96, %cst_59 [1] : vector<8x128xf32> to vector<8xf32>
      %100 = vector.shape_cast %99 : vector<8xf32> to vector<8x1xf32>
      %101 = arith.maximumf %98, %100 : vector<8x1xf32>
      %102 = arith.subf %98, %101 : vector<8x1xf32>
      %103 = math.exp %102 : vector<8x1xf32>
      %104 = vector.broadcast %101 : vector<8x1xf32> to vector<8x128xf32>
      %105 = arith.subf %96, %104 : vector<8x128xf32>
      %106 = math.exp %105 : vector<8x128xf32>
      %c2_60 = arith.constant 2 : index
      %c0_61 = arith.constant 0 : index
      %c0_62 = arith.constant 0 : index
      %107 = vector.load %arg18[%c2_60, %c0_61, %c0_62] : memref<4x8x1xf32, #tpu.memory_space<vmem>>, vector<1x8x1xf32>
      %108 = vector.shape_cast %107 : vector<1x8x1xf32> to vector<8x1xf32>
      %109 = arith.mulf %103, %108 : vector<8x1xf32>
      %cst_63 = arith.constant dense<0.000000e+00> : vector<8xf32>
      %110 = vector.multi_reduction <add>, %106, %cst_63 [1] : vector<8x128xf32> to vector<8xf32>
      %111 = vector.shape_cast %110 : vector<8xf32> to vector<8x1xf32>
      %112 = arith.addf %109, %111 : vector<8x1xf32>
      %c2_64 = arith.constant 2 : index
      %c0_65 = arith.constant 0 : index
      %c0_66 = arith.constant 0 : index
      %113 = vector.load %arg18[%c2_64, %c0_65, %c0_66] : memref<4x8x1xf32, #tpu.memory_space<vmem>>, vector<1x8x1xf32>
      %114 = vector.shape_cast %113 : vector<1x8x1xf32> to vector<8x1xf32>
      %115 = vector.shape_cast %112 : vector<8x1xf32> to vector<1x8x1xf32>
      tpu.vector_store %arg18[%c2_64, %c0_65, %c0_66], %115 {strides = array<i32>} : memref<4x8x1xf32, #tpu.memory_space<vmem>>, vector<1x8x1xf32>,
      %c2_67 = arith.constant 2 : index
      %c0_68 = arith.constant 0 : index
      %c0_69 = arith.constant 0 : index
      %116 = vector.load %arg19[%c2_67, %c0_68, %c0_69] : memref<4x8x32xf32, #tpu.memory_space<vmem>>, vector<1x8x32xf32>
      %117 = vector.shape_cast %116 : vector<1x8x32xf32> to vector<8x32xf32>
      %118 = vector.broadcast %103 : vector<8x1xf32> to vector<8x32xf32>
      %119 = arith.mulf %118, %117 : vector<8x32xf32>
      %120 = arith.truncf %106 : vector<8x128xf32> to vector<8x128xbf16>
      %cst_70 = arith.constant dense<0.000000e+00> : vector<8x32xf32>
      %121 = tpu.matmul %120, %94, %cst_70 {dimension_numbers = #tpu.dot_dimension_numbers<[1], [0], [0], [1], [0, 0, 1, 1], [], []>} : vector<8x128xbf16>, vector<128x32xbf16>, vector<8x32xf32> -> vector<8x32xf32>
      %122 = arith.addf %119, %121 : vector<8x32xf32>
      %c2_71 = arith.constant 2 : index
      %c0_72 = arith.constant 0 : index
      %c0_73 = arith.constant 0 : index
      %123 = vector.load %arg19[%c2_71, %c0_72, %c0_73] : memref<4x8x32xf32, #tpu.memory_space<vmem>>, vector<1x8x32xf32>
      %124 = vector.shape_cast %123 : vector<1x8x32xf32> to vector<8x32xf32>
      %125 = vector.shape_cast %122 : vector<8x32xf32> to vector<1x8x32xf32>
      tpu.vector_store %arg19[%c2_71, %c0_72, %c0_73], %125 {strides = array<i32>} : memref<4x8x32xf32, #tpu.memory_space<vmem>>, vector<1x8x32xf32>,
      %c2_74 = arith.constant 2 : index
      %c0_75 = arith.constant 0 : index
      %c0_76 = arith.constant 0 : index
      %126 = vector.load %arg17[%c2_74, %c0_75, %c0_76] : memref<4x8x1xf32, #tpu.memory_space<vmem>>, vector<1x8x1xf32>
      %127 = vector.shape_cast %126 : vector<1x8x1xf32> to vector<8x1xf32>
      %128 = vector.shape_cast %101 : vector<8x1xf32> to vector<1x8x1xf32>
      tpu.vector_store %arg17[%c2_74, %c0_75, %c0_76], %128 {strides = array<i32>} : memref<4x8x1xf32, #tpu.memory_space<vmem>>, vector<1x8x1xf32>,
      %129 = vector.extract_strided_slice %17 {offsets = [0, 96], sizes = [8, 32], strides = [1, 1]} : vector<8x128xbf16> to vector<8x32xbf16>
      %130 = vector.extract_strided_slice %13 {offsets = [0, 32], sizes = [128, 32], strides = [1, 1]} : vector<128x64xbf16> to vector<128x32xbf16>
      %131 = vector.extract_strided_slice %15 {offsets = [0, 32], sizes = [128, 32], strides = [1, 1]} : vector<128x64xbf16> to vector<128x32xbf16>
      %cst_77 = arith.constant dense<0.000000e+00> : vector<8x128xf32>
      %132 = tpu.matmul %129, %130, %cst_77 {dimension_numbers = #tpu.dot_dimension_numbers<[1], [1], [0], [0], [0, 0, 1, 0], [], []>} : vector<8x32xbf16>, vector<128x32xbf16>, vector<8x128xf32> -> vector<8x128xf32>
      %133 = arith.addf %132, %16 : vector<8x128xf32>
      %c3 = arith.constant 3 : index
      %c0_78 = arith.constant 0 : index
      %c0_79 = arith.constant 0 : index
      %134 = vector.load %arg17[%c3, %c0_78, %c0_79] : memref<4x8x1xf32, #tpu.memory_space<vmem>>, vector<1x8x1xf32>
      %135 = vector.shape_cast %134 : vector<1x8x1xf32> to vector<8x1xf32>
      %cst_80 = arith.constant dense<0xFF800000> : vector<8xf32>
      %136 = vector.multi_reduction <maximumf>, %133, %cst_80 [1] : vector<8x128xf32> to vector<8xf32>
      %137 = vector.shape_cast %136 : vector<8xf32> to vector<8x1xf32>
      %138 = arith.maximumf %135, %137 : vector<8x1xf32>
      %139 = arith.subf %135, %138 : vector<8x1xf32>
      %140 = math.exp %139 : vector<8x1xf32>
      %141 = vector.broadcast %138 : vector<8x1xf32> to vector<8x128xf32>
      %142 = arith.subf %133, %141 : vector<8x128xf32>
      %143 = math.exp %142 : vector<8x128xf32>
      %c3_81 = arith.constant 3 : index
      %c0_82 = arith.constant 0 : index
      %c0_83 = arith.constant 0 : index
      %144 = vector.load %arg18[%c3_81, %c0_82, %c0_83] : memref<4x8x1xf32, #tpu.memory_space<vmem>>, vector<1x8x1xf32>
      %145 = vector.shape_cast %144 : vector<1x8x1xf32> to vector<8x1xf32>
      %146 = arith.mulf %140, %145 : vector<8x1xf32>
      %cst_84 = arith.constant dense<0.000000e+00> : vector<8xf32>
      %147 = vector.multi_reduction <add>, %143, %cst_84 [1] : vector<8x128xf32> to vector<8xf32>
      %148 = vector.shape_cast %147 : vector<8xf32> to vector<8x1xf32>
      %149 = arith.addf %146, %148 : vector<8x1xf32>
      %c3_85 = arith.constant 3 : index
      %c0_86 = arith.constant 0 : index
      %c0_87 = arith.constant 0 : index
      %150 = vector.load %arg18[%c3_85, %c0_86, %c0_87] : memref<4x8x1xf32, #tpu.memory_space<vmem>>, vector<1x8x1xf32>
      %151 = vector.shape_cast %150 : vector<1x8x1xf32> to vector<8x1xf32>
      %152 = vector.shape_cast %149 : vector<8x1xf32> to vector<1x8x1xf32>
      tpu.vector_store %arg18[%c3_85, %c0_86, %c0_87], %152 {strides = array<i32>} : memref<4x8x1xf32, #tpu.memory_space<vmem>>, vector<1x8x1xf32>,
      %c3_88 = arith.constant 3 : index
      %c0_89 = arith.constant 0 : index
      %c0_90 = arith.constant 0 : index
      %153 = vector.load %arg19[%c3_88, %c0_89, %c0_90] : memref<4x8x32xf32, #tpu.memory_space<vmem>>, vector<1x8x32xf32>
      %154 = vector.shape_cast %153 : vector<1x8x32xf32> to vector<8x32xf32>
      %155 = vector.broadcast %140 : vector<8x1xf32> to vector<8x32xf32>
      %156 = arith.mulf %155, %154 : vector<8x32xf32>
      %157 = arith.truncf %143 : vector<8x128xf32> to vector<8x128xbf16>
      %cst_91 = arith.constant dense<0.000000e+00> : vector<8x32xf32>
      %158 = tpu.matmul %157, %131, %cst_91 {dimension_numbers = #tpu.dot_dimension_numbers<[1], [0], [0], [1], [0, 0, 1, 1], [], []>} : vector<8x128xbf16>, vector<128x32xbf16>, vector<8x32xf32> -> vector<8x32xf32>
      %159 = arith.addf %156, %158 : vector<8x32xf32>
      %c3_92 = arith.constant 3 : index
      %c0_93 = arith.constant 0 : index
      %c0_94 = arith.constant 0 : index
      %160 = vector.load %arg19[%c3_92, %c0_93, %c0_94] : memref<4x8x32xf32, #tpu.memory_space<vmem>>, vector<1x8x32xf32>
      %161 = vector.shape_cast %160 : vector<1x8x32xf32> to vector<8x32xf32>
      %162 = vector.shape_cast %159 : vector<8x32xf32> to vector<1x8x32xf32>
      tpu.vector_store %arg19[%c3_92, %c0_93, %c0_94], %162 {strides = array<i32>} : memref<4x8x32xf32, #tpu.memory_space<vmem>>, vector<1x8x32xf32>,
      %c3_95 = arith.constant 3 : index
      %c0_96 = arith.constant 0 : index
      %c0_97 = arith.constant 0 : index
      %163 = vector.load %arg17[%c3_95, %c0_96, %c0_97] : memref<4x8x1xf32, #tpu.memory_space<vmem>>, vector<1x8x1xf32>
      %164 = vector.shape_cast %163 : vector<1x8x1xf32> to vector<8x1xf32>
      %165 = vector.shape_cast %138 : vector<8x1xf32> to vector<1x8x1xf32>
      tpu.vector_store %arg17[%c3_95, %c0_96, %c0_97], %165 {strides = array<i32>} : memref<4x8x1xf32, #tpu.memory_space<vmem>>, vector<1x8x1xf32>,
    } else {
    }
    %c1_i32 = arith.constant 1 : i32
    %6 = arith.cmpi eq, %arg1, %c1_i32 : i32
    %7 = arith.extui %6 : i1 to i32
    %c0_i32_2 = arith.constant 0 : i32
    %8 = arith.cmpi ne, %7, %c0_i32_2 : i32
    scf.if %8 {
      %c0 = arith.constant 0 : index
      %c0_5 = arith.constant 0 : index
      %c0_6 = arith.constant 0 : index
      %12 = vector.load %arg2[%c0, %c0_5, %c0_6] : memref<1x8x128xf32, #tpu.memory_space<vmem>>, vector<1x8x128xf32>
      %13 = vector.shape_cast %12 : vector<1x8x128xf32> to vector<8x128xf32>
      %c0_7 = arith.constant 0 : index
      %c0_8 = arith.constant 0 : index
      %14 = vector.load %arg9[%c0_7, %c0_8] : memref<128x128xbf16, #tpu.memory_space<vmem>>, vector<128x128xbf16>
      %cst = arith.constant 0.000000e+00 : f32
      %15 = vector.broadcast %cst : f32 to vector<8x128xf32>
      %c0_9 = arith.constant 0 : index
      %c0_10 = arith.constant 0 : index
      %c0_11 = arith.constant 0 : index
      %16 = vector.load %arg19[%c0_9, %c0_10, %c0_11] : memref<4x8x32xf32, #tpu.memory_space<vmem>>, vector<1x8x32xf32>
      %17 = vector.shape_cast %16 : vector<1x8x32xf32> to vector<8x32xf32>
      %c0_12 = arith.constant 0 : index
      %c0_13 = arith.constant 0 : index
      %c0_14 = arith.constant 0 : index
      %18 = vector.load %arg18[%c0_12, %c0_13, %c0_14] : memref<4x8x1xf32, #tpu.memory_space<vmem>>, vector<1x8x1xf32>
      %19 = vector.shape_cast %18 : vector<1x8x1xf32> to vector<8x1xf32>
      %20 = tpu.reciprocal %19 {approx = true} : vector<8x1xf32> -> vector<8x1xf32>
      %21 = vector.broadcast %20 : vector<8x1xf32> to vector<8x32xf32>
      %22 = arith.mulf %17, %21 : vector<8x32xf32>
      %23 = arith.truncf %22 : vector<8x32xf32> to vector<8x32xbf16>
      %24 = vector.extract_strided_slice %14 {offsets = [0, 0], sizes = [128, 32], strides = [1, 1]} : vector<128x128xbf16> to vector<128x32xbf16>
      %cst_15 = arith.constant dense<0.000000e+00> : vector<8x128xf32>
      %25 = tpu.matmul %23, %24, %cst_15 {dimension_numbers = #tpu.dot_dimension_numbers<[1], [1], [0], [0], [0, 0, 1, 0], [], []>} : vector<8x32xbf16>, vector<128x32xbf16>, vector<8x128xf32> -> vector<8x128xf32>
      %26 = arith.addf %15, %25 : vector<8x128xf32>
      %c1 = arith.constant 1 : index
      %c0_16 = arith.constant 0 : index
      %c0_17 = arith.constant 0 : index
      %27 = vector.load %arg19[%c1, %c0_16, %c0_17] : memref<4x8x32xf32, #tpu.memory_space<vmem>>, vector<1x8x32xf32>
      %28 = vector.shape_cast %27 : vector<1x8x32xf32> to vector<8x32xf32>
      %c1_18 = arith.constant 1 : index
      %c0_19 = arith.constant 0 : index
      %c0_20 = arith.constant 0 : index
      %29 = vector.load %arg18[%c1_18, %c0_19, %c0_20] : memref<4x8x1xf32, #tpu.memory_space<vmem>>, vector<1x8x1xf32>
      %30 = vector.shape_cast %29 : vector<1x8x1xf32> to vector<8x1xf32>
      %31 = tpu.reciprocal %30 {approx = true} : vector<8x1xf32> -> vector<8x1xf32>
      %32 = vector.broadcast %31 : vector<8x1xf32> to vector<8x32xf32>
      %33 = arith.mulf %28, %32 : vector<8x32xf32>
      %34 = arith.truncf %33 : vector<8x32xf32> to vector<8x32xbf16>
      %35 = vector.extract_strided_slice %14 {offsets = [0, 32], sizes = [128, 32], strides = [1, 1]} : vector<128x128xbf16> to vector<128x32xbf16>
      %cst_21 = arith.constant dense<0.000000e+00> : vector<8x128xf32>
      %36 = tpu.matmul %34, %35, %cst_21 {dimension_numbers = #tpu.dot_dimension_numbers<[1], [1], [0], [0], [0, 0, 1, 0], [], []>} : vector<8x32xbf16>, vector<128x32xbf16>, vector<8x128xf32> -> vector<8x128xf32>
      %37 = arith.addf %26, %36 : vector<8x128xf32>
      %c2 = arith.constant 2 : index
      %c0_22 = arith.constant 0 : index
      %c0_23 = arith.constant 0 : index
      %38 = vector.load %arg19[%c2, %c0_22, %c0_23] : memref<4x8x32xf32, #tpu.memory_space<vmem>>, vector<1x8x32xf32>
      %39 = vector.shape_cast %38 : vector<1x8x32xf32> to vector<8x32xf32>
      %c2_24 = arith.constant 2 : index
      %c0_25 = arith.constant 0 : index
      %c0_26 = arith.constant 0 : index
      %40 = vector.load %arg18[%c2_24, %c0_25, %c0_26] : memref<4x8x1xf32, #tpu.memory_space<vmem>>, vector<1x8x1xf32>
      %41 = vector.shape_cast %40 : vector<1x8x1xf32> to vector<8x1xf32>
      %42 = tpu.reciprocal %41 {approx = true} : vector<8x1xf32> -> vector<8x1xf32>
      %43 = vector.broadcast %42 : vector<8x1xf32> to vector<8x32xf32>
      %44 = arith.mulf %39, %43 : vector<8x32xf32>
      %45 = arith.truncf %44 : vector<8x32xf32> to vector<8x32xbf16>
      %46 = vector.extract_strided_slice %14 {offsets = [0, 64], sizes = [128, 32], strides = [1, 1]} : vector<128x128xbf16> to vector<128x32xbf16>
      %cst_27 = arith.constant dense<0.000000e+00> : vector<8x128xf32>
      %47 = tpu.matmul %45, %46, %cst_27 {dimension_numbers = #tpu.dot_dimension_numbers<[1], [1], [0], [0], [0, 0, 1, 0], [], []>} : vector<8x32xbf16>, vector<128x32xbf16>, vector<8x128xf32> -> vector<8x128xf32>
      %48 = arith.addf %37, %47 : vector<8x128xf32>
      %c3 = arith.constant 3 : index
      %c0_28 = arith.constant 0 : index
      %c0_29 = arith.constant 0 : index
      %49 = vector.load %arg19[%c3, %c0_28, %c0_29] : memref<4x8x32xf32, #tpu.memory_space<vmem>>, vector<1x8x32xf32>
      %50 = vector.shape_cast %49 : vector<1x8x32xf32> to vector<8x32xf32>
      %c3_30 = arith.constant 3 : index
      %c0_31 = arith.constant 0 : index
      %c0_32 = arith.constant 0 : index
      %51 = vector.load %arg18[%c3_30, %c0_31, %c0_32] : memref<4x8x1xf32, #tpu.memory_space<vmem>>, vector<1x8x1xf32>
      %52 = vector.shape_cast %51 : vector<1x8x1xf32> to vector<8x1xf32>
      %53 = tpu.reciprocal %52 {approx = true} : vector<8x1xf32> -> vector<8x1xf32>
      %54 = vector.broadcast %53 : vector<8x1xf32> to vector<8x32xf32>
      %55 = arith.mulf %50, %54 : vector<8x32xf32>
      %56 = arith.truncf %55 : vector<8x32xf32> to vector<8x32xbf16>
      %57 = vector.extract_strided_slice %14 {offsets = [0, 96], sizes = [128, 32], strides = [1, 1]} : vector<128x128xbf16> to vector<128x32xbf16>
      %cst_33 = arith.constant dense<0.000000e+00> : vector<8x128xf32>
      %58 = tpu.matmul %56, %57, %cst_33 {dimension_numbers = #tpu.dot_dimension_numbers<[1], [1], [0], [0], [0, 0, 1, 0], [], []>} : vector<8x32xbf16>, vector<128x32xbf16>, vector<8x128xf32> -> vector<8x128xf32>
      %59 = arith.addf %48, %58 : vector<8x128xf32>
      %60 = arith.addf %59, %13 : vector<8x128xf32>
      %c0_34 = arith.constant 0 : index
      %c0_35 = arith.constant 0 : index
      %c0_36 = arith.constant 0 : index
      %61 = vector.load %arg14[%c0_34, %c0_35, %c0_36] : memref<1x8x128xf32, #tpu.memory_space<vmem>>, vector<1x8x128xf32>
      %62 = vector.shape_cast %61 : vector<1x8x128xf32> to vector<8x128xf32>
      %63 = vector.shape_cast %60 : vector<8x128xf32> to vector<1x8x128xf32>
      tpu.vector_store %arg14[%c0_34, %c0_35, %c0_36], %63 {strides = array<i32>} : memref<1x8x128xf32, #tpu.memory_space<vmem>>, vector<1x8x128xf32>,
      %64 = arith.mulf %60, %60 : vector<8x128xf32>
      %cst_37 = arith.constant dense<0.000000e+00> : vector<8xf32>
      %65 = vector.multi_reduction <add>, %64, %cst_37 [1] : vector<8x128xf32> to vector<8xf32>
      %66 = vector.shape_cast %65 : vector<8xf32> to vector<8x1xf32>
      %cst_38 = arith.constant 1.280000e+02 : f32
      %67 = vector.broadcast %cst_38 : f32 to vector<8x1xf32>
      %68 = arith.divf %66, %67 : vector<8x1xf32>
      %cst_39 = arith.constant 9.99999997E-7 : f32
      %69 = vector.broadcast %cst_39 : f32 to vector<8x1xf32>
      %70 = arith.addf %68, %69 : vector<8x1xf32>
      %71 = math.rsqrt %70 : vector<8x1xf32>
      %72 = vector.broadcast %71 : vector<8x1xf32> to vector<8x128xf32>
      %73 = arith.mulf %60, %72 : vector<8x128xf32>
      %c0_40 = arith.constant 0 : index
      %c0_41 = arith.constant 0 : index
      %74 = vector.load %arg13[%c0_40, %c0_41] : memref<1x128xf32, #tpu.memory_space<vmem>>, vector<1x128xf32>
      %cst_42 = arith.constant 1.000000e+00 : f32
      %75 = vector.broadcast %cst_42 : f32 to vector<1x128xf32>
      %76 = arith.addf %75, %74 : vector<1x128xf32>
      %77 = vector.broadcast %76 : vector<1x128xf32> to vector<8x128xf32>
      %78 = arith.mulf %73, %77 : vector<8x128xf32>
      %79 = arith.truncf %78 : vector<8x128xf32> to vector<8x128xbf16>
      %c0_43 = arith.constant 0 : index
      %c0_44 = arith.constant 0 : index
      %80 = vector.load %arg16[%c0_43, %c0_44] : memref<8x128xbf16, #tpu.memory_space<vmem>>, vector<8x128xbf16>
      tpu.vector_store %arg16[%c0_43, %c0_44], %79 {strides = array<i32>} : memref<8x128xbf16, #tpu.memory_space<vmem>>, vector<8x128xbf16>,
    } else {
    }
    %c2_i32_3 = arith.constant 2 : i32
    %9 = arith.cmpi sge, %arg1, %c2_i32_3 : i32
    %10 = arith.extui %9 : i1 to i32
    %c0_i32_4 = arith.constant 0 : i32
    %11 = arith.cmpi ne, %10, %c0_i32_4 : i32
    scf.if %11 {
      %c0 = arith.constant 0 : index
      %c0_5 = arith.constant 0 : index
      %12 = vector.load %arg16[%c0, %c0_5] : memref<8x128xbf16, #tpu.memory_space<vmem>>, vector<8x128xbf16>
      %c0_6 = arith.constant 0 : index
      %c0_7 = arith.constant 0 : index
      %c0_8 = arith.constant 0 : index
      %13 = vector.load %arg10[%c0_6, %c0_7, %c0_8] : memref<2x128x128xbf16, #tpu.memory_space<vmem>>, vector<1x128x128xbf16>
      %14 = vector.shape_cast %13 : vector<1x128x128xbf16> to vector<128x128xbf16>
      %cst = arith.constant dense<0.000000e+00> : vector<8x128xf32>
      %15 = tpu.matmul %12, %14, %cst {dimension_numbers = #tpu.dot_dimension_numbers<[1], [1], [0], [0], [0, 0, 1, 0], [], []>} : vector<8x128xbf16>, vector<128x128xbf16>, vector<8x128xf32> -> vector<8x128xf32>
      %c1 = arith.constant 1 : index
      %c0_9 = arith.constant 0 : index
      %c0_10 = arith.constant 0 : index
      %16 = vector.load %arg10[%c1, %c0_9, %c0_10] : memref<2x128x128xbf16, #tpu.memory_space<vmem>>, vector<1x128x128xbf16>
      %17 = vector.shape_cast %16 : vector<1x128x128xbf16> to vector<128x128xbf16>
      %cst_11 = arith.constant dense<0.000000e+00> : vector<8x128xf32>
      %18 = tpu.matmul %12, %17, %cst_11 {dimension_numbers = #tpu.dot_dimension_numbers<[1], [1], [0], [0], [0, 0, 1, 0], [], []>} : vector<8x128xbf16>, vector<128x128xbf16>, vector<8x128xf32> -> vector<8x128xf32>
      %cst_12 = arith.constant 5.000000e-01 : f32
      %19 = vector.broadcast %cst_12 : f32 to vector<8x128xf32>
      %20 = arith.mulf %19, %15 : vector<8x128xf32>
      %cst_13 = arith.constant 0.707106769 : f32
      %21 = vector.broadcast %cst_13 : f32 to vector<8x128xf32>
      %22 = arith.mulf %15, %21 : vector<8x128xf32>
      %23 = math.erf %22 : vector<8x128xf32>
      %cst_14 = arith.constant 1.000000e+00 : f32
      %24 = vector.broadcast %cst_14 : f32 to vector<8x128xf32>
      %25 = arith.addf %24, %23 : vector<8x128xf32>
      %26 = arith.mulf %20, %25 : vector<8x128xf32>
      %27 = arith.mulf %26, %18 : vector<8x128xf32>
      %28 = arith.truncf %27 : vector<8x128xf32> to vector<8x128xbf16>
      %c0_15 = arith.constant 0 : index
      %c0_16 = arith.constant 0 : index
      %29 = vector.load %arg11[%c0_15, %c0_16] : memref<128x128xbf16, #tpu.memory_space<vmem>>, vector<128x128xbf16>
      %cst_17 = arith.constant dense<0.000000e+00> : vector<8x128xf32>
      %30 = tpu.matmul %28, %29, %cst_17 {dimension_numbers = #tpu.dot_dimension_numbers<[1], [1], [0], [0], [0, 0, 1, 0], [], []>} : vector<8x128xbf16>, vector<128x128xbf16>, vector<8x128xf32> -> vector<8x128xf32>
      %c0_18 = arith.constant 0 : index
      %c0_19 = arith.constant 0 : index
      %c0_20 = arith.constant 0 : index
      %31 = vector.load %arg14[%c0_18, %c0_19, %c0_20] : memref<1x8x128xf32, #tpu.memory_space<vmem>>, vector<1x8x128xf32>
      %32 = vector.shape_cast %31 : vector<1x8x128xf32> to vector<8x128xf32>
      %33 = arith.addf %32, %30 : vector<8x128xf32>
      %c0_21 = arith.constant 0 : index
      %c0_22 = arith.constant 0 : index
      %c0_23 = arith.constant 0 : index
      %34 = vector.load %arg14[%c0_21, %c0_22, %c0_23] : memref<1x8x128xf32, #tpu.memory_space<vmem>>, vector<1x8x128xf32>
      %35 = vector.shape_cast %34 : vector<1x8x128xf32> to vector<8x128xf32>
      %36 = vector.shape_cast %33 : vector<8x128xf32> to vector<1x8x128xf32>
      tpu.vector_store %arg14[%c0_21, %c0_22, %c0_23], %36 {strides = array<i32>} : memref<1x8x128xf32, #tpu.memory_space<vmem>>, vector<1x8x128xf32>,
    } else {
    }
    return
  }
  func.func @transform_0(%arg0: i32, %arg1: i32) -> (i32, i32, i32) {
    %c0_i32 = arith.constant 0 : i32
    %c0_i32_0 = arith.constant 0 : i32
    %c0_i32_1 = arith.constant 0 : i32
    return %arg0, %c0_i32, %c0_i32_0 : i32, i32, i32
  }
  func.func @transform_1(%arg0: i32, %arg1: i32) -> (i32, i32) {
    %c0_i32 = arith.constant 0 : i32
    %c0_i32_0 = arith.constant 0 : i32
    %c0_i32_1 = arith.constant 0 : i32
    return %c0_i32, %c0_i32_0 : i32, i32
  }
  func.func @transform_2(%arg0: i32, %arg1: i32) -> (i32, i32) {
    %c0_i32 = arith.constant 0 : i32
    %c0_i32_0 = arith.constant 0 : i32
    %c0_i32_1 = arith.constant 0 : i32
    return %c0_i32, %c0_i32_0 : i32, i32
  }
  func.func @transform_3(%arg0: i32, %arg1: i32) -> (i32, i32, i32) {
    %c1_i32 = arith.constant 1 : i32
    %0 = arith.minsi %arg1, %c1_i32 : i32
    %c0_i32 = arith.constant 0 : i32
    %c0_i32_0 = arith.constant 0 : i32
    return %arg0, %0, %c0_i32 : i32, i32, i32
  }
  func.func @transform_4(%arg0: i32, %arg1: i32) -> (i32, i32, i32) {
    %c1_i32 = arith.constant 1 : i32
    %0 = arith.minsi %arg1, %c1_i32 : i32
    %c0_i32 = arith.constant 0 : i32
    %c0_i32_0 = arith.constant 0 : i32
    return %arg0, %0, %c0_i32 : i32, i32, i32
  }
  func.func @transform_5(%arg0: i32, %arg1: i32) -> (i32, i32) {
    %c1_i32 = arith.constant 1 : i32
    %0 = arith.minsi %arg1, %c1_i32 : i32
    %c0_i32 = arith.constant 0 : i32
    %c0_i32_0 = arith.constant 0 : i32
    return %c0_i32, %0 : i32, i32
  }
  func.func @transform_6(%arg0: i32, %arg1: i32) -> (i32, i32) {
    %c0_i32 = arith.constant 0 : i32
    %c0_i32_0 = arith.constant 0 : i32
    %c0_i32_1 = arith.constant 0 : i32
    return %c0_i32, %c0_i32_0 : i32, i32
  }
  func.func @transform_7(%arg0: i32, %arg1: i32) -> (i32, i32) {
    %c0_i32 = arith.constant 0 : i32
    %c0_i32_0 = arith.constant 0 : i32
    %c0_i32_1 = arith.constant 0 : i32
    return %c0_i32, %c0_i32_0 : i32, i32
  }
  func.func @transform_8(%arg0: i32, %arg1: i32) -> (i32, i32, i32) {
    %c2_i32 = arith.constant 2 : i32
    %0 = arith.subi %arg1, %c2_i32 : i32
    %c0_i32 = arith.constant 0 : i32
    %1 = arith.maxsi %0, %c0_i32 : i32
    %c0_i32_0 = arith.constant 0 : i32
    %c0_i32_1 = arith.constant 0 : i32
    %c0_i32_2 = arith.constant 0 : i32
    return %c0_i32_0, %1, %c0_i32_1 : i32, i32, i32
  }
  func.func @transform_9(%arg0: i32, %arg1: i32) -> (i32, i32) {
    %c2_i32 = arith.constant 2 : i32
    %0 = arith.subi %arg1, %c2_i32 : i32
    %c0_i32 = arith.constant 0 : i32
    %1 = arith.maxsi %0, %c0_i32 : i32
    %c0_i32_0 = arith.constant 0 : i32
    %c0_i32_1 = arith.constant 0 : i32
    return %c0_i32_0, %1 : i32, i32
  }
  func.func @transform_10(%arg0: i32, %arg1: i32) -> (i32, i32) {
    %c0_i32 = arith.constant 0 : i32
    %c0_i32_0 = arith.constant 0 : i32
    %c0_i32_1 = arith.constant 0 : i32
    return %c0_i32, %c0_i32_0 : i32, i32
  }
  func.func @transform_11(%arg0: i32, %arg1: i32) -> (i32, i32) {
    %c0_i32 = arith.constant 0 : i32
    %c0_i32_0 = arith.constant 0 : i32
    %c0_i32_1 = arith.constant 0 : i32
    return %c0_i32, %c0_i32_0 : i32, i32
  }
  func.func @transform_12(%arg0: i32, %arg1: i32) -> (i32, i32, i32) {
    %c0_i32 = arith.constant 0 : i32
    %c0_i32_0 = arith.constant 0 : i32
    %c0_i32_1 = arith.constant 0 : i32
    return %arg0, %c0_i32, %c0_i32_0 : i32, i32, i32
  }
}

module attributes {stable_mosaic.version = 11 : i64} {
  func.func @_gemma_block_kernel(%arg0: i32, %arg1: i32, %arg2: memref<1x8x128xf32, #tpu.memory_space<vmem>>, %arg3: memref<8x32xf32, #tpu.memory_space<vmem>>, %arg4: memref<8x32xf32, #tpu.memory_space<vmem>>, %arg5: memref<1x128x64xbf16, #tpu.memory_space<vmem>>, %arg6: memref<1x128x64xbf16, #tpu.memory_space<vmem>>, %arg7: memref<8x128xf32, #tpu.memory_space<vmem>>, %arg8: memref<256x128xbf16, #tpu.memory_space<vmem>>, %arg9: memref<128x128xbf16, #tpu.memory_space<vmem>>, %arg10: memref<2x128x128xbf16, #tpu.memory_space<vmem>>, %arg11: memref<128x128xbf16, #tpu.memory_space<vmem>>, %arg12: memref<1x128xf32, #tpu.memory_space<vmem>>, %arg13: memref<1x128xf32, #tpu.memory_space<vmem>>, %arg14: memref<1x8x128xf32, #tpu.memory_space<vmem>>, %arg15: memref<8x128xbf16, #tpu.memory_space<vmem>>, %arg16: memref<8x128xbf16, #tpu.memory_space<vmem>>, %arg17: memref<4x8x1xf32, #tpu.memory_space<vmem>>, %arg18: memref<4x8x1xf32, #tpu.memory_space<vmem>>, %arg19: memref<4x8x32xf32, #tpu.memory_space<vmem>>) attributes {dimension_semantics = [#tpu.dimension_semantics<parallel>, #tpu.dimension_semantics<arbitrary>], iteration_bounds = array<i64: 2, 4>, scalar_prefetch = 0 : i64, scratch_operands = 5 : i64, tpu.core_type = #tpu.core_type<tc>, window_params = [{transform_indices = @transform_0, window_bounds = array<i64: 1, 8, 128>}, {pipeline_mode = #tpu.pipeline_mode<synchronous>, transform_indices = @transform_1, window_bounds = array<i64: 8, 32>}, {pipeline_mode = #tpu.pipeline_mode<synchronous>, transform_indices = @transform_2, window_bounds = array<i64: 8, 32>}, {transform_indices = @transform_3, window_bounds = array<i64: 1, 128, 64>}, {transform_indices = @transform_4, window_bounds = array<i64: 1, 128, 64>}, {transform_indices = @transform_5, window_bounds = array<i64: 8, 128>}, {pipeline_mode = #tpu.pipeline_mode<synchronous>, transform_indices = @transform_6, window_bounds = array<i64: 256, 128>}, {pipeline_mode = #tpu.pipeline_mode<synchronous>, transform_indices = @transform_7, window_bounds = array<i64: 128, 128>}, {transform_indices = @transform_8, window_bounds = array<i64: 2, 128, 128>}, {transform_indices = @transform_9, window_bounds = array<i64: 128, 128>}, {pipeline_mode = #tpu.pipeline_mode<synchronous>, transform_indices = @transform_10, window_bounds = array<i64: 1, 128>}, {pipeline_mode = #tpu.pipeline_mode<synchronous>, transform_indices = @transform_11, window_bounds = array<i64: 1, 128>}, {transform_indices = @transform_12, window_bounds = array<i64: 1, 8, 128>}]} {
    %c0_i32 = arith.constant 0 : i32
    %0 = arith.cmpi eq, %arg1, %c0_i32 : i32
    %1 = arith.extui %0 : i1 to i32
    %c0_i32_0 = arith.constant 0 : i32
    %2 = arith.cmpi ne, %1, %c0_i32_0 : i32
    scf.if %2 {
      %c0 = arith.constant 0 : index
      %c0_5 = arith.constant 0 : index
      %c0_6 = arith.constant 0 : index
      %12 = vector.load %arg2[%c0, %c0_5, %c0_6] : memref<1x8x128xf32, #tpu.memory_space<vmem>>, vector<1x8x128xf32>
      %13 = vector.shape_cast %12 : vector<1x8x128xf32> to vector<8x128xf32>
      %14 = arith.mulf %13, %13 : vector<8x128xf32>
      %cst = arith.constant dense<0.000000e+00> : vector<8xf32>
      %15 = vector.multi_reduction <add>, %14, %cst [1] : vector<8x128xf32> to vector<8xf32>
      %16 = vector.shape_cast %15 : vector<8xf32> to vector<8x1xf32>
      %cst_7 = arith.constant 1.280000e+02 : f32
      %17 = vector.broadcast %cst_7 : f32 to vector<8x1xf32>
      %18 = arith.divf %16, %17 : vector<8x1xf32>
      %cst_8 = arith.constant 9.99999997E-7 : f32
      %19 = vector.broadcast %cst_8 : f32 to vector<8x1xf32>
      %20 = arith.addf %18, %19 : vector<8x1xf32>
      %21 = math.rsqrt %20 : vector<8x1xf32>
      %22 = vector.broadcast %21 : vector<8x1xf32> to vector<8x128xf32>
      %23 = arith.mulf %13, %22 : vector<8x128xf32>
      %c0_9 = arith.constant 0 : index
      %c0_10 = arith.constant 0 : index
      %24 = vector.load %arg12[%c0_9, %c0_10] : memref<1x128xf32, #tpu.memory_space<vmem>>, vector<1x128xf32>
      %cst_11 = arith.constant 1.000000e+00 : f32
      %25 = vector.broadcast %cst_11 : f32 to vector<1x128xf32>
      %26 = arith.addf %25, %24 : vector<1x128xf32>
      %27 = vector.broadcast %26 : vector<1x128xf32> to vector<8x128xf32>
      %28 = arith.mulf %23, %27 : vector<8x128xf32>
      %29 = arith.truncf %28 : vector<8x128xf32> to vector<8x128xbf16>
      %c0_12 = arith.constant 0 : index
      %c0_13 = arith.constant 0 : index
      %30 = vector.load %arg8[%c0_12, %c0_13] : memref<256x128xbf16, #tpu.memory_space<vmem>>, vector<256x128xbf16>
      %cst_14 = arith.constant dense<0.000000e+00> : vector<8x256xf32>
      %31 = tpu.matmul %29, %30, %cst_14 {dimension_numbers = #tpu.dot_dimension_numbers<[1], [1], [0], [0], [0, 0, 1, 0], [], []>} : vector<8x128xbf16>, vector<256x128xbf16>, vector<8x256xf32> -> vector<8x256xf32>
      %c0_15 = arith.constant 0 : index
      %c0_16 = arith.constant 0 : index
      %32 = vector.load %arg3[%c0_15, %c0_16] : memref<8x32xf32, #tpu.memory_space<vmem>>, vector<8x32xf32>
      %33 = tpu.concatenate %32, %32, %32, %32 in 1 : vector<8x32xf32>, vector<8x32xf32>, vector<8x32xf32>, vector<8x32xf32> -> vector<8x128xf32>
      %c0_17 = arith.constant 0 : index
      %c0_18 = arith.constant 0 : index
      %34 = vector.load %arg4[%c0_17, %c0_18] : memref<8x32xf32, #tpu.memory_space<vmem>>, vector<8x32xf32>
      %35 = tpu.concatenate %34, %34, %34, %34 in 1 : vector<8x32xf32>, vector<8x32xf32>, vector<8x32xf32>, vector<8x32xf32> -> vector<8x128xf32>
      %36 = vector.extract_strided_slice %31 {offsets = [0, 0], sizes = [8, 128], strides = [1, 1]} : vector<8x256xf32> to vector<8x128xf32>
      %37 = arith.mulf %36, %33 : vector<8x128xf32>
      %38 = vector.extract_strided_slice %31 {offsets = [0, 128], sizes = [8, 128], strides = [1, 1]} : vector<8x256xf32> to vector<8x128xf32>
      %39 = arith.mulf %38, %35 : vector<8x128xf32>
      %40 = arith.addf %37, %39 : vector<8x128xf32>
      %41 = arith.truncf %40 : vector<8x128xf32> to vector<8x128xbf16>
      %c0_19 = arith.constant 0 : index
      %c0_20 = arith.constant 0 : index
      %42 = vector.load %arg15[%c0_19, %c0_20] : memref<8x128xbf16, #tpu.memory_space<vmem>>, vector<8x128xbf16>
      tpu.vector_store %arg15[%c0_19, %c0_20], %41 {strides = array<i32>} : memref<8x128xbf16, #tpu.memory_space<vmem>>, vector<8x128xbf16>,
      %cst_21 = arith.constant 0xFF800000 : f32
      %43 = vector.broadcast %cst_21 : f32 to vector<4x8x1xf32>
      %c0_22 = arith.constant 0 : index
      %c0_23 = arith.constant 0 : index
      %c0_24 = arith.constant 0 : index
      %44 = vector.load %arg17[%c0_22, %c0_23, %c0_24] : memref<4x8x1xf32, #tpu.memory_space<vmem>>, vector<4x8x1xf32>
      tpu.vector_store %arg17[%c0_22, %c0_23, %c0_24], %43 {strides = array<i32>} : memref<4x8x1xf32, #tpu.memory_space<vmem>>, vector<4x8x1xf32>,
      %cst_25 = arith.constant 0.000000e+00 : f32
      %45 = vector.broadcast %cst_25 : f32 to vector<4x8x1xf32>
      %c0_26 = arith.constant 0 : index
      %c0_27 = arith.constant 0 : index
      %c0_28 = arith.constant 0 : index
      %46 = vector.load %arg18[%c0_26, %c0_27, %c0_28] : memref<4x8x1xf32, #tpu.memory_space<vmem>>, vector<4x8x1xf32>
      tpu.vector_store %arg18[%c0_26, %c0_27, %c0_28], %45 {strides = array<i32>} : memref<4x8x1xf32, #tpu.memory_space<vmem>>, vector<4x8x1xf32>,
      %cst_29 = arith.constant 0.000000e+00 : f32
      %47 = vector.broadcast %cst_29 : f32 to vector<4x8x32xf32>
      %c0_30 = arith.constant 0 : index
      %c0_31 = arith.constant 0 : index
      %c0_32 = arith.constant 0 : index
      %48 = vector.load %arg19[%c0_30, %c0_31, %c0_32] : memref<4x8x32xf32, #tpu.memory_space<vmem>>, vector<4x8x32xf32>
      tpu.vector_store %arg19[%c0_30, %c0_31, %c0_32], %47 {strides = array<i32>} : memref<4x8x32xf32, #tpu.memory_space<vmem>>, vector<4x8x32xf32>,
    } else {
    }
    %c2_i32 = arith.constant 2 : i32
    %3 = arith.cmpi slt, %arg1, %c2_i32 : i32
    %4 = arith.extui %3 : i1 to i32
    %c0_i32_1 = arith.constant 0 : i32
    %5 = arith.cmpi ne, %4, %c0_i32_1 : i32
    scf.if %5 {
      %c0 = arith.constant 0 : index
      %c0_5 = arith.constant 0 : index
      %c0_6 = arith.constant 0 : index
      %12 = vector.load %arg5[%c0, %c0_5, %c0_6] : memref<1x128x64xbf16, #tpu.memory_space<vmem>>, vector<1x128x64xbf16>
      %13 = vector.shape_cast %12 : vector<1x128x64xbf16> to vector<128x64xbf16>
      %c0_7 = arith.constant 0 : index
      %c0_8 = arith.constant 0 : index
      %c0_9 = arith.constant 0 : index
      %14 = vector.load %arg6[%c0_7, %c0_8, %c0_9] : memref<1x128x64xbf16, #tpu.memory_space<vmem>>, vector<1x128x64xbf16>
      %15 = vector.shape_cast %14 : vector<1x128x64xbf16> to vector<128x64xbf16>
      %c0_10 = arith.constant 0 : index
      %c0_11 = arith.constant 0 : index
      %16 = vector.load %arg7[%c0_10, %c0_11] : memref<8x128xf32, #tpu.memory_space<vmem>>, vector<8x128xf32>
      %c0_12 = arith.constant 0 : index
      %c0_13 = arith.constant 0 : index
      %17 = vector.load %arg15[%c0_12, %c0_13] : memref<8x128xbf16, #tpu.memory_space<vmem>>, vector<8x128xbf16>
      %18 = vector.extract_strided_slice %17 {offsets = [0, 0], sizes = [8, 32], strides = [1, 1]} : vector<8x128xbf16> to vector<8x32xbf16>
      %19 = vector.extract_strided_slice %13 {offsets = [0, 0], sizes = [128, 32], strides = [1, 1]} : vector<128x64xbf16> to vector<128x32xbf16>
      %20 = vector.extract_strided_slice %15 {offsets = [0, 0], sizes = [128, 32], strides = [1, 1]} : vector<128x64xbf16> to vector<128x32xbf16>
      %cst = arith.constant dense<0.000000e+00> : vector<8x128xf32>
      %21 = tpu.matmul %18, %19, %cst {dimension_numbers = #tpu.dot_dimension_numbers<[1], [1], [0], [0], [0, 0, 1, 0], [], []>} : vector<8x32xbf16>, vector<128x32xbf16>, vector<8x128xf32> -> vector<8x128xf32>
      %22 = arith.addf %21, %16 : vector<8x128xf32>
      %c0_14 = arith.constant 0 : index
      %c0_15 = arith.constant 0 : index
      %c0_16 = arith.constant 0 : index
      %23 = vector.load %arg17[%c0_14, %c0_15, %c0_16] : memref<4x8x1xf32, #tpu.memory_space<vmem>>, vector<1x8x1xf32>
      %24 = vector.shape_cast %23 : vector<1x8x1xf32> to vector<8x1xf32>
      %cst_17 = arith.constant dense<0xFF800000> : vector<8xf32>
      %25 = vector.multi_reduction <maximumf>, %22, %cst_17 [1] : vector<8x128xf32> to vector<8xf32>
      %26 = vector.shape_cast %25 : vector<8xf32> to vector<8x1xf32>
      %27 = arith.maximumf %24, %26 : vector<8x1xf32>
      %28 = arith.subf %24, %27 : vector<8x1xf32>
      %29 = math.exp %28 : vector<8x1xf32>
      %30 = vector.broadcast %27 : vector<8x1xf32> to vector<8x128xf32>
      %31 = arith.subf %22, %30 : vector<8x128xf32>
      %32 = math.exp %31 : vector<8x128xf32>
      %c0_18 = arith.constant 0 : index
      %c0_19 = arith.constant 0 : index
      %c0_20 = arith.constant 0 : index
      %33 = vector.load %arg18[%c0_18, %c0_19, %c0_20] : memref<4x8x1xf32, #tpu.memory_space<vmem>>, vector<1x8x1xf32>
      %34 = vector.shape_cast %33 : vector<1x8x1xf32> to vector<8x1xf32>
      %35 = arith.mulf %29, %34 : vector<8x1xf32>
      %cst_21 = arith.constant dense<0.000000e+00> : vector<8xf32>
      %36 = vector.multi_reduction <add>, %32, %cst_21 [1] : vector<8x128xf32> to vector<8xf32>
      %37 = vector.shape_cast %36 : vector<8xf32> to vector<8x1xf32>
      %38 = arith.addf %35, %37 : vector<8x1xf32>
      %c0_22 = arith.constant 0 : index
      %c0_23 = arith.constant 0 : index
      %c0_24 = arith.constant 0 : index
      %39 = vector.load %arg18[%c0_22, %c0_23, %c0_24] : memref<4x8x1xf32, #tpu.memory_space<vmem>>, vector<1x8x1xf32>
      %40 = vector.shape_cast %39 : vector<1x8x1xf32> to vector<8x1xf32>
      %41 = vector.shape_cast %38 : vector<8x1xf32> to vector<1x8x1xf32>
      tpu.vector_store %arg18[%c0_22, %c0_23, %c0_24], %41 {strides = array<i32>} : memref<4x8x1xf32, #tpu.memory_space<vmem>>, vector<1x8x1xf32>,
      %c0_25 = arith.constant 0 : index
      %c0_26 = arith.constant 0 : index
      %c0_27 = arith.constant 0 : index
      %42 = vector.load %arg19[%c0_25, %c0_26, %c0_27] : memref<4x8x32xf32, #tpu.memory_space<vmem>>, vector<1x8x32xf32>
      %43 = vector.shape_cast %42 : vector<1x8x32xf32> to vector<8x32xf32>
      %44 = vector.broadcast %29 : vector<8x1xf32> to vector<8x32xf32>
      %45 = arith.mulf %44, %43 : vector<8x32xf32>
      %46 = arith.truncf %32 : vector<8x128xf32> to vector<8x128xbf16>
      %cst_28 = arith.constant dense<0.000000e+00> : vector<8x32xf32>
      %47 = tpu.matmul %46, %20, %cst_28 {dimension_numbers = #tpu.dot_dimension_numbers<[1], [0], [0], [1], [0, 0, 1, 1], [], []>} : vector<8x128xbf16>, vector<128x32xbf16>, vector<8x32xf32> -> vector<8x32xf32>
      %48 = arith.addf %45, %47 : vector<8x32xf32>
      %c0_29 = arith.constant 0 : index
      %c0_30 = arith.constant 0 : index
      %c0_31 = arith.constant 0 : index
      %49 = vector.load %arg19[%c0_29, %c0_30, %c0_31] : memref<4x8x32xf32, #tpu.memory_space<vmem>>, vector<1x8x32xf32>
      %50 = vector.shape_cast %49 : vector<1x8x32xf32> to vector<8x32xf32>
      %51 = vector.shape_cast %48 : vector<8x32xf32> to vector<1x8x32xf32>
      tpu.vector_store %arg19[%c0_29, %c0_30, %c0_31], %51 {strides = array<i32>} : memref<4x8x32xf32, #tpu.memory_space<vmem>>, vector<1x8x32xf32>,
      %c0_32 = arith.constant 0 : index
      %c0_33 = arith.constant 0 : index
      %c0_34 = arith.constant 0 : index
      %52 = vector.load %arg17[%c0_32, %c0_33, %c0_34] : memref<4x8x1xf32, #tpu.memory_space<vmem>>, vector<1x8x1xf32>
      %53 = vector.shape_cast %52 : vector<1x8x1xf32> to vector<8x1xf32>
      %54 = vector.shape_cast %27 : vector<8x1xf32> to vector<1x8x1xf32>
      tpu.vector_store %arg17[%c0_32, %c0_33, %c0_34], %54 {strides = array<i32>} : memref<4x8x1xf32, #tpu.memory_space<vmem>>, vector<1x8x1xf32>,
      %55 = vector.extract_strided_slice %17 {offsets = [0, 32], sizes = [8, 32], strides = [1, 1]} : vector<8x128xbf16> to vector<8x32xbf16>
      %56 = vector.extract_strided_slice %13 {offsets = [0, 0], sizes = [128, 32], strides = [1, 1]} : vector<128x64xbf16> to vector<128x32xbf16>
      %57 = vector.extract_strided_slice %15 {offsets = [0, 0], sizes = [128, 32], strides = [1, 1]} : vector<128x64xbf16> to vector<128x32xbf16>
      %cst_35 = arith.constant dense<0.000000e+00> : vector<8x128xf32>
      %58 = tpu.matmul %55, %56, %cst_35 {dimension_numbers = #tpu.dot_dimension_numbers<[1], [1], [0], [0], [0, 0, 1, 0], [], []>} : vector<8x32xbf16>, vector<128x32xbf16>, vector<8x128xf32> -> vector<8x128xf32>
      %59 = arith.addf %58, %16 : vector<8x128xf32>
      %c1 = arith.constant 1 : index
      %c0_36 = arith.constant 0 : index
      %c0_37 = arith.constant 0 : index
      %60 = vector.load %arg17[%c1, %c0_36, %c0_37] : memref<4x8x1xf32, #tpu.memory_space<vmem>>, vector<1x8x1xf32>
      %61 = vector.shape_cast %60 : vector<1x8x1xf32> to vector<8x1xf32>
      %cst_38 = arith.constant dense<0xFF800000> : vector<8xf32>
      %62 = vector.multi_reduction <maximumf>, %59, %cst_38 [1] : vector<8x128xf32> to vector<8xf32>
      %63 = vector.shape_cast %62 : vector<8xf32> to vector<8x1xf32>
      %64 = arith.maximumf %61, %63 : vector<8x1xf32>
      %65 = arith.subf %61, %64 : vector<8x1xf32>
      %66 = math.exp %65 : vector<8x1xf32>
      %67 = vector.broadcast %64 : vector<8x1xf32> to vector<8x128xf32>
      %68 = arith.subf %59, %67 : vector<8x128xf32>
      %69 = math.exp %68 : vector<8x128xf32>
      %c1_39 = arith.constant 1 : index
      %c0_40 = arith.constant 0 : index
      %c0_41 = arith.constant 0 : index
      %70 = vector.load %arg18[%c1_39, %c0_40, %c0_41] : memref<4x8x1xf32, #tpu.memory_space<vmem>>, vector<1x8x1xf32>
      %71 = vector.shape_cast %70 : vector<1x8x1xf32> to vector<8x1xf32>
      %72 = arith.mulf %66, %71 : vector<8x1xf32>
      %cst_42 = arith.constant dense<0.000000e+00> : vector<8xf32>
      %73 = vector.multi_reduction <add>, %69, %cst_42 [1] : vector<8x128xf32> to vector<8xf32>
      %74 = vector.shape_cast %73 : vector<8xf32> to vector<8x1xf32>
      %75 = arith.addf %72, %74 : vector<8x1xf32>
      %c1_43 = arith.constant 1 : index
      %c0_44 = arith.constant 0 : index
      %c0_45 = arith.constant 0 : index
      %76 = vector.load %arg18[%c1_43, %c0_44, %c0_45] : memref<4x8x1xf32, #tpu.memory_space<vmem>>, vector<1x8x1xf32>
      %77 = vector.shape_cast %76 : vector<1x8x1xf32> to vector<8x1xf32>
      %78 = vector.shape_cast %75 : vector<8x1xf32> to vector<1x8x1xf32>
      tpu.vector_store %arg18[%c1_43, %c0_44, %c0_45], %78 {strides = array<i32>} : memref<4x8x1xf32, #tpu.memory_space<vmem>>, vector<1x8x1xf32>,
      %c1_46 = arith.constant 1 : index
      %c0_47 = arith.constant 0 : index
      %c0_48 = arith.constant 0 : index
      %79 = vector.load %arg19[%c1_46, %c0_47, %c0_48] : memref<4x8x32xf32, #tpu.memory_space<vmem>>, vector<1x8x32xf32>
      %80 = vector.shape_cast %79 : vector<1x8x32xf32> to vector<8x32xf32>
      %81 = vector.broadcast %66 : vector<8x1xf32> to vector<8x32xf32>
      %82 = arith.mulf %81, %80 : vector<8x32xf32>
      %83 = arith.truncf %69 : vector<8x128xf32> to vector<8x128xbf16>
      %cst_49 = arith.constant dense<0.000000e+00> : vector<8x32xf32>
      %84 = tpu.matmul %83, %57, %cst_49 {dimension_numbers = #tpu.dot_dimension_numbers<[1], [0], [0], [1], [0, 0, 1, 1], [], []>} : vector<8x128xbf16>, vector<128x32xbf16>, vector<8x32xf32> -> vector<8x32xf32>
      %85 = arith.addf %82, %84 : vector<8x32xf32>
      %c1_50 = arith.constant 1 : index
      %c0_51 = arith.constant 0 : index
      %c0_52 = arith.constant 0 : index
      %86 = vector.load %arg19[%c1_50, %c0_51, %c0_52] : memref<4x8x32xf32, #tpu.memory_space<vmem>>, vector<1x8x32xf32>
      %87 = vector.shape_cast %86 : vector<1x8x32xf32> to vector<8x32xf32>
      %88 = vector.shape_cast %85 : vector<8x32xf32> to vector<1x8x32xf32>
      tpu.vector_store %arg19[%c1_50, %c0_51, %c0_52], %88 {strides = array<i32>} : memref<4x8x32xf32, #tpu.memory_space<vmem>>, vector<1x8x32xf32>,
      %c1_53 = arith.constant 1 : index
      %c0_54 = arith.constant 0 : index
      %c0_55 = arith.constant 0 : index
      %89 = vector.load %arg17[%c1_53, %c0_54, %c0_55] : memref<4x8x1xf32, #tpu.memory_space<vmem>>, vector<1x8x1xf32>
      %90 = vector.shape_cast %89 : vector<1x8x1xf32> to vector<8x1xf32>
      %91 = vector.shape_cast %64 : vector<8x1xf32> to vector<1x8x1xf32>
      tpu.vector_store %arg17[%c1_53, %c0_54, %c0_55], %91 {strides = array<i32>} : memref<4x8x1xf32, #tpu.memory_space<vmem>>, vector<1x8x1xf32>,
      %92 = vector.extract_strided_slice %17 {offsets = [0, 64], sizes = [8, 32], strides = [1, 1]} : vector<8x128xbf16> to vector<8x32xbf16>
      %93 = vector.extract_strided_slice %13 {offsets = [0, 32], sizes = [128, 32], strides = [1, 1]} : vector<128x64xbf16> to vector<128x32xbf16>
      %94 = vector.extract_strided_slice %15 {offsets = [0, 32], sizes = [128, 32], strides = [1, 1]} : vector<128x64xbf16> to vector<128x32xbf16>
      %cst_56 = arith.constant dense<0.000000e+00> : vector<8x128xf32>
      %95 = tpu.matmul %92, %93, %cst_56 {dimension_numbers = #tpu.dot_dimension_numbers<[1], [1], [0], [0], [0, 0, 1, 0], [], []>} : vector<8x32xbf16>, vector<128x32xbf16>, vector<8x128xf32> -> vector<8x128xf32>
      %96 = arith.addf %95, %16 : vector<8x128xf32>
      %c2 = arith.constant 2 : index
      %c0_57 = arith.constant 0 : index
      %c0_58 = arith.constant 0 : index
      %97 = vector.load %arg17[%c2, %c0_57, %c0_58] : memref<4x8x1xf32, #tpu.memory_space<vmem>>, vector<1x8x1xf32>
      %98 = vector.shape_cast %97 : vector<1x8x1xf32> to vector<8x1xf32>
      %cst_59 = arith.constant dense<0xFF800000> : vector<8xf32>
      %99 = vector.multi_reduction <maximumf>, %96, %cst_59 [1] : vector<8x128xf32> to vector<8xf32>
      %100 = vector.shape_cast %99 : vector<8xf32> to vector<8x1xf32>
      %101 = arith.maximumf %98, %100 : vector<8x1xf32>
      %102 = arith.subf %98, %101 : vector<8x1xf32>
      %103 = math.exp %102 : vector<8x1xf32>
      %104 = vector.broadcast %101 : vector<8x1xf32> to vector<8x128xf32>
      %105 = arith.subf %96, %104 : vector<8x128xf32>
      %106 = math.exp %105 : vector<8x128xf32>
      %c2_60 = arith.constant 2 : index
      %c0_61 = arith.constant 0 : index
      %c0_62 = arith.constant 0 : index
      %107 = vector.load %arg18[%c2_60, %c0_61, %c0_62] : memref<4x8x1xf32, #tpu.memory_space<vmem>>, vector<1x8x1xf32>
      %108 = vector.shape_cast %107 : vector<1x8x1xf32> to vector<8x1xf32>
      %109 = arith.mulf %103, %108 : vector<8x1xf32>
      %cst_63 = arith.constant dense<0.000000e+00> : vector<8xf32>
      %110 = vector.multi_reduction <add>, %106, %cst_63 [1] : vector<8x128xf32> to vector<8xf32>
      %111 = vector.shape_cast %110 : vector<8xf32> to vector<8x1xf32>
      %112 = arith.addf %109, %111 : vector<8x1xf32>
      %c2_64 = arith.constant 2 : index
      %c0_65 = arith.constant 0 : index
      %c0_66 = arith.constant 0 : index
      %113 = vector.load %arg18[%c2_64, %c0_65, %c0_66] : memref<4x8x1xf32, #tpu.memory_space<vmem>>, vector<1x8x1xf32>
      %114 = vector.shape_cast %113 : vector<1x8x1xf32> to vector<8x1xf32>
      %115 = vector.shape_cast %112 : vector<8x1xf32> to vector<1x8x1xf32>
      tpu.vector_store %arg18[%c2_64, %c0_65, %c0_66], %115 {strides = array<i32>} : memref<4x8x1xf32, #tpu.memory_space<vmem>>, vector<1x8x1xf32>,
      %c2_67 = arith.constant 2 : index
      %c0_68 = arith.constant 0 : index
      %c0_69 = arith.constant 0 : index
      %116 = vector.load %arg19[%c2_67, %c0_68, %c0_69] : memref<4x8x32xf32, #tpu.memory_space<vmem>>, vector<1x8x32xf32>
      %117 = vector.shape_cast %116 : vector<1x8x32xf32> to vector<8x32xf32>
      %118 = vector.broadcast %103 : vector<8x1xf32> to vector<8x32xf32>
      %119 = arith.mulf %118, %117 : vector<8x32xf32>
      %120 = arith.truncf %106 : vector<8x128xf32> to vector<8x128xbf16>
      %cst_70 = arith.constant dense<0.000000e+00> : vector<8x32xf32>
      %121 = tpu.matmul %120, %94, %cst_70 {dimension_numbers = #tpu.dot_dimension_numbers<[1], [0], [0], [1], [0, 0, 1, 1], [], []>} : vector<8x128xbf16>, vector<128x32xbf16>, vector<8x32xf32> -> vector<8x32xf32>
      %122 = arith.addf %119, %121 : vector<8x32xf32>
      %c2_71 = arith.constant 2 : index
      %c0_72 = arith.constant 0 : index
      %c0_73 = arith.constant 0 : index
      %123 = vector.load %arg19[%c2_71, %c0_72, %c0_73] : memref<4x8x32xf32, #tpu.memory_space<vmem>>, vector<1x8x32xf32>
      %124 = vector.shape_cast %123 : vector<1x8x32xf32> to vector<8x32xf32>
      %125 = vector.shape_cast %122 : vector<8x32xf32> to vector<1x8x32xf32>
      tpu.vector_store %arg19[%c2_71, %c0_72, %c0_73], %125 {strides = array<i32>} : memref<4x8x32xf32, #tpu.memory_space<vmem>>, vector<1x8x32xf32>,
      %c2_74 = arith.constant 2 : index
      %c0_75 = arith.constant 0 : index
      %c0_76 = arith.constant 0 : index
      %126 = vector.load %arg17[%c2_74, %c0_75, %c0_76] : memref<4x8x1xf32, #tpu.memory_space<vmem>>, vector<1x8x1xf32>
      %127 = vector.shape_cast %126 : vector<1x8x1xf32> to vector<8x1xf32>
      %128 = vector.shape_cast %101 : vector<8x1xf32> to vector<1x8x1xf32>
      tpu.vector_store %arg17[%c2_74, %c0_75, %c0_76], %128 {strides = array<i32>} : memref<4x8x1xf32, #tpu.memory_space<vmem>>, vector<1x8x1xf32>,
      %129 = vector.extract_strided_slice %17 {offsets = [0, 96], sizes = [8, 32], strides = [1, 1]} : vector<8x128xbf16> to vector<8x32xbf16>
      %130 = vector.extract_strided_slice %13 {offsets = [0, 32], sizes = [128, 32], strides = [1, 1]} : vector<128x64xbf16> to vector<128x32xbf16>
      %131 = vector.extract_strided_slice %15 {offsets = [0, 32], sizes = [128, 32], strides = [1, 1]} : vector<128x64xbf16> to vector<128x32xbf16>
      %cst_77 = arith.constant dense<0.000000e+00> : vector<8x128xf32>
      %132 = tpu.matmul %129, %130, %cst_77 {dimension_numbers = #tpu.dot_dimension_numbers<[1], [1], [0], [0], [0, 0, 1, 0], [], []>} : vector<8x32xbf16>, vector<128x32xbf16>, vector<8x128xf32> -> vector<8x128xf32>
      %133 = arith.addf %132, %16 : vector<8x128xf32>
      %c3 = arith.constant 3 : index
      %c0_78 = arith.constant 0 : index
      %c0_79 = arith.constant 0 : index
      %134 = vector.load %arg17[%c3, %c0_78, %c0_79] : memref<4x8x1xf32, #tpu.memory_space<vmem>>, vector<1x8x1xf32>
      %135 = vector.shape_cast %134 : vector<1x8x1xf32> to vector<8x1xf32>
      %cst_80 = arith.constant dense<0xFF800000> : vector<8xf32>
      %136 = vector.multi_reduction <maximumf>, %133, %cst_80 [1] : vector<8x128xf32> to vector<8xf32>
      %137 = vector.shape_cast %136 : vector<8xf32> to vector<8x1xf32>
      %138 = arith.maximumf %135, %137 : vector<8x1xf32>
      %139 = arith.subf %135, %138 : vector<8x1xf32>
      %140 = math.exp %139 : vector<8x1xf32>
      %141 = vector.broadcast %138 : vector<8x1xf32> to vector<8x128xf32>
      %142 = arith.subf %133, %141 : vector<8x128xf32>
      %143 = math.exp %142 : vector<8x128xf32>
      %c3_81 = arith.constant 3 : index
      %c0_82 = arith.constant 0 : index
      %c0_83 = arith.constant 0 : index
      %144 = vector.load %arg18[%c3_81, %c0_82, %c0_83] : memref<4x8x1xf32, #tpu.memory_space<vmem>>, vector<1x8x1xf32>
      %145 = vector.shape_cast %144 : vector<1x8x1xf32> to vector<8x1xf32>
      %146 = arith.mulf %140, %145 : vector<8x1xf32>
      %cst_84 = arith.constant dense<0.000000e+00> : vector<8xf32>
      %147 = vector.multi_reduction <add>, %143, %cst_84 [1] : vector<8x128xf32> to vector<8xf32>
      %148 = vector.shape_cast %147 : vector<8xf32> to vector<8x1xf32>
      %149 = arith.addf %146, %148 : vector<8x1xf32>
      %c3_85 = arith.constant 3 : index
      %c0_86 = arith.constant 0 : index
      %c0_87 = arith.constant 0 : index
      %150 = vector.load %arg18[%c3_85, %c0_86, %c0_87] : memref<4x8x1xf32, #tpu.memory_space<vmem>>, vector<1x8x1xf32>
      %151 = vector.shape_cast %150 : vector<1x8x1xf32> to vector<8x1xf32>
      %152 = vector.shape_cast %149 : vector<8x1xf32> to vector<1x8x1xf32>
      tpu.vector_store %arg18[%c3_85, %c0_86, %c0_87], %152 {strides = array<i32>} : memref<4x8x1xf32, #tpu.memory_space<vmem>>, vector<1x8x1xf32>,
      %c3_88 = arith.constant 3 : index
      %c0_89 = arith.constant 0 : index
      %c0_90 = arith.constant 0 : index
      %153 = vector.load %arg19[%c3_88, %c0_89, %c0_90] : memref<4x8x32xf32, #tpu.memory_space<vmem>>, vector<1x8x32xf32>
      %154 = vector.shape_cast %153 : vector<1x8x32xf32> to vector<8x32xf32>
      %155 = vector.broadcast %140 : vector<8x1xf32> to vector<8x32xf32>
      %156 = arith.mulf %155, %154 : vector<8x32xf32>
      %157 = arith.truncf %143 : vector<8x128xf32> to vector<8x128xbf16>
      %cst_91 = arith.constant dense<0.000000e+00> : vector<8x32xf32>
      %158 = tpu.matmul %157, %131, %cst_91 {dimension_numbers = #tpu.dot_dimension_numbers<[1], [0], [0], [1], [0, 0, 1, 1], [], []>} : vector<8x128xbf16>, vector<128x32xbf16>, vector<8x32xf32> -> vector<8x32xf32>
      %159 = arith.addf %156, %158 : vector<8x32xf32>
      %c3_92 = arith.constant 3 : index
      %c0_93 = arith.constant 0 : index
      %c0_94 = arith.constant 0 : index
      %160 = vector.load %arg19[%c3_92, %c0_93, %c0_94] : memref<4x8x32xf32, #tpu.memory_space<vmem>>, vector<1x8x32xf32>
      %161 = vector.shape_cast %160 : vector<1x8x32xf32> to vector<8x32xf32>
      %162 = vector.shape_cast %159 : vector<8x32xf32> to vector<1x8x32xf32>
      tpu.vector_store %arg19[%c3_92, %c0_93, %c0_94], %162 {strides = array<i32>} : memref<4x8x32xf32, #tpu.memory_space<vmem>>, vector<1x8x32xf32>,
      %c3_95 = arith.constant 3 : index
      %c0_96 = arith.constant 0 : index
      %c0_97 = arith.constant 0 : index
      %163 = vector.load %arg17[%c3_95, %c0_96, %c0_97] : memref<4x8x1xf32, #tpu.memory_space<vmem>>, vector<1x8x1xf32>
      %164 = vector.shape_cast %163 : vector<1x8x1xf32> to vector<8x1xf32>
      %165 = vector.shape_cast %138 : vector<8x1xf32> to vector<1x8x1xf32>
      tpu.vector_store %arg17[%c3_95, %c0_96, %c0_97], %165 {strides = array<i32>} : memref<4x8x1xf32, #tpu.memory_space<vmem>>, vector<1x8x1xf32>,
    } else {
    }
    %c1_i32 = arith.constant 1 : i32
    %6 = arith.cmpi eq, %arg1, %c1_i32 : i32
    %7 = arith.extui %6 : i1 to i32
    %c0_i32_2 = arith.constant 0 : i32
    %8 = arith.cmpi ne, %7, %c0_i32_2 : i32
    scf.if %8 {
      %c0 = arith.constant 0 : index
      %c0_5 = arith.constant 0 : index
      %c0_6 = arith.constant 0 : index
      %12 = vector.load %arg2[%c0, %c0_5, %c0_6] : memref<1x8x128xf32, #tpu.memory_space<vmem>>, vector<1x8x128xf32>
      %13 = vector.shape_cast %12 : vector<1x8x128xf32> to vector<8x128xf32>
      %c0_7 = arith.constant 0 : index
      %c0_8 = arith.constant 0 : index
      %14 = vector.load %arg9[%c0_7, %c0_8] : memref<128x128xbf16, #tpu.memory_space<vmem>>, vector<128x128xbf16>
      %cst = arith.constant 0.000000e+00 : f32
      %15 = vector.broadcast %cst : f32 to vector<8x128xf32>
      %c0_9 = arith.constant 0 : index
      %c0_10 = arith.constant 0 : index
      %c0_11 = arith.constant 0 : index
      %16 = vector.load %arg19[%c0_9, %c0_10, %c0_11] : memref<4x8x32xf32, #tpu.memory_space<vmem>>, vector<1x8x32xf32>
      %17 = vector.shape_cast %16 : vector<1x8x32xf32> to vector<8x32xf32>
      %c0_12 = arith.constant 0 : index
      %c0_13 = arith.constant 0 : index
      %c0_14 = arith.constant 0 : index
      %18 = vector.load %arg18[%c0_12, %c0_13, %c0_14] : memref<4x8x1xf32, #tpu.memory_space<vmem>>, vector<1x8x1xf32>
      %19 = vector.shape_cast %18 : vector<1x8x1xf32> to vector<8x1xf32>
      %20 = tpu.reciprocal %19 {approx = true} : vector<8x1xf32> -> vector<8x1xf32>
      %21 = vector.broadcast %20 : vector<8x1xf32> to vector<8x32xf32>
      %22 = arith.mulf %17, %21 : vector<8x32xf32>
      %23 = arith.truncf %22 : vector<8x32xf32> to vector<8x32xbf16>
      %24 = vector.extract_strided_slice %14 {offsets = [0, 0], sizes = [128, 32], strides = [1, 1]} : vector<128x128xbf16> to vector<128x32xbf16>
      %cst_15 = arith.constant dense<0.000000e+00> : vector<8x128xf32>
      %25 = tpu.matmul %23, %24, %cst_15 {dimension_numbers = #tpu.dot_dimension_numbers<[1], [1], [0], [0], [0, 0, 1, 0], [], []>} : vector<8x32xbf16>, vector<128x32xbf16>, vector<8x128xf32> -> vector<8x128xf32>
      %26 = arith.addf %15, %25 : vector<8x128xf32>
      %c1 = arith.constant 1 : index
      %c0_16 = arith.constant 0 : index
      %c0_17 = arith.constant 0 : index
      %27 = vector.load %arg19[%c1, %c0_16, %c0_17] : memref<4x8x32xf32, #tpu.memory_space<vmem>>, vector<1x8x32xf32>
      %28 = vector.shape_cast %27 : vector<1x8x32xf32> to vector<8x32xf32>
      %c1_18 = arith.constant 1 : index
      %c0_19 = arith.constant 0 : index
      %c0_20 = arith.constant 0 : index
      %29 = vector.load %arg18[%c1_18, %c0_19, %c0_20] : memref<4x8x1xf32, #tpu.memory_space<vmem>>, vector<1x8x1xf32>
      %30 = vector.shape_cast %29 : vector<1x8x1xf32> to vector<8x1xf32>
      %31 = tpu.reciprocal %30 {approx = true} : vector<8x1xf32> -> vector<8x1xf32>
      %32 = vector.broadcast %31 : vector<8x1xf32> to vector<8x32xf32>
      %33 = arith.mulf %28, %32 : vector<8x32xf32>
      %34 = arith.truncf %33 : vector<8x32xf32> to vector<8x32xbf16>
      %35 = vector.extract_strided_slice %14 {offsets = [0, 32], sizes = [128, 32], strides = [1, 1]} : vector<128x128xbf16> to vector<128x32xbf16>
      %cst_21 = arith.constant dense<0.000000e+00> : vector<8x128xf32>
      %36 = tpu.matmul %34, %35, %cst_21 {dimension_numbers = #tpu.dot_dimension_numbers<[1], [1], [0], [0], [0, 0, 1, 0], [], []>} : vector<8x32xbf16>, vector<128x32xbf16>, vector<8x128xf32> -> vector<8x128xf32>
      %37 = arith.addf %26, %36 : vector<8x128xf32>
      %c2 = arith.constant 2 : index
      %c0_22 = arith.constant 0 : index
      %c0_23 = arith.constant 0 : index
      %38 = vector.load %arg19[%c2, %c0_22, %c0_23] : memref<4x8x32xf32, #tpu.memory_space<vmem>>, vector<1x8x32xf32>
      %39 = vector.shape_cast %38 : vector<1x8x32xf32> to vector<8x32xf32>
      %c2_24 = arith.constant 2 : index
      %c0_25 = arith.constant 0 : index
      %c0_26 = arith.constant 0 : index
      %40 = vector.load %arg18[%c2_24, %c0_25, %c0_26] : memref<4x8x1xf32, #tpu.memory_space<vmem>>, vector<1x8x1xf32>
      %41 = vector.shape_cast %40 : vector<1x8x1xf32> to vector<8x1xf32>
      %42 = tpu.reciprocal %41 {approx = true} : vector<8x1xf32> -> vector<8x1xf32>
      %43 = vector.broadcast %42 : vector<8x1xf32> to vector<8x32xf32>
      %44 = arith.mulf %39, %43 : vector<8x32xf32>
      %45 = arith.truncf %44 : vector<8x32xf32> to vector<8x32xbf16>
      %46 = vector.extract_strided_slice %14 {offsets = [0, 64], sizes = [128, 32], strides = [1, 1]} : vector<128x128xbf16> to vector<128x32xbf16>
      %cst_27 = arith.constant dense<0.000000e+00> : vector<8x128xf32>
      %47 = tpu.matmul %45, %46, %cst_27 {dimension_numbers = #tpu.dot_dimension_numbers<[1], [1], [0], [0], [0, 0, 1, 0], [], []>} : vector<8x32xbf16>, vector<128x32xbf16>, vector<8x128xf32> -> vector<8x128xf32>
      %48 = arith.addf %37, %47 : vector<8x128xf32>
      %c3 = arith.constant 3 : index
      %c0_28 = arith.constant 0 : index
      %c0_29 = arith.constant 0 : index
      %49 = vector.load %arg19[%c3, %c0_28, %c0_29] : memref<4x8x32xf32, #tpu.memory_space<vmem>>, vector<1x8x32xf32>
      %50 = vector.shape_cast %49 : vector<1x8x32xf32> to vector<8x32xf32>
      %c3_30 = arith.constant 3 : index
      %c0_31 = arith.constant 0 : index
      %c0_32 = arith.constant 0 : index
      %51 = vector.load %arg18[%c3_30, %c0_31, %c0_32] : memref<4x8x1xf32, #tpu.memory_space<vmem>>, vector<1x8x1xf32>
      %52 = vector.shape_cast %51 : vector<1x8x1xf32> to vector<8x1xf32>
      %53 = tpu.reciprocal %52 {approx = true} : vector<8x1xf32> -> vector<8x1xf32>
      %54 = vector.broadcast %53 : vector<8x1xf32> to vector<8x32xf32>
      %55 = arith.mulf %50, %54 : vector<8x32xf32>
      %56 = arith.truncf %55 : vector<8x32xf32> to vector<8x32xbf16>
      %57 = vector.extract_strided_slice %14 {offsets = [0, 96], sizes = [128, 32], strides = [1, 1]} : vector<128x128xbf16> to vector<128x32xbf16>
      %cst_33 = arith.constant dense<0.000000e+00> : vector<8x128xf32>
      %58 = tpu.matmul %56, %57, %cst_33 {dimension_numbers = #tpu.dot_dimension_numbers<[1], [1], [0], [0], [0, 0, 1, 0], [], []>} : vector<8x32xbf16>, vector<128x32xbf16>, vector<8x128xf32> -> vector<8x128xf32>
      %59 = arith.addf %48, %58 : vector<8x128xf32>
      %60 = arith.addf %59, %13 : vector<8x128xf32>
      %c0_34 = arith.constant 0 : index
      %c0_35 = arith.constant 0 : index
      %c0_36 = arith.constant 0 : index
      %61 = vector.load %arg14[%c0_34, %c0_35, %c0_36] : memref<1x8x128xf32, #tpu.memory_space<vmem>>, vector<1x8x128xf32>
      %62 = vector.shape_cast %61 : vector<1x8x128xf32> to vector<8x128xf32>
      %63 = vector.shape_cast %60 : vector<8x128xf32> to vector<1x8x128xf32>
      tpu.vector_store %arg14[%c0_34, %c0_35, %c0_36], %63 {strides = array<i32>} : memref<1x8x128xf32, #tpu.memory_space<vmem>>, vector<1x8x128xf32>,
      %64 = arith.mulf %60, %60 : vector<8x128xf32>
      %cst_37 = arith.constant dense<0.000000e+00> : vector<8xf32>
      %65 = vector.multi_reduction <add>, %64, %cst_37 [1] : vector<8x128xf32> to vector<8xf32>
      %66 = vector.shape_cast %65 : vector<8xf32> to vector<8x1xf32>
      %cst_38 = arith.constant 1.280000e+02 : f32
      %67 = vector.broadcast %cst_38 : f32 to vector<8x1xf32>
      %68 = arith.divf %66, %67 : vector<8x1xf32>
      %cst_39 = arith.constant 9.99999997E-7 : f32
      %69 = vector.broadcast %cst_39 : f32 to vector<8x1xf32>
      %70 = arith.addf %68, %69 : vector<8x1xf32>
      %71 = math.rsqrt %70 : vector<8x1xf32>
      %72 = vector.broadcast %71 : vector<8x1xf32> to vector<8x128xf32>
      %73 = arith.mulf %60, %72 : vector<8x128xf32>
      %c0_40 = arith.constant 0 : index
      %c0_41 = arith.constant 0 : index
      %74 = vector.load %arg13[%c0_40, %c0_41] : memref<1x128xf32, #tpu.memory_space<vmem>>, vector<1x128xf32>
      %cst_42 = arith.constant 1.000000e+00 : f32
      %75 = vector.broadcast %cst_42 : f32 to vector<1x128xf32>
      %76 = arith.addf %75, %74 : vector<1x128xf32>
      %77 = vector.broadcast %76 : vector<1x128xf32> to vector<8x128xf32>
      %78 = arith.mulf %73, %77 : vector<8x128xf32>
      %79 = arith.truncf %78 : vector<8x128xf32> to vector<8x128xbf16>
      %c0_43 = arith.constant 0 : index
      %c0_44 = arith.constant 0 : index
      %80 = vector.load %arg16[%c0_43, %c0_44] : memref<8x128xbf16, #tpu.memory_space<vmem>>, vector<8x128xbf16>
      tpu.vector_store %arg16[%c0_43, %c0_44], %79 {strides = array<i32>} : memref<8x128xbf16, #tpu.memory_space<vmem>>, vector<8x128xbf16>,
    } else {
    }
    %c2_i32_3 = arith.constant 2 : i32
    %9 = arith.cmpi sge, %arg1, %c2_i32_3 : i32
    %10 = arith.extui %9 : i1 to i32
    %c0_i32_4 = arith.constant 0 : i32
    %11 = arith.cmpi ne, %10, %c0_i32_4 : i32
    scf.if %11 {
      %c0 = arith.constant 0 : index
      %c0_5 = arith.constant 0 : index
      %12 = vector.load %arg16[%c0, %c0_5] : memref<8x128xbf16, #tpu.memory_space<vmem>>, vector<8x128xbf16>
      %c0_6 = arith.constant 0 : index
      %c0_7 = arith.constant 0 : index
      %c0_8 = arith.constant 0 : index
      %13 = vector.load %arg10[%c0_6, %c0_7, %c0_8] : memref<2x128x128xbf16, #tpu.memory_space<vmem>>, vector<1x128x128xbf16>
      %14 = vector.shape_cast %13 : vector<1x128x128xbf16> to vector<128x128xbf16>
      %cst = arith.constant dense<0.000000e+00> : vector<8x128xf32>
      %15 = tpu.matmul %12, %14, %cst {dimension_numbers = #tpu.dot_dimension_numbers<[1], [1], [0], [0], [0, 0, 1, 0], [], []>} : vector<8x128xbf16>, vector<128x128xbf16>, vector<8x128xf32> -> vector<8x128xf32>
      %c1 = arith.constant 1 : index
      %c0_9 = arith.constant 0 : index
      %c0_10 = arith.constant 0 : index
      %16 = vector.load %arg10[%c1, %c0_9, %c0_10] : memref<2x128x128xbf16, #tpu.memory_space<vmem>>, vector<1x128x128xbf16>
      %17 = vector.shape_cast %16 : vector<1x128x128xbf16> to vector<128x128xbf16>
      %cst_11 = arith.constant dense<0.000000e+00> : vector<8x128xf32>
      %18 = tpu.matmul %12, %17, %cst_11 {dimension_numbers = #tpu.dot_dimension_numbers<[1], [1], [0], [0], [0, 0, 1, 0], [], []>} : vector<8x128xbf16>, vector<128x128xbf16>, vector<8x128xf32> -> vector<8x128xf32>
      %cst_12 = arith.constant 5.000000e-01 : f32
      %19 = vector.broadcast %cst_12 : f32 to vector<8x128xf32>
      %20 = arith.mulf %19, %15 : vector<8x128xf32>
      %cst_13 = arith.constant 0.707106769 : f32
      %21 = vector.broadcast %cst_13 : f32 to vector<8x128xf32>
      %22 = arith.mulf %15, %21 : vector<8x128xf32>
      %23 = math.erf %22 : vector<8x128xf32>
      %cst_14 = arith.constant 1.000000e+00 : f32
      %24 = vector.broadcast %cst_14 : f32 to vector<8x128xf32>
      %25 = arith.addf %24, %23 : vector<8x128xf32>
      %26 = arith.mulf %20, %25 : vector<8x128xf32>
      %27 = arith.mulf %26, %18 : vector<8x128xf32>
      %28 = arith.truncf %27 : vector<8x128xf32> to vector<8x128xbf16>
      %c0_15 = arith.constant 0 : index
      %c0_16 = arith.constant 0 : index
      %29 = vector.load %arg11[%c0_15, %c0_16] : memref<128x128xbf16, #tpu.memory_space<vmem>>, vector<128x128xbf16>
      %cst_17 = arith.constant dense<0.000000e+00> : vector<8x128xf32>
      %30 = tpu.matmul %28, %29, %cst_17 {dimension_numbers = #tpu.dot_dimension_numbers<[1], [1], [0], [0], [0, 0, 1, 0], [], []>} : vector<8x128xbf16>, vector<128x128xbf16>, vector<8x128xf32> -> vector<8x128xf32>
      %c0_18 = arith.constant 0 : index
      %c0_19 = arith.constant 0 : index
      %c0_20 = arith.constant 0 : index
      %31 = vector.load %arg14[%c0_18, %c0_19, %c0_20] : memref<1x8x128xf32, #tpu.memory_space<vmem>>, vector<1x8x128xf32>
      %32 = vector.shape_cast %31 : vector<1x8x128xf32> to vector<8x128xf32>
      %33 = arith.addf %32, %30 : vector<8x128xf32>
      %c0_21 = arith.constant 0 : index
      %c0_22 = arith.constant 0 : index
      %c0_23 = arith.constant 0 : index
      %34 = vector.load %arg14[%c0_21, %c0_22, %c0_23] : memref<1x8x128xf32, #tpu.memory_space<vmem>>, vector<1x8x128xf32>
      %35 = vector.shape_cast %34 : vector<1x8x128xf32> to vector<8x128xf32>
      %36 = vector.shape_cast %33 : vector<8x128xf32> to vector<1x8x128xf32>
      tpu.vector_store %arg14[%c0_21, %c0_22, %c0_23], %36 {strides = array<i32>} : memref<1x8x128xf32, #tpu.memory_space<vmem>>, vector<1x8x128xf32>,
    } else {
    }
    return
  }
  func.func @transform_0(%arg0: i32, %arg1: i32) -> (i32, i32, i32) {
    %c0_i32 = arith.constant 0 : i32
    %c0_i32_0 = arith.constant 0 : i32
    %c0_i32_1 = arith.constant 0 : i32
    return %arg0, %c0_i32, %c0_i32_0 : i32, i32, i32
  }
  func.func @transform_1(%arg0: i32, %arg1: i32) -> (i32, i32) {
    %c0_i32 = arith.constant 0 : i32
    %c0_i32_0 = arith.constant 0 : i32
    %c0_i32_1 = arith.constant 0 : i32
    return %c0_i32, %c0_i32_0 : i32, i32
  }
  func.func @transform_2(%arg0: i32, %arg1: i32) -> (i32, i32) {
    %c0_i32 = arith.constant 0 : i32
    %c0_i32_0 = arith.constant 0 : i32
    %c0_i32_1 = arith.constant 0 : i32
    return %c0_i32, %c0_i32_0 : i32, i32
  }
  func.func @transform_3(%arg0: i32, %arg1: i32) -> (i32, i32, i32) {
    %c1_i32 = arith.constant 1 : i32
    %0 = arith.minsi %arg1, %c1_i32 : i32
    %c0_i32 = arith.constant 0 : i32
    %c0_i32_0 = arith.constant 0 : i32
    return %arg0, %0, %c0_i32 : i32, i32, i32
  }
  func.func @transform_4(%arg0: i32, %arg1: i32) -> (i32, i32, i32) {
    %c1_i32 = arith.constant 1 : i32
    %0 = arith.minsi %arg1, %c1_i32 : i32
    %c0_i32 = arith.constant 0 : i32
    %c0_i32_0 = arith.constant 0 : i32
    return %arg0, %0, %c0_i32 : i32, i32, i32
  }
  func.func @transform_5(%arg0: i32, %arg1: i32) -> (i32, i32) {
    %c1_i32 = arith.constant 1 : i32
    %0 = arith.minsi %arg1, %c1_i32 : i32
    %c0_i32 = arith.constant 0 : i32
    %c0_i32_0 = arith.constant 0 : i32
    return %c0_i32, %0 : i32, i32
  }
  func.func @transform_6(%arg0: i32, %arg1: i32) -> (i32, i32) {
    %c0_i32 = arith.constant 0 : i32
    %c0_i32_0 = arith.constant 0 : i32
    %c0_i32_1 = arith.constant 0 : i32
    return %c0_i32, %c0_i32_0 : i32, i32
  }
  func.func @transform_7(%arg0: i32, %arg1: i32) -> (i32, i32) {
    %c0_i32 = arith.constant 0 : i32
    %c0_i32_0 = arith.constant 0 : i32
    %c0_i32_1 = arith.constant 0 : i32
    return %c0_i32, %c0_i32_0 : i32, i32
  }
  func.func @transform_8(%arg0: i32, %arg1: i32) -> (i32, i32, i32) {
    %c2_i32 = arith.constant 2 : i32
    %0 = arith.subi %arg1, %c2_i32 : i32
    %c0_i32 = arith.constant 0 : i32
    %1 = arith.maxsi %0, %c0_i32 : i32
    %c0_i32_0 = arith.constant 0 : i32
    %c0_i32_1 = arith.constant 0 : i32
    %c0_i32_2 = arith.constant 0 : i32
    return %c0_i32_0, %1, %c0_i32_1 : i32, i32, i32
  }
  func.func @transform_9(%arg0: i32, %arg1: i32) -> (i32, i32) {
    %c2_i32 = arith.constant 2 : i32
    %0 = arith.subi %arg1, %c2_i32 : i32
    %c0_i32 = arith.constant 0 : i32
    %1 = arith.maxsi %0, %c0_i32 : i32
    %c0_i32_0 = arith.constant 0 : i32
    %c0_i32_1 = arith.constant 0 : i32
    return %c0_i32_0, %1 : i32, i32
  }
  func.func @transform_10(%arg0: i32, %arg1: i32) -> (i32, i32) {
    %c0_i32 = arith.constant 0 : i32
    %c0_i32_0 = arith.constant 0 : i32
    %c0_i32_1 = arith.constant 0 : i32
    return %c0_i32, %c0_i32_0 : i32, i32
  }
  func.func @transform_11(%arg0: i32, %arg1: i32) -> (i32, i32) {
    %c0_i32 = arith.constant 0 : i32
    %c0_i32_0 = arith.constant 0 : i32
    %c0_i32_1 = arith.constant 0 : i32
    return %c0_i32, %c0_i32_0 : i32, i32
  }
  func.func @transform_12(%arg0: i32, %arg1: i32) -> (i32, i32, i32) {
    %c0_i32 = arith.constant 0 : i32
    %c0_i32_0 = arith.constant 0 : i32
    %c0_i32_1 = arith.constant 0 : i32
    return %arg0, %c0_i32, %c0_i32_0 : i32, i32, i32
  }
}

</mosaic_0001>

<llo_original>
// kernel: tpu_custom_call.1
$region0: #{tpu_custom_call.1}
  #allocation0 [shape = 'u32[]', space=smem, size = 0x4, offset = 0x4, fixed_abs, tag = 'smem constant byte address 0x4 - core index']
  #allocation1 [shape = 'u32[144,128]{1,0:T(1,128)}', space=vmem, size = 0x12000, scoped, tag = 'internal scratch']
  #allocation2 [shape = 'bf16[8,128]{1,0:T(8,128)(2,1)}', space=vmem, size = 0x800, scoped, tag = 'scratch operand']
  #allocation3 [shape = 'bf16[8,128]{1,0:T(8,128)(2,1)}', space=vmem, size = 0x800, scoped, tag = 'scratch operand']
  #allocation4 [shape = 'f32[4,8,1]{2,1,0:T(8,128)}', space=vmem, size = 0x4000, scoped, tag = 'scratch operand']
  #allocation5 [shape = 'f32[4,8,1]{2,1,0:T(8,128)}', space=vmem, size = 0x4000, scoped, tag = 'scratch operand']
  #allocation6 [shape = 'f32[4,8,32]{2,1,0:T(8,128)}', space=vmem, size = 0x4000, scoped, tag = 'scratch operand']
  #allocation26 [shape = 's32[]', space=sflag, size = 0x4, offset = 0, fixed_abs, tag = 'sflag constant byte address 0x0 - dummy sync flag']
  %s0 = inlined_call_operand.hbm [shape: f32[2,8,128], index: 0, kind: input, shape index: {}]
  %s1 = inlined_call_operand.hbm [shape: f32[8,32], index: 1, kind: input, shape index: {}]
  %s2 = inlined_call_operand.hbm [shape: f32[8,32], index: 2, kind: input, shape index: {}]
  %s3 = inlined_call_operand.hbm [shape: bf16[2,256,64], index: 3, kind: input, shape index: {}]
  %s4 = inlined_call_operand.hbm [shape: bf16[2,256,64], index: 4, kind: input, shape index: {}]
  %s5 = inlined_call_operand.hbm [shape: f32[8,256], index: 5, kind: input, shape index: {}]
  %s6 = inlined_call_operand.hbm [shape: bf16[256,128], index: 6, kind: input, shape index: {}]
  %s7 = inlined_call_operand.hbm [shape: bf16[128,128], index: 7, kind: input, shape index: {}]
  %s8 = inlined_call_operand.hbm [shape: bf16[2,256,128], index: 8, kind: input, shape index: {}]
  %s9 = inlined_call_operand.hbm [shape: bf16[128,256], index: 9, kind: input, shape index: {}]
  %s10 = inlined_call_operand.hbm [shape: f32[1,128], index: 10, kind: input, shape index: {}]
  %s11 = inlined_call_operand.hbm [shape: f32[1,128], index: 11, kind: input, shape index: {}]
  %s12 = inlined_call_operand.hbm [shape: f32[2,8,128], index: 12, kind: output, shape index: {}]
  %s13 = sld [smem:[#allocation0]]
  $region145: #{tpu_custom_call.1} parent=0
    _
  %s15 = ssub.s32 1, %s13
  %s16 = scalar_select 0, %s15, %s13
  $region1: #{tpu_custom_call.1} parent=0
    #allocation7 [shape = 'u8[8192]{0}', space=vmem, size = 0x2000, scoped, tag = 'input window, operand 0']
    #allocation8 [shape = 's32[2]{0}', space=sflag, size = 0x8, scoped, tag = 'scoped memory for tpu_custom_call.1']
    #allocation9 [shape = 's32[2]{0}', space=sflag, size = 0x8, scoped, tag = 'scoped memory for tpu_custom_call.1']
    #allocation10 [shape = 'u8[4096]{0}', space=vmem, size = 0x1000, scoped, tag = 'input window, operand 1, single buffered']
    #allocation11 [shape = 's32[1]{0}', space=sflag, size = 0x4, scoped, tag = 'scoped memory for tpu_custom_call.1']
    #allocation12 [shape = 'u8[4096]{0}', space=vmem, size = 0x1000, scoped, tag = 'input window, operand 2, single buffered']
    #allocation13 [shape = 'u8[65536]{0}', space=vmem, size = 0x10000, scoped, tag = 'input window, operand 3']
    #allocation14 [shape = 's32[2]{0}', space=sflag, size = 0x8, scoped, tag = 'scoped memory for tpu_custom_call.1']
    #allocation15 [shape = 'u8[65536]{0}', space=vmem, size = 0x10000, scoped, tag = 'input window, operand 4']
    #allocation16 [shape = 'u8[8192]{0}', space=vmem, size = 0x2000, scoped, tag = 'input window, operand 5']
    #allocation17 [shape = 's32[2]{0}', space=sflag, size = 0x8, scoped, tag = 'scoped memory for tpu_custom_call.1']
    #allocation18 [shape = 'u8[65536]{0}', space=vmem, size = 0x10000, scoped, tag = 'input window, operand 6, single buffered']
    #allocation19 [shape = 'u8[32768]{0}', space=vmem, size = 0x8000, scoped, tag = 'input window, operand 7, single buffered']
    #allocation20 [shape = 's32[1]{0}', space=sflag, size = 0x4, scoped, tag = 'scoped memory for tpu_custom_call.1']
    #allocation21 [shape = 'u8[131072]{0}', space=vmem, size = 0x20000, scoped, tag = 'input window, operand 8']
    #allocation22 [shape = 'u8[65536]{0}', space=vmem, size = 0x10000, scoped, tag = 'input window, operand 9']
    #allocation23 [shape = 'u8[512]{0}', space=vmem, size = 0x400, scoped, tag = 'input window, operand 10, single buffered']
    #allocation24 [shape = 'u8[512]{0}', space=vmem, size = 0x400, scoped, tag = 'input window, operand 11, single buffered']
    #allocation25 [shape = 'u8[8192]{0}', space=vmem, size = 0x2000, scoped, tag = 'output window, operand 0']
    %17 = vsyncpa [#allocation8], 0
    %s18 = scalar_lea.sflag [#allocation8], 1
    %19 = vsyncpa %s18, 0
    %20 = vsyncpa [#allocation11], 0
    %21 = vsyncpa [#allocation14], 0
    %s22 = scalar_lea.sflag [#allocation14], 1
    %23 = vsyncpa %s22, 0
    %24 = vsyncpa [#allocation17], 0
    %s25 = scalar_lea.sflag [#allocation17], 1
    %26 = vsyncpa %s25, 0
    %27 = vsyncpa [#allocation20], 0
    %28 = vsyncpa [#allocation9], 0
    %s29 = scalar_lea.sflag [#allocation9], 1
    %30 = vsyncpa %s29, 0
    loop: start=0, step=1, limit=10
    $region2: #{tpu_custom_call.1} parent=1 // loop_pre_header
      _
    $region3: #{tpu_custom_call.1} parent=1 // loop_header
      %s32 = sphi 0, %s36
      %p33 = scmp.ge.s32.totalorder %s32, 10
      %s39 = sphi 0, %s51
      %s40 = sphi 0, %s47
      %s41 = sphi 0, %s39
      %s42 = sphi 0, %s40
      %s43 = sphi 0, %s41
      %s44 = sphi 0, %s42
      %s54 = sphi 0, %s56
      %s57 = sphi 0, %s54
      %s58 = sphi 0, %s57
      %s74 = sphi 0, %s58
      %s78 = sphi 0, %s78
      %s80 = sphi 0, %s78
      %s81 = sphi 0, %s80
      %s95 = sphi 0, %s81
      %s99 = sphi 0, %s99
      %s101 = sphi 0, %s99
      %s102 = sphi 0, %s101
      %s116 = sphi 0, %s102
      %s128 = sphi 0, %s130
      %s131 = sphi 0, %s128
      %s132 = sphi 0, %s131
      %s148 = sphi 0, %s132
      %s160 = sphi 0, %s162
      %s163 = sphi 0, %s160
      %s164 = sphi 0, %s163
      %s180 = sphi 0, %s164
      %s190 = sphi 0, %s192
      %s193 = sphi 0, %s190
      %s194 = sphi 0, %s193
      %s210 = sphi 0, %s194
      %s214 = sphi 0, %s214
      %s216 = sphi 0, %s214
      %s217 = sphi 0, %s216
      %s231 = sphi 0, %s217
      %s235 = sphi 0, %s235
      %s237 = sphi 0, %s235
      %s238 = sphi 0, %s237
      %s252 = sphi 0, %s238
      %s264 = sphi 0, %s266
      %s267 = sphi 0, %s264
      %s268 = sphi 0, %s267
      %s284 = sphi 0, %s268
      %s296 = sphi 0, %s298
      %s299 = sphi 0, %s296
      %s300 = sphi 0, %s299
      %s316 = sphi 0, %s300
      %s320 = sphi 0, %s320
      %s322 = sphi 0, %s320
      %s323 = sphi 0, %s322
      %s337 = sphi 0, %s323
      %s341 = sphi 0, %s341
      %s343 = sphi 0, %s341
      %s344 = sphi 0, %s343
      %s358 = sphi 0, %s344
      %s364 = sphi 0, %s366
      %s367 = sphi 0, %s364
      %s368 = sphi 0, %s367
      %s384 = sphi 0, %s368
    $region4: #{tpu_custom_call.1} parent=1 // loop_header_branch
      %35 = sbr.rel (%p33) target = $region8
    $region5: #{tpu_custom_call.1} parent=1 // loop_body
      %s37 = ssub.s32 %s32, 1
      %s38 = ssub.s32 %s32, 2
      %s45 = sadd.s32 1, %s40
      %p46 = scmp.ge.s32.totalorder %s45, 4
      %s47 = scalar_select %p46, 0, %s45
      %s48 = sadd.s32 1, %s39
      %s49 = scalar_select %p46, %s48, %s39
      %p50 = scmp.ge.s32.totalorder %s49, 2
      %s51 = scalar_select %p50, 0, %s49
      %s52 = ssub.s32 %s39, %s51
      %p53 = scmp.eq.s32.totalorder %s52, 0
      %s55 = sadd.s32 %s54, 1
      %s56 = scalar_select %p53, %s54, %s55
      %p59 = pneg %p53
      %p60 = scmp.eq.s32.totalorder %s32, 7
      %p61 = por %p59, %p60
      %p62 = scmp.ne.s32.totalorder %s54, %s57
      %p63 = scmp.eq.s32.totalorder %s32, 0
      %p64 = por %p62, %p63
      %p65 = scmp.ne.s32.totalorder %s54, %s57
      %p66 = scmp.eq.s32.totalorder %s37, 7
      %p67 = por %p65, %p66
      %p68 = scmp.ne.s32.totalorder %s57, %s58
      %p69 = scmp.eq.s32.totalorder %s37, 0
      %p70 = por %p68, %p69
      %p71 = scmp.ne.s32.totalorder %s57, %s58
      %p72 = scmp.eq.s32.totalorder %s38, 7
      %p73 = por %p71, %p72
      %p75 = scmp.ne.s32.totalorder %s58, %s74
      %p76 = scmp.eq.s32.totalorder %s38, 0
      %p77 = por %p75, %p76
      %s79 = sadd.s32 %s78, 1
      %p82 = scmp.eq.s32.totalorder %s32, 7
      %p83 = scmp.ne.s32.totalorder %s78, %s80
      %p84 = scmp.eq.s32.totalorder %s32, 0
      %p85 = por %p83, %p84
      %p86 = scmp.ne.s32.totalorder %s78, %s80
      %p87 = scmp.eq.s32.totalorder %s37, 7
      %p88 = por %p86, %p87
      %p89 = scmp.ne.s32.totalorder %s80, %s81
      %p90 = scmp.eq.s32.totalorder %s37, 0
      %p91 = por %p89, %p90
      %p92 = scmp.ne.s32.totalorder %s80, %s81
      %p93 = scmp.eq.s32.totalorder %s38, 7
      %p94 = por %p92, %p93
      %p96 = scmp.ne.s32.totalorder %s81, %s95
      %p97 = scmp.eq.s32.totalorder %s38, 0
      %p98 = por %p96, %p97
      %s100 = sadd.s32 %s99, 1
      %p103 = scmp.eq.s32.totalorder %s32, 7
      %p104 = scmp.ne.s32.totalorder %s99, %s101
      %p105 = scmp.eq.s32.totalorder %s32, 0
      %p106 = por %p104, %p105
      %p107 = scmp.ne.s32.totalorder %s99, %s101
      %p108 = scmp.eq.s32.totalorder %s37, 7
      %p109 = por %p107, %p108
      %p110 = scmp.ne.s32.totalorder %s101, %s102
      %p111 = scmp.eq.s32.totalorder %s37, 0
      %p112 = por %p110, %p111
      %p113 = scmp.ne.s32.totalorder %s101, %s102
      %p114 = scmp.eq.s32.totalorder %s38, 7
      %p115 = por %p113, %p114
      %p117 = scmp.ne.s32.totalorder %s102, %s116
      %p118 = scmp.eq.s32.totalorder %s38, 0
      %p119 = por %p117, %p118
      %p120 = scmp.lt.s32.totalorder %s40, 1
      %s121 = scalar_select %p120, %s40, 1
      %p122 = scmp.lt.s32.totalorder %s47, 1
      %s123 = scalar_select %p122, %s47, 1
      %s124 = ssub.s32 %s39, %s51
      %s125 = ssub.s32 %s121, %s123
      %s126 = sor.u32 %s124, %s125
      %p127 = scmp.eq.s32.totalorder %s126, 0
      %s129 = sadd.s32 %s128, 1
      %s130 = scalar_select %p127, %s128, %s129
      %p133 = pneg %p127
      %p134 = scmp.eq.s32.totalorder %s32, 7
      %p135 = por %p133, %p134
      %p136 = scmp.ne.s32.totalorder %s128, %s131
      %p137 = scmp.eq.s32.totalorder %s32, 0
      %p138 = por %p136, %p137
      %p139 = scmp.ne.s32.totalorder %s128, %s131
      %p140 = scmp.eq.s32.totalorder %s37, 7
      %p141 = por %p139, %p140
      %p142 = scmp.ne.s32.totalorder %s131, %s132
      %p143 = scmp.eq.s32.totalorder %s37, 0
      %p144 = por %p142, %p143
      %p145 = scmp.ne.s32.totalorder %s131, %s132
      %p146 = scmp.eq.s32.totalorder %s38, 7
      %p147 = por %p145, %p146
      %p149 = scmp.ne.s32.totalorder %s132, %s148
      %p150 = scmp.eq.s32.totalorder %s38, 0
      %p151 = por %p149, %p150
      %p152 = scmp.lt.s32.totalorder %s40, 1
      %s153 = scalar_select %p152, %s40, 1
      %p154 = scmp.lt.s32.totalorder %s47, 1
      %s155 = scalar_select %p154, %s47, 1
      %s156 = ssub.s32 %s39, %s51
      %s157 = ssub.s32 %s153, %s155
      %s158 = sor.u32 %s156, %s157
      %p159 = scmp.eq.s32.totalorder %s158, 0
      %s161 = sadd.s32 %s160, 1
      %s162 = scalar_select %p159, %s160, %s161
      %p165 = pneg %p159
      %p166 = scmp.eq.s32.totalorder %s32, 7
      %p167 = por %p165, %p166
      %p168 = scmp.ne.s32.totalorder %s160, %s163
      %p169 = scmp.eq.s32.totalorder %s32, 0
      %p170 = por %p168, %p169
      %p171 = scmp.ne.s32.totalorder %s160, %s163
      %p172 = scmp.eq.s32.totalorder %s37, 7
      %p173 = por %p171, %p172
      %p174 = scmp.ne.s32.totalorder %s163, %s164
      %p175 = scmp.eq.s32.totalorder %s37, 0
      %p176 = por %p174, %p175
      %p177 = scmp.ne.s32.totalorder %s163, %s164
      %p178 = scmp.eq.s32.totalorder %s38, 7
      %p179 = por %p177, %p178
      %p181 = scmp.ne.s32.totalorder %s164, %s180
      %p182 = scmp.eq.s32.totalorder %s38, 0
      %p183 = por %p181, %p182
      %p184 = scmp.lt.s32.totalorder %s40, 1
      %s185 = scalar_select %p184, %s40, 1
      %p186 = scmp.lt.s32.totalorder %s47, 1
      %s187 = scalar_select %p186, %s47, 1
      %s188 = ssub.s32 %s185, %s187
      %p189 = scmp.eq.s32.totalorder %s188, 0
      %s191 = sadd.s32 %s190, 1
      %s192 = scalar_select %p189, %s190, %s191
      %p195 = pneg %p189
      %p196 = scmp.eq.s32.totalorder %s32, 7
      %p197 = por %p195, %p196
      %p198 = scmp.ne.s32.totalorder %s190, %s193
      %p199 = scmp.eq.s32.totalorder %s32, 0
      %p200 = por %p198, %p199
      %p201 = scmp.ne.s32.totalorder %s190, %s193
      %p202 = scmp.eq.s32.totalorder %s37, 7
      %p203 = por %p201, %p202
      %p204 = scmp.ne.s32.totalorder %s193, %s194
      %p205 = scmp.eq.s32.totalorder %s37, 0
      %p206 = por %p204, %p205
      %p207 = scmp.ne.s32.totalorder %s193, %s194
      %p208 = scmp.eq.s32.totalorder %s38, 7
      %p209 = por %p207, %p208
      %p211 = scmp.ne.s32.totalorder %s194, %s210
      %p212 = scmp.eq.s32.totalorder %s38, 0
      %p213 = por %p211, %p212
      %s215 = sadd.s32 %s214, 1
      %p218 = scmp.eq.s32.totalorder %s32, 7
      %p219 = scmp.ne.s32.totalorder %s214, %s216
      %p220 = scmp.eq.s32.totalorder %s32, 0
      %p221 = por %p219, %p220
      %p222 = scmp.ne.s32.totalorder %s214, %s216
      %p223 = scmp.eq.s32.totalorder %s37, 7
      %p224 = por %p222, %p223
      %p225 = scmp.ne.s32.totalorder %s216, %s217
      %p226 = scmp.eq.s32.totalorder %s37, 0
      %p227 = por %p225, %p226
      %p228 = scmp.ne.s32.totalorder %s216, %s217
      %p229 = scmp.eq.s32.totalorder %s38, 7
      %p230 = por %p228, %p229
      %p232 = scmp.ne.s32.totalorder %s217, %s231
      %p233 = scmp.eq.s32.totalorder %s38, 0
      %p234 = por %p232, %p233
      %s236 = sadd.s32 %s235, 1
      %p239 = scmp.eq.s32.totalorder %s32, 7
      %p240 = scmp.ne.s32.totalorder %s235, %s237
      %p241 = scmp.eq.s32.totalorder %s32, 0
      %p242 = por %p240, %p241
      %p243 = scmp.ne.s32.totalorder %s235, %s237
      %p244 = scmp.eq.s32.totalorder %s37, 7
      %p245 = por %p243, %p244
      %p246 = scmp.ne.s32.totalorder %s237, %s238
      %p247 = scmp.eq.s32.totalorder %s37, 0
      %p248 = por %p246, %p247
      %p249 = scmp.ne.s32.totalorder %s237, %s238
      %p250 = scmp.eq.s32.totalorder %s38, 7
      %p251 = por %p249, %p250
      %p253 = scmp.ne.s32.totalorder %s238, %s252
      %p254 = scmp.eq.s32.totalorder %s38, 0
      %p255 = por %p253, %p254
      %s256 = ssub.s32 %s40, 2
      %p257 = scmp.gt.s32.totalorder %s256, 0
      %s258 = scalar_select %p257, %s256, 0
      %s259 = ssub.s32 %s47, 2
      %p260 = scmp.gt.s32.totalorder %s259, 0
      %s261 = scalar_select %p260, %s259, 0
      %s262 = ssub.s32 %s258, %s261
      %p263 = scmp.eq.s32.totalorder %s262, 0
      %s265 = sadd.s32 %s264, 1
      %s266 = scalar_select %p263, %s264, %s265
      %p269 = pneg %p263
      %p270 = scmp.eq.s32.totalorder %s32, 7
      %p271 = por %p269, %p270
      %p272 = scmp.ne.s32.totalorder %s264, %s267
      %p273 = scmp.eq.s32.totalorder %s32, 0
      %p274 = por %p272, %p273
      %p275 = scmp.ne.s32.totalorder %s264, %s267
      %p276 = scmp.eq.s32.totalorder %s37, 7
      %p277 = por %p275, %p276
      %p278 = scmp.ne.s32.totalorder %s267, %s268
      %p279 = scmp.eq.s32.totalorder %s37, 0
      %p280 = por %p278, %p279
      %p281 = scmp.ne.s32.totalorder %s267, %s268
      %p282 = scmp.eq.s32.totalorder %s38, 7
      %p283 = por %p281, %p282
      %p285 = scmp.ne.s32.totalorder %s268, %s284
      %p286 = scmp.eq.s32.totalorder %s38, 0
      %p287 = por %p285, %p286
      %s288 = ssub.s32 %s40, 2
      %p289 = scmp.gt.s32.totalorder %s288, 0
      %s290 = scalar_select %p289, %s288, 0
      %s291 = ssub.s32 %s47, 2
      %p292 = scmp.gt.s32.totalorder %s291, 0
      %s293 = scalar_select %p292, %s291, 0
      %s294 = ssub.s32 %s290, %s293
      %p295 = scmp.eq.s32.totalorder %s294, 0
      %s297 = sadd.s32 %s296, 1
      %s298 = scalar_select %p295, %s296, %s297
      %p301 = pneg %p295
      %p302 = scmp.eq.s32.totalorder %s32, 7
      %p303 = por %p301, %p302
      %p304 = scmp.ne.s32.totalorder %s296, %s299
      %p305 = scmp.eq.s32.totalorder %s32, 0
      %p306 = por %p304, %p305
      %p307 = scmp.ne.s32.totalorder %s296, %s299
      %p308 = scmp.eq.s32.totalorder %s37, 7
      %p309 = por %p307, %p308
      %p310 = scmp.ne.s32.totalorder %s299, %s300
      %p311 = scmp.eq.s32.totalorder %s37, 0
      %p312 = por %p310, %p311
      %p313 = scmp.ne.s32.totalorder %s299, %s300
      %p314 = scmp.eq.s32.totalorder %s38, 7
      %p315 = por %p313, %p314
      %p317 = scmp.ne.s32.totalorder %s300, %s316
      %p318 = scmp.eq.s32.totalorder %s38, 0
      %p319 = por %p317, %p318
      %s321 = sadd.s32 %s320, 1
      %p324 = scmp.eq.s32.totalorder %s32, 7
      %p325 = scmp.ne.s32.totalorder %s320, %s322
      %p326 = scmp.eq.s32.totalorder %s32, 0
      %p327 = por %p325, %p326
      %p328 = scmp.ne.s32.totalorder %s320, %s322
      %p329 = scmp.eq.s32.totalorder %s37, 7
      %p330 = por %p328, %p329
      %p331 = scmp.ne.s32.totalorder %s322, %s323
      %p332 = scmp.eq.s32.totalorder %s37, 0
      %p333 = por %p331, %p332
      %p334 = scmp.ne.s32.totalorder %s322, %s323
      %p335 = scmp.eq.s32.totalorder %s38, 7
      %p336 = por %p334, %p335
      %p338 = scmp.ne.s32.totalorder %s323, %s337
      %p339 = scmp.eq.s32.totalorder %s38, 0
      %p340 = por %p338, %p339
      %s342 = sadd.s32 %s341, 1
      %p345 = scmp.eq.s32.totalorder %s32, 7
      %p346 = scmp.ne.s32.totalorder %s341, %s343
      %p347 = scmp.eq.s32.totalorder %s32, 0
      %p348 = por %p346, %p347
      %p349 = scmp.ne.s32.totalorder %s341, %s343
      %p350 = scmp.eq.s32.totalorder %s37, 7
      %p351 = por %p349, %p350
      %p352 = scmp.ne.s32.totalorder %s343, %s344
      %p353 = scmp.eq.s32.totalorder %s37, 0
      %p354 = por %p352, %p353
      %p355 = scmp.ne.s32.totalorder %s343, %s344
      %p356 = scmp.eq.s32.totalorder %s38, 7
      %p357 = por %p355, %p356
      %p359 = scmp.ne.s32.totalorder %s344, %s358
      %p360 = scmp.eq.s32.totalorder %s38, 0
      %p361 = por %p359, %p360
      %s362 = ssub.s32 %s39, %s51
      %p363 = scmp.eq.s32.totalorder %s362, 0
      %s365 = sadd.s32 %s364, 1
      %s366 = scalar_select %p363, %s364, %s365
      %p369 = pneg %p363
      %p370 = scmp.eq.s32.totalorder %s32, 7
      %p371 = por %p369, %p370
      %p372 = scmp.ne.s32.totalorder %s364, %s367
      %p373 = scmp.eq.s32.totalorder %s32, 0
      %p374 = por %p372, %p373
      %p375 = scmp.ne.s32.totalorder %s364, %s367
      %p376 = scmp.eq.s32.totalorder %s37, 7
      %p377 = por %p375, %p376
      %p378 = scmp.ne.s32.totalorder %s367, %s368
      %p379 = scmp.eq.s32.totalorder %s37, 0
      %p380 = por %p378, %p379
      %p381 = scmp.ne.s32.totalorder %s367, %s368
      %p382 = scmp.eq.s32.totalorder %s38, 7
      %p383 = por %p381, %p382
      %p385 = scmp.ne.s32.totalorder %s368, %s384
      %p386 = scmp.eq.s32.totalorder %s38, 0
      %p387 = por %p385, %p386
      %p388 = scmp.le.s32.totalorder 1, %s32
      %p389 = scmp.lt.s32.totalorder %s32, 9
      %p390 = pnand %p388, %p389
      %p391 = pneg %p390
      // Predicated region
      $region9: #{tpu_custom_call.1} parent=5 // pred_check
        _
      $region10: #{tpu_custom_call.1} parent=5 // pred_check_branch
        %393 = sbr.rel (%p390) target = $region12
      $region11: #{tpu_custom_call.1} parent=5 // pred_region
        %s394 = ssub.s32 %s32, 1
        // Predicated region
        $region13: #{tpu_custom_call.1} parent=11 // pred_check
          %p395 = pneg %p91
        $region14: #{tpu_custom_call.1} parent=11 // pred_check_branch
          %397 = sbr.rel (%p395) target = $region16
        $region15: #{tpu_custom_call.1} parent=11 // pred_region
          %s399 = ssub.s32 128, 128
          %400 = vsyncadd [#allocation11], %s399
          %s402 = sshll.u32 [#allocation10], 4
          %s403 = int_to_ptr.vmem [resolvable:$true] %s402
          %405 = dma.hbm_to_vmem [thread:$0]  %s1, 128, %s403, [#allocation11]
        $region16: #{tpu_custom_call.1} parent=11 // pred_fallthru
          _
        // Predicated region
        $region17: #{tpu_custom_call.1} parent=11 // pred_check
          %p406 = pneg %p112
        $region18: #{tpu_custom_call.1} parent=11 // pred_check_branch
          %408 = sbr.rel (%p406) target = $region20
        $region19: #{tpu_custom_call.1} parent=11 // pred_region
          %s410 = ssub.s32 128, 128
          %411 = vsyncadd [#allocation11], %s410
          %s413 = sshll.u32 [#allocation12], 4
          %s414 = int_to_ptr.vmem [resolvable:$true] %s413
          %416 = dma.hbm_to_vmem [thread:$0]  %s2, 128, %s414, [#allocation11]
        $region20: #{tpu_custom_call.1} parent=11 // pred_fallthru
          _
        // Predicated region
        $region21: #{tpu_custom_call.1} parent=11 // pred_check
          %p417 = pneg %p227
        $region22: #{tpu_custom_call.1} parent=11 // pred_check_branch
          %419 = sbr.rel (%p417) target = $region24
        $region23: #{tpu_custom_call.1} parent=11 // pred_region
          %s421 = ssub.s32 2048, 2048
          %422 = vsyncadd [#allocation17], %s421
          %s423 = sshll.u32 [#allocation18], 4
          %s424 = int_to_ptr.vmem [resolvable:$true] %s423
          %429 = dma.hbm_to_vmem [thread:$0]  %s6, 2048, %s424, [#allocation17], 64, 64, 4
        $region24: #{tpu_custom_call.1} parent=11 // pred_fallthru
          _
        // Predicated region
        $region25: #{tpu_custom_call.1} parent=11 // pred_check
          %p430 = pneg %p248
        $region26: #{tpu_custom_call.1} parent=11 // pred_check_branch
          %432 = sbr.rel (%p430) target = $region28
        $region27: #{tpu_custom_call.1} parent=11 // pred_region
          %s434 = ssub.s32 1024, 1024
          %435 = vsyncadd [#allocation20], %s434
          %s436 = sshll.u32 [#allocation19], 4
          %s437 = int_to_ptr.vmem [resolvable:$true] %s436
          %442 = dma.hbm_to_vmem [thread:$0]  %s7, 1024, %s437, [#allocation20], 64, 64, 4
        $region28: #{tpu_custom_call.1} parent=11 // pred_fallthru
          _
        // Predicated region
        $region29: #{tpu_custom_call.1} parent=11 // pred_check
          %p443 = pneg %p333
        $region30: #{tpu_custom_call.1} parent=11 // pred_check_branch
          %445 = sbr.rel (%p443) target = $region32
        $region31: #{tpu_custom_call.1} parent=11 // pred_region
          %s447 = ssub.s32 16, 16
          %448 = vsyncadd [#allocation17], %s447
          %s450 = sshll.u32 [#allocation23], 4
          %s451 = int_to_ptr.vmem [resolvable:$true] %s450
          %453 = dma.hbm_to_vmem [thread:$0]  %s10, 16, %s451, [#allocation17]
        $region32: #{tpu_custom_call.1} parent=11 // pred_fallthru
          _
        // Predicated region
        $region33: #{tpu_custom_call.1} parent=11 // pred_check
          %p454 = pneg %p354
        $region34: #{tpu_custom_call.1} parent=11 // pred_check_branch
          %456 = sbr.rel (%p454) target = $region36
        $region35: #{tpu_custom_call.1} parent=11 // pred_region
          %s458 = ssub.s32 16, 16
          %459 = vsyncadd [#allocation20], %s458
          %s461 = sshll.u32 [#allocation24], 4
          %s462 = int_to_ptr.vmem [resolvable:$true] %s461
          %464 = dma.hbm_to_vmem [thread:$0]  %s11, 16, %s462, [#allocation20]
        $region36: #{tpu_custom_call.1} parent=11 // pred_fallthru
          _
      $region12: #{tpu_custom_call.1} parent=5 // pred_fallthru
        _
      %p465 = scmp.lt.s32.totalorder %s32, 8
      // Predicated region
      $region37: #{tpu_custom_call.1} parent=5 // pred_check
        %p466 = pneg %p465
      $region38: #{tpu_custom_call.1} parent=5 // pred_check_branch
        %468 = sbr.rel (%p466) target = $region40
      $region39: #{tpu_custom_call.1} parent=5 // pred_region
        // Predicated region
        $region41: #{tpu_custom_call.1} parent=39 // pred_check
          %p469 = pneg %p64
        $region42: #{tpu_custom_call.1} parent=39 // pred_check_branch
          %471 = sbr.rel (%p469) target = $region44
        $region43: #{tpu_custom_call.1} parent=39 // pred_region
          %s472 = sand.u32 %s32, 1
          %s473 = scalar_lea.sflag [#allocation8], %s472
          %s474 = sand.u32 %s54, 1
          %s475 = smul.addr %s474, 8
          %s476 = scalar_lea.vmem [#allocation7], %s475
          %s478 = ssub.s32 128, 128
          %479 = vsyncadd %s473, %s478
          %s480 = smul.addr %s39, 128
          %s481 = scalar_lea.hbm %s0, %s480
          %s483 = sshll.u32 %s476, 4
          %s484 = int_to_ptr.vmem [resolvable:$true] %s483
          %486 = dma.hbm_to_vmem [thread:$0]  %s481, 128, %s484, %s473
        $region44: #{tpu_custom_call.1} parent=39 // pred_fallthru
          _
        // Predicated region
        $region45: #{tpu_custom_call.1} parent=39 // pred_check
          %p487 = pneg %p138
        $region46: #{tpu_custom_call.1} parent=39 // pred_check_branch
          %489 = sbr.rel (%p487) target = $region48
        $region47: #{tpu_custom_call.1} parent=39 // pred_region
          %s490 = sand.u32 %s32, 1
          %s491 = scalar_lea.sflag [#allocation14], %s490
          %s492 = sand.u32 %s128, 1
          %s493 = smul.addr %s492, 64
          %s494 = scalar_lea.vmem [#allocation13], %s493
          %p495 = scmp.lt.s32.totalorder %s40, 1
          %s496 = scalar_select %p495, %s40, 1
          %s497 = smul.u32 16, %s496
          %s499 = ssub.s32 1024, 1024
          %500 = vsyncadd %s491, %s499
          %s501 = smul.addr %s39, 32
          %s502 = sadd.s32 %s497, %s501
          %s503 = smul.addr %s502, 64
          %s504 = scalar_lea.hbm %s3, %s503
          %s505 = sshll.u32 %s494, 4
          %s506 = int_to_ptr.vmem [resolvable:$true] %s505
          %511 = dma.hbm_to_vmem [thread:$0]  %s504, 1024, %s506, %s491, 64, 64, 4
        $region48: #{tpu_custom_call.1} parent=39 // pred_fallthru
          _
        // Predicated region
        $region49: #{tpu_custom_call.1} parent=39 // pred_check
          %p512 = pneg %p170
        $region50: #{tpu_custom_call.1} parent=39 // pred_check_branch
          %514 = sbr.rel (%p512) target = $region52
        $region51: #{tpu_custom_call.1} parent=39 // pred_region
          %s515 = sand.u32 %s32, 1
          %s516 = scalar_lea.sflag [#allocation14], %s515
          %s517 = sand.u32 %s160, 1
          %s518 = smul.addr %s517, 64
          %s519 = scalar_lea.vmem [#allocation15], %s518
          %p520 = scmp.lt.s32.totalorder %s40, 1
          %s521 = scalar_select %p520, %s40, 1
          %s522 = smul.u32 16, %s521
          %s524 = ssub.s32 1024, 1024
          %525 = vsyncadd %s516, %s524
          %s526 = smul.addr %s39, 32
          %s527 = sadd.s32 %s522, %s526
          %s528 = smul.addr %s527, 64
          %s529 = scalar_lea.hbm %s4, %s528
          %s530 = sshll.u32 %s519, 4
          %s531 = int_to_ptr.vmem [resolvable:$true] %s530
          %536 = dma.hbm_to_vmem [thread:$0]  %s529, 1024, %s531, %s516, 64, 64, 4
        $region52: #{tpu_custom_call.1} parent=39 // pred_fallthru
          _
        // Predicated region
        $region53: #{tpu_custom_call.1} parent=39 // pred_check
          %p537 = pneg %p200
        $region54: #{tpu_custom_call.1} parent=39 // pred_check_branch
          %539 = sbr.rel (%p537) target = $region56
        $region55: #{tpu_custom_call.1} parent=39 // pred_region
          %s540 = sand.u32 %s32, 1
          %s541 = scalar_lea.sflag [#allocation17], %s540
          %s542 = sand.u32 %s190, 1
          %s543 = smul.addr %s542, 8
          %s544 = scalar_lea.vmem [#allocation16], %s543
          %p545 = scmp.lt.s32.totalorder %s40, 1
          %s546 = scalar_select %p545, %s40, 1
          %s548 = ssub.s32 128, 128
          %549 = vsyncadd %s541, %s548
          %s550 = smul.addr %s546, 128
          %s551 = scalar_lea.hbm %s5, %s550
          %s553 = sshll.u32 %s544, 4
          %s554 = int_to_ptr.vmem [resolvable:$true] %s553
          %556 = dma.hbm_to_vmem [thread:$0]  %s551, 128, %s554, %s541
        $region56: #{tpu_custom_call.1} parent=39 // pred_fallthru
          _
        // Predicated region
        $region57: #{tpu_custom_call.1} parent=39 // pred_check
          %p557 = pneg %p274
        $region58: #{tpu_custom_call.1} parent=39 // pred_check_branch
          %559 = sbr.rel (%p557) target = $region60
        $region59: #{tpu_custom_call.1} parent=39 // pred_region
          #allocation27 [shape = 'u32[6]{0}', space=smem, size = 0x18, scoped, tag = 'DMA stride descriptor']
          %s560 = sand.u32 %s32, 1
          %s561 = scalar_lea.sflag [#allocation8], %s560
          %s562 = sand.u32 %s264, 1
          %s563 = smul.addr %s562, 128
          %s564 = scalar_lea.vmem [#allocation21], %s563
          %s565 = ssub.s32 %s40, 2
          %p566 = scmp.gt.s32.totalorder %s565, 0
          %s567 = scalar_select %p566, %s565, 0
          %s568 = smul.u32 16, %s567
          %s570 = ssub.s32 2048, 2048
          %571 = vsyncadd %s561, %s570
          %s572 = smul.addr %s568, 64
          %s573 = scalar_lea.hbm %s8, %s572
          %s575 = sshll.u32 1, 14
          %s576 = sxor.u32 4294967295, %s575
          %s578 = sld [smem:[#allocation0]]
          %s579 = sadd.s32 2, %s578
          %s581 = sshll.u32 7, 26
          %s582 = sxor.u32 4294967295, %s581
          %s583 = sand.u32 0, %s582
          %s584 = sshll.u32 %s579, 26
          %s585 = sor.u32 %s583, %s584
          %s586 = sshll.u32 %s564, 4
          %s587 = int_to_ptr.vmem [resolvable:$true] %s586
          %593 = sst [smem:[#allocation27]] 2048
          %s594 = scalar_lea.smem [#allocation27], 1
          %595 = sst [smem:[%s594]] 1024
          %s596 = scalar_lea.smem [#allocation27], 2
          %597 = sst [smem:[%s596]] 16
          %s598 = scalar_lea.smem [#allocation27], 3
          %599 = sst [smem:[%s598]] 64
          %s600 = scalar_lea.smem [#allocation27], 4
          %601 = sst [smem:[%s600]] 64
          %s602 = scalar_lea.smem [#allocation27], 5
          %603 = sst [smem:[%s602]] 4
          %605 = dma.general %s573, 2048, %s587, %s561, [#allocation26], [#allocation27], %s585, 0
        $region60: #{tpu_custom_call.1} parent=39 // pred_fallthru
          _
        // Predicated region
        $region61: #{tpu_custom_call.1} parent=39 // pred_check
          %p606 = pneg %p306
        $region62: #{tpu_custom_call.1} parent=39 // pred_check_branch
          %608 = sbr.rel (%p606) target = $region64
        $region63: #{tpu_custom_call.1} parent=39 // pred_region
          %s609 = sand.u32 %s32, 1
          %s610 = scalar_lea.sflag [#allocation14], %s609
          %s611 = sand.u32 %s296, 1
          %s612 = smul.addr %s611, 64
          %s613 = scalar_lea.vmem [#allocation22], %s612
          %s614 = ssub.s32 %s40, 2
          %p615 = scmp.gt.s32.totalorder %s614, 0
          %s616 = scalar_select %p615, %s614, 0
          %s618 = ssub.s32 1024, 1024
          %619 = vsyncadd %s610, %s618
          %s620 = smul.addr %s616, 64
          %s621 = scalar_lea.hbm %s9, %s620
          %s622 = sshll.u32 %s613, 4
          %s623 = int_to_ptr.vmem [resolvable:$true] %s622
          %628 = dma.hbm_to_vmem [thread:$0]  %s621, 1024, %s623, %s610, 128, 64, 4
        $region64: #{tpu_custom_call.1} parent=39 // pred_fallthru
          _
      $region40: #{tpu_custom_call.1} parent=5 // pred_fallthru
        _
      %p629 = scmp.le.s32.totalorder 1, %s32
      %p630 = scmp.lt.s32.totalorder %s32, 9
      %p631 = pnand %p629, %p630
      %p632 = pneg %p631
      // Predicated region
      $region65: #{tpu_custom_call.1} parent=5 // pred_check
        _
      $region66: #{tpu_custom_call.1} parent=5 // pred_check_branch
        %634 = sbr.rel (%p631) target = $region68
      $region67: #{tpu_custom_call.1} parent=5 // pred_region
        %s635 = ssub.s32 %s32, 1
        %s636 = sand.u32 %s37, 1
        %s637 = scalar_lea.sflag [#allocation8], %s636
        %s638 = sand.u32 %s57, 1
        %s639 = smul.addr %s638, 8
        %s640 = scalar_lea.vmem [#allocation7], %s639
        // Predicated region
        $region69: #{tpu_custom_call.1} parent=67 // pred_check
          %p641 = pneg %p70
        $region70: #{tpu_custom_call.1} parent=67 // pred_check_branch
          %643 = sbr.rel (%p641) target = $region72
        $region71: #{tpu_custom_call.1} parent=67 // pred_region
          %644 = dma.done %s637, 128
        $region72: #{tpu_custom_call.1} parent=67 // pred_fallthru
          _
        // Predicated region
        $region73: #{tpu_custom_call.1} parent=67 // pred_check
          %p645 = pneg %p91
        $region74: #{tpu_custom_call.1} parent=67 // pred_check_branch
          %647 = sbr.rel (%p645) target = $region76
        $region75: #{tpu_custom_call.1} parent=67 // pred_region
          %648 = dma.done [#allocation11], 128
        $region76: #{tpu_custom_call.1} parent=67 // pred_fallthru
          _
        // Predicated region
        $region77: #{tpu_custom_call.1} parent=67 // pred_check
          %p649 = pneg %p112
        $region78: #{tpu_custom_call.1} parent=67 // pred_check_branch
          %651 = sbr.rel (%p649) target = $region80
        $region79: #{tpu_custom_call.1} parent=67 // pred_region
          %652 = dma.done [#allocation11], 128
        $region80: #{tpu_custom_call.1} parent=67 // pred_fallthru
          _
        %s653 = sand.u32 %s37, 1
        %s654 = scalar_lea.sflag [#allocation14], %s653
        %s655 = sand.u32 %s131, 1
        %s656 = smul.addr %s655, 64
        %s657 = scalar_lea.vmem [#allocation13], %s656
        // Predicated region
        $region81: #{tpu_custom_call.1} parent=67 // pred_check
          %p658 = pneg %p144
        $region82: #{tpu_custom_call.1} parent=67 // pred_check_branch
          %660 = sbr.rel (%p658) target = $region84
        $region83: #{tpu_custom_call.1} parent=67 // pred_region
          %661 = dma.done %s654, 1024
        $region84: #{tpu_custom_call.1} parent=67 // pred_fallthru
          _
        %s662 = sand.u32 %s37, 1
        %s663 = scalar_lea.sflag [#allocation14], %s662
        %s664 = sand.u32 %s163, 1
        %s665 = smul.addr %s664, 64
        %s666 = scalar_lea.vmem [#allocation15], %s665
        // Predicated region
        $region85: #{tpu_custom_call.1} parent=67 // pred_check
          %p667 = pneg %p176
        $region86: #{tpu_custom_call.1} parent=67 // pred_check_branch
          %669 = sbr.rel (%p667) target = $region88
        $region87: #{tpu_custom_call.1} parent=67 // pred_region
          %670 = dma.done %s663, 1024
        $region88: #{tpu_custom_call.1} parent=67 // pred_fallthru
          _
        %s671 = sand.u32 %s37, 1
        %s672 = scalar_lea.sflag [#allocation17], %s671
        %s673 = sand.u32 %s193, 1
        %s674 = smul.addr %s673, 8
        %s675 = scalar_lea.vmem [#allocation16], %s674
        // Predicated region
        $region89: #{tpu_custom_call.1} parent=67 // pred_check
          %p676 = pneg %p206
        $region90: #{tpu_custom_call.1} parent=67 // pred_check_branch
          %678 = sbr.rel (%p676) target = $region92
        $region91: #{tpu_custom_call.1} parent=67 // pred_region
          %679 = dma.done %s672, 128
        $region92: #{tpu_custom_call.1} parent=67 // pred_fallthru
          _
        // Predicated region
        $region93: #{tpu_custom_call.1} parent=67 // pred_check
          %p680 = pneg %p227
        $region94: #{tpu_custom_call.1} parent=67 // pred_check_branch
          %682 = sbr.rel (%p680) target = $region96
        $region95: #{tpu_custom_call.1} parent=67 // pred_region
          %683 = dma.done [#allocation17], 2048
        $region96: #{tpu_custom_call.1} parent=67 // pred_fallthru
          _
        // Predicated region
        $region97: #{tpu_custom_call.1} parent=67 // pred_check
          %p684 = pneg %p248
        $region98: #{tpu_custom_call.1} parent=67 // pred_check_branch
          %686 = sbr.rel (%p684) target = $region100
        $region99: #{tpu_custom_call.1} parent=67 // pred_region
          %687 = dma.done [#allocation20], 1024
        $region100: #{tpu_custom_call.1} parent=67 // pred_fallthru
          _
        %s688 = sand.u32 %s37, 1
        %s689 = scalar_lea.sflag [#allocation8], %s688
        %s690 = sand.u32 %s267, 1
        %s691 = smul.addr %s690, 128
        %s692 = scalar_lea.vmem [#allocation21], %s691
        // Predicated region
        $region101: #{tpu_custom_call.1} parent=67 // pred_check
          %p693 = pneg %p280
        $region102: #{tpu_custom_call.1} parent=67 // pred_check_branch
          %695 = sbr.rel (%p693) target = $region104
        $region103: #{tpu_custom_call.1} parent=67 // pred_region
          %696 = dma.done %s689, 2048
        $region104: #{tpu_custom_call.1} parent=67 // pred_fallthru
          _
        %s697 = sand.u32 %s37, 1
        %s698 = scalar_lea.sflag [#allocation14], %s697
        %s699 = sand.u32 %s299, 1
        %s700 = smul.addr %s699, 64
        %s701 = scalar_lea.vmem [#allocation22], %s700
        // Predicated region
        $region105: #{tpu_custom_call.1} parent=67 // pred_check
          %p702 = pneg %p312
        $region106: #{tpu_custom_call.1} parent=67 // pred_check_branch
          %704 = sbr.rel (%p702) target = $region108
        $region107: #{tpu_custom_call.1} parent=67 // pred_region
          %705 = dma.done %s698, 1024
        $region108: #{tpu_custom_call.1} parent=67 // pred_fallthru
          _
        // Predicated region
        $region109: #{tpu_custom_call.1} parent=67 // pred_check
          %p706 = pneg %p333
        $region110: #{tpu_custom_call.1} parent=67 // pred_check_branch
          %708 = sbr.rel (%p706) target = $region112
        $region111: #{tpu_custom_call.1} parent=67 // pred_region
          %709 = dma.done [#allocation17], 16
        $region112: #{tpu_custom_call.1} parent=67 // pred_fallthru
          _
        // Predicated region
        $region113: #{tpu_custom_call.1} parent=67 // pred_check
          %p710 = pneg %p354
        $region114: #{tpu_custom_call.1} parent=67 // pred_check_branch
          %712 = sbr.rel (%p710) target = $region116
        $region115: #{tpu_custom_call.1} parent=67 // pred_region
          %713 = dma.done [#allocation20], 16
        $region116: #{tpu_custom_call.1} parent=67 // pred_fallthru
          _
        %s714 = sand.u32 %s37, 1
        %s715 = scalar_lea.sflag [#allocation8], %s714
        %s716 = sand.u32 %s57, 1
        %s717 = smul.addr %s716, 8
        %s718 = scalar_lea.vmem [#allocation7], %s717
        %p719 = pneg %p70
        %p720 = pneg %p67
        %p721 = pneg %p91
        %p722 = pneg %p88
        %p723 = pneg %p112
        %p724 = pneg %p109
        %s725 = sand.u32 %s37, 1
        %s726 = scalar_lea.sflag [#allocation14], %s725
        %s727 = sand.u32 %s131, 1
        %s728 = smul.addr %s727, 64
        %s729 = scalar_lea.vmem [#allocation13], %s728
        %p730 = pneg %p144
        %p731 = pneg %p141
        %s732 = sand.u32 %s37, 1
        %s733 = scalar_lea.sflag [#allocation14], %s732
        %s734 = sand.u32 %s163, 1
        %s735 = smul.addr %s734, 64
        %s736 = scalar_lea.vmem [#allocation15], %s735
        %p737 = pneg %p176
        %p738 = pneg %p173
        %s739 = sand.u32 %s37, 1
        %s740 = scalar_lea.sflag [#allocation17], %s739
        %s741 = sand.u32 %s193, 1
        %s742 = smul.addr %s741, 8
        %s743 = scalar_lea.vmem [#allocation16], %s742
        %p744 = pneg %p206
        %p745 = pneg %p203
        %p746 = pneg %p227
        %p747 = pneg %p224
        %p748 = pneg %p248
        %p749 = pneg %p245
        %s750 = sand.u32 %s37, 1
        %s751 = scalar_lea.sflag [#allocation8], %s750
        %s752 = sand.u32 %s267, 1
        %s753 = smul.addr %s752, 128
        %s754 = scalar_lea.vmem [#allocation21], %s753
        %p755 = pneg %p280
        %p756 = pneg %p277
        %s757 = sand.u32 %s37, 1
        %s758 = scalar_lea.sflag [#allocation14], %s757
        %s759 = sand.u32 %s299, 1
        %s760 = smul.addr %s759, 64
        %s761 = scalar_lea.vmem [#allocation22], %s760
        %p762 = pneg %p312
        %p763 = pneg %p309
        %p764 = pneg %p333
        %p765 = pneg %p330
        %p766 = pneg %p354
        %p767 = pneg %p351
        %p768 = pneg %p380
        %p769 = pneg %p377
        %s770 = sand.u32 %s367, 1
        %s771 = scalar_lea.sflag [#allocation9], %s770
        %s772 = sand.u32 %s367, 1
        %s773 = smul.addr %s772, 8
        %s774 = scalar_lea.vmem [#allocation25], %s773
        %p775 = scmp.lt.s32.totalorder %s42, 1
        %s776 = scalar_select %p775, %s42, 1
        %s777 = smul.u32 16, %s776
        %p778 = scmp.lt.s32.totalorder %s42, 1
        %s779 = scalar_select %p778, %s42, 1
        %s780 = smul.u32 16, %s779
        %p781 = scmp.lt.s32.totalorder %s42, 1
        %s782 = scalar_select %p781, %s42, 1
        %s783 = ssub.s32 %s42, 2
        %p784 = scmp.gt.s32.totalorder %s783, 0
        %s785 = scalar_select %p784, %s783, 0
        %s786 = smul.u32 16, %s785
        %s787 = ssub.s32 %s42, 2
        %p788 = scmp.gt.s32.totalorder %s787, 0
        %s789 = scalar_select %p788, %s787, 0
        %p791 = scmp.eq.s32.totalorder %s42, 0
        // Predicated region
        $region117: #{tpu_custom_call.1} parent=67 // pred_check
          %p792 = pneg %p791
        $region118: #{tpu_custom_call.1} parent=67 // pred_check_branch
          %794 = sbr.rel (%p792) target = $region120
        $region119: #{tpu_custom_call.1} parent=67 // pred_region
          %v795 = vld [vmem:[%s640] sm:$0xff]
          %v796 = vmul.f32 %v795, %v795
          %797 = vadd.xlane.f32.xlu0 %v796
          %v798 = vpop.xlane.xlu0 %797
          %v799 = vrcp.pop 128.0
          %v800 = vmul.f32 %v798, %v799
          %v801 = vadd.f32 %v800, 1e-06
          %v802 = vrsqrt.pop %v801
          %v803 = vmul.f32 %v795, %v802
          %v804 = vld [vmem:[#allocation23] sm:$0x1]
          %v805 = vadd.f32 %v804, 1.0
          %v807 = vlaneseq
          %v808 = vshrl.u32 %v807, 7
          %v809 = vsub.s32 0, %v808
          %v810 = vrot.slane %v805, %v809
          %v812 = vmul.f32 %v803, %v810
          %v813 = vpack.c.bf16 %v812, %v812
          %v814 = vld [vmem:[#allocation18] sm:$0xf]
          %v815 = vld [vmem:[#allocation18 + $0x4] sm:$0xf]
          %v816 = vld [vmem:[#allocation18 + $0x8] sm:$0xf]
          %v817 = vld [vmem:[#allocation18 + $0xc] sm:$0xf]
          %v818 = vld [vmem:[#allocation18 + $0x10] sm:$0xf]
          %v819 = vld [vmem:[#allocation18 + $0x14] sm:$0xf]
          %v820 = vld [vmem:[#allocation18 + $0x18] sm:$0xf]
          %v821 = vld [vmem:[#allocation18 + $0x1c] sm:$0xf]
          %v822 = vld [vmem:[#allocation18 + $0x20] sm:$0xf]
          %v823 = vld [vmem:[#allocation18 + $0x24] sm:$0xf]
          %v824 = vld [vmem:[#allocation18 + $0x28] sm:$0xf]
          %v825 = vld [vmem:[#allocation18 + $0x2c] sm:$0xf]
          %v826 = vld [vmem:[#allocation18 + $0x30] sm:$0xf]
          %v827 = vld [vmem:[#allocation18 + $0x34] sm:$0xf]
          %v828 = vld [vmem:[#allocation18 + $0x38] sm:$0xf]
          %v829 = vld [vmem:[#allocation18 + $0x3c] sm:$0xf]
          %v830 = vld [vmem:[#allocation18 + $0x40] sm:$0xf]
          %v831 = vld [vmem:[#allocation18 + $0x44] sm:$0xf]
          %v832 = vld [vmem:[#allocation18 + $0x48] sm:$0xf]
          %v833 = vld [vmem:[#allocation18 + $0x4c] sm:$0xf]
          %v834 = vld [vmem:[#allocation18 + $0x50] sm:$0xf]
          %v835 = vld [vmem:[#allocation18 + $0x54] sm:$0xf]
          %v836 = vld [vmem:[#allocation18 + $0x58] sm:$0xf]
          %v837 = vld [vmem:[#allocation18 + $0x5c] sm:$0xf]
          %v838 = vld [vmem:[#allocation18 + $0x60] sm:$0xf]
          %v839 = vld [vmem:[#allocation18 + $0x64] sm:$0xf]
          %v840 = vld [vmem:[#allocation18 + $0x68] sm:$0xf]
          %v841 = vld [vmem:[#allocation18 + $0x6c] sm:$0xf]
          %v842 = vld [vmem:[#allocation18 + $0x70] sm:$0xf]
          %v843 = vld [vmem:[#allocation18 + $0x74] sm:$0xf]
          %v844 = vld [vmem:[#allocation18 + $0x78] sm:$0xf]
          %v845 = vld [vmem:[#allocation18 + $0x7c] sm:$0xf]
          %v878 = vunpack.c.l.b16 %v814
          %v879 = vunpack.c.l.b16 %v815
          %v880 = vunpack.c.l.b16 %v816
          %v881 = vunpack.c.l.b16 %v817
          %v882 = vunpack.c.l.b16 %v818
          %v883 = vunpack.c.l.b16 %v819
          %v884 = vunpack.c.l.b16 %v820
          %v885 = vunpack.c.l.b16 %v821
          %v886 = vunpack.c.l.b16 %v822
          %v887 = vunpack.c.l.b16 %v823
          %v888 = vunpack.c.l.b16 %v824
          %v889 = vunpack.c.l.b16 %v825
          %v890 = vunpack.c.l.b16 %v826
          %v891 = vunpack.c.l.b16 %v827
          %v892 = vunpack.c.l.b16 %v828
          %v893 = vunpack.c.l.b16 %v829
          %v894 = vunpack.c.l.b16 %v830
          %v895 = vunpack.c.l.b16 %v831
          %v896 = vunpack.c.l.b16 %v832
          %v897 = vunpack.c.l.b16 %v833
          %v898 = vunpack.c.l.b16 %v834
          %v899 = vunpack.c.l.b16 %v835
          %v900 = vunpack.c.l.b16 %v836
          %v901 = vunpack.c.l.b16 %v837
          %v902 = vunpack.c.l.b16 %v838
          %v903 = vunpack.c.l.b16 %v839
          %v904 = vunpack.c.l.b16 %v840
          %v905 = vunpack.c.l.b16 %v841
          %v906 = vunpack.c.l.b16 %v842
          %v907 = vunpack.c.l.b16 %v843
          %v908 = vunpack.c.l.b16 %v844
          %v909 = vunpack.c.l.b16 %v845
          %v910 = vpack.c.b16 %v879, %v878
          %v911 = vpack.c.b16 %v881, %v880
          %v912 = vpack.c.b16 %v883, %v882
          %v913 = vpack.c.b16 %v885, %v884
          %v914 = vpack.c.b16 %v887, %v886
          %v915 = vpack.c.b16 %v889, %v888
          %v916 = vpack.c.b16 %v891, %v890
          %v917 = vpack.c.b16 %v893, %v892
          %v918 = vpack.c.b16 %v895, %v894
          %v919 = vpack.c.b16 %v897, %v896
          %v920 = vpack.c.b16 %v899, %v898
          %v921 = vpack.c.b16 %v901, %v900
          %v922 = vpack.c.b16 %v903, %v902
          %v923 = vpack.c.b16 %v905, %v904
          %v924 = vpack.c.b16 %v907, %v906
          %v925 = vpack.c.b16 %v909, %v908
          %942 = vmatprep.subr.bf16.mxu0 0
          %943 = vmatpush1.bf16.xpose.msra.mxu0 %v910
          %944 = vmatprep.subr.bf16.mxu0 0
          %945 = vmatpush1.bf16.xpose.msra.mxu0 %v911
          %946 = vmatprep.subr.bf16.mxu0 0
          %947 = vmatpush1.bf16.xpose.msra.mxu0 %v912
          %948 = vmatprep.subr.bf16.mxu0 0
          %949 = vmatpush1.bf16.xpose.msra.mxu0 %v913
          %950 = vmatprep.subr.bf16.mxu0 0
          %951 = vmatpush1.bf16.xpose.msra.mxu0 %v914
          %952 = vmatprep.subr.bf16.mxu0 0
          %953 = vmatpush1.bf16.xpose.msra.mxu0 %v915
          %954 = vmatprep.subr.bf16.mxu0 0
          %955 = vmatpush1.bf16.xpose.msra.mxu0 %v916
          %956 = vmatprep.subr.bf16.mxu0 0
          %957 = vmatpush1.bf16.xpose.msra.mxu0 %v917
          %958 = vmatprep.subr.bf16.mxu0 0
          %959 = vmatpush1.bf16.xpose.msra.mxu0 %v918
          %960 = vmatprep.subr.bf16.mxu0 0
          %961 = vmatpush1.bf16.xpose.msra.mxu0 %v919
          %962 = vmatprep.subr.bf16.mxu0 0
          %963 = vmatpush1.bf16.xpose.msra.mxu0 %v920
          %964 = vmatprep.subr.bf16.mxu0 0
          %965 = vmatpush1.bf16.xpose.msra.mxu0 %v921
          %966 = vmatprep.subr.bf16.mxu0 0
          %967 = vmatpush1.bf16.xpose.msra.mxu0 %v922
          %968 = vmatprep.subr.bf16.mxu0 0
          %969 = vmatpush1.bf16.xpose.msra.mxu0 %v923
          %970 = vmatprep.subr.bf16.mxu0 0
          %971 = vmatpush1.bf16.xpose.msra.mxu0 %v924
          %972 = vmatprep.subr.bf16.mxu0 0
          %973 = vmatpush1.bf16.xpose.msra.mxu0 %v925
          %974 = vmatprep.mubr.bf16.mxu0 0
          %975 = vmatmul.mubr.bf16.gmra.mrb[0].mxu0 %v813
          %v976 = vpop.f32.mrb[0].mxu0
          %v977 = vadd.f32 0.0, %v976
          %v978 = vpop.f32.mrb[0].mxu0
          %v979 = vadd.f32 0.0, %v978
          %v980 = vpop.f32.mrb[0].mxu0
          %v981 = vpop.f32.mrb[0].mxu0
          %982 = vdwg.mxu0
          %v983 = vld [vmem:[#allocation10] sm:$0xff]
          %985 = vrot.lane.b32.xlu0 %v983, 32
          %v986 = vpop.permute.xlu0 %985
          %988 = vrot.lane.b32.xlu0 %v983, 64
          %v989 = vpop.permute.xlu0 %988
          %991 = vrot.lane.b32.xlu0 %v983, 96
          %v992 = vpop.permute.xlu0 %991
          %vm994 = vcmask 261120
          %v995 = vsel %vm994, %v983, %v986
          %vm996 = vcmask 523264
          %v997 = vsel %vm996, %v995, %v989
          %vm998 = vcmask 785408
          %v999 = vsel %vm998, %v997, %v992
          %v1000 = vld [vmem:[#allocation12] sm:$0xff]
          %1002 = vrot.lane.b32.xlu0 %v1000, 32
          %v1003 = vpop.permute.xlu0 %1002
          %1005 = vrot.lane.b32.xlu0 %v1000, 64
          %v1006 = vpop.permute.xlu0 %1005
          %1008 = vrot.lane.b32.xlu0 %v1000, 96
          %v1009 = vpop.permute.xlu0 %1008
          %v1011 = vsel %vm994, %v1000, %v1003
          %v1012 = vsel %vm996, %v1011, %v1006
          %v1013 = vsel %vm998, %v1012, %v1009
          %v1014 = vmul.f32 %v977, %v999
          %v1015 = vmul.f32 %v979, %v1013
          %v1016 = vadd.f32 %v1014, %v1015
          %v1017 = vpack.c.bf16 %v1016, %v1016
          %1018 = vst [vmem:[#allocation2] sm:$0xf] %v1017
          %vm1019 = vcmask 7168
          %1020 = vst.msk [vmem:[#allocation4] sm:$0xff] %vm1019, -inf
          %1021 = vst.msk [vmem:[#allocation4 + $0x8] sm:$0xff] %vm1019, -inf
          %1022 = vst.msk [vmem:[#allocation4 + $0x10] sm:$0xff] %vm1019, -inf
          %1023 = vst.msk [vmem:[#allocation4 + $0x18] sm:$0xff] %vm1019, -inf
          %1024 = vst.msk [vmem:[#allocation5] sm:$0xff] %vm1019, 0.0
          %1025 = vst.msk [vmem:[#allocation5 + $0x8] sm:$0xff] %vm1019, 0.0
          %1026 = vst.msk [vmem:[#allocation5 + $0x10] sm:$0xff] %vm1019, 0.0
          %1027 = vst.msk [vmem:[#allocation5 + $0x18] sm:$0xff] %vm1019, 0.0
          %1028 = vst.msk [vmem:[#allocation6] sm:$0xff] %vm994, 0.0
          %1029 = vst.msk [vmem:[#allocation6 + $0x8] sm:$0xff] %vm994, 0.0
          %1030 = vst.msk [vmem:[#allocation6 + $0x10] sm:$0xff] %vm994, 0.0
          %1031 = vst.msk [vmem:[#allocation6 + $0x18] sm:$0xff] %vm994, 0.0
        $region120: #{tpu_custom_call.1} parent=67 // pred_fallthru
          _
        %p1032 = scmp.lt.s32.totalorder %s42, 2
        // Predicated region
        $region121: #{tpu_custom_call.1} parent=67 // pred_check
          %p1033 = pneg %p1032
        $region122: #{tpu_custom_call.1} parent=67 // pred_check_branch
          %1035 = sbr.rel (%p1033) target = $region124
        $region123: #{tpu_custom_call.1} parent=67 // pred_region
          %v1036 = vld [vmem:[%s657] sm:$0xf]
          %v1037 = vld [vmem:[%s657 + $0x4] sm:$0xf]
          %v1038 = vld [vmem:[%s657 + $0x8] sm:$0xf]
          %v1039 = vld [vmem:[%s657 + $0xc] sm:$0xf]
          %v1040 = vld [vmem:[%s657 + $0x10] sm:$0xf]
          %v1041 = vld [vmem:[%s657 + $0x14] sm:$0xf]
          %v1042 = vld [vmem:[%s657 + $0x18] sm:$0xf]
          %v1043 = vld [vmem:[%s657 + $0x1c] sm:$0xf]
          %v1044 = vld [vmem:[%s657 + $0x20] sm:$0xf]
          %v1045 = vld [vmem:[%s657 + $0x24] sm:$0xf]
          %v1046 = vld [vmem:[%s657 + $0x28] sm:$0xf]
          %v1047 = vld [vmem:[%s657 + $0x2c] sm:$0xf]
          %v1048 = vld [vmem:[%s657 + $0x30] sm:$0xf]
          %v1049 = vld [vmem:[%s657 + $0x34] sm:$0xf]
          %v1050 = vld [vmem:[%s657 + $0x38] sm:$0xf]
          %v1051 = vld [vmem:[%s657 + $0x3c] sm:$0xf]
          %v1052 = vld [vmem:[%s666] sm:$0xf]
          %v1053 = vld [vmem:[%s666 + $0x4] sm:$0xf]
          %v1054 = vld [vmem:[%s666 + $0x8] sm:$0xf]
          %v1055 = vld [vmem:[%s666 + $0xc] sm:$0xf]
          %v1056 = vld [vmem:[%s666 + $0x10] sm:$0xf]
          %v1057 = vld [vmem:[%s666 + $0x14] sm:$0xf]
          %v1058 = vld [vmem:[%s666 + $0x18] sm:$0xf]
          %v1059 = vld [vmem:[%s666 + $0x1c] sm:$0xf]
          %v1060 = vld [vmem:[%s666 + $0x20] sm:$0xf]
          %v1061 = vld [vmem:[%s666 + $0x24] sm:$0xf]
          %v1062 = vld [vmem:[%s666 + $0x28] sm:$0xf]
          %v1063 = vld [vmem:[%s666 + $0x2c] sm:$0xf]
          %v1064 = vld [vmem:[%s666 + $0x30] sm:$0xf]
          %v1065 = vld [vmem:[%s666 + $0x34] sm:$0xf]
          %v1066 = vld [vmem:[%s666 + $0x38] sm:$0xf]
          %v1067 = vld [vmem:[%s666 + $0x3c] sm:$0xf]
          %v1068 = vld [vmem:[%s675] sm:$0xff]
          %v1069 = vld [vmem:[#allocation2] sm:$0xf]
          %v1086 = vunpack.c.l.b16 %v1036
          %v1087 = vunpack.c.l.b16 %v1037
          %v1088 = vunpack.c.l.b16 %v1038
          %v1089 = vunpack.c.l.b16 %v1039
          %v1090 = vunpack.c.l.b16 %v1040
          %v1091 = vunpack.c.l.b16 %v1041
          %v1092 = vunpack.c.l.b16 %v1042
          %v1093 = vunpack.c.l.b16 %v1043
          %v1094 = vunpack.c.l.b16 %v1044
          %v1095 = vunpack.c.l.b16 %v1045
          %v1096 = vunpack.c.l.b16 %v1046
          %v1097 = vunpack.c.l.b16 %v1047
          %v1098 = vunpack.c.l.b16 %v1048
          %v1099 = vunpack.c.l.b16 %v1049
          %v1100 = vunpack.c.l.b16 %v1050
          %v1101 = vunpack.c.l.b16 %v1051
          %v1102 = vpack.c.b16 %v1087, %v1086
          %v1103 = vpack.c.b16 %v1089, %v1088
          %v1104 = vpack.c.b16 %v1091, %v1090
          %v1105 = vpack.c.b16 %v1093, %v1092
          %v1106 = vpack.c.b16 %v1095, %v1094
          %v1107 = vpack.c.b16 %v1097, %v1096
          %v1108 = vpack.c.b16 %v1099, %v1098
          %v1109 = vpack.c.b16 %v1101, %v1100
          %vm1110 = vcmask 261120
          %v1112 = vsel %vm1110, %v1069, 0
          %v1115 = vsel %vm1110, %v1102, 0
          %v1118 = vsel %vm1110, %v1103, 0
          %v1121 = vsel %vm1110, %v1104, 0
          %v1124 = vsel %vm1110, %v1105, 0
          %v1127 = vsel %vm1110, %v1106, 0
          %v1130 = vsel %vm1110, %v1107, 0
          %v1133 = vsel %vm1110, %v1108, 0
          %v1136 = vsel %vm1110, %v1109, 0
          %1138 = vmatprep.subr.bf16.mxu0 0
          %1139 = vmatpush1.bf16.xpose.msra.mxu0 %v1115
          %1140 = vmatprep.subr.bf16.mxu0 0
          %1141 = vmatpush1.bf16.xpose.msra.mxu0 %v1118
          %1142 = vmatprep.subr.bf16.mxu0 0
          %1143 = vmatpush1.bf16.xpose.msra.mxu0 %v1121
          %1144 = vmatprep.subr.bf16.mxu0 0
          %1145 = vmatpush1.bf16.xpose.msra.mxu0 %v1124
          %1146 = vmatprep.subr.bf16.mxu0 0
          %1147 = vmatpush1.bf16.xpose.msra.mxu0 %v1127
          %1148 = vmatprep.subr.bf16.mxu0 0
          %1149 = vmatpush1.bf16.xpose.msra.mxu0 %v1130
          %1150 = vmatprep.subr.bf16.mxu0 0
          %1151 = vmatpush1.bf16.xpose.msra.mxu0 %v1133
          %1152 = vmatprep.subr.bf16.mxu0 0
          %1153 = vmatpush1.bf16.xpose.msra.mxu0 %v1136
          %1154 = vmatprep.subr.bf16.mxu0 0
          %1155 = vmatpush1.bf16.xpose.msra.mxu0 0
          %1156 = vmatprep.subr.bf16.mxu0 0
          %1157 = vmatpush1.bf16.xpose.msra.mxu0 0
          %1158 = vmatprep.subr.bf16.mxu0 0
          %1159 = vmatpush1.bf16.xpose.msra.mxu0 0
          %1160 = vmatprep.subr.bf16.mxu0 0
          %1161 = vmatpush1.bf16.xpose.msra.mxu0 0
          %1162 = vmatprep.subr.bf16.mxu0 0
          %1163 = vmatpush1.bf16.xpose.msra.mxu0 0
          %1164 = vmatprep.subr.bf16.mxu0 0
          %1165 = vmatpush1.bf16.xpose.msra.mxu0 0
          %1166 = vmatprep.subr.bf16.mxu0 0
          %1167 = vmatpush1.bf16.xpose.msra.mxu0 0
          %1168 = vmatprep.subr.bf16.mxu0 0
          %1169 = vmatpush1.bf16.xpose.msra.mxu0 0
          %1170 = vmatprep.mubr.bf16.mxu0 0
          %1171 = vmatmul.mubr.bf16.gmra.mrb[0].mxu0 %v1112
          %v1172 = vpop.f32.mrb[0].mxu0
          %v1173 = vadd.f32 %v1068, %v1172
          %v1174 = vpop.f32.mrb[0].mxu0
          %v1175 = vpop.f32.mrb[0].mxu0
          %v1176 = vpop.f32.mrb[0].mxu0
          %1177 = vdwg.mxu0
          %v1178 = vld [vmem:[#allocation4] sm:$0xff]
          %1179 = vmax.xlane.f32.xlu0 %v1173
          %v1180 = vpop.xlane.xlu0 %1179
          %v1181 = vmax.f32 %v1178, %v1180
          %v1182 = vsub.f32 %v1178, %v1181
          %v1183 = vmul.f32 %v1182, 1.442695
          %v1184 = vpow.pop %v1183
          %1186 = vset.pattern.permute.xlu0 0
          %1187 = vperm.xlu0 %1186, %v1181
          %v1188 = vpop.permute.xlu0 %1187
          %v1190 = vsub.f32 %v1173, %v1188
          %v1191 = vmul.f32 %v1190, 1.442695
          %v1192 = vpow.pop %v1191
          %v1193 = vld [vmem:[#allocation5] sm:$0xff]
          %v1194 = vmul.f32 %v1184, %v1193
          %1195 = vadd.xlane.f32.xlu0 %v1192
          %v1196 = vpop.xlane.xlu0 %1195
          %v1197 = vadd.f32 %v1194, %v1196
          %vm1198 = vcmask 7168
          %1199 = vst.msk [vmem:[#allocation5] sm:$0xff] %vm1198, %v1197
          %v1200 = vld [vmem:[#allocation6] sm:$0xff]
          %1202 = vset.pattern.permute.xlu0 0
          %1203 = vperm.xlu0 %1202, %v1184
          %v1204 = vpop.permute.xlu0 %1203
          %v1206 = vmul.f32 %v1204, %v1200
          %v1207 = vpack.c.bf16 %v1192, %v1192
          %v1224 = vunpack.c.l.b16 %v1052
          %v1225 = vunpack.c.l.b16 %v1053
          %v1226 = vunpack.c.l.b16 %v1054
          %v1227 = vunpack.c.l.b16 %v1055
          %v1228 = vunpack.c.l.b16 %v1056
          %v1229 = vunpack.c.l.b16 %v1057
          %v1230 = vunpack.c.l.b16 %v1058
          %v1231 = vunpack.c.l.b16 %v1059
          %v1232 = vunpack.c.l.b16 %v1060
          %v1233 = vunpack.c.l.b16 %v1061
          %v1234 = vunpack.c.l.b16 %v1062
          %v1235 = vunpack.c.l.b16 %v1063
          %v1236 = vunpack.c.l.b16 %v1064
          %v1237 = vunpack.c.l.b16 %v1065
          %v1238 = vunpack.c.l.b16 %v1066
          %v1239 = vunpack.c.l.b16 %v1067
          %v1240 = vpack.c.b16 %v1225, %v1224
          %v1241 = vpack.c.b16 %v1227, %v1226
          %v1242 = vpack.c.b16 %v1229, %v1228
          %v1243 = vpack.c.b16 %v1231, %v1230
          %v1244 = vpack.c.b16 %v1233, %v1232
          %v1245 = vpack.c.b16 %v1235, %v1234
          %v1246 = vpack.c.b16 %v1237, %v1236
          %v1247 = vpack.c.b16 %v1239, %v1238
          %1256 = vmatprep.subr.bf16.mxu0 0
          %1257 = vmatpush1.bf16.msra.mxu0 %v1240
          %1258 = vmatprep.subr.bf16.mxu0 0
          %1259 = vmatpush1.bf16.msra.mxu0 %v1241
          %1260 = vmatprep.subr.bf16.mxu0 0
          %1261 = vmatpush1.bf16.msra.mxu0 %v1242
          %1262 = vmatprep.subr.bf16.mxu0 0
          %1263 = vmatpush1.bf16.msra.mxu0 %v1243
          %1264 = vmatprep.subr.bf16.mxu0 0
          %1265 = vmatpush1.bf16.msra.mxu0 %v1244
          %1266 = vmatprep.subr.bf16.mxu0 0
          %1267 = vmatpush1.bf16.msra.mxu0 %v1245
          %1268 = vmatprep.subr.bf16.mxu0 0
          %1269 = vmatpush1.bf16.msra.mxu0 %v1246
          %1270 = vmatprep.subr.bf16.mxu0 0
          %1271 = vmatpush1.bf16.msra.mxu0 %v1247
          %1272 = vmatprep.subr.bf16.mxu0 0
          %1273 = vmatpush1.bf16.msra.mxu0 0
          %1274 = vmatprep.subr.bf16.mxu0 0
          %1275 = vmatpush1.bf16.msra.mxu0 0
          %1276 = vmatprep.subr.bf16.mxu0 0
          %1277 = vmatpush1.bf16.msra.mxu0 0
          %1278 = vmatprep.subr.bf16.mxu0 0
          %1279 = vmatpush1.bf16.msra.mxu0 0
          %1280 = vmatprep.subr.bf16.mxu0 0
          %1281 = vmatpush1.bf16.msra.mxu0 0
          %1282 = vmatprep.subr.bf16.mxu0 0
          %1283 = vmatpush1.bf16.msra.mxu0 0
          %1284 = vmatprep.subr.bf16.mxu0 0
          %1285 = vmatpush1.bf16.msra.mxu0 0
          %1286 = vmatprep.subr.bf16.mxu0 0
          %1287 = vmatpush1.bf16.msra.mxu0 0
          %1288 = vmatprep.mubr.bf16.mxu0 0
          %1289 = vmatmul.mubr.bf16.gmra.mrb[0].mxu0 %v1207
          %v1290 = vpop.f32.mrb[0].mxu0
          %v1291 = vadd.f32 0.0, %v1290
          %v1292 = vpop.f32.mrb[0].mxu0
          %v1293 = vpop.f32.mrb[0].mxu0
          %v1294 = vpop.f32.mrb[0].mxu0
          %1295 = vdwg.mxu0
          %v1296 = vadd.f32 %v1206, %v1291
          %1297 = vst.msk [vmem:[#allocation6] sm:$0xff] %vm1110, %v1296
          %1298 = vst.msk [vmem:[#allocation4] sm:$0xff] %vm1198, %v1181
          %v1300 = vunpack.c.l.b16 %v1069
          %v1301 = vpack.c.b16 %v1300, %v1300
          %1302 = vrot.lane.b32.xlu0 %v1301, 96
          %v1303 = vpop.permute.xlu0 %1302
          %v1305 = vsel %vm1110, %v1303, 0
          %1307 = vmatprep.subr.bf16.mxu0 0
          %1308 = vmatpush1.bf16.xpose.msra.mxu0 %v1115
          %1309 = vmatprep.subr.bf16.mxu0 0
          %1310 = vmatpush1.bf16.xpose.msra.mxu0 %v1118
          %1311 = vmatprep.subr.bf16.mxu0 0
          %1312 = vmatpush1.bf16.xpose.msra.mxu0 %v1121
          %1313 = vmatprep.subr.bf16.mxu0 0
          %1314 = vmatpush1.bf16.xpose.msra.mxu0 %v1124
          %1315 = vmatprep.subr.bf16.mxu0 0
          %1316 = vmatpush1.bf16.xpose.msra.mxu0 %v1127
          %1317 = vmatprep.subr.bf16.mxu0 0
          %1318 = vmatpush1.bf16.xpose.msra.mxu0 %v1130
          %1319 = vmatprep.subr.bf16.mxu0 0
          %1320 = vmatpush1.bf16.xpose.msra.mxu0 %v1133
          %1321 = vmatprep.subr.bf16.mxu0 0
          %1322 = vmatpush1.bf16.xpose.msra.mxu0 %v1136
          %1323 = vmatprep.subr.bf16.mxu0 0
          %1324 = vmatpush1.bf16.xpose.msra.mxu0 0
          %1325 = vmatprep.subr.bf16.mxu0 0
          %1326 = vmatpush1.bf16.xpose.msra.mxu0 0
          %1327 = vmatprep.subr.bf16.mxu0 0
          %1328 = vmatpush1.bf16.xpose.msra.mxu0 0
          %1329 = vmatprep.subr.bf16.mxu0 0
          %1330 = vmatpush1.bf16.xpose.msra.mxu0 0
          %1331 = vmatprep.subr.bf16.mxu0 0
          %1332 = vmatpush1.bf16.xpose.msra.mxu0 0
          %1333 = vmatprep.subr.bf16.mxu0 0
          %1334 = vmatpush1.bf16.xpose.msra.mxu0 0
          %1335 = vmatprep.subr.bf16.mxu0 0
          %1336 = vmatpush1.bf16.xpose.msra.mxu0 0
          %1337 = vmatprep.subr.bf16.mxu0 0
          %1338 = vmatpush1.bf16.xpose.msra.mxu0 0
          %1339 = vmatprep.mubr.bf16.mxu0 0
          %1340 = vmatmul.mubr.bf16.gmra.mrb[0].mxu0 %v1305
          %v1341 = vpop.f32.mrb[0].mxu0
          %v1342 = vadd.f32 %v1068, %v1341
          %v1343 = vpop.f32.mrb[0].mxu0
          %v1344 = vpop.f32.mrb[0].mxu0
          %v1345 = vpop.f32.mrb[0].mxu0
          %1346 = vdwg.mxu0
          %s1347 = scalar_lea.vmem [#allocation4], 8
          %v1348 = vld [vmem:[%s1347] sm:$0xff]
          %1349 = vmax.xlane.f32.xlu0 %v1342
          %v1350 = vpop.xlane.xlu0 %1349
          %v1351 = vmax.f32 %v1348, %v1350
          %v1352 = vsub.f32 %v1348, %v1351
          %v1353 = vmul.f32 %v1352, 1.442695
          %v1354 = vpow.pop %v1353
          %1356 = vset.pattern.permute.xlu0 0
          %1357 = vperm.xlu0 %1356, %v1351
          %v1358 = vpop.permute.xlu0 %1357
          %v1360 = vsub.f32 %v1342, %v1358
          %v1361 = vmul.f32 %v1360, 1.442695
          %v1362 = vpow.pop %v1361
          %s1363 = scalar_lea.vmem [#allocation5], 8
          %v1364 = vld [vmem:[%s1363] sm:$0xff]
          %v1365 = vmul.f32 %v1354, %v1364
          %1366 = vadd.xlane.f32.xlu0 %v1362
          %v1367 = vpop.xlane.xlu0 %1366
          %v1368 = vadd.f32 %v1365, %v1367
          %1369 = vst.msk [vmem:[%s1363] sm:$0xff] %vm1198, %v1368
          %s1370 = scalar_lea.vmem [#allocation6], 8
          %v1371 = vld [vmem:[%s1370] sm:$0xff]
          %1373 = vset.pattern.permute.xlu0 0
          %1374 = vperm.xlu0 %1373, %v1354
          %v1375 = vpop.permute.xlu0 %1374
          %v1377 = vmul.f32 %v1375, %v1371
          %v1378 = vpack.c.bf16 %v1362, %v1362
          %1379 = vmatprep.subr.bf16.mxu0 0
          %1380 = vmatpush1.bf16.msra.mxu0 %v1240
          %1381 = vmatprep.subr.bf16.mxu0 0
          %1382 = vmatpush1.bf16.msra.mxu0 %v1241
          %1383 = vmatprep.subr.bf16.mxu0 0
          %1384 = vmatpush1.bf16.msra.mxu0 %v1242
          %1385 = vmatprep.subr.bf16.mxu0 0
          %1386 = vmatpush1.bf16.msra.mxu0 %v1243
          %1387 = vmatprep.subr.bf16.mxu0 0
          %1388 = vmatpush1.bf16.msra.mxu0 %v1244
          %1389 = vmatprep.subr.bf16.mxu0 0
          %1390 = vmatpush1.bf16.msra.mxu0 %v1245
          %1391 = vmatprep.subr.bf16.mxu0 0
          %1392 = vmatpush1.bf16.msra.mxu0 %v1246
          %1393 = vmatprep.subr.bf16.mxu0 0
          %1394 = vmatpush1.bf16.msra.mxu0 %v1247
          %1395 = vmatprep.subr.bf16.mxu0 0
          %1396 = vmatpush1.bf16.msra.mxu0 0
          %1397 = vmatprep.subr.bf16.mxu0 0
          %1398 = vmatpush1.bf16.msra.mxu0 0
          %1399 = vmatprep.subr.bf16.mxu0 0
          %1400 = vmatpush1.bf16.msra.mxu0 0
          %1401 = vmatprep.subr.bf16.mxu0 0
          %1402 = vmatpush1.bf16.msra.mxu0 0
          %1403 = vmatprep.subr.bf16.mxu0 0
          %1404 = vmatpush1.bf16.msra.mxu0 0
          %1405 = vmatprep.subr.bf16.mxu0 0
          %1406 = vmatpush1.bf16.msra.mxu0 0
          %1407 = vmatprep.subr.bf16.mxu0 0
          %1408 = vmatpush1.bf16.msra.mxu0 0
          %1409 = vmatprep.subr.bf16.mxu0 0
          %1410 = vmatpush1.bf16.msra.mxu0 0
          %1411 = vmatprep.mubr.bf16.mxu0 0
          %1412 = vmatmul.mubr.bf16.gmra.mrb[0].mxu0 %v1378
          %v1413 = vpop.f32.mrb[0].mxu0
          %v1414 = vadd.f32 0.0, %v1413
          %v1415 = vpop.f32.mrb[0].mxu0
          %v1416 = vpop.f32.mrb[0].mxu0
          %v1417 = vpop.f32.mrb[0].mxu0
          %1418 = vdwg.mxu0
          %v1419 = vadd.f32 %v1377, %v1414
          %1420 = vst.msk [vmem:[%s1370] sm:$0xff] %vm1110, %v1419
          %1421 = vst.msk [vmem:[%s1347] sm:$0xff] %vm1198, %v1351
          %1422 = vrot.lane.b32.xlu0 %v1301, 64
          %v1423 = vpop.permute.xlu0 %1422
          %1424 = vrot.lane.b32.xlu0 %v1102, 96
          %v1425 = vpop.permute.xlu0 %1424
          %1426 = vrot.lane.b32.xlu0 %v1103, 96
          %v1427 = vpop.permute.xlu0 %1426
          %1428 = vrot.lane.b32.xlu0 %v1104, 96
          %v1429 = vpop.permute.xlu0 %1428
          %1430 = vrot.lane.b32.xlu0 %v1105, 96
          %v1431 = vpop.permute.xlu0 %1430
          %1432 = vrot.lane.b32.xlu0 %v1106, 96
          %v1433 = vpop.permute.xlu0 %1432
          %1434 = vrot.lane.b32.xlu0 %v1107, 96
          %v1435 = vpop.permute.xlu0 %1434
          %1436 = vrot.lane.b32.xlu0 %v1108, 96
          %v1437 = vpop.permute.xlu0 %1436
          %1438 = vrot.lane.b32.xlu0 %v1109, 96
          %v1439 = vpop.permute.xlu0 %1438
          %v1441 = vsel %vm1110, %v1423, 0
          %v1444 = vsel %vm1110, %v1425, 0
          %v1447 = vsel %vm1110, %v1427, 0
          %v1450 = vsel %vm1110, %v1429, 0
          %v1453 = vsel %vm1110, %v1431, 0
          %v1456 = vsel %vm1110, %v1433, 0
          %v1459 = vsel %vm1110, %v1435, 0
          %v1462 = vsel %vm1110, %v1437, 0
          %v1465 = vsel %vm1110, %v1439, 0
          %1467 = vmatprep.subr.bf16.mxu0 0
          %1468 = vmatpush1.bf16.xpose.msra.mxu0 %v1444
          %1469 = vmatprep.subr.bf16.mxu0 0
          %1470 = vmatpush1.bf16.xpose.msra.mxu0 %v1447
          %1471 = vmatprep.subr.bf16.mxu0 0
          %1472 = vmatpush1.bf16.xpose.msra.mxu0 %v1450
          %1473 = vmatprep.subr.bf16.mxu0 0
          %1474 = vmatpush1.bf16.xpose.msra.mxu0 %v1453
          %1475 = vmatprep.subr.bf16.mxu0 0
          %1476 = vmatpush1.bf16.xpose.msra.mxu0 %v1456
          %1477 = vmatprep.subr.bf16.mxu0 0
          %1478 = vmatpush1.bf16.xpose.msra.mxu0 %v1459
          %1479 = vmatprep.subr.bf16.mxu0 0
          %1480 = vmatpush1.bf16.xpose.msra.mxu0 %v1462
          %1481 = vmatprep.subr.bf16.mxu0 0
          %1482 = vmatpush1.bf16.xpose.msra.mxu0 %v1465
          %1483 = vmatprep.subr.bf16.mxu0 0
          %1484 = vmatpush1.bf16.xpose.msra.mxu0 0
          %1485 = vmatprep.subr.bf16.mxu0 0
          %1486 = vmatpush1.bf16.xpose.msra.mxu0 0
          %1487 = vmatprep.subr.bf16.mxu0 0
          %1488 = vmatpush1.bf16.xpose.msra.mxu0 0
          %1489 = vmatprep.subr.bf16.mxu0 0
          %1490 = vmatpush1.bf16.xpose.msra.mxu0 0
          %1491 = vmatprep.subr.bf16.mxu0 0
          %1492 = vmatpush1.bf16.xpose.msra.mxu0 0
          %1493 = vmatprep.subr.bf16.mxu0 0
          %1494 = vmatpush1.bf16.xpose.msra.mxu0 0
          %1495 = vmatprep.subr.bf16.mxu0 0
          %1496 = vmatpush1.bf16.xpose.msra.mxu0 0
          %1497 = vmatprep.subr.bf16.mxu0 0
          %1498 = vmatpush1.bf16.xpose.msra.mxu0 0
          %1499 = vmatprep.mubr.bf16.mxu0 0
          %1500 = vmatmul.mubr.bf16.gmra.mrb[0].mxu0 %v1441
          %v1501 = vpop.f32.mrb[0].mxu0
          %v1502 = vadd.f32 %v1068, %v1501
          %v1503 = vpop.f32.mrb[0].mxu0
          %v1504 = vpop.f32.mrb[0].mxu0
          %v1505 = vpop.f32.mrb[0].mxu0
          %1506 = vdwg.mxu0
          %s1507 = scalar_lea.vmem [#allocation4], 16
          %v1508 = vld [vmem:[%s1507] sm:$0xff]
          %1509 = vmax.xlane.f32.xlu0 %v1502
          %v1510 = vpop.xlane.xlu0 %1509
          %v1511 = vmax.f32 %v1508, %v1510
          %v1512 = vsub.f32 %v1508, %v1511
          %v1513 = vmul.f32 %v1512, 1.442695
          %v1514 = vpow.pop %v1513
          %1516 = vset.pattern.permute.xlu0 0
          %1517 = vperm.xlu0 %1516, %v1511
          %v1518 = vpop.permute.xlu0 %1517
          %v1520 = vsub.f32 %v1502, %v1518
          %v1521 = vmul.f32 %v1520, 1.442695
          %v1522 = vpow.pop %v1521
          %s1523 = scalar_lea.vmem [#allocation5], 16
          %v1524 = vld [vmem:[%s1523] sm:$0xff]
          %v1525 = vmul.f32 %v1514, %v1524
          %1526 = vadd.xlane.f32.xlu0 %v1522
          %v1527 = vpop.xlane.xlu0 %1526
          %v1528 = vadd.f32 %v1525, %v1527
          %1529 = vst.msk [vmem:[%s1523] sm:$0xff] %vm1198, %v1528
          %s1530 = scalar_lea.vmem [#allocation6], 16
          %v1531 = vld [vmem:[%s1530] sm:$0xff]
          %1533 = vset.pattern.permute.xlu0 0
          %1534 = vperm.xlu0 %1533, %v1514
          %v1535 = vpop.permute.xlu0 %1534
          %v1537 = vmul.f32 %v1535, %v1531
          %v1538 = vpack.c.bf16 %v1522, %v1522
          %1539 = vrot.lane.b32.xlu0 %v1240, 96
          %v1540 = vpop.permute.xlu0 %1539
          %1541 = vrot.lane.b32.xlu0 %v1241, 96
          %v1542 = vpop.permute.xlu0 %1541
          %1543 = vrot.lane.b32.xlu0 %v1242, 96
          %v1544 = vpop.permute.xlu0 %1543
          %1545 = vrot.lane.b32.xlu0 %v1243, 96
          %v1546 = vpop.permute.xlu0 %1545
          %1547 = vrot.lane.b32.xlu0 %v1244, 96
          %v1548 = vpop.permute.xlu0 %1547
          %1549 = vrot.lane.b32.xlu0 %v1245, 96
          %v1550 = vpop.permute.xlu0 %1549
          %1551 = vrot.lane.b32.xlu0 %v1246, 96
          %v1552 = vpop.permute.xlu0 %1551
          %1553 = vrot.lane.b32.xlu0 %v1247, 96
          %v1554 = vpop.permute.xlu0 %1553
          %1563 = vmatprep.subr.bf16.mxu0 0
          %1564 = vmatpush1.bf16.msra.mxu0 %v1540
          %1565 = vmatprep.subr.bf16.mxu0 0
          %1566 = vmatpush1.bf16.msra.mxu0 %v1542
          %1567 = vmatprep.subr.bf16.mxu0 0
          %1568 = vmatpush1.bf16.msra.mxu0 %v1544
          %1569 = vmatprep.subr.bf16.mxu0 0
          %1570 = vmatpush1.bf16.msra.mxu0 %v1546
          %1571 = vmatprep.subr.bf16.mxu0 0
          %1572 = vmatpush1.bf16.msra.mxu0 %v1548
          %1573 = vmatprep.subr.bf16.mxu0 0
          %1574 = vmatpush1.bf16.msra.mxu0 %v1550
          %1575 = vmatprep.subr.bf16.mxu0 0
          %1576 = vmatpush1.bf16.msra.mxu0 %v1552
          %1577 = vmatprep.subr.bf16.mxu0 0
          %1578 = vmatpush1.bf16.msra.mxu0 %v1554
          %1579 = vmatprep.subr.bf16.mxu0 0
          %1580 = vmatpush1.bf16.msra.mxu0 0
          %1581 = vmatprep.subr.bf16.mxu0 0
          %1582 = vmatpush1.bf16.msra.mxu0 0
          %1583 = vmatprep.subr.bf16.mxu0 0
          %1584 = vmatpush1.bf16.msra.mxu0 0
          %1585 = vmatprep.subr.bf16.mxu0 0
          %1586 = vmatpush1.bf16.msra.mxu0 0
          %1587 = vmatprep.subr.bf16.mxu0 0
          %1588 = vmatpush1.bf16.msra.mxu0 0
          %1589 = vmatprep.subr.bf16.mxu0 0
          %1590 = vmatpush1.bf16.msra.mxu0 0
          %1591 = vmatprep.subr.bf16.mxu0 0
          %1592 = vmatpush1.bf16.msra.mxu0 0
          %1593 = vmatprep.subr.bf16.mxu0 0
          %1594 = vmatpush1.bf16.msra.mxu0 0
          %1595 = vmatprep.mubr.bf16.mxu0 0
          %1596 = vmatmul.mubr.bf16.gmra.mrb[0].mxu0 %v1538
          %v1597 = vpop.f32.mrb[0].mxu0
          %v1598 = vadd.f32 0.0, %v1597
          %v1599 = vpop.f32.mrb[0].mxu0
          %v1600 = vpop.f32.mrb[0].mxu0
          %v1601 = vpop.f32.mrb[0].mxu0
          %1602 = vdwg.mxu0
          %v1603 = vadd.f32 %v1537, %v1598
          %1604 = vst.msk [vmem:[%s1530] sm:$0xff] %vm1110, %v1603
          %1605 = vst.msk [vmem:[%s1507] sm:$0xff] %vm1198, %v1511
          %1606 = vrot.lane.b32.xlu0 %v1301, 32
          %v1607 = vpop.permute.xlu0 %1606
          %v1609 = vsel %vm1110, %v1607, 0
          %1611 = vmatprep.subr.bf16.mxu0 0
          %1612 = vmatpush1.bf16.xpose.msra.mxu0 %v1444
          %1613 = vmatprep.subr.bf16.mxu0 0
          %1614 = vmatpush1.bf16.xpose.msra.mxu0 %v1447
          %1615 = vmatprep.subr.bf16.mxu0 0
          %1616 = vmatpush1.bf16.xpose.msra.mxu0 %v1450
          %1617 = vmatprep.subr.bf16.mxu0 0
          %1618 = vmatpush1.bf16.xpose.msra.mxu0 %v1453
          %1619 = vmatprep.subr.bf16.mxu0 0
          %1620 = vmatpush1.bf16.xpose.msra.mxu0 %v1456
          %1621 = vmatprep.subr.bf16.mxu0 0
          %1622 = vmatpush1.bf16.xpose.msra.mxu0 %v1459
          %1623 = vmatprep.subr.bf16.mxu0 0
          %1624 = vmatpush1.bf16.xpose.msra.mxu0 %v1462
          %1625 = vmatprep.subr.bf16.mxu0 0
          %1626 = vmatpush1.bf16.xpose.msra.mxu0 %v1465
          %1627 = vmatprep.subr.bf16.mxu0 0
          %1628 = vmatpush1.bf16.xpose.msra.mxu0 0
          %1629 = vmatprep.subr.bf16.mxu0 0
          %1630 = vmatpush1.bf16.xpose.msra.mxu0 0
          %1631 = vmatprep.subr.bf16.mxu0 0
          %1632 = vmatpush1.bf16.xpose.msra.mxu0 0
          %1633 = vmatprep.subr.bf16.mxu0 0
          %1634 = vmatpush1.bf16.xpose.msra.mxu0 0
          %1635 = vmatprep.subr.bf16.mxu0 0
          %1636 = vmatpush1.bf16.xpose.msra.mxu0 0
          %1637 = vmatprep.subr.bf16.mxu0 0
          %1638 = vmatpush1.bf16.xpose.msra.mxu0 0
          %1639 = vmatprep.subr.bf16.mxu0 0
          %1640 = vmatpush1.bf16.xpose.msra.mxu0 0
          %1641 = vmatprep.subr.bf16.mxu0 0
          %1642 = vmatpush1.bf16.xpose.msra.mxu0 0
          %1643 = vmatprep.mubr.bf16.mxu0 0
          %1644 = vmatmul.mubr.bf16.gmra.mrb[0].mxu0 %v1609
          %v1645 = vpop.f32.mrb[0].mxu0
          %v1646 = vadd.f32 %v1068, %v1645
          %v1647 = vpop.f32.mrb[0].mxu0
          %v1648 = vpop.f32.mrb[0].mxu0
          %v1649 = vpop.f32.mrb[0].mxu0
          %1650 = vdwg.mxu0
          %s1651 = scalar_lea.vmem [#allocation4], 24
          %v1652 = vld [vmem:[%s1651] sm:$0xff]
          %1653 = vmax.xlane.f32.xlu0 %v1646
          %v1654 = vpop.xlane.xlu0 %1653
          %v1655 = vmax.f32 %v1652, %v1654
          %v1656 = vsub.f32 %v1652, %v1655
          %v1657 = vmul.f32 %v1656, 1.442695
          %v1658 = vpow.pop %v1657
          %1660 = vset.pattern.permute.xlu0 0
          %1661 = vperm.xlu0 %1660, %v1655
          %v1662 = vpop.permute.xlu0 %1661
          %v1664 = vsub.f32 %v1646, %v1662
          %v1665 = vmul.f32 %v1664, 1.442695
          %v1666 = vpow.pop %v1665
          %s1667 = scalar_lea.vmem [#allocation5], 24
          %v1668 = vld [vmem:[%s1667] sm:$0xff]
          %v1669 = vmul.f32 %v1658, %v1668
          %1670 = vadd.xlane.f32.xlu0 %v1666
          %v1671 = vpop.xlane.xlu0 %1670
          %v1672 = vadd.f32 %v1669, %v1671
          %1673 = vst.msk [vmem:[%s1667] sm:$0xff] %vm1198, %v1672
          %s1674 = scalar_lea.vmem [#allocation6], 24
          %v1675 = vld [vmem:[%s1674] sm:$0xff]
          %1677 = vset.pattern.permute.xlu0 0
          %1678 = vperm.xlu0 %1677, %v1658
          %v1679 = vpop.permute.xlu0 %1678
          %v1681 = vmul.f32 %v1679, %v1675
          %v1682 = vpack.c.bf16 %v1666, %v1666
          %1683 = vmatprep.subr.bf16.mxu0 0
          %1684 = vmatpush1.bf16.msra.mxu0 %v1540
          %1685 = vmatprep.subr.bf16.mxu0 0
          %1686 = vmatpush1.bf16.msra.mxu0 %v1542
          %1687 = vmatprep.subr.bf16.mxu0 0
          %1688 = vmatpush1.bf16.msra.mxu0 %v1544
          %1689 = vmatprep.subr.bf16.mxu0 0
          %1690 = vmatpush1.bf16.msra.mxu0 %v1546
          %1691 = vmatprep.subr.bf16.mxu0 0
          %1692 = vmatpush1.bf16.msra.mxu0 %v1548
          %1693 = vmatprep.subr.bf16.mxu0 0
          %1694 = vmatpush1.bf16.msra.mxu0 %v1550
          %1695 = vmatprep.subr.bf16.mxu0 0
          %1696 = vmatpush1.bf16.msra.mxu0 %v1552
          %1697 = vmatprep.subr.bf16.mxu0 0
          %1698 = vmatpush1.bf16.msra.mxu0 %v1554
          %1699 = vmatprep.subr.bf16.mxu0 0
          %1700 = vmatpush1.bf16.msra.mxu0 0
          %1701 = vmatprep.subr.bf16.mxu0 0
          %1702 = vmatpush1.bf16.msra.mxu0 0
          %1703 = vmatprep.subr.bf16.mxu0 0
          %1704 = vmatpush1.bf16.msra.mxu0 0
          %1705 = vmatprep.subr.bf16.mxu0 0
          %1706 = vmatpush1.bf16.msra.mxu0 0
          %1707 = vmatprep.subr.bf16.mxu0 0
          %1708 = vmatpush1.bf16.msra.mxu0 0
          %1709 = vmatprep.subr.bf16.mxu0 0
          %1710 = vmatpush1.bf16.msra.mxu0 0
          %1711 = vmatprep.subr.bf16.mxu0 0
          %1712 = vmatpush1.bf16.msra.mxu0 0
          %1713 = vmatprep.subr.bf16.mxu0 0
          %1714 = vmatpush1.bf16.msra.mxu0 0
          %1715 = vmatprep.mubr.bf16.mxu0 0
          %1716 = vmatmul.mubr.bf16.gmra.mrb[0].mxu0 %v1682
          %v1717 = vpop.f32.mrb[0].mxu0
          %v1718 = vadd.f32 0.0, %v1717
          %v1719 = vpop.f32.mrb[0].mxu0
          %v1720 = vpop.f32.mrb[0].mxu0
          %v1721 = vpop.f32.mrb[0].mxu0
          %1722 = vdwg.mxu0
          %v1723 = vadd.f32 %v1681, %v1718
          %1724 = vst.msk [vmem:[%s1674] sm:$0xff] %vm1110, %v1723
          %1725 = vst.msk [vmem:[%s1651] sm:$0xff] %vm1198, %v1655
        $region124: #{tpu_custom_call.1} parent=67 // pred_fallthru
          _
        %p1726 = scmp.eq.s32.totalorder %s42, 1
        // Predicated region
        $region125: #{tpu_custom_call.1} parent=67 // pred_check
          %p1727 = pneg %p1726
        $region126: #{tpu_custom_call.1} parent=67 // pred_check_branch
          %1729 = sbr.rel (%p1727) target = $region128
        $region127: #{tpu_custom_call.1} parent=67 // pred_region
          %v1730 = vld [vmem:[%s640] sm:$0xff]
          %v1731 = vld [vmem:[#allocation19] sm:$0xf]
          %v1732 = vld [vmem:[#allocation19 + $0x4] sm:$0xf]
          %v1733 = vld [vmem:[#allocation19 + $0x8] sm:$0xf]
          %v1734 = vld [vmem:[#allocation19 + $0xc] sm:$0xf]
          %v1735 = vld [vmem:[#allocation19 + $0x10] sm:$0xf]
          %v1736 = vld [vmem:[#allocation19 + $0x14] sm:$0xf]
          %v1737 = vld [vmem:[#allocation19 + $0x18] sm:$0xf]
          %v1738 = vld [vmem:[#allocation19 + $0x1c] sm:$0xf]
          %v1739 = vld [vmem:[#allocation19 + $0x20] sm:$0xf]
          %v1740 = vld [vmem:[#allocation19 + $0x24] sm:$0xf]
          %v1741 = vld [vmem:[#allocation19 + $0x28] sm:$0xf]
          %v1742 = vld [vmem:[#allocation19 + $0x2c] sm:$0xf]
          %v1743 = vld [vmem:[#allocation19 + $0x30] sm:$0xf]
          %v1744 = vld [vmem:[#allocation19 + $0x34] sm:$0xf]
          %v1745 = vld [vmem:[#allocation19 + $0x38] sm:$0xf]
          %v1746 = vld [vmem:[#allocation19 + $0x3c] sm:$0xf]
          %v1747 = vld [vmem:[#allocation6] sm:$0xff]
          %v1748 = vld [vmem:[#allocation5] sm:$0xff]
          %v1749 = vrcp.pop %v1748
          %1751 = vset.pattern.permute.xlu0 0
          %1752 = vperm.xlu0 %1751, %v1749
          %v1753 = vpop.permute.xlu0 %1752
          %v1755 = vmul.f32 %v1747, %v1753
          %v1756 = vpack.c.bf16 %v1755, %v1755
          %s1757 = scalar_lea.vmem [#allocation6], 8
          %v1758 = vld [vmem:[%s1757] sm:$0xff]
          %s1759 = scalar_lea.vmem [#allocation5], 8
          %v1760 = vld [vmem:[%s1759] sm:$0xff]
          %v1761 = vrcp.pop %v1760
          %1763 = vset.pattern.permute.xlu0 0
          %1764 = vperm.xlu0 %1763, %v1761
          %v1765 = vpop.permute.xlu0 %1764
          %v1767 = vmul.f32 %v1758, %v1765
          %v1768 = vpack.c.bf16 %v1767, %v1767
          %v1785 = vunpack.c.l.b16 %v1731
          %v1786 = vunpack.c.l.b16 %v1732
          %v1787 = vunpack.c.l.b16 %v1733
          %v1788 = vunpack.c.l.b16 %v1734
          %v1789 = vunpack.c.l.b16 %v1735
          %v1790 = vunpack.c.l.b16 %v1736
          %v1791 = vunpack.c.l.b16 %v1737
          %v1792 = vunpack.c.l.b16 %v1738
          %v1793 = vunpack.c.l.b16 %v1739
          %v1794 = vunpack.c.l.b16 %v1740
          %v1795 = vunpack.c.l.b16 %v1741
          %v1796 = vunpack.c.l.b16 %v1742
          %v1797 = vunpack.c.l.b16 %v1743
          %v1798 = vunpack.c.l.b16 %v1744
          %v1799 = vunpack.c.l.b16 %v1745
          %v1800 = vunpack.c.l.b16 %v1746
          %v1801 = vpack.c.b16 %v1786, %v1785
          %v1802 = vpack.c.b16 %v1788, %v1787
          %v1803 = vpack.c.b16 %v1790, %v1789
          %v1804 = vpack.c.b16 %v1792, %v1791
          %v1805 = vpack.c.b16 %v1794, %v1793
          %v1806 = vpack.c.b16 %v1796, %v1795
          %v1807 = vpack.c.b16 %v1798, %v1797
          %v1808 = vpack.c.b16 %v1800, %v1799
          %1809 = vrot.lane.b32.xlu0 %v1801, 96
          %v1810 = vpop.permute.xlu0 %1809
          %1811 = vrot.lane.b32.xlu0 %v1802, 96
          %v1812 = vpop.permute.xlu0 %1811
          %1813 = vrot.lane.b32.xlu0 %v1803, 96
          %v1814 = vpop.permute.xlu0 %1813
          %1815 = vrot.lane.b32.xlu0 %v1804, 96
          %v1816 = vpop.permute.xlu0 %1815
          %1817 = vrot.lane.b32.xlu0 %v1805, 96
          %v1818 = vpop.permute.xlu0 %1817
          %1819 = vrot.lane.b32.xlu0 %v1806, 96
          %v1820 = vpop.permute.xlu0 %1819
          %1821 = vrot.lane.b32.xlu0 %v1807, 96
          %v1822 = vpop.permute.xlu0 %1821
          %1823 = vrot.lane.b32.xlu0 %v1808, 96
          %v1824 = vpop.permute.xlu0 %1823
          %vm1825 = vcmask 261120
          %v1827 = vsel %vm1825, %v1768, 0
          %v1830 = vsel %vm1825, %v1810, 0
          %v1833 = vsel %vm1825, %v1812, 0
          %v1836 = vsel %vm1825, %v1814, 0
          %v1839 = vsel %vm1825, %v1816, 0
          %v1842 = vsel %vm1825, %v1818, 0
          %v1845 = vsel %vm1825, %v1820, 0
          %v1848 = vsel %vm1825, %v1822, 0
          %v1851 = vsel %vm1825, %v1824, 0
          %1853 = vmatprep.subr.bf16.mxu0 0
          %1854 = vmatpush1.bf16.xpose.msra.mxu0 %v1830
          %1855 = vmatprep.subr.bf16.mxu0 0
          %1856 = vmatpush1.bf16.xpose.msra.mxu0 %v1833
          %1857 = vmatprep.subr.bf16.mxu0 0
          %1858 = vmatpush1.bf16.xpose.msra.mxu0 %v1836
          %1859 = vmatprep.subr.bf16.mxu0 0
          %1860 = vmatpush1.bf16.xpose.msra.mxu0 %v1839
          %1861 = vmatprep.subr.bf16.mxu0 0
          %1862 = vmatpush1.bf16.xpose.msra.mxu0 %v1842
          %1863 = vmatprep.subr.bf16.mxu0 0
          %1864 = vmatpush1.bf16.xpose.msra.mxu0 %v1845
          %1865 = vmatprep.subr.bf16.mxu0 0
          %1866 = vmatpush1.bf16.xpose.msra.mxu0 %v1848
          %1867 = vmatprep.subr.bf16.mxu0 0
          %1868 = vmatpush1.bf16.xpose.msra.mxu0 %v1851
          %1869 = vmatprep.subr.bf16.mxu0 0
          %1870 = vmatpush1.bf16.xpose.msra.mxu0 0
          %1871 = vmatprep.subr.bf16.mxu0 0
          %1872 = vmatpush1.bf16.xpose.msra.mxu0 0
          %1873 = vmatprep.subr.bf16.mxu0 0
          %1874 = vmatpush1.bf16.xpose.msra.mxu0 0
          %1875 = vmatprep.subr.bf16.mxu0 0
          %1876 = vmatpush1.bf16.xpose.msra.mxu0 0
          %1877 = vmatprep.subr.bf16.mxu0 0
          %1878 = vmatpush1.bf16.xpose.msra.mxu0 0
          %1879 = vmatprep.subr.bf16.mxu0 0
          %1880 = vmatpush1.bf16.xpose.msra.mxu0 0
          %1881 = vmatprep.subr.bf16.mxu0 0
          %1882 = vmatpush1.bf16.xpose.msra.mxu0 0
          %1883 = vmatprep.subr.bf16.mxu0 0
          %1884 = vmatpush1.bf16.xpose.msra.mxu0 0
          %1885 = vmatprep.mubr.bf16.mxu0 0
          %1886 = vmatmul.mubr.bf16.gmra.mrb[0].mxu0 %v1827
          %v1887 = vpop.f32.mrb[0].mxu0
          %v1888 = vadd.f32 0.0, %v1887
          %v1889 = vpop.f32.mrb[0].mxu0
          %v1890 = vpop.f32.mrb[0].mxu0
          %v1891 = vpop.f32.mrb[0].mxu0
          %1892 = vdwg.mxu0
          %v1894 = vsel %vm1825, %v1756, 0
          %v1897 = vsel %vm1825, %v1801, 0
          %v1900 = vsel %vm1825, %v1802, 0
          %v1903 = vsel %vm1825, %v1803, 0
          %v1906 = vsel %vm1825, %v1804, 0
          %v1909 = vsel %vm1825, %v1805, 0
          %v1912 = vsel %vm1825, %v1806, 0
          %v1915 = vsel %vm1825, %v1807, 0
          %v1918 = vsel %vm1825, %v1808, 0
          %1920 = vmatprep.subr.bf16.mxu0 0
          %1921 = vmatpush1.bf16.xpose.msra.mxu0 %v1897
          %1922 = vmatprep.subr.bf16.mxu0 0
          %1923 = vmatpush1.bf16.xpose.msra.mxu0 %v1900
          %1924 = vmatprep.subr.bf16.mxu0 0
          %1925 = vmatpush1.bf16.xpose.msra.mxu0 %v1903
          %1926 = vmatprep.subr.bf16.mxu0 0
          %1927 = vmatpush1.bf16.xpose.msra.mxu0 %v1906
          %1928 = vmatprep.subr.bf16.mxu0 0
          %1929 = vmatpush1.bf16.xpose.msra.mxu0 %v1909
          %1930 = vmatprep.subr.bf16.mxu0 0
          %1931 = vmatpush1.bf16.xpose.msra.mxu0 %v1912
          %1932 = vmatprep.subr.bf16.mxu0 0
          %1933 = vmatpush1.bf16.xpose.msra.mxu0 %v1915
          %1934 = vmatprep.subr.bf16.mxu0 0
          %1935 = vmatpush1.bf16.xpose.msra.mxu0 %v1918
          %1936 = vmatprep.subr.bf16.mxu0 0
          %1937 = vmatpush1.bf16.xpose.msra.mxu0 0
          %1938 = vmatprep.subr.bf16.mxu0 0
          %1939 = vmatpush1.bf16.xpose.msra.mxu0 0
          %1940 = vmatprep.subr.bf16.mxu0 0
          %1941 = vmatpush1.bf16.xpose.msra.mxu0 0
          %1942 = vmatprep.subr.bf16.mxu0 0
          %1943 = vmatpush1.bf16.xpose.msra.mxu0 0
          %1944 = vmatprep.subr.bf16.mxu0 0
          %1945 = vmatpush1.bf16.xpose.msra.mxu0 0
          %1946 = vmatprep.subr.bf16.mxu0 0
          %1947 = vmatpush1.bf16.xpose.msra.mxu0 0
          %1948 = vmatprep.subr.bf16.mxu0 0
          %1949 = vmatpush1.bf16.xpose.msra.mxu0 0
          %1950 = vmatprep.subr.bf16.mxu0 0
          %1951 = vmatpush1.bf16.xpose.msra.mxu0 0
          %1952 = vmatprep.mubr.bf16.mxu0 0
          %1953 = vmatmul.mubr.bf16.gmra.mrb[0].mxu0 %v1894
          %v1954 = vpop.f32.mrb[0].mxu0
          %v1955 = vadd.f32 %v1888, %v1954
          %v1956 = vpop.f32.mrb[0].mxu0
          %v1957 = vpop.f32.mrb[0].mxu0
          %v1958 = vpop.f32.mrb[0].mxu0
          %1959 = vdwg.mxu0
          %s1960 = scalar_lea.vmem [#allocation6], 16
          %v1961 = vld [vmem:[%s1960] sm:$0xff]
          %s1962 = scalar_lea.vmem [#allocation5], 16
          %v1963 = vld [vmem:[%s1962] sm:$0xff]
          %v1964 = vrcp.pop %v1963
          %1966 = vset.pattern.permute.xlu0 0
          %1967 = vperm.xlu0 %1966, %v1964
          %v1968 = vpop.permute.xlu0 %1967
          %v1970 = vmul.f32 %v1961, %v1968
          %v1971 = vpack.c.bf16 %v1970, %v1970
          %1972 = vrot.lane.b32.xlu0 %v1801, 64
          %v1973 = vpop.permute.xlu0 %1972
          %1974 = vrot.lane.b32.xlu0 %v1802, 64
          %v1975 = vpop.permute.xlu0 %1974
          %1976 = vrot.lane.b32.xlu0 %v1803, 64
          %v1977 = vpop.permute.xlu0 %1976
          %1978 = vrot.lane.b32.xlu0 %v1804, 64
          %v1979 = vpop.permute.xlu0 %1978
          %1980 = vrot.lane.b32.xlu0 %v1805, 64
          %v1981 = vpop.permute.xlu0 %1980
          %1982 = vrot.lane.b32.xlu0 %v1806, 64
          %v1983 = vpop.permute.xlu0 %1982
          %1984 = vrot.lane.b32.xlu0 %v1807, 64
          %v1985 = vpop.permute.xlu0 %1984
          %1986 = vrot.lane.b32.xlu0 %v1808, 64
          %v1987 = vpop.permute.xlu0 %1986
          %v1989 = vsel %vm1825, %v1971, 0
          %v1992 = vsel %vm1825, %v1973, 0
          %v1995 = vsel %vm1825, %v1975, 0
          %v1998 = vsel %vm1825, %v1977, 0
          %v2001 = vsel %vm1825, %v1979, 0
          %v2004 = vsel %vm1825, %v1981, 0
          %v2007 = vsel %vm1825, %v1983, 0
          %v2010 = vsel %vm1825, %v1985, 0
          %v2013 = vsel %vm1825, %v1987, 0
          %2015 = vmatprep.subr.bf16.mxu0 0
          %2016 = vmatpush1.bf16.xpose.msra.mxu0 %v1992
          %2017 = vmatprep.subr.bf16.mxu0 0
          %2018 = vmatpush1.bf16.xpose.msra.mxu0 %v1995
          %2019 = vmatprep.subr.bf16.mxu0 0
          %2020 = vmatpush1.bf16.xpose.msra.mxu0 %v1998
          %2021 = vmatprep.subr.bf16.mxu0 0
          %2022 = vmatpush1.bf16.xpose.msra.mxu0 %v2001
          %2023 = vmatprep.subr.bf16.mxu0 0
          %2024 = vmatpush1.bf16.xpose.msra.mxu0 %v2004
          %2025 = vmatprep.subr.bf16.mxu0 0
          %2026 = vmatpush1.bf16.xpose.msra.mxu0 %v2007
          %2027 = vmatprep.subr.bf16.mxu0 0
          %2028 = vmatpush1.bf16.xpose.msra.mxu0 %v2010
          %2029 = vmatprep.subr.bf16.mxu0 0
          %2030 = vmatpush1.bf16.xpose.msra.mxu0 %v2013
          %2031 = vmatprep.subr.bf16.mxu0 0
          %2032 = vmatpush1.bf16.xpose.msra.mxu0 0
          %2033 = vmatprep.subr.bf16.mxu0 0
          %2034 = vmatpush1.bf16.xpose.msra.mxu0 0
          %2035 = vmatprep.subr.bf16.mxu0 0
          %2036 = vmatpush1.bf16.xpose.msra.mxu0 0
          %2037 = vmatprep.subr.bf16.mxu0 0
          %2038 = vmatpush1.bf16.xpose.msra.mxu0 0
          %2039 = vmatprep.subr.bf16.mxu0 0
          %2040 = vmatpush1.bf16.xpose.msra.mxu0 0
          %2041 = vmatprep.subr.bf16.mxu0 0
          %2042 = vmatpush1.bf16.xpose.msra.mxu0 0
          %2043 = vmatprep.subr.bf16.mxu0 0
          %2044 = vmatpush1.bf16.xpose.msra.mxu0 0
          %2045 = vmatprep.subr.bf16.mxu0 0
          %2046 = vmatpush1.bf16.xpose.msra.mxu0 0
          %2047 = vmatprep.mubr.bf16.mxu0 0
          %2048 = vmatmul.mubr.bf16.gmra.mrb[0].mxu0 %v1989
          %v2049 = vpop.f32.mrb[0].mxu0
          %v2050 = vadd.f32 0.0, %v2049
          %v2051 = vpop.f32.mrb[0].mxu0
          %v2052 = vpop.f32.mrb[0].mxu0
          %v2053 = vpop.f32.mrb[0].mxu0
          %2054 = vdwg.mxu0
          %v2055 = vadd.f32 %v1955, %v2050
          %s2056 = scalar_lea.vmem [#allocation6], 24
          %v2057 = vld [vmem:[%s2056] sm:$0xff]
          %s2058 = scalar_lea.vmem [#allocation5], 24
          %v2059 = vld [vmem:[%s2058] sm:$0xff]
          %v2060 = vrcp.pop %v2059
          %2062 = vset.pattern.permute.xlu0 0
          %2063 = vperm.xlu0 %2062, %v2060
          %v2064 = vpop.permute.xlu0 %2063
          %v2066 = vmul.f32 %v2057, %v2064
          %v2067 = vpack.c.bf16 %v2066, %v2066
          %2068 = vrot.lane.b32.xlu0 %v1801, 32
          %v2069 = vpop.permute.xlu0 %2068
          %2070 = vrot.lane.b32.xlu0 %v1802, 32
          %v2071 = vpop.permute.xlu0 %2070
          %2072 = vrot.lane.b32.xlu0 %v1803, 32
          %v2073 = vpop.permute.xlu0 %2072
          %2074 = vrot.lane.b32.xlu0 %v1804, 32
          %v2075 = vpop.permute.xlu0 %2074
          %2076 = vrot.lane.b32.xlu0 %v1805, 32
          %v2077 = vpop.permute.xlu0 %2076
          %2078 = vrot.lane.b32.xlu0 %v1806, 32
          %v2079 = vpop.permute.xlu0 %2078
          %2080 = vrot.lane.b32.xlu0 %v1807, 32
          %v2081 = vpop.permute.xlu0 %2080
          %2082 = vrot.lane.b32.xlu0 %v1808, 32
          %v2083 = vpop.permute.xlu0 %2082
          %v2085 = vsel %vm1825, %v2067, 0
          %v2088 = vsel %vm1825, %v2069, 0
          %v2091 = vsel %vm1825, %v2071, 0
          %v2094 = vsel %vm1825, %v2073, 0
          %v2097 = vsel %vm1825, %v2075, 0
          %v2100 = vsel %vm1825, %v2077, 0
          %v2103 = vsel %vm1825, %v2079, 0
          %v2106 = vsel %vm1825, %v2081, 0
          %v2109 = vsel %vm1825, %v2083, 0
          %2111 = vmatprep.subr.bf16.mxu0 0
          %2112 = vmatpush1.bf16.xpose.msra.mxu0 %v2088
          %2113 = vmatprep.subr.bf16.mxu0 0
          %2114 = vmatpush1.bf16.xpose.msra.mxu0 %v2091
          %2115 = vmatprep.subr.bf16.mxu0 0
          %2116 = vmatpush1.bf16.xpose.msra.mxu0 %v2094
          %2117 = vmatprep.subr.bf16.mxu0 0
          %2118 = vmatpush1.bf16.xpose.msra.mxu0 %v2097
          %2119 = vmatprep.subr.bf16.mxu0 0
          %2120 = vmatpush1.bf16.xpose.msra.mxu0 %v2100
          %2121 = vmatprep.subr.bf16.mxu0 0
          %2122 = vmatpush1.bf16.xpose.msra.mxu0 %v2103
          %2123 = vmatprep.subr.bf16.mxu0 0
          %2124 = vmatpush1.bf16.xpose.msra.mxu0 %v2106
          %2125 = vmatprep.subr.bf16.mxu0 0
          %2126 = vmatpush1.bf16.xpose.msra.mxu0 %v2109
          %2127 = vmatprep.subr.bf16.mxu0 0
          %2128 = vmatpush1.bf16.xpose.msra.mxu0 0
          %2129 = vmatprep.subr.bf16.mxu0 0
          %2130 = vmatpush1.bf16.xpose.msra.mxu0 0
          %2131 = vmatprep.subr.bf16.mxu0 0
          %2132 = vmatpush1.bf16.xpose.msra.mxu0 0
          %2133 = vmatprep.subr.bf16.mxu0 0
          %2134 = vmatpush1.bf16.xpose.msra.mxu0 0
          %2135 = vmatprep.subr.bf16.mxu0 0
          %2136 = vmatpush1.bf16.xpose.msra.mxu0 0
          %2137 = vmatprep.subr.bf16.mxu0 0
          %2138 = vmatpush1.bf16.xpose.msra.mxu0 0
          %2139 = vmatprep.subr.bf16.mxu0 0
          %2140 = vmatpush1.bf16.xpose.msra.mxu0 0
          %2141 = vmatprep.subr.bf16.mxu0 0
          %2142 = vmatpush1.bf16.xpose.msra.mxu0 0
          %2143 = vmatprep.mubr.bf16.mxu0 0
          %2144 = vmatmul.mubr.bf16.gmra.mrb[0].mxu0 %v2085
          %v2145 = vpop.f32.mrb[0].mxu0
          %v2146 = vadd.f32 0.0, %v2145
          %v2147 = vpop.f32.mrb[0].mxu0
          %v2148 = vpop.f32.mrb[0].mxu0
          %v2149 = vpop.f32.mrb[0].mxu0
          %2150 = vdwg.mxu0
          %v2151 = vadd.f32 %v2055, %v2146
          %v2152 = vadd.f32 %v2151, %v1730
          %2153 = vst [vmem:[%s774] sm:$0xff] %v2152
          %v2154 = vmul.f32 %v2152, %v2152
          %2155 = vadd.xlane.f32.xlu0 %v2154
          %v2156 = vpop.xlane.xlu0 %2155
          %v2157 = vrcp.pop 128.0
          %v2158 = vmul.f32 %v2156, %v2157
          %v2159 = vadd.f32 %v2158, 1e-06
          %v2160 = vrsqrt.pop %v2159
          %v2161 = vmul.f32 %v2152, %v2160
          %v2162 = vld [vmem:[#allocation24] sm:$0x1]
          %v2163 = vadd.f32 %v2162, 1.0
          %v2165 = vlaneseq
          %v2166 = vshrl.u32 %v2165, 7
          %v2167 = vsub.s32 0, %v2166
          %v2168 = vrot.slane %v2163, %v2167
          %v2170 = vmul.f32 %v2161, %v2168
          %v2171 = vpack.c.bf16 %v2170, %v2170
          %2172 = vst [vmem:[#allocation3] sm:$0xf] %v2171
        $region128: #{tpu_custom_call.1} parent=67 // pred_fallthru
          _
        %p2173 = scmp.ge.s32.totalorder %s42, 2
        // Predicated region
        $region129: #{tpu_custom_call.1} parent=67 // pred_check
          %p2174 = pneg %p2173
        $region130: #{tpu_custom_call.1} parent=67 // pred_check_branch
          %2176 = sbr.rel (%p2174) target = $region132
        $region131: #{tpu_custom_call.1} parent=67 // pred_region
          %v2177 = vld [vmem:[#allocation3] sm:$0xf]
          %v2178 = vld [vmem:[%s692] sm:$0xf]
          %v2179 = vld [vmem:[%s692 + $0x4] sm:$0xf]
          %v2180 = vld [vmem:[%s692 + $0x8] sm:$0xf]
          %v2181 = vld [vmem:[%s692 + $0xc] sm:$0xf]
          %v2182 = vld [vmem:[%s692 + $0x10] sm:$0xf]
          %v2183 = vld [vmem:[%s692 + $0x14] sm:$0xf]
          %v2184 = vld [vmem:[%s692 + $0x18] sm:$0xf]
          %v2185 = vld [vmem:[%s692 + $0x1c] sm:$0xf]
          %v2186 = vld [vmem:[%s692 + $0x20] sm:$0xf]
          %v2187 = vld [vmem:[%s692 + $0x24] sm:$0xf]
          %v2188 = vld [vmem:[%s692 + $0x28] sm:$0xf]
          %v2189 = vld [vmem:[%s692 + $0x2c] sm:$0xf]
          %v2190 = vld [vmem:[%s692 + $0x30] sm:$0xf]
          %v2191 = vld [vmem:[%s692 + $0x34] sm:$0xf]
          %v2192 = vld [vmem:[%s692 + $0x38] sm:$0xf]
          %v2193 = vld [vmem:[%s692 + $0x3c] sm:$0xf]
          %v2210 = vunpack.c.l.b16 %v2178
          %v2211 = vunpack.c.l.b16 %v2179
          %v2212 = vunpack.c.l.b16 %v2180
          %v2213 = vunpack.c.l.b16 %v2181
          %v2214 = vunpack.c.l.b16 %v2182
          %v2215 = vunpack.c.l.b16 %v2183
          %v2216 = vunpack.c.l.b16 %v2184
          %v2217 = vunpack.c.l.b16 %v2185
          %v2218 = vunpack.c.l.b16 %v2186
          %v2219 = vunpack.c.l.b16 %v2187
          %v2220 = vunpack.c.l.b16 %v2188
          %v2221 = vunpack.c.l.b16 %v2189
          %v2222 = vunpack.c.l.b16 %v2190
          %v2223 = vunpack.c.l.b16 %v2191
          %v2224 = vunpack.c.l.b16 %v2192
          %v2225 = vunpack.c.l.b16 %v2193
          %v2226 = vpack.c.b16 %v2211, %v2210
          %v2227 = vpack.c.b16 %v2213, %v2212
          %v2228 = vpack.c.b16 %v2215, %v2214
          %v2229 = vpack.c.b16 %v2217, %v2216
          %v2230 = vpack.c.b16 %v2219, %v2218
          %v2231 = vpack.c.b16 %v2221, %v2220
          %v2232 = vpack.c.b16 %v2223, %v2222
          %v2233 = vpack.c.b16 %v2225, %v2224
          %2242 = vmatprep.subr.bf16.mxu0 0
          %2243 = vmatpush1.bf16.xpose.msra.mxu0 %v2226
          %2244 = vmatprep.subr.bf16.mxu0 0
          %2245 = vmatpush1.bf16.xpose.msra.mxu0 %v2227
          %2246 = vmatprep.subr.bf16.mxu0 0
          %2247 = vmatpush1.bf16.xpose.msra.mxu0 %v2228
          %2248 = vmatprep.subr.bf16.mxu0 0
          %2249 = vmatpush1.bf16.xpose.msra.mxu0 %v2229
          %2250 = vmatprep.subr.bf16.mxu0 0
          %2251 = vmatpush1.bf16.xpose.msra.mxu0 %v2230
          %2252 = vmatprep.subr.bf16.mxu0 0
          %2253 = vmatpush1.bf16.xpose.msra.mxu0 %v2231
          %2254 = vmatprep.subr.bf16.mxu0 0
          %2255 = vmatpush1.bf16.xpose.msra.mxu0 %v2232
          %2256 = vmatprep.subr.bf16.mxu0 0
          %2257 = vmatpush1.bf16.xpose.msra.mxu0 %v2233
          %2258 = vmatprep.subr.bf16.mxu0 0
          %2259 = vmatpush1.bf16.xpose.msra.mxu0 0
          %2260 = vmatprep.subr.bf16.mxu0 0
          %2261 = vmatpush1.bf16.xpose.msra.mxu0 0
          %2262 = vmatprep.subr.bf16.mxu0 0
          %2263 = vmatpush1.bf16.xpose.msra.mxu0 0
          %2264 = vmatprep.subr.bf16.mxu0 0
          %2265 = vmatpush1.bf16.xpose.msra.mxu0 0
          %2266 = vmatprep.subr.bf16.mxu0 0
          %2267 = vmatpush1.bf16.xpose.msra.mxu0 0
          %2268 = vmatprep.subr.bf16.mxu0 0
          %2269 = vmatpush1.bf16.xpose.msra.mxu0 0
          %2270 = vmatprep.subr.bf16.mxu0 0
          %2271 = vmatpush1.bf16.xpose.msra.mxu0 0
          %2272 = vmatprep.subr.bf16.mxu0 0
          %2273 = vmatpush1.bf16.xpose.msra.mxu0 0
          %2274 = vmatprep.mubr.bf16.mxu0 0
          %2275 = vmatmul.mubr.bf16.gmra.mrb[0].mxu0 %v2177
          %v2276 = vpop.f32.mrb[0].mxu0
          %v2277 = vadd.f32 0.0, %v2276
          %v2278 = vpop.f32.mrb[0].mxu0
          %v2279 = vpop.f32.mrb[0].mxu0
          %v2280 = vpop.f32.mrb[0].mxu0
          %2281 = vdwg.mxu0
          %s2282 = scalar_lea.vmem %s692, 64 [#allocation21]
          %v2283 = vld [vmem:[%s2282] sm:$0xf]
          %v2284 = vld [vmem:[%s2282 + $0x4] sm:$0xf]
          %v2285 = vld [vmem:[%s2282 + $0x8] sm:$0xf]
          %v2286 = vld [vmem:[%s2282 + $0xc] sm:$0xf]
          %v2287 = vld [vmem:[%s2282 + $0x10] sm:$0xf]
          %v2288 = vld [vmem:[%s2282 + $0x14] sm:$0xf]
          %v2289 = vld [vmem:[%s2282 + $0x18] sm:$0xf]
          %v2290 = vld [vmem:[%s2282 + $0x1c] sm:$0xf]
          %v2291 = vld [vmem:[%s2282 + $0x20] sm:$0xf]
          %v2292 = vld [vmem:[%s2282 + $0x24] sm:$0xf]
          %v2293 = vld [vmem:[%s2282 + $0x28] sm:$0xf]
          %v2294 = vld [vmem:[%s2282 + $0x2c] sm:$0xf]
          %v2295 = vld [vmem:[%s2282 + $0x30] sm:$0xf]
          %v2296 = vld [vmem:[%s2282 + $0x34] sm:$0xf]
          %v2297 = vld [vmem:[%s2282 + $0x38] sm:$0xf]
          %v2298 = vld [vmem:[%s2282 + $0x3c] sm:$0xf]
          %v2315 = vunpack.c.l.b16 %v2283
          %v2316 = vunpack.c.l.b16 %v2284
          %v2317 = vunpack.c.l.b16 %v2285
          %v2318 = vunpack.c.l.b16 %v2286
          %v2319 = vunpack.c.l.b16 %v2287
          %v2320 = vunpack.c.l.b16 %v2288
          %v2321 = vunpack.c.l.b16 %v2289
          %v2322 = vunpack.c.l.b16 %v2290
          %v2323 = vunpack.c.l.b16 %v2291
          %v2324 = vunpack.c.l.b16 %v2292
          %v2325 = vunpack.c.l.b16 %v2293
          %v2326 = vunpack.c.l.b16 %v2294
          %v2327 = vunpack.c.l.b16 %v2295
          %v2328 = vunpack.c.l.b16 %v2296
          %v2329 = vunpack.c.l.b16 %v2297
          %v2330 = vunpack.c.l.b16 %v2298
          %v2331 = vpack.c.b16 %v2316, %v2315
          %v2332 = vpack.c.b16 %v2318, %v2317
          %v2333 = vpack.c.b16 %v2320, %v2319
          %v2334 = vpack.c.b16 %v2322, %v2321
          %v2335 = vpack.c.b16 %v2324, %v2323
          %v2336 = vpack.c.b16 %v2326, %v2325
          %v2337 = vpack.c.b16 %v2328, %v2327
          %v2338 = vpack.c.b16 %v2330, %v2329
          %2347 = vmatprep.subr.bf16.mxu0 0
          %2348 = vmatpush1.bf16.xpose.msra.mxu0 %v2331
          %2349 = vmatprep.subr.bf16.mxu0 0
          %2350 = vmatpush1.bf16.xpose.msra.mxu0 %v2332
          %2351 = vmatprep.subr.bf16.mxu0 0
          %2352 = vmatpush1.bf16.xpose.msra.mxu0 %v2333
          %2353 = vmatprep.subr.bf16.mxu0 0
          %2354 = vmatpush1.bf16.xpose.msra.mxu0 %v2334
          %2355 = vmatprep.subr.bf16.mxu0 0
          %2356 = vmatpush1.bf16.xpose.msra.mxu0 %v2335
          %2357 = vmatprep.subr.bf16.mxu0 0
          %2358 = vmatpush1.bf16.xpose.msra.mxu0 %v2336
          %2359 = vmatprep.subr.bf16.mxu0 0
          %2360 = vmatpush1.bf16.xpose.msra.mxu0 %v2337
          %2361 = vmatprep.subr.bf16.mxu0 0
          %2362 = vmatpush1.bf16.xpose.msra.mxu0 %v2338
          %2363 = vmatprep.subr.bf16.mxu0 0
          %2364 = vmatpush1.bf16.xpose.msra.mxu0 0
          %2365 = vmatprep.subr.bf16.mxu0 0
          %2366 = vmatpush1.bf16.xpose.msra.mxu0 0
          %2367 = vmatprep.subr.bf16.mxu0 0
          %2368 = vmatpush1.bf16.xpose.msra.mxu0 0
          %2369 = vmatprep.subr.bf16.mxu0 0
          %2370 = vmatpush1.bf16.xpose.msra.mxu0 0
          %2371 = vmatprep.subr.bf16.mxu0 0
          %2372 = vmatpush1.bf16.xpose.msra.mxu0 0
          %2373 = vmatprep.subr.bf16.mxu0 0
          %2374 = vmatpush1.bf16.xpose.msra.mxu0 0
          %2375 = vmatprep.subr.bf16.mxu0 0
          %2376 = vmatpush1.bf16.xpose.msra.mxu0 0
          %2377 = vmatprep.subr.bf16.mxu0 0
          %2378 = vmatpush1.bf16.xpose.msra.mxu0 0
          %2379 = vmatprep.mubr.bf16.mxu0 0
          %2380 = vmatmul.mubr.bf16.gmra.mrb[0].mxu0 %v2177
          %v2381 = vpop.f32.mrb[0].mxu0
          %v2382 = vadd.f32 0.0, %v2381
          %v2383 = vpop.f32.mrb[0].mxu0
          %v2384 = vpop.f32.mrb[0].mxu0
          %v2385 = vpop.f32.mrb[0].mxu0
          %2386 = vdwg.mxu0
          %v2387 = vmul.f32 %v2277, 0.5
          %v2388 = vmul.f32 %v2277, 0.70710677
          %v2389 = verf.f32.pop %v2388
          %v2390 = vadd.f32 %v2389, 1.0
          %v2391 = vmul.f32 %v2387, %v2390
          %v2392 = vmul.f32 %v2391, %v2382
          %v2393 = vpack.c.bf16 %v2392, %v2392
          %v2394 = vld [vmem:[%s701] sm:$0xf]
          %v2395 = vld [vmem:[%s701 + $0x4] sm:$0xf]
          %v2396 = vld [vmem:[%s701 + $0x8] sm:$0xf]
          %v2397 = vld [vmem:[%s701 + $0xc] sm:$0xf]
          %v2398 = vld [vmem:[%s701 + $0x10] sm:$0xf]
          %v2399 = vld [vmem:[%s701 + $0x14] sm:$0xf]
          %v2400 = vld [vmem:[%s701 + $0x18] sm:$0xf]
          %v2401 = vld [vmem:[%s701 + $0x1c] sm:$0xf]
          %v2402 = vld [vmem:[%s701 + $0x20] sm:$0xf]
          %v2403 = vld [vmem:[%s701 + $0x24] sm:$0xf]
          %v2404 = vld [vmem:[%s701 + $0x28] sm:$0xf]
          %v2405 = vld [vmem:[%s701 + $0x2c] sm:$0xf]
          %v2406 = vld [vmem:[%s701 + $0x30] sm:$0xf]
          %v2407 = vld [vmem:[%s701 + $0x34] sm:$0xf]
          %v2408 = vld [vmem:[%s701 + $0x38] sm:$0xf]
          %v2409 = vld [vmem:[%s701 + $0x3c] sm:$0xf]
          %v2426 = vunpack.c.l.b16 %v2394
          %v2427 = vunpack.c.l.b16 %v2395
          %v2428 = vunpack.c.l.b16 %v2396
          %v2429 = vunpack.c.l.b16 %v2397
          %v2430 = vunpack.c.l.b16 %v2398
          %v2431 = vunpack.c.l.b16 %v2399
          %v2432 = vunpack.c.l.b16 %v2400
          %v2433 = vunpack.c.l.b16 %v2401
          %v2434 = vunpack.c.l.b16 %v2402
          %v2435 = vunpack.c.l.b16 %v2403
          %v2436 = vunpack.c.l.b16 %v2404
          %v2437 = vunpack.c.l.b16 %v2405
          %v2438 = vunpack.c.l.b16 %v2406
          %v2439 = vunpack.c.l.b16 %v2407
          %v2440 = vunpack.c.l.b16 %v2408
          %v2441 = vunpack.c.l.b16 %v2409
          %v2442 = vpack.c.b16 %v2427, %v2426
          %v2443 = vpack.c.b16 %v2429, %v2428
          %v2444 = vpack.c.b16 %v2431, %v2430
          %v2445 = vpack.c.b16 %v2433, %v2432
          %v2446 = vpack.c.b16 %v2435, %v2434
          %v2447 = vpack.c.b16 %v2437, %v2436
          %v2448 = vpack.c.b16 %v2439, %v2438
          %v2449 = vpack.c.b16 %v2441, %v2440
          %2458 = vmatprep.subr.bf16.mxu0 0
          %2459 = vmatpush1.bf16.xpose.msra.mxu0 %v2442
          %2460 = vmatprep.subr.bf16.mxu0 0
          %2461 = vmatpush1.bf16.xpose.msra.mxu0 %v2443
          %2462 = vmatprep.subr.bf16.mxu0 0
          %2463 = vmatpush1.bf16.xpose.msra.mxu0 %v2444
          %2464 = vmatprep.subr.bf16.mxu0 0
          %2465 = vmatpush1.bf16.xpose.msra.mxu0 %v2445
          %2466 = vmatprep.subr.bf16.mxu0 0
          %2467 = vmatpush1.bf16.xpose.msra.mxu0 %v2446
          %2468 = vmatprep.subr.bf16.mxu0 0
          %2469 = vmatpush1.bf16.xpose.msra.mxu0 %v2447
          %2470 = vmatprep.subr.bf16.mxu0 0
          %2471 = vmatpush1.bf16.xpose.msra.mxu0 %v2448
          %2472 = vmatprep.subr.bf16.mxu0 0
          %2473 = vmatpush1.bf16.xpose.msra.mxu0 %v2449
          %2474 = vmatprep.subr.bf16.mxu0 0
          %2475 = vmatpush1.bf16.xpose.msra.mxu0 0
          %2476 = vmatprep.subr.bf16.mxu0 0
          %2477 = vmatpush1.bf16.xpose.msra.mxu0 0
          %2478 = vmatprep.subr.bf16.mxu0 0
          %2479 = vmatpush1.bf16.xpose.msra.mxu0 0
          %2480 = vmatprep.subr.bf16.mxu0 0
          %2481 = vmatpush1.bf16.xpose.msra.mxu0 0
          %2482 = vmatprep.subr.bf16.mxu0 0
          %2483 = vmatpush1.bf16.xpose.msra.mxu0 0
          %2484 = vmatprep.subr.bf16.mxu0 0
          %2485 = vmatpush1.bf16.xpose.msra.mxu0 0
          %2486 = vmatprep.subr.bf16.mxu0 0
          %2487 = vmatpush1.bf16.xpose.msra.mxu0 0
          %2488 = vmatprep.subr.bf16.mxu0 0
          %2489 = vmatpush1.bf16.xpose.msra.mxu0 0
          %2490 = vmatprep.mubr.bf16.mxu0 0
          %2491 = vmatmul.mubr.bf16.gmra.mrb[0].mxu0 %v2393
          %v2492 = vpop.f32.mrb[0].mxu0
          %v2493 = vadd.f32 0.0, %v2492
          %v2494 = vpop.f32.mrb[0].mxu0
          %v2495 = vpop.f32.mrb[0].mxu0
          %v2496 = vpop.f32.mrb[0].mxu0
          %2497 = vdwg.mxu0
          %v2498 = vld [vmem:[%s774] sm:$0xff]
          %v2499 = vadd.f32 %v2498, %v2493
          %2500 = vst [vmem:[%s774] sm:$0xff] %v2499
        $region132: #{tpu_custom_call.1} parent=67 // pred_fallthru
          _
        %s2501 = sand.u32 %s367, 1
        %s2502 = scalar_lea.sflag [#allocation9], %s2501
        %s2503 = sand.u32 %s367, 1
        %s2504 = smul.addr %s2503, 8
        %s2505 = scalar_lea.vmem [#allocation25], %s2504
        // Predicated region
        $region133: #{tpu_custom_call.1} parent=67 // pred_check
          %p2506 = pneg %p377
        $region134: #{tpu_custom_call.1} parent=67 // pred_check_branch
          %2508 = sbr.rel (%p2506) target = $region136
        $region135: #{tpu_custom_call.1} parent=67 // pred_region
          %s2510 = ssub.s32 128, 128
          %2511 = vsyncadd %s2502, %s2510
          %s2512 = smul.addr %s41, 128
          %s2513 = scalar_lea.hbm %s12, %s2512
          %s2515 = sshll.u32 %s2505, 4
          %s2516 = int_to_ptr.vmem [resolvable:$true] %s2515
          %2518 = dma.vmem_to_hbm [thread:$0]  %s2516, 128, %s2513, %s2502
        $region136: #{tpu_custom_call.1} parent=67 // pred_fallthru
          _
      $region68: #{tpu_custom_call.1} parent=5 // pred_fallthru
        _
      %p2519 = scmp.le.s32.totalorder 2, %s32
      // Predicated region
      $region137: #{tpu_custom_call.1} parent=5 // pred_check
        %p2520 = pneg %p2519
      $region138: #{tpu_custom_call.1} parent=5 // pred_check_branch
        %2522 = sbr.rel (%p2520) target = $region140
      $region139: #{tpu_custom_call.1} parent=5 // pred_region
        %s2523 = ssub.s32 %s32, 2
        // Predicated region
        $region141: #{tpu_custom_call.1} parent=139 // pred_check
          %p2524 = pneg %p383
        $region142: #{tpu_custom_call.1} parent=139 // pred_check_branch
          %2526 = sbr.rel (%p2524) target = $region144
        $region143: #{tpu_custom_call.1} parent=139 // pred_region
          %s2527 = sand.u32 %s368, 1
          %s2528 = scalar_lea.sflag [#allocation9], %s2527
          %s2529 = sand.u32 %s368, 1
          %s2530 = smul.addr %s2529, 8
          %s2531 = scalar_lea.vmem [#allocation25], %s2530
          %2532 = dma.done %s2528, 128
        $region144: #{tpu_custom_call.1} parent=139 // pred_fallthru
          _
      $region140: #{tpu_custom_call.1} parent=5 // pred_fallthru
        _
    $region6: #{tpu_custom_call.1} parent=1 // loop_footer
      %s36 = sadd.s32 1, %s32
    $region7: #{tpu_custom_call.1} parent=1 // loop_footer_branch
      %31 = sbr.rel target = $region3
    $region8: #{tpu_custom_call.1} parent=1 // loop_exit
      _
    %2533 = vsyncpa [#allocation8], 1
    %s2534 = scalar_lea.sflag [#allocation8], 1
    %2535 = vsyncpa %s2534, 1
    %2536 = vsyncpa [#allocation11], 1
    %2537 = vsyncpa [#allocation14], 1
    %s2538 = scalar_lea.sflag [#allocation14], 1
    %2539 = vsyncpa %s2538, 1
    %2540 = vsyncpa [#allocation17], 1
    %s2541 = scalar_lea.sflag [#allocation17], 1
    %2542 = vsyncpa %s2541, 1
    %2543 = vsyncpa [#allocation20], 1
    %2544 = vsyncpa [#allocation9], 1
    %s2545 = scalar_lea.sflag [#allocation9], 1
    %2546 = vsyncpa %s2545, 1

// kernel: tpu_custom_call.1
$region0: #{tpu_custom_call.1}
  #allocation0 [shape = 'u32[]', space=smem, size = 0x4, offset = 0x4, fixed_abs, tag = 'smem constant byte address 0x4 - core index']
  #allocation1 [shape = 'u32[144,128]{1,0:T(1,128)}', space=vmem, size = 0x12000, scoped, tag = 'internal scratch']
  #allocation2 [shape = 'bf16[8,128]{1,0:T(8,128)(2,1)}', space=vmem, size = 0x800, scoped, tag = 'scratch operand']
  #allocation3 [shape = 'bf16[8,128]{1,0:T(8,128)(2,1)}', space=vmem, size = 0x800, scoped, tag = 'scratch operand']
  #allocation4 [shape = 'f32[4,8,1]{2,1,0:T(8,128)}', space=vmem, size = 0x4000, scoped, tag = 'scratch operand']
  #allocation5 [shape = 'f32[4,8,1]{2,1,0:T(8,128)}', space=vmem, size = 0x4000, scoped, tag = 'scratch operand']
  #allocation6 [shape = 'f32[4,8,32]{2,1,0:T(8,128)}', space=vmem, size = 0x4000, scoped, tag = 'scratch operand']
  #allocation26 [shape = 's32[]', space=sflag, size = 0x4, offset = 0, fixed_abs, tag = 'sflag constant byte address 0x0 - dummy sync flag']
  %s0 = inlined_call_operand.hbm [shape: f32[2,8,128], index: 0, kind: input, shape index: {}]
  %s1 = inlined_call_operand.hbm [shape: f32[8,32], index: 1, kind: input, shape index: {}]
  %s2 = inlined_call_operand.hbm [shape: f32[8,32], index: 2, kind: input, shape index: {}]
  %s3 = inlined_call_operand.hbm [shape: bf16[2,256,64], index: 3, kind: input, shape index: {}]
  %s4 = inlined_call_operand.hbm [shape: bf16[2,256,64], index: 4, kind: input, shape index: {}]
  %s5 = inlined_call_operand.hbm [shape: f32[8,256], index: 5, kind: input, shape index: {}]
  %s6 = inlined_call_operand.hbm [shape: bf16[256,128], index: 6, kind: input, shape index: {}]
  %s7 = inlined_call_operand.hbm [shape: bf16[128,128], index: 7, kind: input, shape index: {}]
  %s8 = inlined_call_operand.hbm [shape: bf16[2,256,128], index: 8, kind: input, shape index: {}]
  %s9 = inlined_call_operand.hbm [shape: bf16[128,256], index: 9, kind: input, shape index: {}]
  %s10 = inlined_call_operand.hbm [shape: f32[1,128], index: 10, kind: input, shape index: {}]
  %s11 = inlined_call_operand.hbm [shape: f32[1,128], index: 11, kind: input, shape index: {}]
  %s12 = inlined_call_operand.hbm [shape: f32[2,8,128], index: 12, kind: output, shape index: {}]
  %s13 = sld [smem:[#allocation0]]
  $region145: #{tpu_custom_call.1} parent=0
    _
  %s15 = ssub.s32 1, %s13
  %s16 = scalar_select 0, %s15, %s13
  $region1: #{tpu_custom_call.1} parent=0
    #allocation7 [shape = 'u8[8192]{0}', space=vmem, size = 0x2000, scoped, tag = 'input window, operand 0']
    #allocation8 [shape = 's32[2]{0}', space=sflag, size = 0x8, scoped, tag = 'scoped memory for tpu_custom_call.1']
    #allocation9 [shape = 's32[2]{0}', space=sflag, size = 0x8, scoped, tag = 'scoped memory for tpu_custom_call.1']
    #allocation10 [shape = 'u8[4096]{0}', space=vmem, size = 0x1000, scoped, tag = 'input window, operand 1, single buffered']
    #allocation11 [shape = 's32[1]{0}', space=sflag, size = 0x4, scoped, tag = 'scoped memory for tpu_custom_call.1']
    #allocation12 [shape = 'u8[4096]{0}', space=vmem, size = 0x1000, scoped, tag = 'input window, operand 2, single buffered']
    #allocation13 [shape = 'u8[65536]{0}', space=vmem, size = 0x10000, scoped, tag = 'input window, operand 3']
    #allocation14 [shape = 's32[2]{0}', space=sflag, size = 0x8, scoped, tag = 'scoped memory for tpu_custom_call.1']
    #allocation15 [shape = 'u8[65536]{0}', space=vmem, size = 0x10000, scoped, tag = 'input window, operand 4']
    #allocation16 [shape = 'u8[8192]{0}', space=vmem, size = 0x2000, scoped, tag = 'input window, operand 5']
    #allocation17 [shape = 's32[2]{0}', space=sflag, size = 0x8, scoped, tag = 'scoped memory for tpu_custom_call.1']
    #allocation18 [shape = 'u8[65536]{0}', space=vmem, size = 0x10000, scoped, tag = 'input window, operand 6, single buffered']
    #allocation19 [shape = 'u8[32768]{0}', space=vmem, size = 0x8000, scoped, tag = 'input window, operand 7, single buffered']
    #allocation20 [shape = 's32[1]{0}', space=sflag, size = 0x4, scoped, tag = 'scoped memory for tpu_custom_call.1']
    #allocation21 [shape = 'u8[131072]{0}', space=vmem, size = 0x20000, scoped, tag = 'input window, operand 8']
    #allocation22 [shape = 'u8[65536]{0}', space=vmem, size = 0x10000, scoped, tag = 'input window, operand 9']
    #allocation23 [shape = 'u8[512]{0}', space=vmem, size = 0x400, scoped, tag = 'input window, operand 10, single buffered']
    #allocation24 [shape = 'u8[512]{0}', space=vmem, size = 0x400, scoped, tag = 'input window, operand 11, single buffered']
    #allocation25 [shape = 'u8[8192]{0}', space=vmem, size = 0x2000, scoped, tag = 'output window, operand 0']
    %17 = vsyncpa [#allocation8], 0
    %s18 = scalar_lea.sflag [#allocation8], 1
    %19 = vsyncpa %s18, 0
    %20 = vsyncpa [#allocation11], 0
    %21 = vsyncpa [#allocation14], 0
    %s22 = scalar_lea.sflag [#allocation14], 1
    %23 = vsyncpa %s22, 0
    %24 = vsyncpa [#allocation17], 0
    %s25 = scalar_lea.sflag [#allocation17], 1
    %26 = vsyncpa %s25, 0
    %27 = vsyncpa [#allocation20], 0
    %28 = vsyncpa [#allocation9], 0
    %s29 = scalar_lea.sflag [#allocation9], 1
    %30 = vsyncpa %s29, 0
    loop: start=0, step=1, limit=10
    $region2: #{tpu_custom_call.1} parent=1 // loop_pre_header
      _
    $region3: #{tpu_custom_call.1} parent=1 // loop_header
      %s32 = sphi 0, %s36
      %p33 = scmp.ge.s32.totalorder %s32, 10
      %s39 = sphi 0, %s51
      %s40 = sphi 0, %s47
      %s41 = sphi 0, %s39
      %s42 = sphi 0, %s40
      %s43 = sphi 0, %s41
      %s44 = sphi 0, %s42
      %s54 = sphi 0, %s56
      %s57 = sphi 0, %s54
      %s58 = sphi 0, %s57
      %s74 = sphi 0, %s58
      %s78 = sphi 0, %s78
      %s80 = sphi 0, %s78
      %s81 = sphi 0, %s80
      %s95 = sphi 0, %s81
      %s99 = sphi 0, %s99
      %s101 = sphi 0, %s99
      %s102 = sphi 0, %s101
      %s116 = sphi 0, %s102
      %s128 = sphi 0, %s130
      %s131 = sphi 0, %s128
      %s132 = sphi 0, %s131
      %s148 = sphi 0, %s132
      %s160 = sphi 0, %s162
      %s163 = sphi 0, %s160
      %s164 = sphi 0, %s163
      %s180 = sphi 0, %s164
      %s190 = sphi 0, %s192
      %s193 = sphi 0, %s190
      %s194 = sphi 0, %s193
      %s210 = sphi 0, %s194
      %s214 = sphi 0, %s214
      %s216 = sphi 0, %s214
      %s217 = sphi 0, %s216
      %s231 = sphi 0, %s217
      %s235 = sphi 0, %s235
      %s237 = sphi 0, %s235
      %s238 = sphi 0, %s237
      %s252 = sphi 0, %s238
      %s264 = sphi 0, %s266
      %s267 = sphi 0, %s264
      %s268 = sphi 0, %s267
      %s284 = sphi 0, %s268
      %s296 = sphi 0, %s298
      %s299 = sphi 0, %s296
      %s300 = sphi 0, %s299
      %s316 = sphi 0, %s300
      %s320 = sphi 0, %s320
      %s322 = sphi 0, %s320
      %s323 = sphi 0, %s322
      %s337 = sphi 0, %s323
      %s341 = sphi 0, %s341
      %s343 = sphi 0, %s341
      %s344 = sphi 0, %s343
      %s358 = sphi 0, %s344
      %s364 = sphi 0, %s366
      %s367 = sphi 0, %s364
      %s368 = sphi 0, %s367
      %s384 = sphi 0, %s368
    $region4: #{tpu_custom_call.1} parent=1 // loop_header_branch
      %35 = sbr.rel (%p33) target = $region8
    $region5: #{tpu_custom_call.1} parent=1 // loop_body
      %s37 = ssub.s32 %s32, 1
      %s38 = ssub.s32 %s32, 2
      %s45 = sadd.s32 1, %s40
      %p46 = scmp.ge.s32.totalorder %s45, 4
      %s47 = scalar_select %p46, 0, %s45
      %s48 = sadd.s32 1, %s39
      %s49 = scalar_select %p46, %s48, %s39
      %p50 = scmp.ge.s32.totalorder %s49, 2
      %s51 = scalar_select %p50, 0, %s49
      %s52 = ssub.s32 %s39, %s51
      %p53 = scmp.eq.s32.totalorder %s52, 0
      %s55 = sadd.s32 %s54, 1
      %s56 = scalar_select %p53, %s54, %s55
      %p59 = pneg %p53
      %p60 = scmp.eq.s32.totalorder %s32, 7
      %p61 = por %p59, %p60
      %p62 = scmp.ne.s32.totalorder %s54, %s57
      %p63 = scmp.eq.s32.totalorder %s32, 0
      %p64 = por %p62, %p63
      %p65 = scmp.ne.s32.totalorder %s54, %s57
      %p66 = scmp.eq.s32.totalorder %s37, 7
      %p67 = por %p65, %p66
      %p68 = scmp.ne.s32.totalorder %s57, %s58
      %p69 = scmp.eq.s32.totalorder %s37, 0
      %p70 = por %p68, %p69
      %p71 = scmp.ne.s32.totalorder %s57, %s58
      %p72 = scmp.eq.s32.totalorder %s38, 7
      %p73 = por %p71, %p72
      %p75 = scmp.ne.s32.totalorder %s58, %s74
      %p76 = scmp.eq.s32.totalorder %s38, 0
      %p77 = por %p75, %p76
      %s79 = sadd.s32 %s78, 1
      %p82 = scmp.eq.s32.totalorder %s32, 7
      %p83 = scmp.ne.s32.totalorder %s78, %s80
      %p84 = scmp.eq.s32.totalorder %s32, 0
      %p85 = por %p83, %p84
      %p86 = scmp.ne.s32.totalorder %s78, %s80
      %p87 = scmp.eq.s32.totalorder %s37, 7
      %p88 = por %p86, %p87
      %p89 = scmp.ne.s32.totalorder %s80, %s81
      %p90 = scmp.eq.s32.totalorder %s37, 0
      %p91 = por %p89, %p90
      %p92 = scmp.ne.s32.totalorder %s80, %s81
      %p93 = scmp.eq.s32.totalorder %s38, 7
      %p94 = por %p92, %p93
      %p96 = scmp.ne.s32.totalorder %s81, %s95
      %p97 = scmp.eq.s32.totalorder %s38, 0
      %p98 = por %p96, %p97
      %s100 = sadd.s32 %s99, 1
      %p103 = scmp.eq.s32.totalorder %s32, 7
      %p104 = scmp.ne.s32.totalorder %s99, %s101
      %p105 = scmp.eq.s32.totalorder %s32, 0
      %p106 = por %p104, %p105
      %p107 = scmp.ne.s32.totalorder %s99, %s101
      %p108 = scmp.eq.s32.totalorder %s37, 7
      %p109 = por %p107, %p108
      %p110 = scmp.ne.s32.totalorder %s101, %s102
      %p111 = scmp.eq.s32.totalorder %s37, 0
      %p112 = por %p110, %p111
      %p113 = scmp.ne.s32.totalorder %s101, %s102
      %p114 = scmp.eq.s32.totalorder %s38, 7
      %p115 = por %p113, %p114
      %p117 = scmp.ne.s32.totalorder %s102, %s116
      %p118 = scmp.eq.s32.totalorder %s38, 0
      %p119 = por %p117, %p118
      %p120 = scmp.lt.s32.totalorder %s40, 1
      %s121 = scalar_select %p120, %s40, 1
      %p122 = scmp.lt.s32.totalorder %s47, 1
      %s123 = scalar_select %p122, %s47, 1
      %s124 = ssub.s32 %s39, %s51
      %s125 = ssub.s32 %s121, %s123
      %s126 = sor.u32 %s124, %s125
      %p127 = scmp.eq.s32.totalorder %s126, 0
      %s129 = sadd.s32 %s128, 1
      %s130 = scalar_select %p127, %s128, %s129
      %p133 = pneg %p127
      %p134 = scmp.eq.s32.totalorder %s32, 7
      %p135 = por %p133, %p134
      %p136 = scmp.ne.s32.totalorder %s128, %s131
      %p137 = scmp.eq.s32.totalorder %s32, 0
      %p138 = por %p136, %p137
      %p139 = scmp.ne.s32.totalorder %s128, %s131
      %p140 = scmp.eq.s32.totalorder %s37, 7
      %p141 = por %p139, %p140
      %p142 = scmp.ne.s32.totalorder %s131, %s132
      %p143 = scmp.eq.s32.totalorder %s37, 0
      %p144 = por %p142, %p143
      %p145 = scmp.ne.s32.totalorder %s131, %s132
      %p146 = scmp.eq.s32.totalorder %s38, 7
      %p147 = por %p145, %p146
      %p149 = scmp.ne.s32.totalorder %s132, %s148
      %p150 = scmp.eq.s32.totalorder %s38, 0
      %p151 = por %p149, %p150
      %p152 = scmp.lt.s32.totalorder %s40, 1
      %s153 = scalar_select %p152, %s40, 1
      %p154 = scmp.lt.s32.totalorder %s47, 1
      %s155 = scalar_select %p154, %s47, 1
      %s156 = ssub.s32 %s39, %s51
      %s157 = ssub.s32 %s153, %s155
      %s158 = sor.u32 %s156, %s157
      %p159 = scmp.eq.s32.totalorder %s158, 0
      %s161 = sadd.s32 %s160, 1
      %s162 = scalar_select %p159, %s160, %s161
      %p165 = pneg %p159
      %p166 = scmp.eq.s32.totalorder %s32, 7
      %p167 = por %p165, %p166
      %p168 = scmp.ne.s32.totalorder %s160, %s163
      %p169 = scmp.eq.s32.totalorder %s32, 0
      %p170 = por %p168, %p169
      %p171 = scmp.ne.s32.totalorder %s160, %s163
      %p172 = scmp.eq.s32.totalorder %s37, 7
      %p173 = por %p171, %p172
      %p174 = scmp.ne.s32.totalorder %s163, %s164
      %p175 = scmp.eq.s32.totalorder %s37, 0
      %p176 = por %p174, %p175
      %p177 = scmp.ne.s32.totalorder %s163, %s164
      %p178 = scmp.eq.s32.totalorder %s38, 7
      %p179 = por %p177, %p178
      %p181 = scmp.ne.s32.totalorder %s164, %s180
      %p182 = scmp.eq.s32.totalorder %s38, 0
      %p183 = por %p181, %p182
      %p184 = scmp.lt.s32.totalorder %s40, 1
      %s185 = scalar_select %p184, %s40, 1
      %p186 = scmp.lt.s32.totalorder %s47, 1
      %s187 = scalar_select %p186, %s47, 1
      %s188 = ssub.s32 %s185, %s187
      %p189 = scmp.eq.s32.totalorder %s188, 0
      %s191 = sadd.s32 %s190, 1
      %s192 = scalar_select %p189, %s190, %s191
      %p195 = pneg %p189
      %p196 = scmp.eq.s32.totalorder %s32, 7
      %p197 = por %p195, %p196
      %p198 = scmp.ne.s32.totalorder %s190, %s193
      %p199 = scmp.eq.s32.totalorder %s32, 0
      %p200 = por %p198, %p199
      %p201 = scmp.ne.s32.totalorder %s190, %s193
      %p202 = scmp.eq.s32.totalorder %s37, 7
      %p203 = por %p201, %p202
      %p204 = scmp.ne.s32.totalorder %s193, %s194
      %p205 = scmp.eq.s32.totalorder %s37, 0
      %p206 = por %p204, %p205
      %p207 = scmp.ne.s32.totalorder %s193, %s194
      %p208 = scmp.eq.s32.totalorder %s38, 7
      %p209 = por %p207, %p208
      %p211 = scmp.ne.s32.totalorder %s194, %s210
      %p212 = scmp.eq.s32.totalorder %s38, 0
      %p213 = por %p211, %p212
      %s215 = sadd.s32 %s214, 1
      %p218 = scmp.eq.s32.totalorder %s32, 7
      %p219 = scmp.ne.s32.totalorder %s214, %s216
      %p220 = scmp.eq.s32.totalorder %s32, 0
      %p221 = por %p219, %p220
      %p222 = scmp.ne.s32.totalorder %s214, %s216
      %p223 = scmp.eq.s32.totalorder %s37, 7
      %p224 = por %p222, %p223
      %p225 = scmp.ne.s32.totalorder %s216, %s217
      %p226 = scmp.eq.s32.totalorder %s37, 0
      %p227 = por %p225, %p226
      %p228 = scmp.ne.s32.totalorder %s216, %s217
      %p229 = scmp.eq.s32.totalorder %s38, 7
      %p230 = por %p228, %p229
      %p232 = scmp.ne.s32.totalorder %s217, %s231
      %p233 = scmp.eq.s32.totalorder %s38, 0
      %p234 = por %p232, %p233
      %s236 = sadd.s32 %s235, 1
      %p239 = scmp.eq.s32.totalorder %s32, 7
      %p240 = scmp.ne.s32.totalorder %s235, %s237
      %p241 = scmp.eq.s32.totalorder %s32, 0
      %p242 = por %p240, %p241
      %p243 = scmp.ne.s32.totalorder %s235, %s237
      %p244 = scmp.eq.s32.totalorder %s37, 7
      %p245 = por %p243, %p244
      %p246 = scmp.ne.s32.totalorder %s237, %s238
      %p247 = scmp.eq.s32.totalorder %s37, 0
      %p248 = por %p246, %p247
      %p249 = scmp.ne.s32.totalorder %s237, %s238
      %p250 = scmp.eq.s32.totalorder %s38, 7
      %p251 = por %p249, %p250
      %p253 = scmp.ne.s32.totalorder %s238, %s252
      %p254 = scmp.eq.s32.totalorder %s38, 0
      %p255 = por %p253, %p254
      %s256 = ssub.s32 %s40, 2
      %p257 = scmp.gt.s32.totalorder %s256, 0
      %s258 = scalar_select %p257, %s256, 0
      %s259 = ssub.s32 %s47, 2
      %p260 = scmp.gt.s32.totalorder %s259, 0
      %s261 = scalar_select %p260, %s259, 0
      %s262 = ssub.s32 %s258, %s261
      %p263 = scmp.eq.s32.totalorder %s262, 0
      %s265 = sadd.s32 %s264, 1
      %s266 = scalar_select %p263, %s264, %s265
      %p269 = pneg %p263
      %p270 = scmp.eq.s32.totalorder %s32, 7
      %p271 = por %p269, %p270
      %p272 = scmp.ne.s32.totalorder %s264, %s267
      %p273 = scmp.eq.s32.totalorder %s32, 0
      %p274 = por %p272, %p273
      %p275 = scmp.ne.s32.totalorder %s264, %s267
      %p276 = scmp.eq.s32.totalorder %s37, 7
      %p277 = por %p275, %p276
      %p278 = scmp.ne.s32.totalorder %s267, %s268
      %p279 = scmp.eq.s32.totalorder %s37, 0
      %p280 = por %p278, %p279
      %p281 = scmp.ne.s32.totalorder %s267, %s268
      %p282 = scmp.eq.s32.totalorder %s38, 7
      %p283 = por %p281, %p282
      %p285 = scmp.ne.s32.totalorder %s268, %s284
      %p286 = scmp.eq.s32.totalorder %s38, 0
      %p287 = por %p285, %p286
      %s288 = ssub.s32 %s40, 2
      %p289 = scmp.gt.s32.totalorder %s288, 0
      %s290 = scalar_select %p289, %s288, 0
      %s291 = ssub.s32 %s47, 2
      %p292 = scmp.gt.s32.totalorder %s291, 0
      %s293 = scalar_select %p292, %s291, 0
      %s294 = ssub.s32 %s290, %s293
      %p295 = scmp.eq.s32.totalorder %s294, 0
      %s297 = sadd.s32 %s296, 1
      %s298 = scalar_select %p295, %s296, %s297
      %p301 = pneg %p295
      %p302 = scmp.eq.s32.totalorder %s32, 7
      %p303 = por %p301, %p302
      %p304 = scmp.ne.s32.totalorder %s296, %s299
      %p305 = scmp.eq.s32.totalorder %s32, 0
      %p306 = por %p304, %p305
      %p307 = scmp.ne.s32.totalorder %s296, %s299
      %p308 = scmp.eq.s32.totalorder %s37, 7
      %p309 = por %p307, %p308
      %p310 = scmp.ne.s32.totalorder %s299, %s300
      %p311 = scmp.eq.s32.totalorder %s37, 0
      %p312 = por %p310, %p311
      %p313 = scmp.ne.s32.totalorder %s299, %s300
      %p314 = scmp.eq.s32.totalorder %s38, 7
      %p315 = por %p313, %p314
      %p317 = scmp.ne.s32.totalorder %s300, %s316
      %p318 = scmp.eq.s32.totalorder %s38, 0
      %p319 = por %p317, %p318
      %s321 = sadd.s32 %s320, 1
      %p324 = scmp.eq.s32.totalorder %s32, 7
      %p325 = scmp.ne.s32.totalorder %s320, %s322
      %p326 = scmp.eq.s32.totalorder %s32, 0
      %p327 = por %p325, %p326
      %p328 = scmp.ne.s32.totalorder %s320, %s322
      %p329 = scmp.eq.s32.totalorder %s37, 7
      %p330 = por %p328, %p329
      %p331 = scmp.ne.s32.totalorder %s322, %s323
      %p332 = scmp.eq.s32.totalorder %s37, 0
      %p333 = por %p331, %p332
      %p334 = scmp.ne.s32.totalorder %s322, %s323
      %p335 = scmp.eq.s32.totalorder %s38, 7
      %p336 = por %p334, %p335
      %p338 = scmp.ne.s32.totalorder %s323, %s337
      %p339 = scmp.eq.s32.totalorder %s38, 0
      %p340 = por %p338, %p339
      %s342 = sadd.s32 %s341, 1
      %p345 = scmp.eq.s32.totalorder %s32, 7
      %p346 = scmp.ne.s32.totalorder %s341, %s343
      %p347 = scmp.eq.s32.totalorder %s32, 0
      %p348 = por %p346, %p347
      %p349 = scmp.ne.s32.totalorder %s341, %s343
      %p350 = scmp.eq.s32.totalorder %s37, 7
      %p351 = por %p349, %p350
      %p352 = scmp.ne.s32.totalorder %s343, %s344
      %p353 = scmp.eq.s32.totalorder %s37, 0
      %p354 = por %p352, %p353
      %p355 = scmp.ne.s32.totalorder %s343, %s344
      %p356 = scmp.eq.s32.totalorder %s38, 7
      %p357 = por %p355, %p356
      %p359 = scmp.ne.s32.totalorder %s344, %s358
      %p360 = scmp.eq.s32.totalorder %s38, 0
      %p361 = por %p359, %p360
      %s362 = ssub.s32 %s39, %s51
      %p363 = scmp.eq.s32.totalorder %s362, 0
      %s365 = sadd.s32 %s364, 1
      %s366 = scalar_select %p363, %s364, %s365
      %p369 = pneg %p363
      %p370 = scmp.eq.s32.totalorder %s32, 7
      %p371 = por %p369, %p370
      %p372 = scmp.ne.s32.totalorder %s364, %s367
      %p373 = scmp.eq.s32.totalorder %s32, 0
      %p374 = por %p372, %p373
      %p375 = scmp.ne.s32.totalorder %s364, %s367
      %p376 = scmp.eq.s32.totalorder %s37, 7
      %p377 = por %p375, %p376
      %p378 = scmp.ne.s32.totalorder %s367, %s368
      %p379 = scmp.eq.s32.totalorder %s37, 0
      %p380 = por %p378, %p379
      %p381 = scmp.ne.s32.totalorder %s367, %s368
      %p382 = scmp.eq.s32.totalorder %s38, 7
      %p383 = por %p381, %p382
      %p385 = scmp.ne.s32.totalorder %s368, %s384
      %p386 = scmp.eq.s32.totalorder %s38, 0
      %p387 = por %p385, %p386
      %p388 = scmp.le.s32.totalorder 1, %s32
      %p389 = scmp.lt.s32.totalorder %s32, 9
      %p390 = pnand %p388, %p389
      %p391 = pneg %p390
      // Predicated region
      $region9: #{tpu_custom_call.1} parent=5 // pred_check
        _
      $region10: #{tpu_custom_call.1} parent=5 // pred_check_branch
        %393 = sbr.rel (%p390) target = $region12
      $region11: #{tpu_custom_call.1} parent=5 // pred_region
        %s394 = ssub.s32 %s32, 1
        // Predicated region
        $region13: #{tpu_custom_call.1} parent=11 // pred_check
          %p395 = pneg %p91
        $region14: #{tpu_custom_call.1} parent=11 // pred_check_branch
          %397 = sbr.rel (%p395) target = $region16
        $region15: #{tpu_custom_call.1} parent=11 // pred_region
          %s399 = ssub.s32 128, 128
          %400 = vsyncadd [#allocation11], %s399
          %s402 = sshll.u32 [#allocation10], 4
          %s403 = int_to_ptr.vmem [resolvable:$true] %s402
          %405 = dma.hbm_to_vmem [thread:$0]  %s1, 128, %s403, [#allocation11]
        $region16: #{tpu_custom_call.1} parent=11 // pred_fallthru
          _
        // Predicated region
        $region17: #{tpu_custom_call.1} parent=11 // pred_check
          %p406 = pneg %p112
        $region18: #{tpu_custom_call.1} parent=11 // pred_check_branch
          %408 = sbr.rel (%p406) target = $region20
        $region19: #{tpu_custom_call.1} parent=11 // pred_region
          %s410 = ssub.s32 128, 128
          %411 = vsyncadd [#allocation11], %s410
          %s413 = sshll.u32 [#allocation12], 4
          %s414 = int_to_ptr.vmem [resolvable:$true] %s413
          %416 = dma.hbm_to_vmem [thread:$0]  %s2, 128, %s414, [#allocation11]
        $region20: #{tpu_custom_call.1} parent=11 // pred_fallthru
          _
        // Predicated region
        $region21: #{tpu_custom_call.1} parent=11 // pred_check
          %p417 = pneg %p227
        $region22: #{tpu_custom_call.1} parent=11 // pred_check_branch
          %419 = sbr.rel (%p417) target = $region24
        $region23: #{tpu_custom_call.1} parent=11 // pred_region
          %s421 = ssub.s32 2048, 2048
          %422 = vsyncadd [#allocation17], %s421
          %s423 = sshll.u32 [#allocation18], 4
          %s424 = int_to_ptr.vmem [resolvable:$true] %s423
          %429 = dma.hbm_to_vmem [thread:$0]  %s6, 2048, %s424, [#allocation17], 64, 64, 4
        $region24: #{tpu_custom_call.1} parent=11 // pred_fallthru
          _
        // Predicated region
        $region25: #{tpu_custom_call.1} parent=11 // pred_check
          %p430 = pneg %p248
        $region26: #{tpu_custom_call.1} parent=11 // pred_check_branch
          %432 = sbr.rel (%p430) target = $region28
        $region27: #{tpu_custom_call.1} parent=11 // pred_region
          %s434 = ssub.s32 1024, 1024
          %435 = vsyncadd [#allocation20], %s434
          %s436 = sshll.u32 [#allocation19], 4
          %s437 = int_to_ptr.vmem [resolvable:$true] %s436
          %442 = dma.hbm_to_vmem [thread:$0]  %s7, 1024, %s437, [#allocation20], 64, 64, 4
        $region28: #{tpu_custom_call.1} parent=11 // pred_fallthru
          _
        // Predicated region
        $region29: #{tpu_custom_call.1} parent=11 // pred_check
          %p443 = pneg %p333
        $region30: #{tpu_custom_call.1} parent=11 // pred_check_branch
          %445 = sbr.rel (%p443) target = $region32
        $region31: #{tpu_custom_call.1} parent=11 // pred_region
          %s447 = ssub.s32 16, 16
          %448 = vsyncadd [#allocation17], %s447
          %s450 = sshll.u32 [#allocation23], 4
          %s451 = int_to_ptr.vmem [resolvable:$true] %s450
          %453 = dma.hbm_to_vmem [thread:$0]  %s10, 16, %s451, [#allocation17]
        $region32: #{tpu_custom_call.1} parent=11 // pred_fallthru
          _
        // Predicated region
        $region33: #{tpu_custom_call.1} parent=11 // pred_check
          %p454 = pneg %p354
        $region34: #{tpu_custom_call.1} parent=11 // pred_check_branch
          %456 = sbr.rel (%p454) target = $region36
        $region35: #{tpu_custom_call.1} parent=11 // pred_region
          %s458 = ssub.s32 16, 16
          %459 = vsyncadd [#allocation20], %s458
          %s461 = sshll.u32 [#allocation24], 4
          %s462 = int_to_ptr.vmem [resolvable:$true] %s461
          %464 = dma.hbm_to_vmem [thread:$0]  %s11, 16, %s462, [#allocation20]
        $region36: #{tpu_custom_call.1} parent=11 // pred_fallthru
          _
      $region12: #{tpu_custom_call.1} parent=5 // pred_fallthru
        _
      %p465 = scmp.lt.s32.totalorder %s32, 8
      // Predicated region
      $region37: #{tpu_custom_call.1} parent=5 // pred_check
        %p466 = pneg %p465
      $region38: #{tpu_custom_call.1} parent=5 // pred_check_branch
        %468 = sbr.rel (%p466) target = $region40
      $region39: #{tpu_custom_call.1} parent=5 // pred_region
        // Predicated region
        $region41: #{tpu_custom_call.1} parent=39 // pred_check
          %p469 = pneg %p64
        $region42: #{tpu_custom_call.1} parent=39 // pred_check_branch
          %471 = sbr.rel (%p469) target = $region44
        $region43: #{tpu_custom_call.1} parent=39 // pred_region
          %s472 = sand.u32 %s32, 1
          %s473 = scalar_lea.sflag [#allocation8], %s472
          %s474 = sand.u32 %s54, 1
          %s475 = smul.addr %s474, 8
          %s476 = scalar_lea.vmem [#allocation7], %s475
          %s478 = ssub.s32 128, 128
          %479 = vsyncadd %s473, %s478
          %s480 = smul.addr %s39, 128
          %s481 = scalar_lea.hbm %s0, %s480
          %s483 = sshll.u32 %s476, 4
          %s484 = int_to_ptr.vmem [resolvable:$true] %s483
          %486 = dma.hbm_to_vmem [thread:$0]  %s481, 128, %s484, %s473
        $region44: #{tpu_custom_call.1} parent=39 // pred_fallthru
          _
        // Predicated region
        $region45: #{tpu_custom_call.1} parent=39 // pred_check
          %p487 = pneg %p138
        $region46: #{tpu_custom_call.1} parent=39 // pred_check_branch
          %489 = sbr.rel (%p487) target = $region48
        $region47: #{tpu_custom_call.1} parent=39 // pred_region
          %s490 = sand.u32 %s32, 1
          %s491 = scalar_lea.sflag [#allocation14], %s490
          %s492 = sand.u32 %s128, 1
          %s493 = smul.addr %s492, 64
          %s494 = scalar_lea.vmem [#allocation13], %s493
          %p495 = scmp.lt.s32.totalorder %s40, 1
          %s496 = scalar_select %p495, %s40, 1
          %s497 = smul.u32 16, %s496
          %s499 = ssub.s32 1024, 1024
          %500 = vsyncadd %s491, %s499
          %s501 = smul.addr %s39, 32
          %s502 = sadd.s32 %s497, %s501
          %s503 = smul.addr %s502, 64
          %s504 = scalar_lea.hbm %s3, %s503
          %s505 = sshll.u32 %s494, 4
          %s506 = int_to_ptr.vmem [resolvable:$true] %s505
          %511 = dma.hbm_to_vmem [thread:$0]  %s504, 1024, %s506, %s491, 64, 64, 4
        $region48: #{tpu_custom_call.1} parent=39 // pred_fallthru
          _
        // Predicated region
        $region49: #{tpu_custom_call.1} parent=39 // pred_check
          %p512 = pneg %p170
        $region50: #{tpu_custom_call.1} parent=39 // pred_check_branch
          %514 = sbr.rel (%p512) target = $region52
        $region51: #{tpu_custom_call.1} parent=39 // pred_region
          %s515 = sand.u32 %s32, 1
          %s516 = scalar_lea.sflag [#allocation14], %s515
          %s517 = sand.u32 %s160, 1
          %s518 = smul.addr %s517, 64
          %s519 = scalar_lea.vmem [#allocation15], %s518
          %p520 = scmp.lt.s32.totalorder %s40, 1
          %s521 = scalar_select %p520, %s40, 1
          %s522 = smul.u32 16, %s521
          %s524 = ssub.s32 1024, 1024
          %525 = vsyncadd %s516, %s524
          %s526 = smul.addr %s39, 32
          %s527 = sadd.s32 %s522, %s526
          %s528 = smul.addr %s527, 64
          %s529 = scalar_lea.hbm %s4, %s528
          %s530 = sshll.u32 %s519, 4
          %s531 = int_to_ptr.vmem [resolvable:$true] %s530
          %536 = dma.hbm_to_vmem [thread:$0]  %s529, 1024, %s531, %s516, 64, 64, 4
        $region52: #{tpu_custom_call.1} parent=39 // pred_fallthru
          _
        // Predicated region
        $region53: #{tpu_custom_call.1} parent=39 // pred_check
          %p537 = pneg %p200
        $region54: #{tpu_custom_call.1} parent=39 // pred_check_branch
          %539 = sbr.rel (%p537) target = $region56
        $region55: #{tpu_custom_call.1} parent=39 // pred_region
          %s540 = sand.u32 %s32, 1
          %s541 = scalar_lea.sflag [#allocation17], %s540
          %s542 = sand.u32 %s190, 1
          %s543 = smul.addr %s542, 8
          %s544 = scalar_lea.vmem [#allocation16], %s543
          %p545 = scmp.lt.s32.totalorder %s40, 1
          %s546 = scalar_select %p545, %s40, 1
          %s548 = ssub.s32 128, 128
          %549 = vsyncadd %s541, %s548
          %s550 = smul.addr %s546, 128
          %s551 = scalar_lea.hbm %s5, %s550
          %s553 = sshll.u32 %s544, 4
          %s554 = int_to_ptr.vmem [resolvable:$true] %s553
          %556 = dma.hbm_to_vmem [thread:$0]  %s551, 128, %s554, %s541
        $region56: #{tpu_custom_call.1} parent=39 // pred_fallthru
          _
        // Predicated region
        $region57: #{tpu_custom_call.1} parent=39 // pred_check
          %p557 = pneg %p274
        $region58: #{tpu_custom_call.1} parent=39 // pred_check_branch
          %559 = sbr.rel (%p557) target = $region60
        $region59: #{tpu_custom_call.1} parent=39 // pred_region
          #allocation27 [shape = 'u32[6]{0}', space=smem, size = 0x18, scoped, tag = 'DMA stride descriptor']
          %s560 = sand.u32 %s32, 1
          %s561 = scalar_lea.sflag [#allocation8], %s560
          %s562 = sand.u32 %s264, 1
          %s563 = smul.addr %s562, 128
          %s564 = scalar_lea.vmem [#allocation21], %s563
          %s565 = ssub.s32 %s40, 2
          %p566 = scmp.gt.s32.totalorder %s565, 0
          %s567 = scalar_select %p566, %s565, 0
          %s568 = smul.u32 16, %s567
          %s570 = ssub.s32 2048, 2048
          %571 = vsyncadd %s561, %s570
          %s572 = smul.addr %s568, 64
          %s573 = scalar_lea.hbm %s8, %s572
          %s575 = sshll.u32 1, 14
          %s576 = sxor.u32 4294967295, %s575
          %s578 = sld [smem:[#allocation0]]
          %s579 = sadd.s32 2, %s578
          %s581 = sshll.u32 7, 26
          %s582 = sxor.u32 4294967295, %s581
          %s583 = sand.u32 0, %s582
          %s584 = sshll.u32 %s579, 26
          %s585 = sor.u32 %s583, %s584
          %s586 = sshll.u32 %s564, 4
          %s587 = int_to_ptr.vmem [resolvable:$true] %s586
          %593 = sst [smem:[#allocation27]] 2048
          %s594 = scalar_lea.smem [#allocation27], 1
          %595 = sst [smem:[%s594]] 1024
          %s596 = scalar_lea.smem [#allocation27], 2
          %597 = sst [smem:[%s596]] 16
          %s598 = scalar_lea.smem [#allocation27], 3
          %599 = sst [smem:[%s598]] 64
          %s600 = scalar_lea.smem [#allocation27], 4
          %601 = sst [smem:[%s600]] 64
          %s602 = scalar_lea.smem [#allocation27], 5
          %603 = sst [smem:[%s602]] 4
          %605 = dma.general %s573, 2048, %s587, %s561, [#allocation26], [#allocation27], %s585, 0
        $region60: #{tpu_custom_call.1} parent=39 // pred_fallthru
          _
        // Predicated region
        $region61: #{tpu_custom_call.1} parent=39 // pred_check
          %p606 = pneg %p306
        $region62: #{tpu_custom_call.1} parent=39 // pred_check_branch
          %608 = sbr.rel (%p606) target = $region64
        $region63: #{tpu_custom_call.1} parent=39 // pred_region
          %s609 = sand.u32 %s32, 1
          %s610 = scalar_lea.sflag [#allocation14], %s609
          %s611 = sand.u32 %s296, 1
          %s612 = smul.addr %s611, 64
          %s613 = scalar_lea.vmem [#allocation22], %s612
          %s614 = ssub.s32 %s40, 2
          %p615 = scmp.gt.s32.totalorder %s614, 0
          %s616 = scalar_select %p615, %s614, 0
          %s618 = ssub.s32 1024, 1024
          %619 = vsyncadd %s610, %s618
          %s620 = smul.addr %s616, 64
          %s621 = scalar_lea.hbm %s9, %s620
          %s622 = sshll.u32 %s613, 4
          %s623 = int_to_ptr.vmem [resolvable:$true] %s622
          %628 = dma.hbm_to_vmem [thread:$0]  %s621, 1024, %s623, %s610, 128, 64, 4
        $region64: #{tpu_custom_call.1} parent=39 // pred_fallthru
          _
      $region40: #{tpu_custom_call.1} parent=5 // pred_fallthru
        _
      %p629 = scmp.le.s32.totalorder 1, %s32
      %p630 = scmp.lt.s32.totalorder %s32, 9
      %p631 = pnand %p629, %p630
      %p632 = pneg %p631
      // Predicated region
      $region65: #{tpu_custom_call.1} parent=5 // pred_check
        _
      $region66: #{tpu_custom_call.1} parent=5 // pred_check_branch
        %634 = sbr.rel (%p631) target = $region68
      $region67: #{tpu_custom_call.1} parent=5 // pred_region
        %s635 = ssub.s32 %s32, 1
        %s636 = sand.u32 %s37, 1
        %s637 = scalar_lea.sflag [#allocation8], %s636
        %s638 = sand.u32 %s57, 1
        %s639 = smul.addr %s638, 8
        %s640 = scalar_lea.vmem [#allocation7], %s639
        // Predicated region
        $region69: #{tpu_custom_call.1} parent=67 // pred_check
          %p641 = pneg %p70
        $region70: #{tpu_custom_call.1} parent=67 // pred_check_branch
          %643 = sbr.rel (%p641) target = $region72
        $region71: #{tpu_custom_call.1} parent=67 // pred_region
          %644 = dma.done %s637, 128
        $region72: #{tpu_custom_call.1} parent=67 // pred_fallthru
          _
        // Predicated region
        $region73: #{tpu_custom_call.1} parent=67 // pred_check
          %p645 = pneg %p91
        $region74: #{tpu_custom_call.1} parent=67 // pred_check_branch
          %647 = sbr.rel (%p645) target = $region76
        $region75: #{tpu_custom_call.1} parent=67 // pred_region
          %648 = dma.done [#allocation11], 128
        $region76: #{tpu_custom_call.1} parent=67 // pred_fallthru
          _
        // Predicated region
        $region77: #{tpu_custom_call.1} parent=67 // pred_check
          %p649 = pneg %p112
        $region78: #{tpu_custom_call.1} parent=67 // pred_check_branch
          %651 = sbr.rel (%p649) target = $region80
        $region79: #{tpu_custom_call.1} parent=67 // pred_region
          %652 = dma.done [#allocation11], 128
        $region80: #{tpu_custom_call.1} parent=67 // pred_fallthru
          _
        %s653 = sand.u32 %s37, 1
        %s654 = scalar_lea.sflag [#allocation14], %s653
        %s655 = sand.u32 %s131, 1
        %s656 = smul.addr %s655, 64
        %s657 = scalar_lea.vmem [#allocation13], %s656
        // Predicated region
        $region81: #{tpu_custom_call.1} parent=67 // pred_check
          %p658 = pneg %p144
        $region82: #{tpu_custom_call.1} parent=67 // pred_check_branch
          %660 = sbr.rel (%p658) target = $region84
        $region83: #{tpu_custom_call.1} parent=67 // pred_region
          %661 = dma.done %s654, 1024
        $region84: #{tpu_custom_call.1} parent=67 // pred_fallthru
          _
        %s662 = sand.u32 %s37, 1
        %s663 = scalar_lea.sflag [#allocation14], %s662
        %s664 = sand.u32 %s163, 1
        %s665 = smul.addr %s664, 64
        %s666 = scalar_lea.vmem [#allocation15], %s665
        // Predicated region
        $region85: #{tpu_custom_call.1} parent=67 // pred_check
          %p667 = pneg %p176
        $region86: #{tpu_custom_call.1} parent=67 // pred_check_branch
          %669 = sbr.rel (%p667) target = $region88
        $region87: #{tpu_custom_call.1} parent=67 // pred_region
          %670 = dma.done %s663, 1024
        $region88: #{tpu_custom_call.1} parent=67 // pred_fallthru
          _
        %s671 = sand.u32 %s37, 1
        %s672 = scalar_lea.sflag [#allocation17], %s671
        %s673 = sand.u32 %s193, 1
        %s674 = smul.addr %s673, 8
        %s675 = scalar_lea.vmem [#allocation16], %s674
        // Predicated region
        $region89: #{tpu_custom_call.1} parent=67 // pred_check
          %p676 = pneg %p206
        $region90: #{tpu_custom_call.1} parent=67 // pred_check_branch
          %678 = sbr.rel (%p676) target = $region92
        $region91: #{tpu_custom_call.1} parent=67 // pred_region
          %679 = dma.done %s672, 128
        $region92: #{tpu_custom_call.1} parent=67 // pred_fallthru
          _
        // Predicated region
        $region93: #{tpu_custom_call.1} parent=67 // pred_check
          %p680 = pneg %p227
        $region94: #{tpu_custom_call.1} parent=67 // pred_check_branch
          %682 = sbr.rel (%p680) target = $region96
        $region95: #{tpu_custom_call.1} parent=67 // pred_region
          %683 = dma.done [#allocation17], 2048
        $region96: #{tpu_custom_call.1} parent=67 // pred_fallthru
          _
        // Predicated region
        $region97: #{tpu_custom_call.1} parent=67 // pred_check
          %p684 = pneg %p248
        $region98: #{tpu_custom_call.1} parent=67 // pred_check_branch
          %686 = sbr.rel (%p684) target = $region100
        $region99: #{tpu_custom_call.1} parent=67 // pred_region
          %687 = dma.done [#allocation20], 1024
        $region100: #{tpu_custom_call.1} parent=67 // pred_fallthru
          _
        %s688 = sand.u32 %s37, 1
        %s689 = scalar_lea.sflag [#allocation8], %s688
        %s690 = sand.u32 %s267, 1
        %s691 = smul.addr %s690, 128
        %s692 = scalar_lea.vmem [#allocation21], %s691
        // Predicated region
        $region101: #{tpu_custom_call.1} parent=67 // pred_check
          %p693 = pneg %p280
        $region102: #{tpu_custom_call.1} parent=67 // pred_check_branch
          %695 = sbr.rel (%p693) target = $region104
        $region103: #{tpu_custom_call.1} parent=67 // pred_region
          %696 = dma.done %s689, 2048
        $region104: #{tpu_custom_call.1} parent=67 // pred_fallthru
          _
        %s697 = sand.u32 %s37, 1
        %s698 = scalar_lea.sflag [#allocation14], %s697
        %s699 = sand.u32 %s299, 1
        %s700 = smul.addr %s699, 64
        %s701 = scalar_lea.vmem [#allocation22], %s700
        // Predicated region
        $region105: #{tpu_custom_call.1} parent=67 // pred_check
          %p702 = pneg %p312
        $region106: #{tpu_custom_call.1} parent=67 // pred_check_branch
          %704 = sbr.rel (%p702) target = $region108
        $region107: #{tpu_custom_call.1} parent=67 // pred_region
          %705 = dma.done %s698, 1024
        $region108: #{tpu_custom_call.1} parent=67 // pred_fallthru
          _
        // Predicated region
        $region109: #{tpu_custom_call.1} parent=67 // pred_check
          %p706 = pneg %p333
        $region110: #{tpu_custom_call.1} parent=67 // pred_check_branch
          %708 = sbr.rel (%p706) target = $region112
        $region111: #{tpu_custom_call.1} parent=67 // pred_region
          %709 = dma.done [#allocation17], 16
        $region112: #{tpu_custom_call.1} parent=67 // pred_fallthru
          _
        // Predicated region
        $region113: #{tpu_custom_call.1} parent=67 // pred_check
          %p710 = pneg %p354
        $region114: #{tpu_custom_call.1} parent=67 // pred_check_branch
          %712 = sbr.rel (%p710) target = $region116
        $region115: #{tpu_custom_call.1} parent=67 // pred_region
          %713 = dma.done [#allocation20], 16
        $region116: #{tpu_custom_call.1} parent=67 // pred_fallthru
          _
        %s714 = sand.u32 %s37, 1
        %s715 = scalar_lea.sflag [#allocation8], %s714
        %s716 = sand.u32 %s57, 1
        %s717 = smul.addr %s716, 8
        %s718 = scalar_lea.vmem [#allocation7], %s717
        %p719 = pneg %p70
        %p720 = pneg %p67
        %p721 = pneg %p91
        %p722 = pneg %p88
        %p723 = pneg %p112
        %p724 = pneg %p109
        %s725 = sand.u32 %s37, 1
        %s726 = scalar_lea.sflag [#allocation14], %s725
        %s727 = sand.u32 %s131, 1
        %s728 = smul.addr %s727, 64
        %s729 = scalar_lea.vmem [#allocation13], %s728
        %p730 = pneg %p144
        %p731 = pneg %p141
        %s732 = sand.u32 %s37, 1
        %s733 = scalar_lea.sflag [#allocation14], %s732
        %s734 = sand.u32 %s163, 1
        %s735 = smul.addr %s734, 64
        %s736 = scalar_lea.vmem [#allocation15], %s735
        %p737 = pneg %p176
        %p738 = pneg %p173
        %s739 = sand.u32 %s37, 1
        %s740 = scalar_lea.sflag [#allocation17], %s739
        %s741 = sand.u32 %s193, 1
        %s742 = smul.addr %s741, 8
        %s743 = scalar_lea.vmem [#allocation16], %s742
        %p744 = pneg %p206
        %p745 = pneg %p203
        %p746 = pneg %p227
        %p747 = pneg %p224
        %p748 = pneg %p248
        %p749 = pneg %p245
        %s750 = sand.u32 %s37, 1
        %s751 = scalar_lea.sflag [#allocation8], %s750
        %s752 = sand.u32 %s267, 1
        %s753 = smul.addr %s752, 128
        %s754 = scalar_lea.vmem [#allocation21], %s753
        %p755 = pneg %p280
        %p756 = pneg %p277
        %s757 = sand.u32 %s37, 1
        %s758 = scalar_lea.sflag [#allocation14], %s757
        %s759 = sand.u32 %s299, 1
        %s760 = smul.addr %s759, 64
        %s761 = scalar_lea.vmem [#allocation22], %s760
        %p762 = pneg %p312
        %p763 = pneg %p309
        %p764 = pneg %p333
        %p765 = pneg %p330
        %p766 = pneg %p354
        %p767 = pneg %p351
        %p768 = pneg %p380
        %p769 = pneg %p377
        %s770 = sand.u32 %s367, 1
        %s771 = scalar_lea.sflag [#allocation9], %s770
        %s772 = sand.u32 %s367, 1
        %s773 = smul.addr %s772, 8
        %s774 = scalar_lea.vmem [#allocation25], %s773
        %p775 = scmp.lt.s32.totalorder %s42, 1
        %s776 = scalar_select %p775, %s42, 1
        %s777 = smul.u32 16, %s776
        %p778 = scmp.lt.s32.totalorder %s42, 1
        %s779 = scalar_select %p778, %s42, 1
        %s780 = smul.u32 16, %s779
        %p781 = scmp.lt.s32.totalorder %s42, 1
        %s782 = scalar_select %p781, %s42, 1
        %s783 = ssub.s32 %s42, 2
        %p784 = scmp.gt.s32.totalorder %s783, 0
        %s785 = scalar_select %p784, %s783, 0
        %s786 = smul.u32 16, %s785
        %s787 = ssub.s32 %s42, 2
        %p788 = scmp.gt.s32.totalorder %s787, 0
        %s789 = scalar_select %p788, %s787, 0
        %p791 = scmp.eq.s32.totalorder %s42, 0
        // Predicated region
        $region117: #{tpu_custom_call.1} parent=67 // pred_check
          %p792 = pneg %p791
        $region118: #{tpu_custom_call.1} parent=67 // pred_check_branch
          %794 = sbr.rel (%p792) target = $region120
        $region119: #{tpu_custom_call.1} parent=67 // pred_region
          %v795 = vld [vmem:[%s640] sm:$0xff]
          %v796 = vmul.f32 %v795, %v795
          %797 = vadd.xlane.f32.xlu0 %v796
          %v798 = vpop.xlane.xlu0 %797
          %v799 = vrcp.pop 128.0
          %v800 = vmul.f32 %v798, %v799
          %v801 = vadd.f32 %v800, 1e-06
          %v802 = vrsqrt.pop %v801
          %v803 = vmul.f32 %v795, %v802
          %v804 = vld [vmem:[#allocation23] sm:$0x1]
          %v805 = vadd.f32 %v804, 1.0
          %v807 = vlaneseq
          %v808 = vshrl.u32 %v807, 7
          %v809 = vsub.s32 0, %v808
          %v810 = vrot.slane %v805, %v809
          %v812 = vmul.f32 %v803, %v810
          %v813 = vpack.c.bf16 %v812, %v812
          %v814 = vld [vmem:[#allocation18] sm:$0xf]
          %v815 = vld [vmem:[#allocation18 + $0x4] sm:$0xf]
          %v816 = vld [vmem:[#allocation18 + $0x8] sm:$0xf]
          %v817 = vld [vmem:[#allocation18 + $0xc] sm:$0xf]
          %v818 = vld [vmem:[#allocation18 + $0x10] sm:$0xf]
          %v819 = vld [vmem:[#allocation18 + $0x14] sm:$0xf]
          %v820 = vld [vmem:[#allocation18 + $0x18] sm:$0xf]
          %v821 = vld [vmem:[#allocation18 + $0x1c] sm:$0xf]
          %v822 = vld [vmem:[#allocation18 + $0x20] sm:$0xf]
          %v823 = vld [vmem:[#allocation18 + $0x24] sm:$0xf]
          %v824 = vld [vmem:[#allocation18 + $0x28] sm:$0xf]
          %v825 = vld [vmem:[#allocation18 + $0x2c] sm:$0xf]
          %v826 = vld [vmem:[#allocation18 + $0x30] sm:$0xf]
          %v827 = vld [vmem:[#allocation18 + $0x34] sm:$0xf]
          %v828 = vld [vmem:[#allocation18 + $0x38] sm:$0xf]
          %v829 = vld [vmem:[#allocation18 + $0x3c] sm:$0xf]
          %v830 = vld [vmem:[#allocation18 + $0x40] sm:$0xf]
          %v831 = vld [vmem:[#allocation18 + $0x44] sm:$0xf]
          %v832 = vld [vmem:[#allocation18 + $0x48] sm:$0xf]
          %v833 = vld [vmem:[#allocation18 + $0x4c] sm:$0xf]
          %v834 = vld [vmem:[#allocation18 + $0x50] sm:$0xf]
          %v835 = vld [vmem:[#allocation18 + $0x54] sm:$0xf]
          %v836 = vld [vmem:[#allocation18 + $0x58] sm:$0xf]
          %v837 = vld [vmem:[#allocation18 + $0x5c] sm:$0xf]
          %v838 = vld [vmem:[#allocation18 + $0x60] sm:$0xf]
          %v839 = vld [vmem:[#allocation18 + $0x64] sm:$0xf]
          %v840 = vld [vmem:[#allocation18 + $0x68] sm:$0xf]
          %v841 = vld [vmem:[#allocation18 + $0x6c] sm:$0xf]
          %v842 = vld [vmem:[#allocation18 + $0x70] sm:$0xf]
          %v843 = vld [vmem:[#allocation18 + $0x74] sm:$0xf]
          %v844 = vld [vmem:[#allocation18 + $0x78] sm:$0xf]
          %v845 = vld [vmem:[#allocation18 + $0x7c] sm:$0xf]
          %v878 = vunpack.c.l.b16 %v814
          %v879 = vunpack.c.l.b16 %v815
          %v880 = vunpack.c.l.b16 %v816
          %v881 = vunpack.c.l.b16 %v817
          %v882 = vunpack.c.l.b16 %v818
          %v883 = vunpack.c.l.b16 %v819
          %v884 = vunpack.c.l.b16 %v820
          %v885 = vunpack.c.l.b16 %v821
          %v886 = vunpack.c.l.b16 %v822
          %v887 = vunpack.c.l.b16 %v823
          %v888 = vunpack.c.l.b16 %v824
          %v889 = vunpack.c.l.b16 %v825
          %v890 = vunpack.c.l.b16 %v826
          %v891 = vunpack.c.l.b16 %v827
          %v892 = vunpack.c.l.b16 %v828
          %v893 = vunpack.c.l.b16 %v829
          %v894 = vunpack.c.l.b16 %v830
          %v895 = vunpack.c.l.b16 %v831
          %v896 = vunpack.c.l.b16 %v832
          %v897 = vunpack.c.l.b16 %v833
          %v898 = vunpack.c.l.b16 %v834
          %v899 = vunpack.c.l.b16 %v835
          %v900 = vunpack.c.l.b16 %v836
          %v901 = vunpack.c.l.b16 %v837
          %v902 = vunpack.c.l.b16 %v838
          %v903 = vunpack.c.l.b16 %v839
          %v904 = vunpack.c.l.b16 %v840
          %v905 = vunpack.c.l.b16 %v841
          %v906 = vunpack.c.l.b16 %v842
          %v907 = vunpack.c.l.b16 %v843
          %v908 = vunpack.c.l.b16 %v844
          %v909 = vunpack.c.l.b16 %v845
          %v910 = vpack.c.b16 %v879, %v878
          %v911 = vpack.c.b16 %v881, %v880
          %v912 = vpack.c.b16 %v883, %v882
          %v913 = vpack.c.b16 %v885, %v884
          %v914 = vpack.c.b16 %v887, %v886
          %v915 = vpack.c.b16 %v889, %v888
          %v916 = vpack.c.b16 %v891, %v890
          %v917 = vpack.c.b16 %v893, %v892
          %v918 = vpack.c.b16 %v895, %v894
          %v919 = vpack.c.b16 %v897, %v896
          %v920 = vpack.c.b16 %v899, %v898
          %v921 = vpack.c.b16 %v901, %v900
          %v922 = vpack.c.b16 %v903, %v902
          %v923 = vpack.c.b16 %v905, %v904
          %v924 = vpack.c.b16 %v907, %v906
          %v925 = vpack.c.b16 %v909, %v908
          %942 = vmatprep.subr.bf16.mxu0 0
          %943 = vmatpush1.bf16.xpose.msra.mxu0 %v910
          %944 = vmatprep.subr.bf16.mxu0 0
          %945 = vmatpush1.bf16.xpose.msra.mxu0 %v911
          %946 = vmatprep.subr.bf16.mxu0 0
          %947 = vmatpush1.bf16.xpose.msra.mxu0 %v912
          %948 = vmatprep.subr.bf16.mxu0 0
          %949 = vmatpush1.bf16.xpose.msra.mxu0 %v913
          %950 = vmatprep.subr.bf16.mxu0 0
          %951 = vmatpush1.bf16.xpose.msra.mxu0 %v914
          %952 = vmatprep.subr.bf16.mxu0 0
          %953 = vmatpush1.bf16.xpose.msra.mxu0 %v915
          %954 = vmatprep.subr.bf16.mxu0 0
          %955 = vmatpush1.bf16.xpose.msra.mxu0 %v916
          %956 = vmatprep.subr.bf16.mxu0 0
          %957 = vmatpush1.bf16.xpose.msra.mxu0 %v917
          %958 = vmatprep.subr.bf16.mxu0 0
          %959 = vmatpush1.bf16.xpose.msra.mxu0 %v918
          %960 = vmatprep.subr.bf16.mxu0 0
          %961 = vmatpush1.bf16.xpose.msra.mxu0 %v919
          %962 = vmatprep.subr.bf16.mxu0 0
          %963 = vmatpush1.bf16.xpose.msra.mxu0 %v920
          %964 = vmatprep.subr.bf16.mxu0 0
          %965 = vmatpush1.bf16.xpose.msra.mxu0 %v921
          %966 = vmatprep.subr.bf16.mxu0 0
          %967 = vmatpush1.bf16.xpose.msra.mxu0 %v922
          %968 = vmatprep.subr.bf16.mxu0 0
          %969 = vmatpush1.bf16.xpose.msra.mxu0 %v923
          %970 = vmatprep.subr.bf16.mxu0 0
          %971 = vmatpush1.bf16.xpose.msra.mxu0 %v924
          %972 = vmatprep.subr.bf16.mxu0 0
          %973 = vmatpush1.bf16.xpose.msra.mxu0 %v925
          %974 = vmatprep.mubr.bf16.mxu0 0
          %975 = vmatmul.mubr.bf16.gmra.mrb[0].mxu0 %v813
          %v976 = vpop.f32.mrb[0].mxu0
          %v977 = vadd.f32 0.0, %v976
          %v978 = vpop.f32.mrb[0].mxu0
          %v979 = vadd.f32 0.0, %v978
          %v980 = vpop.f32.mrb[0].mxu0
          %v981 = vpop.f32.mrb[0].mxu0
          %982 = vdwg.mxu0
          %v983 = vld [vmem:[#allocation10] sm:$0xff]
          %985 = vrot.lane.b32.xlu0 %v983, 32
          %v986 = vpop.permute.xlu0 %985
          %988 = vrot.lane.b32.xlu0 %v983, 64
          %v989 = vpop.permute.xlu0 %988
          %991 = vrot.lane.b32.xlu0 %v983, 96
          %v992 = vpop.permute.xlu0 %991
          %vm994 = vcmask 261120
          %v995 = vsel %vm994, %v983, %v986
          %vm996 = vcmask 523264
          %v997 = vsel %vm996, %v995, %v989
          %vm998 = vcmask 785408
          %v999 = vsel %vm998, %v997, %v992
          %v1000 = vld [vmem:[#allocation12] sm:$0xff]
          %1002 = vrot.lane.b32.xlu0 %v1000, 32
          %v1003 = vpop.permute.xlu0 %1002
          %1005 = vrot.lane.b32.xlu0 %v1000, 64
          %v1006 = vpop.permute.xlu0 %1005
          %1008 = vrot.lane.b32.xlu0 %v1000, 96
          %v1009 = vpop.permute.xlu0 %1008
          %v1011 = vsel %vm994, %v1000, %v1003
          %v1012 = vsel %vm996, %v1011, %v1006
          %v1013 = vsel %vm998, %v1012, %v1009
          %v1014 = vmul.f32 %v977, %v999
          %v1015 = vmul.f32 %v979, %v1013
          %v1016 = vadd.f32 %v1014, %v1015
          %v1017 = vpack.c.bf16 %v1016, %v1016
          %1018 = vst [vmem:[#allocation2] sm:$0xf] %v1017
          %vm1019 = vcmask 7168
          %1020 = vst.msk [vmem:[#allocation4] sm:$0xff] %vm1019, -inf
          %1021 = vst.msk [vmem:[#allocation4 + $0x8] sm:$0xff] %vm1019, -inf
          %1022 = vst.msk [vmem:[#allocation4 + $0x10] sm:$0xff] %vm1019, -inf
          %1023 = vst.msk [vmem:[#allocation4 + $0x18] sm:$0xff] %vm1019, -inf
          %1024 = vst.msk [vmem:[#allocation5] sm:$0xff] %vm1019, 0.0
          %1025 = vst.msk [vmem:[#allocation5 + $0x8] sm:$0xff] %vm1019, 0.0
          %1026 = vst.msk [vmem:[#allocation5 + $0x10] sm:$0xff] %vm1019, 0.0
          %1027 = vst.msk [vmem:[#allocation5 + $0x18] sm:$0xff] %vm1019, 0.0
          %1028 = vst.msk [vmem:[#allocation6] sm:$0xff] %vm994, 0.0
          %1029 = vst.msk [vmem:[#allocation6 + $0x8] sm:$0xff] %vm994, 0.0
          %1030 = vst.msk [vmem:[#allocation6 + $0x10] sm:$0xff] %vm994, 0.0
          %1031 = vst.msk [vmem:[#allocation6 + $0x18] sm:$0xff] %vm994, 0.0
        $region120: #{tpu_custom_call.1} parent=67 // pred_fallthru
          _
        %p1032 = scmp.lt.s32.totalorder %s42, 2
        // Predicated region
        $region121: #{tpu_custom_call.1} parent=67 // pred_check
          %p1033 = pneg %p1032
        $region122: #{tpu_custom_call.1} parent=67 // pred_check_branch
          %1035 = sbr.rel (%p1033) target = $region124
        $region123: #{tpu_custom_call.1} parent=67 // pred_region
          %v1036 = vld [vmem:[%s657] sm:$0xf]
          %v1037 = vld [vmem:[%s657 + $0x4] sm:$0xf]
          %v1038 = vld [vmem:[%s657 + $0x8] sm:$0xf]
          %v1039 = vld [vmem:[%s657 + $0xc] sm:$0xf]
          %v1040 = vld [vmem:[%s657 + $0x10] sm:$0xf]
          %v1041 = vld [vmem:[%s657 + $0x14] sm:$0xf]
          %v1042 = vld [vmem:[%s657 + $0x18] sm:$0xf]
          %v1043 = vld [vmem:[%s657 + $0x1c] sm:$0xf]
          %v1044 = vld [vmem:[%s657 + $0x20] sm:$0xf]
          %v1045 = vld [vmem:[%s657 + $0x24] sm:$0xf]
          %v1046 = vld [vmem:[%s657 + $0x28] sm:$0xf]
          %v1047 = vld [vmem:[%s657 + $0x2c] sm:$0xf]
          %v1048 = vld [vmem:[%s657 + $0x30] sm:$0xf]
          %v1049 = vld [vmem:[%s657 + $0x34] sm:$0xf]
          %v1050 = vld [vmem:[%s657 + $0x38] sm:$0xf]
          %v1051 = vld [vmem:[%s657 + $0x3c] sm:$0xf]
          %v1052 = vld [vmem:[%s666] sm:$0xf]
          %v1053 = vld [vmem:[%s666 + $0x4] sm:$0xf]
          %v1054 = vld [vmem:[%s666 + $0x8] sm:$0xf]
          %v1055 = vld [vmem:[%s666 + $0xc] sm:$0xf]
          %v1056 = vld [vmem:[%s666 + $0x10] sm:$0xf]
          %v1057 = vld [vmem:[%s666 + $0x14] sm:$0xf]
          %v1058 = vld [vmem:[%s666 + $0x18] sm:$0xf]
          %v1059 = vld [vmem:[%s666 + $0x1c] sm:$0xf]
          %v1060 = vld [vmem:[%s666 + $0x20] sm:$0xf]
          %v1061 = vld [vmem:[%s666 + $0x24] sm:$0xf]
          %v1062 = vld [vmem:[%s666 + $0x28] sm:$0xf]
          %v1063 = vld [vmem:[%s666 + $0x2c] sm:$0xf]
          %v1064 = vld [vmem:[%s666 + $0x30] sm:$0xf]
          %v1065 = vld [vmem:[%s666 + $0x34] sm:$0xf]
          %v1066 = vld [vmem:[%s666 + $0x38] sm:$0xf]
          %v1067 = vld [vmem:[%s666 + $0x3c] sm:$0xf]
          %v1068 = vld [vmem:[%s675] sm:$0xff]
          %v1069 = vld [vmem:[#allocation2] sm:$0xf]
          %v1086 = vunpack.c.l.b16 %v1036
          %v1087 = vunpack.c.l.b16 %v1037
          %v1088 = vunpack.c.l.b16 %v1038
          %v1089 = vunpack.c.l.b16 %v1039
          %v1090 = vunpack.c.l.b16 %v1040
          %v1091 = vunpack.c.l.b16 %v1041
          %v1092 = vunpack.c.l.b16 %v1042
          %v1093 = vunpack.c.l.b16 %v1043
          %v1094 = vunpack.c.l.b16 %v1044
          %v1095 = vunpack.c.l.b16 %v1045
          %v1096 = vunpack.c.l.b16 %v1046
          %v1097 = vunpack.c.l.b16 %v1047
          %v1098 = vunpack.c.l.b16 %v1048
          %v1099 = vunpack.c.l.b16 %v1049
          %v1100 = vunpack.c.l.b16 %v1050
          %v1101 = vunpack.c.l.b16 %v1051
          %v1102 = vpack.c.b16 %v1087, %v1086
          %v1103 = vpack.c.b16 %v1089, %v1088
          %v1104 = vpack.c.b16 %v1091, %v1090
          %v1105 = vpack.c.b16 %v1093, %v1092
          %v1106 = vpack.c.b16 %v1095, %v1094
          %v1107 = vpack.c.b16 %v1097, %v1096
          %v1108 = vpack.c.b16 %v1099, %v1098
          %v1109 = vpack.c.b16 %v1101, %v1100
          %vm1110 = vcmask 261120
          %v1112 = vsel %vm1110, %v1069, 0
          %v1115 = vsel %vm1110, %v1102, 0
          %v1118 = vsel %vm1110, %v1103, 0
          %v1121 = vsel %vm1110, %v1104, 0
          %v1124 = vsel %vm1110, %v1105, 0
          %v1127 = vsel %vm1110, %v1106, 0
          %v1130 = vsel %vm1110, %v1107, 0
          %v1133 = vsel %vm1110, %v1108, 0
          %v1136 = vsel %vm1110, %v1109, 0
          %1138 = vmatprep.subr.bf16.mxu0 0
          %1139 = vmatpush1.bf16.xpose.msra.mxu0 %v1115
          %1140 = vmatprep.subr.bf16.mxu0 0
          %1141 = vmatpush1.bf16.xpose.msra.mxu0 %v1118
          %1142 = vmatprep.subr.bf16.mxu0 0
          %1143 = vmatpush1.bf16.xpose.msra.mxu0 %v1121
          %1144 = vmatprep.subr.bf16.mxu0 0
          %1145 = vmatpush1.bf16.xpose.msra.mxu0 %v1124
          %1146 = vmatprep.subr.bf16.mxu0 0
          %1147 = vmatpush1.bf16.xpose.msra.mxu0 %v1127
          %1148 = vmatprep.subr.bf16.mxu0 0
          %1149 = vmatpush1.bf16.xpose.msra.mxu0 %v1130
          %1150 = vmatprep.subr.bf16.mxu0 0
          %1151 = vmatpush1.bf16.xpose.msra.mxu0 %v1133
          %1152 = vmatprep.subr.bf16.mxu0 0
          %1153 = vmatpush1.bf16.xpose.msra.mxu0 %v1136
          %1154 = vmatprep.subr.bf16.mxu0 0
          %1155 = vmatpush1.bf16.xpose.msra.mxu0 0
          %1156 = vmatprep.subr.bf16.mxu0 0
          %1157 = vmatpush1.bf16.xpose.msra.mxu0 0
          %1158 = vmatprep.subr.bf16.mxu0 0
          %1159 = vmatpush1.bf16.xpose.msra.mxu0 0
          %1160 = vmatprep.subr.bf16.mxu0 0
          %1161 = vmatpush1.bf16.xpose.msra.mxu0 0
          %1162 = vmatprep.subr.bf16.mxu0 0
          %1163 = vmatpush1.bf16.xpose.msra.mxu0 0
          %1164 = vmatprep.subr.bf16.mxu0 0
          %1165 = vmatpush1.bf16.xpose.msra.mxu0 0
          %1166 = vmatprep.subr.bf16.mxu0 0
          %1167 = vmatpush1.bf16.xpose.msra.mxu0 0
          %1168 = vmatprep.subr.bf16.mxu0 0
          %1169 = vmatpush1.bf16.xpose.msra.mxu0 0
          %1170 = vmatprep.mubr.bf16.mxu0 0
          %1171 = vmatmul.mubr.bf16.gmra.mrb[0].mxu0 %v1112
          %v1172 = vpop.f32.mrb[0].mxu0
          %v1173 = vadd.f32 %v1068, %v1172
          %v1174 = vpop.f32.mrb[0].mxu0
          %v1175 = vpop.f32.mrb[0].mxu0
          %v1176 = vpop.f32.mrb[0].mxu0
          %1177 = vdwg.mxu0
          %v1178 = vld [vmem:[#allocation4] sm:$0xff]
          %1179 = vmax.xlane.f32.xlu0 %v1173
          %v1180 = vpop.xlane.xlu0 %1179
          %v1181 = vmax.f32 %v1178, %v1180
          %v1182 = vsub.f32 %v1178, %v1181
          %v1183 = vmul.f32 %v1182, 1.442695
          %v1184 = vpow.pop %v1183
          %1186 = vset.pattern.permute.xlu0 0
          %1187 = vperm.xlu0 %1186, %v1181
          %v1188 = vpop.permute.xlu0 %1187
          %v1190 = vsub.f32 %v1173, %v1188
          %v1191 = vmul.f32 %v1190, 1.442695
          %v1192 = vpow.pop %v1191
          %v1193 = vld [vmem:[#allocation5] sm:$0xff]
          %v1194 = vmul.f32 %v1184, %v1193
          %1195 = vadd.xlane.f32.xlu0 %v1192
          %v1196 = vpop.xlane.xlu0 %1195
          %v1197 = vadd.f32 %v1194, %v1196
          %vm1198 = vcmask 7168
          %1199 = vst.msk [vmem:[#allocation5] sm:$0xff] %vm1198, %v1197
          %v1200 = vld [vmem:[#allocation6] sm:$0xff]
          %1202 = vset.pattern.permute.xlu0 0
          %1203 = vperm.xlu0 %1202, %v1184
          %v1204 = vpop.permute.xlu0 %1203
          %v1206 = vmul.f32 %v1204, %v1200
          %v1207 = vpack.c.bf16 %v1192, %v1192
          %v1224 = vunpack.c.l.b16 %v1052
          %v1225 = vunpack.c.l.b16 %v1053
          %v1226 = vunpack.c.l.b16 %v1054
          %v1227 = vunpack.c.l.b16 %v1055
          %v1228 = vunpack.c.l.b16 %v1056
          %v1229 = vunpack.c.l.b16 %v1057
          %v1230 = vunpack.c.l.b16 %v1058
          %v1231 = vunpack.c.l.b16 %v1059
          %v1232 = vunpack.c.l.b16 %v1060
          %v1233 = vunpack.c.l.b16 %v1061
          %v1234 = vunpack.c.l.b16 %v1062
          %v1235 = vunpack.c.l.b16 %v1063
          %v1236 = vunpack.c.l.b16 %v1064
          %v1237 = vunpack.c.l.b16 %v1065
          %v1238 = vunpack.c.l.b16 %v1066
          %v1239 = vunpack.c.l.b16 %v1067
          %v1240 = vpack.c.b16 %v1225, %v1224
          %v1241 = vpack.c.b16 %v1227, %v1226
          %v1242 = vpack.c.b16 %v1229, %v1228
          %v1243 = vpack.c.b16 %v1231, %v1230
          %v1244 = vpack.c.b16 %v1233, %v1232
          %v1245 = vpack.c.b16 %v1235, %v1234
          %v1246 = vpack.c.b16 %v1237, %v1236
          %v1247 = vpack.c.b16 %v1239, %v1238
          %1256 = vmatprep.subr.bf16.mxu0 0
          %1257 = vmatpush1.bf16.msra.mxu0 %v1240
          %1258 = vmatprep.subr.bf16.mxu0 0
          %1259 = vmatpush1.bf16.msra.mxu0 %v1241
          %1260 = vmatprep.subr.bf16.mxu0 0
          %1261 = vmatpush1.bf16.msra.mxu0 %v1242
          %1262 = vmatprep.subr.bf16.mxu0 0
          %1263 = vmatpush1.bf16.msra.mxu0 %v1243
          %1264 = vmatprep.subr.bf16.mxu0 0
          %1265 = vmatpush1.bf16.msra.mxu0 %v1244
          %1266 = vmatprep.subr.bf16.mxu0 0
          %1267 = vmatpush1.bf16.msra.mxu0 %v1245
          %1268 = vmatprep.subr.bf16.mxu0 0
          %1269 = vmatpush1.bf16.msra.mxu0 %v1246
          %1270 = vmatprep.subr.bf16.mxu0 0
          %1271 = vmatpush1.bf16.msra.mxu0 %v1247
          %1272 = vmatprep.subr.bf16.mxu0 0
          %1273 = vmatpush1.bf16.msra.mxu0 0
          %1274 = vmatprep.subr.bf16.mxu0 0
          %1275 = vmatpush1.bf16.msra.mxu0 0
          %1276 = vmatprep.subr.bf16.mxu0 0
          %1277 = vmatpush1.bf16.msra.mxu0 0
          %1278 = vmatprep.subr.bf16.mxu0 0
          %1279 = vmatpush1.bf16.msra.mxu0 0
          %1280 = vmatprep.subr.bf16.mxu0 0
          %1281 = vmatpush1.bf16.msra.mxu0 0
          %1282 = vmatprep.subr.bf16.mxu0 0
          %1283 = vmatpush1.bf16.msra.mxu0 0
          %1284 = vmatprep.subr.bf16.mxu0 0
          %1285 = vmatpush1.bf16.msra.mxu0 0
          %1286 = vmatprep.subr.bf16.mxu0 0
          %1287 = vmatpush1.bf16.msra.mxu0 0
          %1288 = vmatprep.mubr.bf16.mxu0 0
          %1289 = vmatmul.mubr.bf16.gmra.mrb[0].mxu0 %v1207
          %v1290 = vpop.f32.mrb[0].mxu0
          %v1291 = vadd.f32 0.0, %v1290
          %v1292 = vpop.f32.mrb[0].mxu0
          %v1293 = vpop.f32.mrb[0].mxu0
          %v1294 = vpop.f32.mrb[0].mxu0
          %1295 = vdwg.mxu0
          %v1296 = vadd.f32 %v1206, %v1291
          %1297 = vst.msk [vmem:[#allocation6] sm:$0xff] %vm1110, %v1296
          %1298 = vst.msk [vmem:[#allocation4] sm:$0xff] %vm1198, %v1181
          %v1300 = vunpack.c.l.b16 %v1069
          %v1301 = vpack.c.b16 %v1300, %v1300
          %1302 = vrot.lane.b32.xlu0 %v1301, 96
          %v1303 = vpop.permute.xlu0 %1302
          %v1305 = vsel %vm1110, %v1303, 0
          %1307 = vmatprep.subr.bf16.mxu0 0
          %1308 = vmatpush1.bf16.xpose.msra.mxu0 %v1115
          %1309 = vmatprep.subr.bf16.mxu0 0
          %1310 = vmatpush1.bf16.xpose.msra.mxu0 %v1118
          %1311 = vmatprep.subr.bf16.mxu0 0
          %1312 = vmatpush1.bf16.xpose.msra.mxu0 %v1121
          %1313 = vmatprep.subr.bf16.mxu0 0
          %1314 = vmatpush1.bf16.xpose.msra.mxu0 %v1124
          %1315 = vmatprep.subr.bf16.mxu0 0
          %1316 = vmatpush1.bf16.xpose.msra.mxu0 %v1127
          %1317 = vmatprep.subr.bf16.mxu0 0
          %1318 = vmatpush1.bf16.xpose.msra.mxu0 %v1130
          %1319 = vmatprep.subr.bf16.mxu0 0
          %1320 = vmatpush1.bf16.xpose.msra.mxu0 %v1133
          %1321 = vmatprep.subr.bf16.mxu0 0
          %1322 = vmatpush1.bf16.xpose.msra.mxu0 %v1136
          %1323 = vmatprep.subr.bf16.mxu0 0
          %1324 = vmatpush1.bf16.xpose.msra.mxu0 0
          %1325 = vmatprep.subr.bf16.mxu0 0
          %1326 = vmatpush1.bf16.xpose.msra.mxu0 0
          %1327 = vmatprep.subr.bf16.mxu0 0
          %1328 = vmatpush1.bf16.xpose.msra.mxu0 0
          %1329 = vmatprep.subr.bf16.mxu0 0
          %1330 = vmatpush1.bf16.xpose.msra.mxu0 0
          %1331 = vmatprep.subr.bf16.mxu0 0
          %1332 = vmatpush1.bf16.xpose.msra.mxu0 0
          %1333 = vmatprep.subr.bf16.mxu0 0
          %1334 = vmatpush1.bf16.xpose.msra.mxu0 0
          %1335 = vmatprep.subr.bf16.mxu0 0
          %1336 = vmatpush1.bf16.xpose.msra.mxu0 0
          %1337 = vmatprep.subr.bf16.mxu0 0
          %1338 = vmatpush1.bf16.xpose.msra.mxu0 0
          %1339 = vmatprep.mubr.bf16.mxu0 0
          %1340 = vmatmul.mubr.bf16.gmra.mrb[0].mxu0 %v1305
          %v1341 = vpop.f32.mrb[0].mxu0
          %v1342 = vadd.f32 %v1068, %v1341
          %v1343 = vpop.f32.mrb[0].mxu0
          %v1344 = vpop.f32.mrb[0].mxu0
          %v1345 = vpop.f32.mrb[0].mxu0
          %1346 = vdwg.mxu0
          %s1347 = scalar_lea.vmem [#allocation4], 8
          %v1348 = vld [vmem:[%s1347] sm:$0xff]
          %1349 = vmax.xlane.f32.xlu0 %v1342
          %v1350 = vpop.xlane.xlu0 %1349
          %v1351 = vmax.f32 %v1348, %v1350
          %v1352 = vsub.f32 %v1348, %v1351
          %v1353 = vmul.f32 %v1352, 1.442695
          %v1354 = vpow.pop %v1353
          %1356 = vset.pattern.permute.xlu0 0
          %1357 = vperm.xlu0 %1356, %v1351
          %v1358 = vpop.permute.xlu0 %1357
          %v1360 = vsub.f32 %v1342, %v1358
          %v1361 = vmul.f32 %v1360, 1.442695
          %v1362 = vpow.pop %v1361
          %s1363 = scalar_lea.vmem [#allocation5], 8
          %v1364 = vld [vmem:[%s1363] sm:$0xff]
          %v1365 = vmul.f32 %v1354, %v1364
          %1366 = vadd.xlane.f32.xlu0 %v1362
          %v1367 = vpop.xlane.xlu0 %1366
          %v1368 = vadd.f32 %v1365, %v1367
          %1369 = vst.msk [vmem:[%s1363] sm:$0xff] %vm1198, %v1368
          %s1370 = scalar_lea.vmem [#allocation6], 8
          %v1371 = vld [vmem:[%s1370] sm:$0xff]
          %1373 = vset.pattern.permute.xlu0 0
          %1374 = vperm.xlu0 %1373, %v1354
          %v1375 = vpop.permute.xlu0 %1374
          %v1377 = vmul.f32 %v1375, %v1371
          %v1378 = vpack.c.bf16 %v1362, %v1362
          %1379 = vmatprep.subr.bf16.mxu0 0
          %1380 = vmatpush1.bf16.msra.mxu0 %v1240
          %1381 = vmatprep.subr.bf16.mxu0 0
          %1382 = vmatpush1.bf16.msra.mxu0 %v1241
          %1383 = vmatprep.subr.bf16.mxu0 0
          %1384 = vmatpush1.bf16.msra.mxu0 %v1242
          %1385 = vmatprep.subr.bf16.mxu0 0
          %1386 = vmatpush1.bf16.msra.mxu0 %v1243
          %1387 = vmatprep.subr.bf16.mxu0 0
          %1388 = vmatpush1.bf16.msra.mxu0 %v1244
          %1389 = vmatprep.subr.bf16.mxu0 0
          %1390 = vmatpush1.bf16.msra.mxu0 %v1245
          %1391 = vmatprep.subr.bf16.mxu0 0
          %1392 = vmatpush1.bf16.msra.mxu0 %v1246
          %1393 = vmatprep.subr.bf16.mxu0 0
          %1394 = vmatpush1.bf16.msra.mxu0 %v1247
          %1395 = vmatprep.subr.bf16.mxu0 0
          %1396 = vmatpush1.bf16.msra.mxu0 0
          %1397 = vmatprep.subr.bf16.mxu0 0
          %1398 = vmatpush1.bf16.msra.mxu0 0
          %1399 = vmatprep.subr.bf16.mxu0 0
          %1400 = vmatpush1.bf16.msra.mxu0 0
          %1401 = vmatprep.subr.bf16.mxu0 0
          %1402 = vmatpush1.bf16.msra.mxu0 0
          %1403 = vmatprep.subr.bf16.mxu0 0
          %1404 = vmatpush1.bf16.msra.mxu0 0
          %1405 = vmatprep.subr.bf16.mxu0 0
          %1406 = vmatpush1.bf16.msra.mxu0 0
          %1407 = vmatprep.subr.bf16.mxu0 0
          %1408 = vmatpush1.bf16.msra.mxu0 0
          %1409 = vmatprep.subr.bf16.mxu0 0
          %1410 = vmatpush1.bf16.msra.mxu0 0
          %1411 = vmatprep.mubr.bf16.mxu0 0
          %1412 = vmatmul.mubr.bf16.gmra.mrb[0].mxu0 %v1378
          %v1413 = vpop.f32.mrb[0].mxu0
          %v1414 = vadd.f32 0.0, %v1413
          %v1415 = vpop.f32.mrb[0].mxu0
          %v1416 = vpop.f32.mrb[0].mxu0
          %v1417 = vpop.f32.mrb[0].mxu0
          %1418 = vdwg.mxu0
          %v1419 = vadd.f32 %v1377, %v1414
          %1420 = vst.msk [vmem:[%s1370] sm:$0xff] %vm1110, %v1419
          %1421 = vst.msk [vmem:[%s1347] sm:$0xff] %vm1198, %v1351
          %1422 = vrot.lane.b32.xlu0 %v1301, 64
          %v1423 = vpop.permute.xlu0 %1422
          %1424 = vrot.lane.b32.xlu0 %v1102, 96
          %v1425 = vpop.permute.xlu0 %1424
          %1426 = vrot.lane.b32.xlu0 %v1103, 96
          %v1427 = vpop.permute.xlu0 %1426
          %1428 = vrot.lane.b32.xlu0 %v1104, 96
          %v1429 = vpop.permute.xlu0 %1428
          %1430 = vrot.lane.b32.xlu0 %v1105, 96
          %v1431 = vpop.permute.xlu0 %1430
          %1432 = vrot.lane.b32.xlu0 %v1106, 96
          %v1433 = vpop.permute.xlu0 %1432
          %1434 = vrot.lane.b32.xlu0 %v1107, 96
          %v1435 = vpop.permute.xlu0 %1434
          %1436 = vrot.lane.b32.xlu0 %v1108, 96
          %v1437 = vpop.permute.xlu0 %1436
          %1438 = vrot.lane.b32.xlu0 %v1109, 96
          %v1439 = vpop.permute.xlu0 %1438
          %v1441 = vsel %vm1110, %v1423, 0
          %v1444 = vsel %vm1110, %v1425, 0
          %v1447 = vsel %vm1110, %v1427, 0
          %v1450 = vsel %vm1110, %v1429, 0
          %v1453 = vsel %vm1110, %v1431, 0
          %v1456 = vsel %vm1110, %v1433, 0
          %v1459 = vsel %vm1110, %v1435, 0
          %v1462 = vsel %vm1110, %v1437, 0
          %v1465 = vsel %vm1110, %v1439, 0
          %1467 = vmatprep.subr.bf16.mxu0 0
          %1468 = vmatpush1.bf16.xpose.msra.mxu0 %v1444
          %1469 = vmatprep.subr.bf16.mxu0 0
          %1470 = vmatpush1.bf16.xpose.msra.mxu0 %v1447
          %1471 = vmatprep.subr.bf16.mxu0 0
          %1472 = vmatpush1.bf16.xpose.msra.mxu0 %v1450
          %1473 = vmatprep.subr.bf16.mxu0 0
          %1474 = vmatpush1.bf16.xpose.msra.mxu0 %v1453
          %1475 = vmatprep.subr.bf16.mxu0 0
          %1476 = vmatpush1.bf16.xpose.msra.mxu0 %v1456
          %1477 = vmatprep.subr.bf16.mxu0 0
          %1478 = vmatpush1.bf16.xpose.msra.mxu0 %v1459
          %1479 = vmatprep.subr.bf16.mxu0 0
          %1480 = vmatpush1.bf16.xpose.msra.mxu0 %v1462
          %1481 = vmatprep.subr.bf16.mxu0 0
          %1482 = vmatpush1.bf16.xpose.msra.mxu0 %v1465
          %1483 = vmatprep.subr.bf16.mxu0 0
          %1484 = vmatpush1.bf16.xpose.msra.mxu0 0
          %1485 = vmatprep.subr.bf16.mxu0 0
          %1486 = vmatpush1.bf16.xpose.msra.mxu0 0
          %1487 = vmatprep.subr.bf16.mxu0 0
          %1488 = vmatpush1.bf16.xpose.msra.mxu0 0
          %1489 = vmatprep.subr.bf16.mxu0 0
          %1490 = vmatpush1.bf16.xpose.msra.mxu0 0
          %1491 = vmatprep.subr.bf16.mxu0 0
          %1492 = vmatpush1.bf16.xpose.msra.mxu0 0
          %1493 = vmatprep.subr.bf16.mxu0 0
          %1494 = vmatpush1.bf16.xpose.msra.mxu0 0
          %1495 = vmatprep.subr.bf16.mxu0 0
          %1496 = vmatpush1.bf16.xpose.msra.mxu0 0
          %1497 = vmatprep.subr.bf16.mxu0 0
          %1498 = vmatpush1.bf16.xpose.msra.mxu0 0
          %1499 = vmatprep.mubr.bf16.mxu0 0
          %1500 = vmatmul.mubr.bf16.gmra.mrb[0].mxu0 %v1441
          %v1501 = vpop.f32.mrb[0].mxu0
          %v1502 = vadd.f32 %v1068, %v1501
          %v1503 = vpop.f32.mrb[0].mxu0
          %v1504 = vpop.f32.mrb[0].mxu0
          %v1505 = vpop.f32.mrb[0].mxu0
          %1506 = vdwg.mxu0
          %s1507 = scalar_lea.vmem [#allocation4], 16
          %v1508 = vld [vmem:[%s1507] sm:$0xff]
          %1509 = vmax.xlane.f32.xlu0 %v1502
          %v1510 = vpop.xlane.xlu0 %1509
          %v1511 = vmax.f32 %v1508, %v1510
          %v1512 = vsub.f32 %v1508, %v1511
          %v1513 = vmul.f32 %v1512, 1.442695
          %v1514 = vpow.pop %v1513
          %1516 = vset.pattern.permute.xlu0 0
          %1517 = vperm.xlu0 %1516, %v1511
          %v1518 = vpop.permute.xlu0 %1517
          %v1520 = vsub.f32 %v1502, %v1518
          %v1521 = vmul.f32 %v1520, 1.442695
          %v1522 = vpow.pop %v1521
          %s1523 = scalar_lea.vmem [#allocation5], 16
          %v1524 = vld [vmem:[%s1523] sm:$0xff]
          %v1525 = vmul.f32 %v1514, %v1524
          %1526 = vadd.xlane.f32.xlu0 %v1522
          %v1527 = vpop.xlane.xlu0 %1526
          %v1528 = vadd.f32 %v1525, %v1527
          %1529 = vst.msk [vmem:[%s1523] sm:$0xff] %vm1198, %v1528
          %s1530 = scalar_lea.vmem [#allocation6], 16
          %v1531 = vld [vmem:[%s1530] sm:$0xff]
          %1533 = vset.pattern.permute.xlu0 0
          %1534 = vperm.xlu0 %1533, %v1514
          %v1535 = vpop.permute.xlu0 %1534
          %v1537 = vmul.f32 %v1535, %v1531
          %v1538 = vpack.c.bf16 %v1522, %v1522
          %1539 = vrot.lane.b32.xlu0 %v1240, 96
          %v1540 = vpop.permute.xlu0 %1539
          %1541 = vrot.lane.b32.xlu0 %v1241, 96
          %v1542 = vpop.permute.xlu0 %1541
          %1543 = vrot.lane.b32.xlu0 %v1242, 96
          %v1544 = vpop.permute.xlu0 %1543
          %1545 = vrot.lane.b32.xlu0 %v1243, 96
          %v1546 = vpop.permute.xlu0 %1545
          %1547 = vrot.lane.b32.xlu0 %v1244, 96
          %v1548 = vpop.permute.xlu0 %1547
          %1549 = vrot.lane.b32.xlu0 %v1245, 96
          %v1550 = vpop.permute.xlu0 %1549
          %1551 = vrot.lane.b32.xlu0 %v1246, 96
          %v1552 = vpop.permute.xlu0 %1551
          %1553 = vrot.lane.b32.xlu0 %v1247, 96
          %v1554 = vpop.permute.xlu0 %1553
          %1563 = vmatprep.subr.bf16.mxu0 0
          %1564 = vmatpush1.bf16.msra.mxu0 %v1540
          %1565 = vmatprep.subr.bf16.mxu0 0
          %1566 = vmatpush1.bf16.msra.mxu0 %v1542
          %1567 = vmatprep.subr.bf16.mxu0 0
          %1568 = vmatpush1.bf16.msra.mxu0 %v1544
          %1569 = vmatprep.subr.bf16.mxu0 0
          %1570 = vmatpush1.bf16.msra.mxu0 %v1546
          %1571 = vmatprep.subr.bf16.mxu0 0
          %1572 = vmatpush1.bf16.msra.mxu0 %v1548
          %1573 = vmatprep.subr.bf16.mxu0 0
          %1574 = vmatpush1.bf16.msra.mxu0 %v1550
          %1575 = vmatprep.subr.bf16.mxu0 0
          %1576 = vmatpush1.bf16.msra.mxu0 %v1552
          %1577 = vmatprep.subr.bf16.mxu0 0
          %1578 = vmatpush1.bf16.msra.mxu0 %v1554
          %1579 = vmatprep.subr.bf16.mxu0 0
          %1580 = vmatpush1.bf16.msra.mxu0 0
          %1581 = vmatprep.subr.bf16.mxu0 0
          %1582 = vmatpush1.bf16.msra.mxu0 0
          %1583 = vmatprep.subr.bf16.mxu0 0
          %1584 = vmatpush1.bf16.msra.mxu0 0
          %1585 = vmatprep.subr.bf16.mxu0 0
          %1586 = vmatpush1.bf16.msra.mxu0 0
          %1587 = vmatprep.subr.bf16.mxu0 0
          %1588 = vmatpush1.bf16.msra.mxu0 0
          %1589 = vmatprep.subr.bf16.mxu0 0
          %1590 = vmatpush1.bf16.msra.mxu0 0
          %1591 = vmatprep.subr.bf16.mxu0 0
          %1592 = vmatpush1.bf16.msra.mxu0 0
          %1593 = vmatprep.subr.bf16.mxu0 0
          %1594 = vmatpush1.bf16.msra.mxu0 0
          %1595 = vmatprep.mubr.bf16.mxu0 0
          %1596 = vmatmul.mubr.bf16.gmra.mrb[0].mxu0 %v1538
          %v1597 = vpop.f32.mrb[0].mxu0
          %v1598 = vadd.f32 0.0, %v1597
          %v1599 = vpop.f32.mrb[0].mxu0
          %v1600 = vpop.f32.mrb[0].mxu0
          %v1601 = vpop.f32.mrb[0].mxu0
          %1602 = vdwg.mxu0
          %v1603 = vadd.f32 %v1537, %v1598
          %1604 = vst.msk [vmem:[%s1530] sm:$0xff] %vm1110, %v1603
          %1605 = vst.msk [vmem:[%s1507] sm:$0xff] %vm1198, %v1511
          %1606 = vrot.lane.b32.xlu0 %v1301, 32
          %v1607 = vpop.permute.xlu0 %1606
          %v1609 = vsel %vm1110, %v1607, 0
          %1611 = vmatprep.subr.bf16.mxu0 0
          %1612 = vmatpush1.bf16.xpose.msra.mxu0 %v1444
          %1613 = vmatprep.subr.bf16.mxu0 0
          %1614 = vmatpush1.bf16.xpose.msra.mxu0 %v1447
          %1615 = vmatprep.subr.bf16.mxu0 0
          %1616 = vmatpush1.bf16.xpose.msra.mxu0 %v1450
          %1617 = vmatprep.subr.bf16.mxu0 0
          %1618 = vmatpush1.bf16.xpose.msra.mxu0 %v1453
          %1619 = vmatprep.subr.bf16.mxu0 0
          %1620 = vmatpush1.bf16.xpose.msra.mxu0 %v1456
          %1621 = vmatprep.subr.bf16.mxu0 0
          %1622 = vmatpush1.bf16.xpose.msra.mxu0 %v1459
          %1623 = vmatprep.subr.bf16.mxu0 0
          %1624 = vmatpush1.bf16.xpose.msra.mxu0 %v1462
          %1625 = vmatprep.subr.bf16.mxu0 0
          %1626 = vmatpush1.bf16.xpose.msra.mxu0 %v1465
          %1627 = vmatprep.subr.bf16.mxu0 0
          %1628 = vmatpush1.bf16.xpose.msra.mxu0 0
          %1629 = vmatprep.subr.bf16.mxu0 0
          %1630 = vmatpush1.bf16.xpose.msra.mxu0 0
          %1631 = vmatprep.subr.bf16.mxu0 0
          %1632 = vmatpush1.bf16.xpose.msra.mxu0 0
          %1633 = vmatprep.subr.bf16.mxu0 0
          %1634 = vmatpush1.bf16.xpose.msra.mxu0 0
          %1635 = vmatprep.subr.bf16.mxu0 0
          %1636 = vmatpush1.bf16.xpose.msra.mxu0 0
          %1637 = vmatprep.subr.bf16.mxu0 0
          %1638 = vmatpush1.bf16.xpose.msra.mxu0 0
          %1639 = vmatprep.subr.bf16.mxu0 0
          %1640 = vmatpush1.bf16.xpose.msra.mxu0 0
          %1641 = vmatprep.subr.bf16.mxu0 0
          %1642 = vmatpush1.bf16.xpose.msra.mxu0 0
          %1643 = vmatprep.mubr.bf16.mxu0 0
          %1644 = vmatmul.mubr.bf16.gmra.mrb[0].mxu0 %v1609
          %v1645 = vpop.f32.mrb[0].mxu0
          %v1646 = vadd.f32 %v1068, %v1645
          %v1647 = vpop.f32.mrb[0].mxu0
          %v1648 = vpop.f32.mrb[0].mxu0
          %v1649 = vpop.f32.mrb[0].mxu0
          %1650 = vdwg.mxu0
          %s1651 = scalar_lea.vmem [#allocation4], 24
          %v1652 = vld [vmem:[%s1651] sm:$0xff]
          %1653 = vmax.xlane.f32.xlu0 %v1646
          %v1654 = vpop.xlane.xlu0 %1653
          %v1655 = vmax.f32 %v1652, %v1654
          %v1656 = vsub.f32 %v1652, %v1655
          %v1657 = vmul.f32 %v1656, 1.442695
          %v1658 = vpow.pop %v1657
          %1660 = vset.pattern.permute.xlu0 0
          %1661 = vperm.xlu0 %1660, %v1655
          %v1662 = vpop.permute.xlu0 %1661
          %v1664 = vsub.f32 %v1646, %v1662
          %v1665 = vmul.f32 %v1664, 1.442695
          %v1666 = vpow.pop %v1665
          %s1667 = scalar_lea.vmem [#allocation5], 24
          %v1668 = vld [vmem:[%s1667] sm:$0xff]
          %v1669 = vmul.f32 %v1658, %v1668
          %1670 = vadd.xlane.f32.xlu0 %v1666
          %v1671 = vpop.xlane.xlu0 %1670
          %v1672 = vadd.f32 %v1669, %v1671
          %1673 = vst.msk [vmem:[%s1667] sm:$0xff] %vm1198, %v1672
          %s1674 = scalar_lea.vmem [#allocation6], 24
          %v1675 = vld [vmem:[%s1674] sm:$0xff]
          %1677 = vset.pattern.permute.xlu0 0
          %1678 = vperm.xlu0 %1677, %v1658
          %v1679 = vpop.permute.xlu0 %1678
          %v1681 = vmul.f32 %v1679, %v1675
          %v1682 = vpack.c.bf16 %v1666, %v1666
          %1683 = vmatprep.subr.bf16.mxu0 0
          %1684 = vmatpush1.bf16.msra.mxu0 %v1540
          %1685 = vmatprep.subr.bf16.mxu0 0
          %1686 = vmatpush1.bf16.msra.mxu0 %v1542
          %1687 = vmatprep.subr.bf16.mxu0 0
          %1688 = vmatpush1.bf16.msra.mxu0 %v1544
          %1689 = vmatprep.subr.bf16.mxu0 0
          %1690 = vmatpush1.bf16.msra.mxu0 %v1546
          %1691 = vmatprep.subr.bf16.mxu0 0
          %1692 = vmatpush1.bf16.msra.mxu0 %v1548
          %1693 = vmatprep.subr.bf16.mxu0 0
          %1694 = vmatpush1.bf16.msra.mxu0 %v1550
          %1695 = vmatprep.subr.bf16.mxu0 0
          %1696 = vmatpush1.bf16.msra.mxu0 %v1552
          %1697 = vmatprep.subr.bf16.mxu0 0
          %1698 = vmatpush1.bf16.msra.mxu0 %v1554
          %1699 = vmatprep.subr.bf16.mxu0 0
          %1700 = vmatpush1.bf16.msra.mxu0 0
          %1701 = vmatprep.subr.bf16.mxu0 0
          %1702 = vmatpush1.bf16.msra.mxu0 0
          %1703 = vmatprep.subr.bf16.mxu0 0
          %1704 = vmatpush1.bf16.msra.mxu0 0
          %1705 = vmatprep.subr.bf16.mxu0 0
          %1706 = vmatpush1.bf16.msra.mxu0 0
          %1707 = vmatprep.subr.bf16.mxu0 0
          %1708 = vmatpush1.bf16.msra.mxu0 0
          %1709 = vmatprep.subr.bf16.mxu0 0
          %1710 = vmatpush1.bf16.msra.mxu0 0
          %1711 = vmatprep.subr.bf16.mxu0 0
          %1712 = vmatpush1.bf16.msra.mxu0 0
          %1713 = vmatprep.subr.bf16.mxu0 0
          %1714 = vmatpush1.bf16.msra.mxu0 0
          %1715 = vmatprep.mubr.bf16.mxu0 0
          %1716 = vmatmul.mubr.bf16.gmra.mrb[0].mxu0 %v1682
          %v1717 = vpop.f32.mrb[0].mxu0
          %v1718 = vadd.f32 0.0, %v1717
          %v1719 = vpop.f32.mrb[0].mxu0
          %v1720 = vpop.f32.mrb[0].mxu0
          %v1721 = vpop.f32.mrb[0].mxu0
          %1722 = vdwg.mxu0
          %v1723 = vadd.f32 %v1681, %v1718
          %1724 = vst.msk [vmem:[%s1674] sm:$0xff] %vm1110, %v1723
          %1725 = vst.msk [vmem:[%s1651] sm:$0xff] %vm1198, %v1655
        $region124: #{tpu_custom_call.1} parent=67 // pred_fallthru
          _
        %p1726 = scmp.eq.s32.totalorder %s42, 1
        // Predicated region
        $region125: #{tpu_custom_call.1} parent=67 // pred_check
          %p1727 = pneg %p1726
        $region126: #{tpu_custom_call.1} parent=67 // pred_check_branch
          %1729 = sbr.rel (%p1727) target = $region128
        $region127: #{tpu_custom_call.1} parent=67 // pred_region
          %v1730 = vld [vmem:[%s640] sm:$0xff]
          %v1731 = vld [vmem:[#allocation19] sm:$0xf]
          %v1732 = vld [vmem:[#allocation19 + $0x4] sm:$0xf]
          %v1733 = vld [vmem:[#allocation19 + $0x8] sm:$0xf]
          %v1734 = vld [vmem:[#allocation19 + $0xc] sm:$0xf]
          %v1735 = vld [vmem:[#allocation19 + $0x10] sm:$0xf]
          %v1736 = vld [vmem:[#allocation19 + $0x14] sm:$0xf]
          %v1737 = vld [vmem:[#allocation19 + $0x18] sm:$0xf]
          %v1738 = vld [vmem:[#allocation19 + $0x1c] sm:$0xf]
          %v1739 = vld [vmem:[#allocation19 + $0x20] sm:$0xf]
          %v1740 = vld [vmem:[#allocation19 + $0x24] sm:$0xf]
          %v1741 = vld [vmem:[#allocation19 + $0x28] sm:$0xf]
          %v1742 = vld [vmem:[#allocation19 + $0x2c] sm:$0xf]
          %v1743 = vld [vmem:[#allocation19 + $0x30] sm:$0xf]
          %v1744 = vld [vmem:[#allocation19 + $0x34] sm:$0xf]
          %v1745 = vld [vmem:[#allocation19 + $0x38] sm:$0xf]
          %v1746 = vld [vmem:[#allocation19 + $0x3c] sm:$0xf]
          %v1747 = vld [vmem:[#allocation6] sm:$0xff]
          %v1748 = vld [vmem:[#allocation5] sm:$0xff]
          %v1749 = vrcp.pop %v1748
          %1751 = vset.pattern.permute.xlu0 0
          %1752 = vperm.xlu0 %1751, %v1749
          %v1753 = vpop.permute.xlu0 %1752
          %v1755 = vmul.f32 %v1747, %v1753
          %v1756 = vpack.c.bf16 %v1755, %v1755
          %s1757 = scalar_lea.vmem [#allocation6], 8
          %v1758 = vld [vmem:[%s1757] sm:$0xff]
          %s1759 = scalar_lea.vmem [#allocation5], 8
          %v1760 = vld [vmem:[%s1759] sm:$0xff]
          %v1761 = vrcp.pop %v1760
          %1763 = vset.pattern.permute.xlu0 0
          %1764 = vperm.xlu0 %1763, %v1761
          %v1765 = vpop.permute.xlu0 %1764
          %v1767 = vmul.f32 %v1758, %v1765
          %v1768 = vpack.c.bf16 %v1767, %v1767
          %v1785 = vunpack.c.l.b16 %v1731
          %v1786 = vunpack.c.l.b16 %v1732
          %v1787 = vunpack.c.l.b16 %v1733
          %v1788 = vunpack.c.l.b16 %v1734
          %v1789 = vunpack.c.l.b16 %v1735
          %v1790 = vunpack.c.l.b16 %v1736
          %v1791 = vunpack.c.l.b16 %v1737
          %v1792 = vunpack.c.l.b16 %v1738
          %v1793 = vunpack.c.l.b16 %v1739
          %v1794 = vunpack.c.l.b16 %v1740
          %v1795 = vunpack.c.l.b16 %v1741
          %v1796 = vunpack.c.l.b16 %v1742
          %v1797 = vunpack.c.l.b16 %v1743
          %v1798 = vunpack.c.l.b16 %v1744
          %v1799 = vunpack.c.l.b16 %v1745
          %v1800 = vunpack.c.l.b16 %v1746
          %v1801 = vpack.c.b16 %v1786, %v1785
          %v1802 = vpack.c.b16 %v1788, %v1787
          %v1803 = vpack.c.b16 %v1790, %v1789
          %v1804 = vpack.c.b16 %v1792, %v1791
          %v1805 = vpack.c.b16 %v1794, %v1793
          %v1806 = vpack.c.b16 %v1796, %v1795
          %v1807 = vpack.c.b16 %v1798, %v1797
          %v1808 = vpack.c.b16 %v1800, %v1799
          %1809 = vrot.lane.b32.xlu0 %v1801, 96
          %v1810 = vpop.permute.xlu0 %1809
          %1811 = vrot.lane.b32.xlu0 %v1802, 96
          %v1812 = vpop.permute.xlu0 %1811
          %1813 = vrot.lane.b32.xlu0 %v1803, 96
          %v1814 = vpop.permute.xlu0 %1813
          %1815 = vrot.lane.b32.xlu0 %v1804, 96
          %v1816 = vpop.permute.xlu0 %1815
          %1817 = vrot.lane.b32.xlu0 %v1805, 96
          %v1818 = vpop.permute.xlu0 %1817
          %1819 = vrot.lane.b32.xlu0 %v1806, 96
          %v1820 = vpop.permute.xlu0 %1819
          %1821 = vrot.lane.b32.xlu0 %v1807, 96
          %v1822 = vpop.permute.xlu0 %1821
          %1823 = vrot.lane.b32.xlu0 %v1808, 96
          %v1824 = vpop.permute.xlu0 %1823
          %vm1825 = vcmask 261120
          %v1827 = vsel %vm1825, %v1768, 0
          %v1830 = vsel %vm1825, %v1810, 0
          %v1833 = vsel %vm1825, %v1812, 0
          %v1836 = vsel %vm1825, %v1814, 0
          %v1839 = vsel %vm1825, %v1816, 0
          %v1842 = vsel %vm1825, %v1818, 0
          %v1845 = vsel %vm1825, %v1820, 0
          %v1848 = vsel %vm1825, %v1822, 0
          %v1851 = vsel %vm1825, %v1824, 0
          %1853 = vmatprep.subr.bf16.mxu0 0
          %1854 = vmatpush1.bf16.xpose.msra.mxu0 %v1830
          %1855 = vmatprep.subr.bf16.mxu0 0
          %1856 = vmatpush1.bf16.xpose.msra.mxu0 %v1833
          %1857 = vmatprep.subr.bf16.mxu0 0
          %1858 = vmatpush1.bf16.xpose.msra.mxu0 %v1836
          %1859 = vmatprep.subr.bf16.mxu0 0
          %1860 = vmatpush1.bf16.xpose.msra.mxu0 %v1839
          %1861 = vmatprep.subr.bf16.mxu0 0
          %1862 = vmatpush1.bf16.xpose.msra.mxu0 %v1842
          %1863 = vmatprep.subr.bf16.mxu0 0
          %1864 = vmatpush1.bf16.xpose.msra.mxu0 %v1845
          %1865 = vmatprep.subr.bf16.mxu0 0
          %1866 = vmatpush1.bf16.xpose.msra.mxu0 %v1848
          %1867 = vmatprep.subr.bf16.mxu0 0
          %1868 = vmatpush1.bf16.xpose.msra.mxu0 %v1851
          %1869 = vmatprep.subr.bf16.mxu0 0
          %1870 = vmatpush1.bf16.xpose.msra.mxu0 0
          %1871 = vmatprep.subr.bf16.mxu0 0
          %1872 = vmatpush1.bf16.xpose.msra.mxu0 0
          %1873 = vmatprep.subr.bf16.mxu0 0
          %1874 = vmatpush1.bf16.xpose.msra.mxu0 0
          %1875 = vmatprep.subr.bf16.mxu0 0
          %1876 = vmatpush1.bf16.xpose.msra.mxu0 0
          %1877 = vmatprep.subr.bf16.mxu0 0
          %1878 = vmatpush1.bf16.xpose.msra.mxu0 0
          %1879 = vmatprep.subr.bf16.mxu0 0
          %1880 = vmatpush1.bf16.xpose.msra.mxu0 0
          %1881 = vmatprep.subr.bf16.mxu0 0
          %1882 = vmatpush1.bf16.xpose.msra.mxu0 0
          %1883 = vmatprep.subr.bf16.mxu0 0
          %1884 = vmatpush1.bf16.xpose.msra.mxu0 0
          %1885 = vmatprep.mubr.bf16.mxu0 0
          %1886 = vmatmul.mubr.bf16.gmra.mrb[0].mxu0 %v1827
          %v1887 = vpop.f32.mrb[0].mxu0
          %v1888 = vadd.f32 0.0, %v1887
          %v1889 = vpop.f32.mrb[0].mxu0
          %v1890 = vpop.f32.mrb[0].mxu0
          %v1891 = vpop.f32.mrb[0].mxu0
          %1892 = vdwg.mxu0
          %v1894 = vsel %vm1825, %v1756, 0
          %v1897 = vsel %vm1825, %v1801, 0
          %v1900 = vsel %vm1825, %v1802, 0
          %v1903 = vsel %vm1825, %v1803, 0
          %v1906 = vsel %vm1825, %v1804, 0
          %v1909 = vsel %vm1825, %v1805, 0
          %v1912 = vsel %vm1825, %v1806, 0
          %v1915 = vsel %vm1825, %v1807, 0
          %v1918 = vsel %vm1825, %v1808, 0
          %1920 = vmatprep.subr.bf16.mxu0 0
          %1921 = vmatpush1.bf16.xpose.msra.mxu0 %v1897
          %1922 = vmatprep.subr.bf16.mxu0 0
          %1923 = vmatpush1.bf16.xpose.msra.mxu0 %v1900
          %1924 = vmatprep.subr.bf16.mxu0 0
          %1925 = vmatpush1.bf16.xpose.msra.mxu0 %v1903
          %1926 = vmatprep.subr.bf16.mxu0 0
          %1927 = vmatpush1.bf16.xpose.msra.mxu0 %v1906
          %1928 = vmatprep.subr.bf16.mxu0 0
          %1929 = vmatpush1.bf16.xpose.msra.mxu0 %v1909
          %1930 = vmatprep.subr.bf16.mxu0 0
          %1931 = vmatpush1.bf16.xpose.msra.mxu0 %v1912
          %1932 = vmatprep.subr.bf16.mxu0 0
          %1933 = vmatpush1.bf16.xpose.msra.mxu0 %v1915
          %1934 = vmatprep.subr.bf16.mxu0 0
          %1935 = vmatpush1.bf16.xpose.msra.mxu0 %v1918
          %1936 = vmatprep.subr.bf16.mxu0 0
          %1937 = vmatpush1.bf16.xpose.msra.mxu0 0
          %1938 = vmatprep.subr.bf16.mxu0 0
          %1939 = vmatpush1.bf16.xpose.msra.mxu0 0
          %1940 = vmatprep.subr.bf16.mxu0 0
          %1941 = vmatpush1.bf16.xpose.msra.mxu0 0
          %1942 = vmatprep.subr.bf16.mxu0 0
          %1943 = vmatpush1.bf16.xpose.msra.mxu0 0
          %1944 = vmatprep.subr.bf16.mxu0 0
          %1945 = vmatpush1.bf16.xpose.msra.mxu0 0
          %1946 = vmatprep.subr.bf16.mxu0 0
          %1947 = vmatpush1.bf16.xpose.msra.mxu0 0
          %1948 = vmatprep.subr.bf16.mxu0 0
          %1949 = vmatpush1.bf16.xpose.msra.mxu0 0
          %1950 = vmatprep.subr.bf16.mxu0 0
          %1951 = vmatpush1.bf16.xpose.msra.mxu0 0
          %1952 = vmatprep.mubr.bf16.mxu0 0
          %1953 = vmatmul.mubr.bf16.gmra.mrb[0].mxu0 %v1894
          %v1954 = vpop.f32.mrb[0].mxu0
          %v1955 = vadd.f32 %v1888, %v1954
          %v1956 = vpop.f32.mrb[0].mxu0
          %v1957 = vpop.f32.mrb[0].mxu0
          %v1958 = vpop.f32.mrb[0].mxu0
          %1959 = vdwg.mxu0
          %s1960 = scalar_lea.vmem [#allocation6], 16
          %v1961 = vld [vmem:[%s1960] sm:$0xff]
          %s1962 = scalar_lea.vmem [#allocation5], 16
          %v1963 = vld [vmem:[%s1962] sm:$0xff]
          %v1964 = vrcp.pop %v1963
          %1966 = vset.pattern.permute.xlu0 0
          %1967 = vperm.xlu0 %1966, %v1964
          %v1968 = vpop.permute.xlu0 %1967
          %v1970 = vmul.f32 %v1961, %v1968
          %v1971 = vpack.c.bf16 %v1970, %v1970
          %1972 = vrot.lane.b32.xlu0 %v1801, 64
          %v1973 = vpop.permute.xlu0 %1972
          %1974 = vrot.lane.b32.xlu0 %v1802, 64
          %v1975 = vpop.permute.xlu0 %1974
          %1976 = vrot.lane.b32.xlu0 %v1803, 64
          %v1977 = vpop.permute.xlu0 %1976
          %1978 = vrot.lane.b32.xlu0 %v1804, 64
          %v1979 = vpop.permute.xlu0 %1978
          %1980 = vrot.lane.b32.xlu0 %v1805, 64
          %v1981 = vpop.permute.xlu0 %1980
          %1982 = vrot.lane.b32.xlu0 %v1806, 64
          %v1983 = vpop.permute.xlu0 %1982
          %1984 = vrot.lane.b32.xlu0 %v1807, 64
          %v1985 = vpop.permute.xlu0 %1984
          %1986 = vrot.lane.b32.xlu0 %v1808, 64
          %v1987 = vpop.permute.xlu0 %1986
          %v1989 = vsel %vm1825, %v1971, 0
          %v1992 = vsel %vm1825, %v1973, 0
          %v1995 = vsel %vm1825, %v1975, 0
          %v1998 = vsel %vm1825, %v1977, 0
          %v2001 = vsel %vm1825, %v1979, 0
          %v2004 = vsel %vm1825, %v1981, 0
          %v2007 = vsel %vm1825, %v1983, 0
          %v2010 = vsel %vm1825, %v1985, 0
          %v2013 = vsel %vm1825, %v1987, 0
          %2015 = vmatprep.subr.bf16.mxu0 0
          %2016 = vmatpush1.bf16.xpose.msra.mxu0 %v1992
          %2017 = vmatprep.subr.bf16.mxu0 0
          %2018 = vmatpush1.bf16.xpose.msra.mxu0 %v1995
          %2019 = vmatprep.subr.bf16.mxu0 0
          %2020 = vmatpush1.bf16.xpose.msra.mxu0 %v1998
          %2021 = vmatprep.subr.bf16.mxu0 0
          %2022 = vmatpush1.bf16.xpose.msra.mxu0 %v2001
          %2023 = vmatprep.subr.bf16.mxu0 0
          %2024 = vmatpush1.bf16.xpose.msra.mxu0 %v2004
          %2025 = vmatprep.subr.bf16.mxu0 0
          %2026 = vmatpush1.bf16.xpose.msra.mxu0 %v2007
          %2027 = vmatprep.subr.bf16.mxu0 0
          %2028 = vmatpush1.bf16.xpose.msra.mxu0 %v2010
          %2029 = vmatprep.subr.bf16.mxu0 0
          %2030 = vmatpush1.bf16.xpose.msra.mxu0 %v2013
          %2031 = vmatprep.subr.bf16.mxu0 0
          %2032 = vmatpush1.bf16.xpose.msra.mxu0 0
          %2033 = vmatprep.subr.bf16.mxu0 0
          %2034 = vmatpush1.bf16.xpose.msra.mxu0 0
          %2035 = vmatprep.subr.bf16.mxu0 0
          %2036 = vmatpush1.bf16.xpose.msra.mxu0 0
          %2037 = vmatprep.subr.bf16.mxu0 0
          %2038 = vmatpush1.bf16.xpose.msra.mxu0 0
          %2039 = vmatprep.subr.bf16.mxu0 0
          %2040 = vmatpush1.bf16.xpose.msra.mxu0 0
          %2041 = vmatprep.subr.bf16.mxu0 0
          %2042 = vmatpush1.bf16.xpose.msra.mxu0 0
          %2043 = vmatprep.subr.bf16.mxu0 0
          %2044 = vmatpush1.bf16.xpose.msra.mxu0 0
          %2045 = vmatprep.subr.bf16.mxu0 0
          %2046 = vmatpush1.bf16.xpose.msra.mxu0 0
          %2047 = vmatprep.mubr.bf16.mxu0 0
          %2048 = vmatmul.mubr.bf16.gmra.mrb[0].mxu0 %v1989
          %v2049 = vpop.f32.mrb[0].mxu0
          %v2050 = vadd.f32 0.0, %v2049
          %v2051 = vpop.f32.mrb[0].mxu0
          %v2052 = vpop.f32.mrb[0].mxu0
          %v2053 = vpop.f32.mrb[0].mxu0
          %2054 = vdwg.mxu0
          %v2055 = vadd.f32 %v1955, %v2050
          %s2056 = scalar_lea.vmem [#allocation6], 24
          %v2057 = vld [vmem:[%s2056] sm:$0xff]
          %s2058 = scalar_lea.vmem [#allocation5], 24
          %v2059 = vld [vmem:[%s2058] sm:$0xff]
          %v2060 = vrcp.pop %v2059
          %2062 = vset.pattern.permute.xlu0 0
          %2063 = vperm.xlu0 %2062, %v2060
          %v2064 = vpop.permute.xlu0 %2063
          %v2066 = vmul.f32 %v2057, %v2064
          %v2067 = vpack.c.bf16 %v2066, %v2066
          %2068 = vrot.lane.b32.xlu0 %v1801, 32
          %v2069 = vpop.permute.xlu0 %2068
          %2070 = vrot.lane.b32.xlu0 %v1802, 32
          %v2071 = vpop.permute.xlu0 %2070
          %2072 = vrot.lane.b32.xlu0 %v1803, 32
          %v2073 = vpop.permute.xlu0 %2072
          %2074 = vrot.lane.b32.xlu0 %v1804, 32
          %v2075 = vpop.permute.xlu0 %2074
          %2076 = vrot.lane.b32.xlu0 %v1805, 32
          %v2077 = vpop.permute.xlu0 %2076
          %2078 = vrot.lane.b32.xlu0 %v1806, 32
          %v2079 = vpop.permute.xlu0 %2078
          %2080 = vrot.lane.b32.xlu0 %v1807, 32
          %v2081 = vpop.permute.xlu0 %2080
          %2082 = vrot.lane.b32.xlu0 %v1808, 32
          %v2083 = vpop.permute.xlu0 %2082
          %v2085 = vsel %vm1825, %v2067, 0
          %v2088 = vsel %vm1825, %v2069, 0
          %v2091 = vsel %vm1825, %v2071, 0
          %v2094 = vsel %vm1825, %v2073, 0
          %v2097 = vsel %vm1825, %v2075, 0
          %v2100 = vsel %vm1825, %v2077, 0
          %v2103 = vsel %vm1825, %v2079, 0
          %v2106 = vsel %vm1825, %v2081, 0
          %v2109 = vsel %vm1825, %v2083, 0
          %2111 = vmatprep.subr.bf16.mxu0 0
          %2112 = vmatpush1.bf16.xpose.msra.mxu0 %v2088
          %2113 = vmatprep.subr.bf16.mxu0 0
          %2114 = vmatpush1.bf16.xpose.msra.mxu0 %v2091
          %2115 = vmatprep.subr.bf16.mxu0 0
          %2116 = vmatpush1.bf16.xpose.msra.mxu0 %v2094
          %2117 = vmatprep.subr.bf16.mxu0 0
          %2118 = vmatpush1.bf16.xpose.msra.mxu0 %v2097
          %2119 = vmatprep.subr.bf16.mxu0 0
          %2120 = vmatpush1.bf16.xpose.msra.mxu0 %v2100
          %2121 = vmatprep.subr.bf16.mxu0 0
          %2122 = vmatpush1.bf16.xpose.msra.mxu0 %v2103
          %2123 = vmatprep.subr.bf16.mxu0 0
          %2124 = vmatpush1.bf16.xpose.msra.mxu0 %v2106
          %2125 = vmatprep.subr.bf16.mxu0 0
          %2126 = vmatpush1.bf16.xpose.msra.mxu0 %v2109
          %2127 = vmatprep.subr.bf16.mxu0 0
          %2128 = vmatpush1.bf16.xpose.msra.mxu0 0
          %2129 = vmatprep.subr.bf16.mxu0 0
          %2130 = vmatpush1.bf16.xpose.msra.mxu0 0
          %2131 = vmatprep.subr.bf16.mxu0 0
          %2132 = vmatpush1.bf16.xpose.msra.mxu0 0
          %2133 = vmatprep.subr.bf16.mxu0 0
          %2134 = vmatpush1.bf16.xpose.msra.mxu0 0
          %2135 = vmatprep.subr.bf16.mxu0 0
          %2136 = vmatpush1.bf16.xpose.msra.mxu0 0
          %2137 = vmatprep.subr.bf16.mxu0 0
          %2138 = vmatpush1.bf16.xpose.msra.mxu0 0
          %2139 = vmatprep.subr.bf16.mxu0 0
          %2140 = vmatpush1.bf16.xpose.msra.mxu0 0
          %2141 = vmatprep.subr.bf16.mxu0 0
          %2142 = vmatpush1.bf16.xpose.msra.mxu0 0
          %2143 = vmatprep.mubr.bf16.mxu0 0
          %2144 = vmatmul.mubr.bf16.gmra.mrb[0].mxu0 %v2085
          %v2145 = vpop.f32.mrb[0].mxu0
          %v2146 = vadd.f32 0.0, %v2145
          %v2147 = vpop.f32.mrb[0].mxu0
          %v2148 = vpop.f32.mrb[0].mxu0
          %v2149 = vpop.f32.mrb[0].mxu0
          %2150 = vdwg.mxu0
          %v2151 = vadd.f32 %v2055, %v2146
          %v2152 = vadd.f32 %v2151, %v1730
          %2153 = vst [vmem:[%s774] sm:$0xff] %v2152
          %v2154 = vmul.f32 %v2152, %v2152
          %2155 = vadd.xlane.f32.xlu0 %v2154
          %v2156 = vpop.xlane.xlu0 %2155
          %v2157 = vrcp.pop 128.0
          %v2158 = vmul.f32 %v2156, %v2157
          %v2159 = vadd.f32 %v2158, 1e-06
          %v2160 = vrsqrt.pop %v2159
          %v2161 = vmul.f32 %v2152, %v2160
          %v2162 = vld [vmem:[#allocation24] sm:$0x1]
          %v2163 = vadd.f32 %v2162, 1.0
          %v2165 = vlaneseq
          %v2166 = vshrl.u32 %v2165, 7
          %v2167 = vsub.s32 0, %v2166
          %v2168 = vrot.slane %v2163, %v2167
          %v2170 = vmul.f32 %v2161, %v2168
          %v2171 = vpack.c.bf16 %v2170, %v2170
          %2172 = vst [vmem:[#allocation3] sm:$0xf] %v2171
        $region128: #{tpu_custom_call.1} parent=67 // pred_fallthru
          _
        %p2173 = scmp.ge.s32.totalorder %s42, 2
        // Predicated region
        $region129: #{tpu_custom_call.1} parent=67 // pred_check
          %p2174 = pneg %p2173
        $region130: #{tpu_custom_call.1} parent=67 // pred_check_branch
          %2176 = sbr.rel (%p2174) target = $region132
        $region131: #{tpu_custom_call.1} parent=67 // pred_region
          %v2177 = vld [vmem:[#allocation3] sm:$0xf]
          %v2178 = vld [vmem:[%s692] sm:$0xf]
          %v2179 = vld [vmem:[%s692 + $0x4] sm:$0xf]
          %v2180 = vld [vmem:[%s692 + $0x8] sm:$0xf]
          %v2181 = vld [vmem:[%s692 + $0xc] sm:$0xf]
          %v2182 = vld [vmem:[%s692 + $0x10] sm:$0xf]
          %v2183 = vld [vmem:[%s692 + $0x14] sm:$0xf]
          %v2184 = vld [vmem:[%s692 + $0x18] sm:$0xf]
          %v2185 = vld [vmem:[%s692 + $0x1c] sm:$0xf]
          %v2186 = vld [vmem:[%s692 + $0x20] sm:$0xf]
          %v2187 = vld [vmem:[%s692 + $0x24] sm:$0xf]
          %v2188 = vld [vmem:[%s692 + $0x28] sm:$0xf]
          %v2189 = vld [vmem:[%s692 + $0x2c] sm:$0xf]
          %v2190 = vld [vmem:[%s692 + $0x30] sm:$0xf]
          %v2191 = vld [vmem:[%s692 + $0x34] sm:$0xf]
          %v2192 = vld [vmem:[%s692 + $0x38] sm:$0xf]
          %v2193 = vld [vmem:[%s692 + $0x3c] sm:$0xf]
          %v2210 = vunpack.c.l.b16 %v2178
          %v2211 = vunpack.c.l.b16 %v2179
          %v2212 = vunpack.c.l.b16 %v2180
          %v2213 = vunpack.c.l.b16 %v2181
          %v2214 = vunpack.c.l.b16 %v2182
          %v2215 = vunpack.c.l.b16 %v2183
          %v2216 = vunpack.c.l.b16 %v2184
          %v2217 = vunpack.c.l.b16 %v2185
          %v2218 = vunpack.c.l.b16 %v2186
          %v2219 = vunpack.c.l.b16 %v2187
          %v2220 = vunpack.c.l.b16 %v2188
          %v2221 = vunpack.c.l.b16 %v2189
          %v2222 = vunpack.c.l.b16 %v2190
          %v2223 = vunpack.c.l.b16 %v2191
          %v2224 = vunpack.c.l.b16 %v2192
          %v2225 = vunpack.c.l.b16 %v2193
          %v2226 = vpack.c.b16 %v2211, %v2210
          %v2227 = vpack.c.b16 %v2213, %v2212
          %v2228 = vpack.c.b16 %v2215, %v2214
          %v2229 = vpack.c.b16 %v2217, %v2216
          %v2230 = vpack.c.b16 %v2219, %v2218
          %v2231 = vpack.c.b16 %v2221, %v2220
          %v2232 = vpack.c.b16 %v2223, %v2222
          %v2233 = vpack.c.b16 %v2225, %v2224
          %2242 = vmatprep.subr.bf16.mxu0 0
          %2243 = vmatpush1.bf16.xpose.msra.mxu0 %v2226
          %2244 = vmatprep.subr.bf16.mxu0 0
          %2245 = vmatpush1.bf16.xpose.msra.mxu0 %v2227
          %2246 = vmatprep.subr.bf16.mxu0 0
          %2247 = vmatpush1.bf16.xpose.msra.mxu0 %v2228
          %2248 = vmatprep.subr.bf16.mxu0 0
          %2249 = vmatpush1.bf16.xpose.msra.mxu0 %v2229
          %2250 = vmatprep.subr.bf16.mxu0 0
          %2251 = vmatpush1.bf16.xpose.msra.mxu0 %v2230
          %2252 = vmatprep.subr.bf16.mxu0 0
          %2253 = vmatpush1.bf16.xpose.msra.mxu0 %v2231
          %2254 = vmatprep.subr.bf16.mxu0 0
          %2255 = vmatpush1.bf16.xpose.msra.mxu0 %v2232
          %2256 = vmatprep.subr.bf16.mxu0 0
          %2257 = vmatpush1.bf16.xpose.msra.mxu0 %v2233
          %2258 = vmatprep.subr.bf16.mxu0 0
          %2259 = vmatpush1.bf16.xpose.msra.mxu0 0
          %2260 = vmatprep.subr.bf16.mxu0 0
          %2261 = vmatpush1.bf16.xpose.msra.mxu0 0
          %2262 = vmatprep.subr.bf16.mxu0 0
          %2263 = vmatpush1.bf16.xpose.msra.mxu0 0
          %2264 = vmatprep.subr.bf16.mxu0 0
          %2265 = vmatpush1.bf16.xpose.msra.mxu0 0
          %2266 = vmatprep.subr.bf16.mxu0 0
          %2267 = vmatpush1.bf16.xpose.msra.mxu0 0
          %2268 = vmatprep.subr.bf16.mxu0 0
          %2269 = vmatpush1.bf16.xpose.msra.mxu0 0
          %2270 = vmatprep.subr.bf16.mxu0 0
          %2271 = vmatpush1.bf16.xpose.msra.mxu0 0
          %2272 = vmatprep.subr.bf16.mxu0 0
          %2273 = vmatpush1.bf16.xpose.msra.mxu0 0
          %2274 = vmatprep.mubr.bf16.mxu0 0
          %2275 = vmatmul.mubr.bf16.gmra.mrb[0].mxu0 %v2177
          %v2276 = vpop.f32.mrb[0].mxu0
          %v2277 = vadd.f32 0.0, %v2276
          %v2278 = vpop.f32.mrb[0].mxu0
          %v2279 = vpop.f32.mrb[0].mxu0
          %v2280 = vpop.f32.mrb[0].mxu0
          %2281 = vdwg.mxu0
          %s2282 = scalar_lea.vmem %s692, 64 [#allocation21]
          %v2283 = vld [vmem:[%s2282] sm:$0xf]
          %v2284 = vld [vmem:[%s2282 + $0x4] sm:$0xf]
          %v2285 = vld [vmem:[%s2282 + $0x8] sm:$0xf]
          %v2286 = vld [vmem:[%s2282 + $0xc] sm:$0xf]
          %v2287 = vld [vmem:[%s2282 + $0x10] sm:$0xf]
          %v2288 = vld [vmem:[%s2282 + $0x14] sm:$0xf]
          %v2289 = vld [vmem:[%s2282 + $0x18] sm:$0xf]
          %v2290 = vld [vmem:[%s2282 + $0x1c] sm:$0xf]
          %v2291 = vld [vmem:[%s2282 + $0x20] sm:$0xf]
          %v2292 = vld [vmem:[%s2282 + $0x24] sm:$0xf]
          %v2293 = vld [vmem:[%s2282 + $0x28] sm:$0xf]
          %v2294 = vld [vmem:[%s2282 + $0x2c] sm:$0xf]
          %v2295 = vld [vmem:[%s2282 + $0x30] sm:$0xf]
          %v2296 = vld [vmem:[%s2282 + $0x34] sm:$0xf]
          %v2297 = vld [vmem:[%s2282 + $0x38] sm:$0xf]
          %v2298 = vld [vmem:[%s2282 + $0x3c] sm:$0xf]
          %v2315 = vunpack.c.l.b16 %v2283
          %v2316 = vunpack.c.l.b16 %v2284
          %v2317 = vunpack.c.l.b16 %v2285
          %v2318 = vunpack.c.l.b16 %v2286
          %v2319 = vunpack.c.l.b16 %v2287
          %v2320 = vunpack.c.l.b16 %v2288
          %v2321 = vunpack.c.l.b16 %v2289
          %v2322 = vunpack.c.l.b16 %v2290
          %v2323 = vunpack.c.l.b16 %v2291
          %v2324 = vunpack.c.l.b16 %v2292
          %v2325 = vunpack.c.l.b16 %v2293
          %v2326 = vunpack.c.l.b16 %v2294
          %v2327 = vunpack.c.l.b16 %v2295
          %v2328 = vunpack.c.l.b16 %v2296
          %v2329 = vunpack.c.l.b16 %v2297
          %v2330 = vunpack.c.l.b16 %v2298
          %v2331 = vpack.c.b16 %v2316, %v2315
          %v2332 = vpack.c.b16 %v2318, %v2317
          %v2333 = vpack.c.b16 %v2320, %v2319
          %v2334 = vpack.c.b16 %v2322, %v2321
          %v2335 = vpack.c.b16 %v2324, %v2323
          %v2336 = vpack.c.b16 %v2326, %v2325
          %v2337 = vpack.c.b16 %v2328, %v2327
          %v2338 = vpack.c.b16 %v2330, %v2329
          %2347 = vmatprep.subr.bf16.mxu0 0
          %2348 = vmatpush1.bf16.xpose.msra.mxu0 %v2331
          %2349 = vmatprep.subr.bf16.mxu0 0
          %2350 = vmatpush1.bf16.xpose.msra.mxu0 %v2332
          %2351 = vmatprep.subr.bf16.mxu0 0
          %2352 = vmatpush1.bf16.xpose.msra.mxu0 %v2333
          %2353 = vmatprep.subr.bf16.mxu0 0
          %2354 = vmatpush1.bf16.xpose.msra.mxu0 %v2334
          %2355 = vmatprep.subr.bf16.mxu0 0
          %2356 = vmatpush1.bf16.xpose.msra.mxu0 %v2335
          %2357 = vmatprep.subr.bf16.mxu0 0
          %2358 = vmatpush1.bf16.xpose.msra.mxu0 %v2336
          %2359 = vmatprep.subr.bf16.mxu0 0
          %2360 = vmatpush1.bf16.xpose.msra.mxu0 %v2337
          %2361 = vmatprep.subr.bf16.mxu0 0
          %2362 = vmatpush1.bf16.xpose.msra.mxu0 %v2338
          %2363 = vmatprep.subr.bf16.mxu0 0
          %2364 = vmatpush1.bf16.xpose.msra.mxu0 0
          %2365 = vmatprep.subr.bf16.mxu0 0
          %2366 = vmatpush1.bf16.xpose.msra.mxu0 0
          %2367 = vmatprep.subr.bf16.mxu0 0
          %2368 = vmatpush1.bf16.xpose.msra.mxu0 0
          %2369 = vmatprep.subr.bf16.mxu0 0
          %2370 = vmatpush1.bf16.xpose.msra.mxu0 0
          %2371 = vmatprep.subr.bf16.mxu0 0
          %2372 = vmatpush1.bf16.xpose.msra.mxu0 0
          %2373 = vmatprep.subr.bf16.mxu0 0
          %2374 = vmatpush1.bf16.xpose.msra.mxu0 0
          %2375 = vmatprep.subr.bf16.mxu0 0
          %2376 = vmatpush1.bf16.xpose.msra.mxu0 0
          %2377 = vmatprep.subr.bf16.mxu0 0
          %2378 = vmatpush1.bf16.xpose.msra.mxu0 0
          %2379 = vmatprep.mubr.bf16.mxu0 0
          %2380 = vmatmul.mubr.bf16.gmra.mrb[0].mxu0 %v2177
          %v2381 = vpop.f32.mrb[0].mxu0
          %v2382 = vadd.f32 0.0, %v2381
          %v2383 = vpop.f32.mrb[0].mxu0
          %v2384 = vpop.f32.mrb[0].mxu0
          %v2385 = vpop.f32.mrb[0].mxu0
          %2386 = vdwg.mxu0
          %v2387 = vmul.f32 %v2277, 0.5
          %v2388 = vmul.f32 %v2277, 0.70710677
          %v2389 = verf.f32.pop %v2388
          %v2390 = vadd.f32 %v2389, 1.0
          %v2391 = vmul.f32 %v2387, %v2390
          %v2392 = vmul.f32 %v2391, %v2382
          %v2393 = vpack.c.bf16 %v2392, %v2392
          %v2394 = vld [vmem:[%s701] sm:$0xf]
          %v2395 = vld [vmem:[%s701 + $0x4] sm:$0xf]
          %v2396 = vld [vmem:[%s701 + $0x8] sm:$0xf]
          %v2397 = vld [vmem:[%s701 + $0xc] sm:$0xf]
          %v2398 = vld [vmem:[%s701 + $0x10] sm:$0xf]
          %v2399 = vld [vmem:[%s701 + $0x14] sm:$0xf]
          %v2400 = vld [vmem:[%s701 + $0x18] sm:$0xf]
          %v2401 = vld [vmem:[%s701 + $0x1c] sm:$0xf]
          %v2402 = vld [vmem:[%s701 + $0x20] sm:$0xf]
          %v2403 = vld [vmem:[%s701 + $0x24] sm:$0xf]
          %v2404 = vld [vmem:[%s701 + $0x28] sm:$0xf]
          %v2405 = vld [vmem:[%s701 + $0x2c] sm:$0xf]
          %v2406 = vld [vmem:[%s701 + $0x30] sm:$0xf]
          %v2407 = vld [vmem:[%s701 + $0x34] sm:$0xf]
          %v2408 = vld [vmem:[%s701 + $0x38] sm:$0xf]
          %v2409 = vld [vmem:[%s701 + $0x3c] sm:$0xf]
          %v2426 = vunpack.c.l.b16 %v2394
          %v2427 = vunpack.c.l.b16 %v2395
          %v2428 = vunpack.c.l.b16 %v2396
          %v2429 = vunpack.c.l.b16 %v2397
          %v2430 = vunpack.c.l.b16 %v2398
          %v2431 = vunpack.c.l.b16 %v2399
          %v2432 = vunpack.c.l.b16 %v2400
          %v2433 = vunpack.c.l.b16 %v2401
          %v2434 = vunpack.c.l.b16 %v2402
          %v2435 = vunpack.c.l.b16 %v2403
          %v2436 = vunpack.c.l.b16 %v2404
          %v2437 = vunpack.c.l.b16 %v2405
          %v2438 = vunpack.c.l.b16 %v2406
          %v2439 = vunpack.c.l.b16 %v2407
          %v2440 = vunpack.c.l.b16 %v2408
          %v2441 = vunpack.c.l.b16 %v2409
          %v2442 = vpack.c.b16 %v2427, %v2426
          %v2443 = vpack.c.b16 %v2429, %v2428
          %v2444 = vpack.c.b16 %v2431, %v2430
          %v2445 = vpack.c.b16 %v2433, %v2432
          %v2446 = vpack.c.b16 %v2435, %v2434
          %v2447 = vpack.c.b16 %v2437, %v2436
          %v2448 = vpack.c.b16 %v2439, %v2438
          %v2449 = vpack.c.b16 %v2441, %v2440
          %2458 = vmatprep.subr.bf16.mxu0 0
          %2459 = vmatpush1.bf16.xpose.msra.mxu0 %v2442
          %2460 = vmatprep.subr.bf16.mxu0 0
          %2461 = vmatpush1.bf16.xpose.msra.mxu0 %v2443
          %2462 = vmatprep.subr.bf16.mxu0 0
          %2463 = vmatpush1.bf16.xpose.msra.mxu0 %v2444
          %2464 = vmatprep.subr.bf16.mxu0 0
          %2465 = vmatpush1.bf16.xpose.msra.mxu0 %v2445
          %2466 = vmatprep.subr.bf16.mxu0 0
          %2467 = vmatpush1.bf16.xpose.msra.mxu0 %v2446
          %2468 = vmatprep.subr.bf16.mxu0 0
          %2469 = vmatpush1.bf16.xpose.msra.mxu0 %v2447
          %2470 = vmatprep.subr.bf16.mxu0 0
          %2471 = vmatpush1.bf16.xpose.msra.mxu0 %v2448
          %2472 = vmatprep.subr.bf16.mxu0 0
          %2473 = vmatpush1.bf16.xpose.msra.mxu0 %v2449
          %2474 = vmatprep.subr.bf16.mxu0 0
          %2475 = vmatpush1.bf16.xpose.msra.mxu0 0
          %2476 = vmatprep.subr.bf16.mxu0 0
          %2477 = vmatpush1.bf16.xpose.msra.mxu0 0
          %2478 = vmatprep.subr.bf16.mxu0 0
          %2479 = vmatpush1.bf16.xpose.msra.mxu0 0
          %2480 = vmatprep.subr.bf16.mxu0 0
          %2481 = vmatpush1.bf16.xpose.msra.mxu0 0
          %2482 = vmatprep.subr.bf16.mxu0 0
          %2483 = vmatpush1.bf16.xpose.msra.mxu0 0
          %2484 = vmatprep.subr.bf16.mxu0 0
          %2485 = vmatpush1.bf16.xpose.msra.mxu0 0
          %2486 = vmatprep.subr.bf16.mxu0 0
          %2487 = vmatpush1.bf16.xpose.msra.mxu0 0
          %2488 = vmatprep.subr.bf16.mxu0 0
          %2489 = vmatpush1.bf16.xpose.msra.mxu0 0
          %2490 = vmatprep.mubr.bf16.mxu0 0
          %2491 = vmatmul.mubr.bf16.gmra.mrb[0].mxu0 %v2393
          %v2492 = vpop.f32.mrb[0].mxu0
          %v2493 = vadd.f32 0.0, %v2492
          %v2494 = vpop.f32.mrb[0].mxu0
          %v2495 = vpop.f32.mrb[0].mxu0
          %v2496 = vpop.f32.mrb[0].mxu0
          %2497 = vdwg.mxu0
          %v2498 = vld [vmem:[%s774] sm:$0xff]
          %v2499 = vadd.f32 %v2498, %v2493
          %2500 = vst [vmem:[%s774] sm:$0xff] %v2499
        $region132: #{tpu_custom_call.1} parent=67 // pred_fallthru
          _
        %s2501 = sand.u32 %s367, 1
        %s2502 = scalar_lea.sflag [#allocation9], %s2501
        %s2503 = sand.u32 %s367, 1
        %s2504 = smul.addr %s2503, 8
        %s2505 = scalar_lea.vmem [#allocation25], %s2504
        // Predicated region
        $region133: #{tpu_custom_call.1} parent=67 // pred_check
          %p2506 = pneg %p377
        $region134: #{tpu_custom_call.1} parent=67 // pred_check_branch
          %2508 = sbr.rel (%p2506) target = $region136
        $region135: #{tpu_custom_call.1} parent=67 // pred_region
          %s2510 = ssub.s32 128, 128
          %2511 = vsyncadd %s2502, %s2510
          %s2512 = smul.addr %s41, 128
          %s2513 = scalar_lea.hbm %s12, %s2512
          %s2515 = sshll.u32 %s2505, 4
          %s2516 = int_to_ptr.vmem [resolvable:$true] %s2515
          %2518 = dma.vmem_to_hbm [thread:$0]  %s2516, 128, %s2513, %s2502
        $region136: #{tpu_custom_call.1} parent=67 // pred_fallthru
          _
      $region68: #{tpu_custom_call.1} parent=5 // pred_fallthru
        _
      %p2519 = scmp.le.s32.totalorder 2, %s32
      // Predicated region
      $region137: #{tpu_custom_call.1} parent=5 // pred_check
        %p2520 = pneg %p2519
      $region138: #{tpu_custom_call.1} parent=5 // pred_check_branch
        %2522 = sbr.rel (%p2520) target = $region140
      $region139: #{tpu_custom_call.1} parent=5 // pred_region
        %s2523 = ssub.s32 %s32, 2
        // Predicated region
        $region141: #{tpu_custom_call.1} parent=139 // pred_check
          %p2524 = pneg %p383
        $region142: #{tpu_custom_call.1} parent=139 // pred_check_branch
          %2526 = sbr.rel (%p2524) target = $region144
        $region143: #{tpu_custom_call.1} parent=139 // pred_region
          %s2527 = sand.u32 %s368, 1
          %s2528 = scalar_lea.sflag [#allocation9], %s2527
          %s2529 = sand.u32 %s368, 1
          %s2530 = smul.addr %s2529, 8
          %s2531 = scalar_lea.vmem [#allocation25], %s2530
          %2532 = dma.done %s2528, 128
        $region144: #{tpu_custom_call.1} parent=139 // pred_fallthru
          _
      $region140: #{tpu_custom_call.1} parent=5 // pred_fallthru
        _
    $region6: #{tpu_custom_call.1} parent=1 // loop_footer
      %s36 = sadd.s32 1, %s32
    $region7: #{tpu_custom_call.1} parent=1 // loop_footer_branch
      %31 = sbr.rel target = $region3
    $region8: #{tpu_custom_call.1} parent=1 // loop_exit
      _
    %2533 = vsyncpa [#allocation8], 1
    %s2534 = scalar_lea.sflag [#allocation8], 1
    %2535 = vsyncpa %s2534, 1
    %2536 = vsyncpa [#allocation11], 1
    %2537 = vsyncpa [#allocation14], 1
    %s2538 = scalar_lea.sflag [#allocation14], 1
    %2539 = vsyncpa %s2538, 1
    %2540 = vsyncpa [#allocation17], 1
    %s2541 = scalar_lea.sflag [#allocation17], 1
    %2542 = vsyncpa %s2541, 1
    %2543 = vsyncpa [#allocation20], 1
    %2544 = vsyncpa [#allocation9], 1
    %s2545 = scalar_lea.sflag [#allocation9], 1
    %2546 = vsyncpa %s2545, 1

</llo_original>
